<compile_context>
chip_gen: v7x
topology: tpu7x:2x2x1
jax: 0.10.0
libtpu: 0.0.40
codegen_flags: <defaults>
</compile_context>

<pallas_src>
import functools

import numpy as np
import jax
import jax.numpy as jnp
from jax import lax
from jax.experimental import pallas as pl
from jax.experimental.pallas import tpu as pltpu


# ----------------------------------------------------------------------------
# Config (16x16 input -> 4x4 after two pools; consistent with the module)
# ----------------------------------------------------------------------------
CONFIG = {
    "input": {"dim": 4},
    "conv1": {"out": 8, "k": 3, "s": 1, "p": 1},
    "pool1": {"k": 2, "s": 2, "p": 0},
    "conv2": {"out": 8, "k": 3, "s": 1, "p": 1},
    "pool2": {"k": 2, "s": 2, "p": 0},
    "conv3": {"out": 8, "k": 3, "s": 1, "p": 1},
    "conv4": {"out": 8, "k": 3, "s": 1, "p": 1},
    "conv5": {"out": 8, "k": 3, "s": 1, "p": 1},
    "conv6": {"out": {"dim": 8, "size": 4}, "k": 3, "s": 1, "p": 1},
    "lstm": {"in": 32, "hidden": 32},
    "output": {"size": 10},
}

_VMEM = pl.BlockSpec(memory_space=pltpu.MemorySpace.VMEM)
_BN_EPS = 1e-5


# ----------------------------------------------------------------------------
# The single fused Pallas kernel
# ----------------------------------------------------------------------------
def _net_fused_kernel(buf1_ref, w1_ref, b1_ref, s1_ref, m1_ref,
                      wr_ref, br_ref, s2_ref, m2_ref, s3_ref,
                      fca_ref, fcb_ref, gsel_ref,
                      wih_ref, whh_ref, bl_ref, wout_ref, bout_ref,
                      o_ref, *, n, wp1, wp2, wp3, hw3, hidden):
    f32 = jnp.float32

    def shift_left(x, off):
        # shifted[c, p] = x[c, p + off] (circular roll; wrapped lanes only
        # ever land on positions that are never selected as valid outputs).
        if off == 0:
            return x
        size = x.shape[1]
        return pltpu.roll(x, size - off, axis=1)

    def tap_matmul(buf, get_w, offsets):
        # sum_k  W_k (OC, Cin) @ shift(buf, off_k)  ->  (OC, L), lane-dense.
        acc = None
        for k, off in enumerate(offsets):
            term = jnp.dot(get_w(k), shift_left(buf, off),
                           preferred_element_type=f32)
            acc = term if acc is None else acc + term
        return acc

    def conv3x3_relu(buf, get_w, bias, wp):
        offs = [kh * wp + kw for kh in range(3) for kw in range(3)]
        return jnp.maximum(tap_matmul(buf, get_w, offs) + bias, 0.0)

    def maxpool2x2(a, wp):
        m = jnp.maximum(a, shift_left(a, 1))       # max over the W pair
        return jnp.maximum(m, shift_left(m, wp))   # max over the H pair

    def batchnorm(xb, mask, count):
        # xb is exactly zero at padding lanes, so plain lane sums are exact
        # sums over the N*H*W valid elements (single pass: E[x], E[x^2]).
        inv = 1.0 / count
        mean = jnp.sum(xb, axis=1, keepdims=True) * inv
        sq = jnp.sum(xb * xb, axis=1, keepdims=True) * inv
        var = sq - mean * mean
        return (xb - mean) * lax.rsqrt(var + _BN_EPS) * mask

    # ---- stage 1: conv1 -> ReLU -> maxpool -> BN ---------------------------
    a1 = conv3x3_relu(buf1_ref[...], lambda k: w1_ref[k], b1_ref[...], wp1)
    p1 = maxpool2x2(a1, wp1)
    hw1 = (wp1 - 2) // 2
    buf2 = jnp.dot(p1, s1_ref[...], preferred_element_type=f32)
    buf2 = batchnorm(buf2, m1_ref[...], float(n * hw1 * hw1))

    # ---- stage 2: conv2 -> ReLU -> maxpool -> BN ---------------------------
    a2 = conv3x3_relu(buf2, lambda k: wr_ref[0, k], br_ref[0], wp2)
    p2 = maxpool2x2(a2, wp2)
    hw2 = (wp2 - 2) // 2
    buf3 = jnp.dot(p2, s2_ref[...], preferred_element_type=f32)
    buf3 = batchnorm(buf3, m2_ref[...], float(n * hw2 * hw2))

    # ---- conv3..conv6 (ReLU, no pooling; re-pad via constant scatter) ------
    a3 = conv3x3_relu(buf3, lambda k: wr_ref[1, k], br_ref[1], wp3)
    b4 = jnp.dot(a3, s3_ref[...], preferred_element_type=f32)
    a4 = conv3x3_relu(b4, lambda k: wr_ref[2, k], br_ref[2], wp3)
    b5 = jnp.dot(a4, s3_ref[...], preferred_element_type=f32)
    a5 = conv3x3_relu(b5, lambda k: wr_ref[3, k], br_ref[3], wp3)
    b6 = jnp.dot(a5, s3_ref[...], preferred_element_type=f32)
    a6 = conv3x3_relu(b6, lambda k: wr_ref[4, k], br_ref[4], wp3)

    # ---- Flatten + Linear(C*hw3*hw3 -> lstm_in) as an hw3 x hw3 "conv" -----
    fc_offs = [sy * wp3 + sx for sy in range(hw3) for sx in range(hw3)]
    fc_full = tap_matmul(a6, lambda k: fca_ref[k], fc_offs)      # (32, L3)
    fcx = jnp.dot(fc_full, gsel_ref[...], preferred_element_type=f32)
    fcx = fcx + fcb_ref[...]                                     # (32, n)

    # ---- LSTM over n timesteps (batch = 1), column form --------------------
    # Input projection for all timesteps hoisted out of the recurrence.
    gx = jnp.dot(wih_ref[...], fcx, preferred_element_type=f32) + bl_ref[...]
    h = jnp.zeros((hidden, 1), f32)
    c = jnp.zeros((hidden, 1), f32)
    for t in range(n):
        g = gx[:, t:t + 1] + jnp.dot(whh_ref[...], h,
                                     preferred_element_type=f32)
        sg = jax.nn.sigmoid(g)        # full 4H column, one EUP pass
        tg = jnp.tanh(g)              # full 4H column, one EUP pass
        i_g = sg[0 * hidden:1 * hidden, :]
        f_g = sg[1 * hidden:2 * hidden, :]
        g_g = tg[2 * hidden:3 * hidden, :]
        o_g = sg[3 * hidden:4 * hidden, :]
        c = f_g * c + i_g * g_g
        h = o_g * jnp.tanh(c)

    # ---- Linear(hidden -> out) + Softmax ------------------------------------
    logits = jnp.dot(wout_ref[...], h, preferred_element_type=f32)
    logits = logits + bout_ref[...]
    mx = jnp.max(logits, axis=0, keepdims=True)
    e = jnp.exp(logits - mx)
    o_ref[...] = (e / jnp.sum(e, axis=0, keepdims=True)).astype(o_ref.dtype)


# ----------------------------------------------------------------------------
# Static (trace-time) tables and weight re-layouts
# ----------------------------------------------------------------------------
def _conv_taps(w):
    """torch conv weight (OC, C, KH, KW) -> per-tap (KH*KW, OC, C)."""
    oc, cin, kh, kw = w.shape
    return jnp.transpose(w, (2, 3, 0, 1)).reshape(kh * kw, oc, cin)


def _pool_pad_scatter(n, wp_src, wp_dst, hw_out):
    """2x2/s2 downsample + zero re-padding as a 0/1 scatter matrix + mask."""
    blk_s, blk_d = wp_src * wp_src, wp_dst * wp_dst
    s = np.zeros((n * blk_s, n * blk_d), np.float32)
    m = np.zeros((1, n * blk_d), np.float32)
    for b in range(n):
        for ph in range(hw_out):
            for pw in range(hw_out):
                src = b * blk_s + (2 * ph) * wp_src + (2 * pw)
                dst = b * blk_d + (ph + 1) * wp_dst + (pw + 1)
                s[src, dst] = 1.0
                m[0, dst] = 1.0
    return s, m


def _repad_scatter(n, wp, hw):
    """Move top-left-anchored conv outputs into the interior (zero-padded)."""
    blk = wp * wp
    s = np.zeros((n * blk, n * blk), np.float32)
    for b in range(n):
        for y in range(hw):
            for x in range(hw):
                s[b * blk + y * wp + x, b * blk + (y + 1) * wp + (x + 1)] = 1.0
    return s


def _sample_select(n, wp):
    """Pick lane n*wp*wp (the per-sample anchor) for each sample."""
    blk = wp * wp
    g = np.zeros((n * blk, n), np.float32)
    for b in range(n):
        g[b * blk, b] = 1.0
    return g


# ----------------------------------------------------------------------------
# Wrapper: single pallas_call for the whole forward pass
# ----------------------------------------------------------------------------
def net_forward(params, x, cfg=CONFIG):
    n, c_in, hh, _ = x.shape
    wp1 = hh + 2                        # 18  (padded 16x16)
    hw1 = hh // 2                       # 8
    wp2 = hw1 + 2                       # 10  (padded 8x8)
    hw2 = hw1 // 2                      # 4
    wp3 = hw2 + 2                       # 6   (padded 4x4)
    hw3 = cfg["conv6"]["out"]["size"]   # 4
    hidden = cfg["lstm"]["hidden"]
    lstm_in = cfg["lstm"]["in"]
    out_dim = cfg["output"]["size"]
    oc6 = cfg["conv6"]["out"]["dim"]

    # Static scatter / selection tables (become jit constants).
    s1, m1 = _pool_pad_scatter(n, wp1, wp2, hw1)
    s2, m2 = _pool_pad_scatter(n, wp2, wp3, hw2)
    s3 = _repad_scatter(n, wp3, hw2)
    gsel = _sample_select(n, wp3)

    # Kernel-layout parameters (tiny one-time transforms).
    w1 = _conv_taps(params["conv1_w"])
    b1 = params["conv1_b"].reshape(-1, 1)
    wr = jnp.stack([_conv_taps(params[f"conv{i}_w"]) for i in range(2, 7)])
    br = jnp.stack([params[f"conv{i}_b"].reshape(-1, 1) for i in range(2, 7)])
    fca = params["fc_w"].reshape(lstm_in, oc6, hw3, hw3)
    fca = jnp.transpose(fca, (2, 3, 0, 1)).reshape(hw3 * hw3, lstm_in, oc6)
    fcb = params["fc_b"].reshape(-1, 1)
    wih = params["lstm_w_ih"]
    whh = params["lstm_w_hh"]
    bl = (params["lstm_b_ih"] + params["lstm_b_hh"]).reshape(-1, 1)
    wout = params["out_w"]
    bout = params["out_b"].reshape(-1, 1)

    # Channel-major, zero-padded, flattened input tile (only input-side glue).
    xp = jnp.pad(x, ((0, 0), (0, 0), (1, 1), (1, 1)))
    buf1 = jnp.transpose(xp, (1, 0, 2, 3)).reshape(c_in, n * wp1 * wp1)

    kernel = functools.partial(
        _net_fused_kernel,
        n=n, wp1=wp1, wp2=wp2, wp3=wp3, hw3=hw3, hidden=hidden)

    out = pl.pallas_call(
        kernel,
        out_shape=jax.ShapeDtypeStruct((out_dim, 1), jnp.float32),
        in_specs=[_VMEM] * 18,
        out_specs=_VMEM,
    )(buf1, w1, b1, jnp.asarray(s1), jnp.asarray(m1), wr, br,
      jnp.asarray(s2), jnp.asarray(m2), jnp.asarray(s3),
      fca, fcb, jnp.asarray(gsel), wih, whh, bl, wout, bout)
    return out[:, 0]


# ----------------------------------------------------------------------------
# Pure-JAX (XLA) reference of the same module, used only for validation
# ----------------------------------------------------------------------------
def net_forward_ref(params, x):
    def conv_relu(h, w, b):
        y = lax.conv_general_dilated(
            h, w, window_strides=(1, 1), padding=((1, 1), (1, 1)),
            dimension_numbers=("NCHW", "OIHW", "NCHW"))
        return jnp.maximum(y + b[None, :, None, None], 0.0)

    def maxpool(h):
        nb, cb, hb, wb = h.shape
        return h.reshape(nb, cb, hb // 2, 2, wb // 2, 2).max(axis=(3, 5))

    def batchnorm(h):
        mean = h.mean(axis=(0, 2, 3), keepdims=True)
        var = ((h - mean) ** 2).mean(axis=(0, 2, 3), keepdims=True)
        return (h - mean) / jnp.sqrt(var + _BN_EPS)

    h = batchnorm(maxpool(conv_relu(x, params["conv1_w"], params["conv1_b"])))
    h = batchnorm(maxpool(conv_relu(h, params["conv2_w"], params["conv2_b"])))
    for i in range(3, 7):
        h = conv_relu(h, params[f"conv{i}_w"], params[f"conv{i}_b"])
    n = h.shape[0]
    xs = h.reshape(n, -1) @ params["fc_w"].T + params["fc_b"]     # (n, 32)
    hid = params["lstm_w_hh"].shape[1]
    hh = jnp.zeros((hid,), jnp.float32)
    cc = jnp.zeros((hid,), jnp.float32)
    for t in range(n):
        g = (params["lstm_w_ih"] @ xs[t] + params["lstm_b_ih"]
             + params["lstm_w_hh"] @ hh + params["lstm_b_hh"])
        i_g = jax.nn.sigmoid(g[0:hid])
        f_g = jax.nn.sigmoid(g[hid:2 * hid])
        g_g = jnp.tanh(g[2 * hid:3 * hid])
        o_g = jax.nn.sigmoid(g[3 * hid:4 * hid])
        cc = f_g * cc + i_g * g_g
        hh = o_g * jnp.tanh(cc)
    logits = params["out_w"] @ hh + params["out_b"]
    return jax.nn.softmax(logits)


# ----------------------------------------------------------------------------
# Deterministic synthetic parameters (torch layouts)
# ----------------------------------------------------------------------------
def init_params(key, cfg):
    def nrm(k, shape, scale=0.1):
        return scale * jax.random.normal(k, shape, jnp.float32)

    keys = jax.random.split(key, 20)
    p = {}
    chans = [cfg["input"]["dim"], cfg["conv1"]["out"], cfg["conv2"]["out"],
             cfg["conv3"]["out"], cfg["conv4"]["out"], cfg["conv5"]["out"],
             cfg["conv6"]["out"]["dim"]]
    for i in range(1, 7):
        k = cfg[f"conv{i}"]["k"]
        p[f"conv{i}_w"] = nrm(keys[2 * i - 2], (chans[i], chans[i - 1], k, k))
        p[f"conv{i}_b"] = nrm(keys[2 * i - 1], (chans[i],))

    flat = (cfg["conv6"]["out"]["dim"] * cfg["conv6"]["out"]["size"]
            * cfg["conv6"]["out"]["size"])
    p["fc_w"] = nrm(keys[12], (cfg["lstm"]["in"], flat))
    p["fc_b"] = nrm(keys[13], (cfg["lstm"]["in"],))

    hid = cfg["lstm"]["hidden"]
    p["lstm_w_ih"] = nrm(keys[14], (4 * hid, cfg["lstm"]["in"]))
    p["lstm_w_hh"] = nrm(keys[15], (4 * hid, hid))
    p["lstm_b_ih"] = nrm(keys[16], (4 * hid,))
    p["lstm_b_hh"] = nrm(keys[17], (4 * hid,))

    p["out_w"] = nrm(keys[18], (cfg["output"]["size"], hid))
    p["out_b"] = nrm(keys[19], (cfg["output"]["size"],))
    return p


if __name__ == "__main__":
    key = jax.random.PRNGKey(0)
    kx, kp = jax.random.split(key)
    x = jax.random.normal(kx, (2, CONFIG["input"]["dim"], 16, 16), jnp.float32)
    params = init_params(kp, CONFIG)

    y = jax.block_until_ready(jax.jit(net_forward)(params, x))

    assert y.shape == (CONFIG["output"]["size"],)
    assert bool(jnp.isfinite(y).all())
    assert abs(float(y.sum()) - 1.0) < 1e-4          # softmax sums to 1

    # Validate the fused kernel against the pure-JAX reference.
    y_ref = jax.block_until_ready(jax.jit(net_forward_ref)(params, x))
    assert jnp.allclose(y, y_ref, atol=1e-4, rtol=1e-3), (y, y_ref)

    print("KERNEL_OK")
</pallas_src>

<mosaic_0001>
module attributes {stable_mosaic.version = 11 : i64} {
  func.func @_net_fused_kernel(%arg0: memref<4x648xf32, #tpu.memory_space<vmem>>, %arg1: memref<9x8x4xf32, #tpu.memory_space<vmem>>, %arg2: memref<8x1xf32, #tpu.memory_space<vmem>>, %arg3: memref<648x200xf32, #tpu.memory_space<vmem>>, %arg4: memref<1x200xf32, #tpu.memory_space<vmem>>, %arg5: memref<5x9x8x8xf32, #tpu.memory_space<vmem>>, %arg6: memref<5x8x1xf32, #tpu.memory_space<vmem>>, %arg7: memref<200x72xf32, #tpu.memory_space<vmem>>, %arg8: memref<1x72xf32, #tpu.memory_space<vmem>>, %arg9: memref<72x72xf32, #tpu.memory_space<vmem>>, %arg10: memref<16x32x8xf32, #tpu.memory_space<vmem>>, %arg11: memref<32x1xf32, #tpu.memory_space<vmem>>, %arg12: memref<72x2xf32, #tpu.memory_space<vmem>>, %arg13: memref<128x32xf32, #tpu.memory_space<vmem>>, %arg14: memref<128x32xf32, #tpu.memory_space<vmem>>, %arg15: memref<128x1xf32, #tpu.memory_space<vmem>>, %arg16: memref<10x32xf32, #tpu.memory_space<vmem>>, %arg17: memref<10x1xf32, #tpu.memory_space<vmem>>, %arg18: memref<10x1xf32, #tpu.memory_space<vmem>>) attributes {dimension_semantics = [], scalar_prefetch = 0 : i64, scratch_operands = 0 : i64, tpu.core_type = #tpu.core_type<tc>} {
    %c0 = arith.constant 0 : index
    %c0_0 = arith.constant 0 : index
    %0 = vector.load %arg0[%c0, %c0_0] : memref<4x648xf32, #tpu.memory_space<vmem>>, vector<4x648xf32>
    %c0_1 = arith.constant 0 : index
    %c0_2 = arith.constant 0 : index
    %1 = vector.load %arg2[%c0_1, %c0_2] : memref<8x1xf32, #tpu.memory_space<vmem>>, vector<8x1xf32>
    %c0_3 = arith.constant 0 : index
    %c0_4 = arith.constant 0 : index
    %c0_5 = arith.constant 0 : index
    %2 = vector.load %arg1[%c0_3, %c0_4, %c0_5] : memref<9x8x4xf32, #tpu.memory_space<vmem>>, vector<1x8x4xf32>
    %3 = vector.shape_cast %2 : vector<1x8x4xf32> to vector<8x4xf32>
    %cst = arith.constant dense<0.000000e+00> : vector<8x648xf32>
    %4 = tpu.matmul %3, %0, %cst {dimension_numbers = #tpu.dot_dimension_numbers<[1], [0], [0], [1], [0, 0, 1, 1], [], []>} : vector<8x4xf32>, vector<4x648xf32>, vector<8x648xf32> -> vector<8x648xf32>
    %c1 = arith.constant 1 : index
    %c0_6 = arith.constant 0 : index
    %c0_7 = arith.constant 0 : index
    %5 = vector.load %arg1[%c1, %c0_6, %c0_7] : memref<9x8x4xf32, #tpu.memory_space<vmem>>, vector<1x8x4xf32>
    %6 = vector.shape_cast %5 : vector<1x8x4xf32> to vector<8x4xf32>
    %c647_i32 = arith.constant 647 : i32
    %7 = tpu.dynamic_rotate %0 by %c647_i32 dim 1 : vector<4x648xf32>, i32 -> vector<4x648xf32>
    %cst_8 = arith.constant dense<0.000000e+00> : vector<8x648xf32>
    %8 = tpu.matmul %6, %7, %cst_8 {dimension_numbers = #tpu.dot_dimension_numbers<[1], [0], [0], [1], [0, 0, 1, 1], [], []>} : vector<8x4xf32>, vector<4x648xf32>, vector<8x648xf32> -> vector<8x648xf32>
    %9 = arith.addf %4, %8 : vector<8x648xf32>
    %c2 = arith.constant 2 : index
    %c0_9 = arith.constant 0 : index
    %c0_10 = arith.constant 0 : index
    %10 = vector.load %arg1[%c2, %c0_9, %c0_10] : memref<9x8x4xf32, #tpu.memory_space<vmem>>, vector<1x8x4xf32>
    %11 = vector.shape_cast %10 : vector<1x8x4xf32> to vector<8x4xf32>
    %c646_i32 = arith.constant 646 : i32
    %12 = tpu.dynamic_rotate %0 by %c646_i32 dim 1 : vector<4x648xf32>, i32 -> vector<4x648xf32>
    %cst_11 = arith.constant dense<0.000000e+00> : vector<8x648xf32>
    %13 = tpu.matmul %11, %12, %cst_11 {dimension_numbers = #tpu.dot_dimension_numbers<[1], [0], [0], [1], [0, 0, 1, 1], [], []>} : vector<8x4xf32>, vector<4x648xf32>, vector<8x648xf32> -> vector<8x648xf32>
    %14 = arith.addf %9, %13 : vector<8x648xf32>
    %c3 = arith.constant 3 : index
    %c0_12 = arith.constant 0 : index
    %c0_13 = arith.constant 0 : index
    %15 = vector.load %arg1[%c3, %c0_12, %c0_13] : memref<9x8x4xf32, #tpu.memory_space<vmem>>, vector<1x8x4xf32>
    %16 = vector.shape_cast %15 : vector<1x8x4xf32> to vector<8x4xf32>
    %c630_i32 = arith.constant 630 : i32
    %17 = tpu.dynamic_rotate %0 by %c630_i32 dim 1 : vector<4x648xf32>, i32 -> vector<4x648xf32>
    %cst_14 = arith.constant dense<0.000000e+00> : vector<8x648xf32>
    %18 = tpu.matmul %16, %17, %cst_14 {dimension_numbers = #tpu.dot_dimension_numbers<[1], [0], [0], [1], [0, 0, 1, 1], [], []>} : vector<8x4xf32>, vector<4x648xf32>, vector<8x648xf32> -> vector<8x648xf32>
    %19 = arith.addf %14, %18 : vector<8x648xf32>
    %c4 = arith.constant 4 : index
    %c0_15 = arith.constant 0 : index
    %c0_16 = arith.constant 0 : index
    %20 = vector.load %arg1[%c4, %c0_15, %c0_16] : memref<9x8x4xf32, #tpu.memory_space<vmem>>, vector<1x8x4xf32>
    %21 = vector.shape_cast %20 : vector<1x8x4xf32> to vector<8x4xf32>
    %c629_i32 = arith.constant 629 : i32
    %22 = tpu.dynamic_rotate %0 by %c629_i32 dim 1 : vector<4x648xf32>, i32 -> vector<4x648xf32>
    %cst_17 = arith.constant dense<0.000000e+00> : vector<8x648xf32>
    %23 = tpu.matmul %21, %22, %cst_17 {dimension_numbers = #tpu.dot_dimension_numbers<[1], [0], [0], [1], [0, 0, 1, 1], [], []>} : vector<8x4xf32>, vector<4x648xf32>, vector<8x648xf32> -> vector<8x648xf32>
    %24 = arith.addf %19, %23 : vector<8x648xf32>
    %c5 = arith.constant 5 : index
    %c0_18 = arith.constant 0 : index
    %c0_19 = arith.constant 0 : index
    %25 = vector.load %arg1[%c5, %c0_18, %c0_19] : memref<9x8x4xf32, #tpu.memory_space<vmem>>, vector<1x8x4xf32>
    %26 = vector.shape_cast %25 : vector<1x8x4xf32> to vector<8x4xf32>
    %c628_i32 = arith.constant 628 : i32
    %27 = tpu.dynamic_rotate %0 by %c628_i32 dim 1 : vector<4x648xf32>, i32 -> vector<4x648xf32>
    %cst_20 = arith.constant dense<0.000000e+00> : vector<8x648xf32>
    %28 = tpu.matmul %26, %27, %cst_20 {dimension_numbers = #tpu.dot_dimension_numbers<[1], [0], [0], [1], [0, 0, 1, 1], [], []>} : vector<8x4xf32>, vector<4x648xf32>, vector<8x648xf32> -> vector<8x648xf32>
    %29 = arith.addf %24, %28 : vector<8x648xf32>
    %c6 = arith.constant 6 : index
    %c0_21 = arith.constant 0 : index
    %c0_22 = arith.constant 0 : index
    %30 = vector.load %arg1[%c6, %c0_21, %c0_22] : memref<9x8x4xf32, #tpu.memory_space<vmem>>, vector<1x8x4xf32>
    %31 = vector.shape_cast %30 : vector<1x8x4xf32> to vector<8x4xf32>
    %c612_i32 = arith.constant 612 : i32
    %32 = tpu.dynamic_rotate %0 by %c612_i32 dim 1 : vector<4x648xf32>, i32 -> vector<4x648xf32>
    %cst_23 = arith.constant dense<0.000000e+00> : vector<8x648xf32>
    %33 = tpu.matmul %31, %32, %cst_23 {dimension_numbers = #tpu.dot_dimension_numbers<[1], [0], [0], [1], [0, 0, 1, 1], [], []>} : vector<8x4xf32>, vector<4x648xf32>, vector<8x648xf32> -> vector<8x648xf32>
    %34 = arith.addf %29, %33 : vector<8x648xf32>
    %c7 = arith.constant 7 : index
    %c0_24 = arith.constant 0 : index
    %c0_25 = arith.constant 0 : index
    %35 = vector.load %arg1[%c7, %c0_24, %c0_25] : memref<9x8x4xf32, #tpu.memory_space<vmem>>, vector<1x8x4xf32>
    %36 = vector.shape_cast %35 : vector<1x8x4xf32> to vector<8x4xf32>
    %c611_i32 = arith.constant 611 : i32
    %37 = tpu.dynamic_rotate %0 by %c611_i32 dim 1 : vector<4x648xf32>, i32 -> vector<4x648xf32>
    %cst_26 = arith.constant dense<0.000000e+00> : vector<8x648xf32>
    %38 = tpu.matmul %36, %37, %cst_26 {dimension_numbers = #tpu.dot_dimension_numbers<[1], [0], [0], [1], [0, 0, 1, 1], [], []>} : vector<8x4xf32>, vector<4x648xf32>, vector<8x648xf32> -> vector<8x648xf32>
    %39 = arith.addf %34, %38 : vector<8x648xf32>
    %c8 = arith.constant 8 : index
    %c0_27 = arith.constant 0 : index
    %c0_28 = arith.constant 0 : index
    %40 = vector.load %arg1[%c8, %c0_27, %c0_28] : memref<9x8x4xf32, #tpu.memory_space<vmem>>, vector<1x8x4xf32>
    %41 = vector.shape_cast %40 : vector<1x8x4xf32> to vector<8x4xf32>
    %c610_i32 = arith.constant 610 : i32
    %42 = tpu.dynamic_rotate %0 by %c610_i32 dim 1 : vector<4x648xf32>, i32 -> vector<4x648xf32>
    %cst_29 = arith.constant dense<0.000000e+00> : vector<8x648xf32>
    %43 = tpu.matmul %41, %42, %cst_29 {dimension_numbers = #tpu.dot_dimension_numbers<[1], [0], [0], [1], [0, 0, 1, 1], [], []>} : vector<8x4xf32>, vector<4x648xf32>, vector<8x648xf32> -> vector<8x648xf32>
    %44 = arith.addf %39, %43 : vector<8x648xf32>
    %45 = vector.broadcast %1 : vector<8x1xf32> to vector<8x648xf32>
    %46 = arith.addf %44, %45 : vector<8x648xf32>
    %cst_30 = arith.constant 0.000000e+00 : f32
    %47 = vector.broadcast %cst_30 : f32 to vector<8x648xf32>
    %48 = arith.maximumf %46, %47 : vector<8x648xf32>
    %c647_i32_31 = arith.constant 647 : i32
    %49 = tpu.dynamic_rotate %48 by %c647_i32_31 dim 1 : vector<8x648xf32>, i32 -> vector<8x648xf32>
    %50 = arith.maximumf %48, %49 : vector<8x648xf32>
    %c630_i32_32 = arith.constant 630 : i32
    %51 = tpu.dynamic_rotate %50 by %c630_i32_32 dim 1 : vector<8x648xf32>, i32 -> vector<8x648xf32>
    %52 = arith.maximumf %50, %51 : vector<8x648xf32>
    %c0_33 = arith.constant 0 : index
    %c0_34 = arith.constant 0 : index
    %53 = vector.load %arg3[%c0_33, %c0_34] : memref<648x200xf32, #tpu.memory_space<vmem>>, vector<648x200xf32>
    %cst_35 = arith.constant dense<0.000000e+00> : vector<8x200xf32>
    %54 = tpu.matmul %52, %53, %cst_35 {dimension_numbers = #tpu.dot_dimension_numbers<[1], [0], [0], [1], [0, 0, 1, 1], [], []>} : vector<8x648xf32>, vector<648x200xf32>, vector<8x200xf32> -> vector<8x200xf32>
    %c0_36 = arith.constant 0 : index
    %c0_37 = arith.constant 0 : index
    %55 = vector.load %arg4[%c0_36, %c0_37] : memref<1x200xf32, #tpu.memory_space<vmem>>, vector<1x200xf32>
    %cst_38 = arith.constant dense<0.000000e+00> : vector<8xf32>
    %56 = vector.multi_reduction <add>, %54, %cst_38 [1] : vector<8x200xf32> to vector<8xf32>
    %57 = vector.shape_cast %56 : vector<8xf32> to vector<8x1xf32>
    %cst_39 = arith.constant 7.812500e-03 : f32
    %58 = vector.broadcast %cst_39 : f32 to vector<8x1xf32>
    %59 = arith.mulf %57, %58 : vector<8x1xf32>
    %60 = arith.mulf %54, %54 : vector<8x200xf32>
    %cst_40 = arith.constant dense<0.000000e+00> : vector<8xf32>
    %61 = vector.multi_reduction <add>, %60, %cst_40 [1] : vector<8x200xf32> to vector<8xf32>
    %62 = vector.shape_cast %61 : vector<8xf32> to vector<8x1xf32>
    %cst_41 = arith.constant 7.812500e-03 : f32
    %63 = vector.broadcast %cst_41 : f32 to vector<8x1xf32>
    %64 = arith.mulf %62, %63 : vector<8x1xf32>
    %65 = arith.mulf %59, %59 : vector<8x1xf32>
    %66 = arith.subf %64, %65 : vector<8x1xf32>
    %67 = vector.broadcast %59 : vector<8x1xf32> to vector<8x200xf32>
    %68 = arith.subf %54, %67 : vector<8x200xf32>
    %cst_42 = arith.constant 9.99999974E-6 : f32
    %69 = vector.broadcast %cst_42 : f32 to vector<8x1xf32>
    %70 = arith.addf %66, %69 : vector<8x1xf32>
    %71 = math.rsqrt %70 : vector<8x1xf32>
    %72 = vector.broadcast %71 : vector<8x1xf32> to vector<8x200xf32>
    %73 = arith.mulf %68, %72 : vector<8x200xf32>
    %74 = vector.broadcast %55 : vector<1x200xf32> to vector<8x200xf32>
    %75 = arith.mulf %73, %74 : vector<8x200xf32>
    %c0_43 = arith.constant 0 : index
    %c0_44 = arith.constant 0 : index
    %c0_45 = arith.constant 0 : index
    %76 = vector.load %arg6[%c0_43, %c0_44, %c0_45] : memref<5x8x1xf32, #tpu.memory_space<vmem>>, vector<1x8x1xf32>
    %77 = vector.shape_cast %76 : vector<1x8x1xf32> to vector<8x1xf32>
    %c0_46 = arith.constant 0 : index
    %c0_47 = arith.constant 0 : index
    %c0_48 = arith.constant 0 : index
    %c0_49 = arith.constant 0 : index
    %78 = vector.load %arg5[%c0_46, %c0_47, %c0_48, %c0_49] : memref<5x9x8x8xf32, #tpu.memory_space<vmem>>, vector<1x1x8x8xf32>
    %79 = vector.shape_cast %78 : vector<1x1x8x8xf32> to vector<8x8xf32>
    %cst_50 = arith.constant dense<0.000000e+00> : vector<8x200xf32>
    %80 = tpu.matmul %79, %75, %cst_50 {dimension_numbers = #tpu.dot_dimension_numbers<[1], [0], [0], [1], [0, 0, 1, 1], [], []>} : vector<8x8xf32>, vector<8x200xf32>, vector<8x200xf32> -> vector<8x200xf32>
    %c0_51 = arith.constant 0 : index
    %c1_52 = arith.constant 1 : index
    %c0_53 = arith.constant 0 : index
    %c0_54 = arith.constant 0 : index
    %81 = vector.load %arg5[%c0_51, %c1_52, %c0_53, %c0_54] : memref<5x9x8x8xf32, #tpu.memory_space<vmem>>, vector<1x1x8x8xf32>
    %82 = vector.shape_cast %81 : vector<1x1x8x8xf32> to vector<8x8xf32>
    %c199_i32 = arith.constant 199 : i32
    %83 = tpu.dynamic_rotate %75 by %c199_i32 dim 1 : vector<8x200xf32>, i32 -> vector<8x200xf32>
    %cst_55 = arith.constant dense<0.000000e+00> : vector<8x200xf32>
    %84 = tpu.matmul %82, %83, %cst_55 {dimension_numbers = #tpu.dot_dimension_numbers<[1], [0], [0], [1], [0, 0, 1, 1], [], []>} : vector<8x8xf32>, vector<8x200xf32>, vector<8x200xf32> -> vector<8x200xf32>
    %85 = arith.addf %80, %84 : vector<8x200xf32>
    %c0_56 = arith.constant 0 : index
    %c2_57 = arith.constant 2 : index
    %c0_58 = arith.constant 0 : index
    %c0_59 = arith.constant 0 : index
    %86 = vector.load %arg5[%c0_56, %c2_57, %c0_58, %c0_59] : memref<5x9x8x8xf32, #tpu.memory_space<vmem>>, vector<1x1x8x8xf32>
    %87 = vector.shape_cast %86 : vector<1x1x8x8xf32> to vector<8x8xf32>
    %c198_i32 = arith.constant 198 : i32
    %88 = tpu.dynamic_rotate %75 by %c198_i32 dim 1 : vector<8x200xf32>, i32 -> vector<8x200xf32>
    %cst_60 = arith.constant dense<0.000000e+00> : vector<8x200xf32>
    %89 = tpu.matmul %87, %88, %cst_60 {dimension_numbers = #tpu.dot_dimension_numbers<[1], [0], [0], [1], [0, 0, 1, 1], [], []>} : vector<8x8xf32>, vector<8x200xf32>, vector<8x200xf32> -> vector<8x200xf32>
    %90 = arith.addf %85, %89 : vector<8x200xf32>
    %c0_61 = arith.constant 0 : index
    %c3_62 = arith.constant 3 : index
    %c0_63 = arith.constant 0 : index
    %c0_64 = arith.constant 0 : index
    %91 = vector.load %arg5[%c0_61, %c3_62, %c0_63, %c0_64] : memref<5x9x8x8xf32, #tpu.memory_space<vmem>>, vector<1x1x8x8xf32>
    %92 = vector.shape_cast %91 : vector<1x1x8x8xf32> to vector<8x8xf32>
    %c190_i32 = arith.constant 190 : i32
    %93 = tpu.dynamic_rotate %75 by %c190_i32 dim 1 : vector<8x200xf32>, i32 -> vector<8x200xf32>
    %cst_65 = arith.constant dense<0.000000e+00> : vector<8x200xf32>
    %94 = tpu.matmul %92, %93, %cst_65 {dimension_numbers = #tpu.dot_dimension_numbers<[1], [0], [0], [1], [0, 0, 1, 1], [], []>} : vector<8x8xf32>, vector<8x200xf32>, vector<8x200xf32> -> vector<8x200xf32>
    %95 = arith.addf %90, %94 : vector<8x200xf32>
    %c0_66 = arith.constant 0 : index
    %c4_67 = arith.constant 4 : index
    %c0_68 = arith.constant 0 : index
    %c0_69 = arith.constant 0 : index
    %96 = vector.load %arg5[%c0_66, %c4_67, %c0_68, %c0_69] : memref<5x9x8x8xf32, #tpu.memory_space<vmem>>, vector<1x1x8x8xf32>
    %97 = vector.shape_cast %96 : vector<1x1x8x8xf32> to vector<8x8xf32>
    %c189_i32 = arith.constant 189 : i32
    %98 = tpu.dynamic_rotate %75 by %c189_i32 dim 1 : vector<8x200xf32>, i32 -> vector<8x200xf32>
    %cst_70 = arith.constant dense<0.000000e+00> : vector<8x200xf32>
    %99 = tpu.matmul %97, %98, %cst_70 {dimension_numbers = #tpu.dot_dimension_numbers<[1], [0], [0], [1], [0, 0, 1, 1], [], []>} : vector<8x8xf32>, vector<8x200xf32>, vector<8x200xf32> -> vector<8x200xf32>
    %100 = arith.addf %95, %99 : vector<8x200xf32>
    %c0_71 = arith.constant 0 : index
    %c5_72 = arith.constant 5 : index
    %c0_73 = arith.constant 0 : index
    %c0_74 = arith.constant 0 : index
    %101 = vector.load %arg5[%c0_71, %c5_72, %c0_73, %c0_74] : memref<5x9x8x8xf32, #tpu.memory_space<vmem>>, vector<1x1x8x8xf32>
    %102 = vector.shape_cast %101 : vector<1x1x8x8xf32> to vector<8x8xf32>
    %c188_i32 = arith.constant 188 : i32
    %103 = tpu.dynamic_rotate %75 by %c188_i32 dim 1 : vector<8x200xf32>, i32 -> vector<8x200xf32>
    %cst_75 = arith.constant dense<0.000000e+00> : vector<8x200xf32>
    %104 = tpu.matmul %102, %103, %cst_75 {dimension_numbers = #tpu.dot_dimension_numbers<[1], [0], [0], [1], [0, 0, 1, 1], [], []>} : vector<8x8xf32>, vector<8x200xf32>, vector<8x200xf32> -> vector<8x200xf32>
    %105 = arith.addf %100, %104 : vector<8x200xf32>
    %c0_76 = arith.constant 0 : index
    %c6_77 = arith.constant 6 : index
    %c0_78 = arith.constant 0 : index
    %c0_79 = arith.constant 0 : index
    %106 = vector.load %arg5[%c0_76, %c6_77, %c0_78, %c0_79] : memref<5x9x8x8xf32, #tpu.memory_space<vmem>>, vector<1x1x8x8xf32>
    %107 = vector.shape_cast %106 : vector<1x1x8x8xf32> to vector<8x8xf32>
    %c180_i32 = arith.constant 180 : i32
    %108 = tpu.dynamic_rotate %75 by %c180_i32 dim 1 : vector<8x200xf32>, i32 -> vector<8x200xf32>
    %cst_80 = arith.constant dense<0.000000e+00> : vector<8x200xf32>
    %109 = tpu.matmul %107, %108, %cst_80 {dimension_numbers = #tpu.dot_dimension_numbers<[1], [0], [0], [1], [0, 0, 1, 1], [], []>} : vector<8x8xf32>, vector<8x200xf32>, vector<8x200xf32> -> vector<8x200xf32>
    %110 = arith.addf %105, %109 : vector<8x200xf32>
    %c0_81 = arith.constant 0 : index
    %c7_82 = arith.constant 7 : index
    %c0_83 = arith.constant 0 : index
    %c0_84 = arith.constant 0 : index
    %111 = vector.load %arg5[%c0_81, %c7_82, %c0_83, %c0_84] : memref<5x9x8x8xf32, #tpu.memory_space<vmem>>, vector<1x1x8x8xf32>
    %112 = vector.shape_cast %111 : vector<1x1x8x8xf32> to vector<8x8xf32>
    %c179_i32 = arith.constant 179 : i32
    %113 = tpu.dynamic_rotate %75 by %c179_i32 dim 1 : vector<8x200xf32>, i32 -> vector<8x200xf32>
    %cst_85 = arith.constant dense<0.000000e+00> : vector<8x200xf32>
    %114 = tpu.matmul %112, %113, %cst_85 {dimension_numbers = #tpu.dot_dimension_numbers<[1], [0], [0], [1], [0, 0, 1, 1], [], []>} : vector<8x8xf32>, vector<8x200xf32>, vector<8x200xf32> -> vector<8x200xf32>
    %115 = arith.addf %110, %114 : vector<8x200xf32>
    %c0_86 = arith.constant 0 : index
    %c8_87 = arith.constant 8 : index
    %c0_88 = arith.constant 0 : index
    %c0_89 = arith.constant 0 : index
    %116 = vector.load %arg5[%c0_86, %c8_87, %c0_88, %c0_89] : memref<5x9x8x8xf32, #tpu.memory_space<vmem>>, vector<1x1x8x8xf32>
    %117 = vector.shape_cast %116 : vector<1x1x8x8xf32> to vector<8x8xf32>
    %c178_i32 = arith.constant 178 : i32
    %118 = tpu.dynamic_rotate %75 by %c178_i32 dim 1 : vector<8x200xf32>, i32 -> vector<8x200xf32>
    %cst_90 = arith.constant dense<0.000000e+00> : vector<8x200xf32>
    %119 = tpu.matmul %117, %118, %cst_90 {dimension_numbers = #tpu.dot_dimension_numbers<[1], [0], [0], [1], [0, 0, 1, 1], [], []>} : vector<8x8xf32>, vector<8x200xf32>, vector<8x200xf32> -> vector<8x200xf32>
    %120 = arith.addf %115, %119 : vector<8x200xf32>
    %121 = vector.broadcast %77 : vector<8x1xf32> to vector<8x200xf32>
    %122 = arith.addf %120, %121 : vector<8x200xf32>
    %cst_91 = arith.constant 0.000000e+00 : f32
    %123 = vector.broadcast %cst_91 : f32 to vector<8x200xf32>
    %124 = arith.maximumf %122, %123 : vector<8x200xf32>
    %c199_i32_92 = arith.constant 199 : i32
    %125 = tpu.dynamic_rotate %124 by %c199_i32_92 dim 1 : vector<8x200xf32>, i32 -> vector<8x200xf32>
    %126 = arith.maximumf %124, %125 : vector<8x200xf32>
    %c190_i32_93 = arith.constant 190 : i32
    %127 = tpu.dynamic_rotate %126 by %c190_i32_93 dim 1 : vector<8x200xf32>, i32 -> vector<8x200xf32>
    %128 = arith.maximumf %126, %127 : vector<8x200xf32>
    %c0_94 = arith.constant 0 : index
    %c0_95 = arith.constant 0 : index
    %129 = vector.load %arg7[%c0_94, %c0_95] : memref<200x72xf32, #tpu.memory_space<vmem>>, vector<200x72xf32>
    %cst_96 = arith.constant dense<0.000000e+00> : vector<8x72xf32>
    %130 = tpu.matmul %128, %129, %cst_96 {dimension_numbers = #tpu.dot_dimension_numbers<[1], [0], [0], [1], [0, 0, 1, 1], [], []>} : vector<8x200xf32>, vector<200x72xf32>, vector<8x72xf32> -> vector<8x72xf32>
    %c0_97 = arith.constant 0 : index
    %c0_98 = arith.constant 0 : index
    %131 = vector.load %arg8[%c0_97, %c0_98] : memref<1x72xf32, #tpu.memory_space<vmem>>, vector<1x72xf32>
    %cst_99 = arith.constant dense<0.000000e+00> : vector<8xf32>
    %132 = vector.multi_reduction <add>, %130, %cst_99 [1] : vector<8x72xf32> to vector<8xf32>
    %133 = vector.shape_cast %132 : vector<8xf32> to vector<8x1xf32>
    %cst_100 = arith.constant 3.125000e-02 : f32
    %134 = vector.broadcast %cst_100 : f32 to vector<8x1xf32>
    %135 = arith.mulf %133, %134 : vector<8x1xf32>
    %136 = arith.mulf %130, %130 : vector<8x72xf32>
    %cst_101 = arith.constant dense<0.000000e+00> : vector<8xf32>
    %137 = vector.multi_reduction <add>, %136, %cst_101 [1] : vector<8x72xf32> to vector<8xf32>
    %138 = vector.shape_cast %137 : vector<8xf32> to vector<8x1xf32>
    %cst_102 = arith.constant 3.125000e-02 : f32
    %139 = vector.broadcast %cst_102 : f32 to vector<8x1xf32>
    %140 = arith.mulf %138, %139 : vector<8x1xf32>
    %141 = arith.mulf %135, %135 : vector<8x1xf32>
    %142 = arith.subf %140, %141 : vector<8x1xf32>
    %143 = vector.broadcast %135 : vector<8x1xf32> to vector<8x72xf32>
    %144 = arith.subf %130, %143 : vector<8x72xf32>
    %cst_103 = arith.constant 9.99999974E-6 : f32
    %145 = vector.broadcast %cst_103 : f32 to vector<8x1xf32>
    %146 = arith.addf %142, %145 : vector<8x1xf32>
    %147 = math.rsqrt %146 : vector<8x1xf32>
    %148 = vector.broadcast %147 : vector<8x1xf32> to vector<8x72xf32>
    %149 = arith.mulf %144, %148 : vector<8x72xf32>
    %150 = vector.broadcast %131 : vector<1x72xf32> to vector<8x72xf32>
    %151 = arith.mulf %149, %150 : vector<8x72xf32>
    %c1_104 = arith.constant 1 : index
    %c0_105 = arith.constant 0 : index
    %c0_106 = arith.constant 0 : index
    %152 = vector.load %arg6[%c1_104, %c0_105, %c0_106] : memref<5x8x1xf32, #tpu.memory_space<vmem>>, vector<1x8x1xf32>
    %153 = vector.shape_cast %152 : vector<1x8x1xf32> to vector<8x1xf32>
    %c1_107 = arith.constant 1 : index
    %c0_108 = arith.constant 0 : index
    %c0_109 = arith.constant 0 : index
    %c0_110 = arith.constant 0 : index
    %154 = vector.load %arg5[%c1_107, %c0_108, %c0_109, %c0_110] : memref<5x9x8x8xf32, #tpu.memory_space<vmem>>, vector<1x1x8x8xf32>
    %155 = vector.shape_cast %154 : vector<1x1x8x8xf32> to vector<8x8xf32>
    %cst_111 = arith.constant dense<0.000000e+00> : vector<8x72xf32>
    %156 = tpu.matmul %155, %151, %cst_111 {dimension_numbers = #tpu.dot_dimension_numbers<[1], [0], [0], [1], [0, 0, 1, 1], [], []>} : vector<8x8xf32>, vector<8x72xf32>, vector<8x72xf32> -> vector<8x72xf32>
    %c1_112 = arith.constant 1 : index
    %c1_113 = arith.constant 1 : index
    %c0_114 = arith.constant 0 : index
    %c0_115 = arith.constant 0 : index
    %157 = vector.load %arg5[%c1_112, %c1_113, %c0_114, %c0_115] : memref<5x9x8x8xf32, #tpu.memory_space<vmem>>, vector<1x1x8x8xf32>
    %158 = vector.shape_cast %157 : vector<1x1x8x8xf32> to vector<8x8xf32>
    %c71_i32 = arith.constant 71 : i32
    %159 = tpu.dynamic_rotate %151 by %c71_i32 dim 1 : vector<8x72xf32>, i32 -> vector<8x72xf32>
    %cst_116 = arith.constant dense<0.000000e+00> : vector<8x72xf32>
    %160 = tpu.matmul %158, %159, %cst_116 {dimension_numbers = #tpu.dot_dimension_numbers<[1], [0], [0], [1], [0, 0, 1, 1], [], []>} : vector<8x8xf32>, vector<8x72xf32>, vector<8x72xf32> -> vector<8x72xf32>
    %161 = arith.addf %156, %160 : vector<8x72xf32>
    %c1_117 = arith.constant 1 : index
    %c2_118 = arith.constant 2 : index
    %c0_119 = arith.constant 0 : index
    %c0_120 = arith.constant 0 : index
    %162 = vector.load %arg5[%c1_117, %c2_118, %c0_119, %c0_120] : memref<5x9x8x8xf32, #tpu.memory_space<vmem>>, vector<1x1x8x8xf32>
    %163 = vector.shape_cast %162 : vector<1x1x8x8xf32> to vector<8x8xf32>
    %c70_i32 = arith.constant 70 : i32
    %164 = tpu.dynamic_rotate %151 by %c70_i32 dim 1 : vector<8x72xf32>, i32 -> vector<8x72xf32>
    %cst_121 = arith.constant dense<0.000000e+00> : vector<8x72xf32>
    %165 = tpu.matmul %163, %164, %cst_121 {dimension_numbers = #tpu.dot_dimension_numbers<[1], [0], [0], [1], [0, 0, 1, 1], [], []>} : vector<8x8xf32>, vector<8x72xf32>, vector<8x72xf32> -> vector<8x72xf32>
    %166 = arith.addf %161, %165 : vector<8x72xf32>
    %c1_122 = arith.constant 1 : index
    %c3_123 = arith.constant 3 : index
    %c0_124 = arith.constant 0 : index
    %c0_125 = arith.constant 0 : index
    %167 = vector.load %arg5[%c1_122, %c3_123, %c0_124, %c0_125] : memref<5x9x8x8xf32, #tpu.memory_space<vmem>>, vector<1x1x8x8xf32>
    %168 = vector.shape_cast %167 : vector<1x1x8x8xf32> to vector<8x8xf32>
    %c66_i32 = arith.constant 66 : i32
    %169 = tpu.dynamic_rotate %151 by %c66_i32 dim 1 : vector<8x72xf32>, i32 -> vector<8x72xf32>
    %cst_126 = arith.constant dense<0.000000e+00> : vector<8x72xf32>
    %170 = tpu.matmul %168, %169, %cst_126 {dimension_numbers = #tpu.dot_dimension_numbers<[1], [0], [0], [1], [0, 0, 1, 1], [], []>} : vector<8x8xf32>, vector<8x72xf32>, vector<8x72xf32> -> vector<8x72xf32>
    %171 = arith.addf %166, %170 : vector<8x72xf32>
    %c1_127 = arith.constant 1 : index
    %c4_128 = arith.constant 4 : index
    %c0_129 = arith.constant 0 : index
    %c0_130 = arith.constant 0 : index
    %172 = vector.load %arg5[%c1_127, %c4_128, %c0_129, %c0_130] : memref<5x9x8x8xf32, #tpu.memory_space<vmem>>, vector<1x1x8x8xf32>
    %173 = vector.shape_cast %172 : vector<1x1x8x8xf32> to vector<8x8xf32>
    %c65_i32 = arith.constant 65 : i32
    %174 = tpu.dynamic_rotate %151 by %c65_i32 dim 1 : vector<8x72xf32>, i32 -> vector<8x72xf32>
    %cst_131 = arith.constant dense<0.000000e+00> : vector<8x72xf32>
    %175 = tpu.matmul %173, %174, %cst_131 {dimension_numbers = #tpu.dot_dimension_numbers<[1], [0], [0], [1], [0, 0, 1, 1], [], []>} : vector<8x8xf32>, vector<8x72xf32>, vector<8x72xf32> -> vector<8x72xf32>
    %176 = arith.addf %171, %175 : vector<8x72xf32>
    %c1_132 = arith.constant 1 : index
    %c5_133 = arith.constant 5 : index
    %c0_134 = arith.constant 0 : index
    %c0_135 = arith.constant 0 : index
    %177 = vector.load %arg5[%c1_132, %c5_133, %c0_134, %c0_135] : memref<5x9x8x8xf32, #tpu.memory_space<vmem>>, vector<1x1x8x8xf32>
    %178 = vector.shape_cast %177 : vector<1x1x8x8xf32> to vector<8x8xf32>
    %c64_i32 = arith.constant 64 : i32
    %179 = tpu.dynamic_rotate %151 by %c64_i32 dim 1 : vector<8x72xf32>, i32 -> vector<8x72xf32>
    %cst_136 = arith.constant dense<0.000000e+00> : vector<8x72xf32>
    %180 = tpu.matmul %178, %179, %cst_136 {dimension_numbers = #tpu.dot_dimension_numbers<[1], [0], [0], [1], [0, 0, 1, 1], [], []>} : vector<8x8xf32>, vector<8x72xf32>, vector<8x72xf32> -> vector<8x72xf32>
    %181 = arith.addf %176, %180 : vector<8x72xf32>
    %c1_137 = arith.constant 1 : index
    %c6_138 = arith.constant 6 : index
    %c0_139 = arith.constant 0 : index
    %c0_140 = arith.constant 0 : index
    %182 = vector.load %arg5[%c1_137, %c6_138, %c0_139, %c0_140] : memref<5x9x8x8xf32, #tpu.memory_space<vmem>>, vector<1x1x8x8xf32>
    %183 = vector.shape_cast %182 : vector<1x1x8x8xf32> to vector<8x8xf32>
    %c60_i32 = arith.constant 60 : i32
    %184 = tpu.dynamic_rotate %151 by %c60_i32 dim 1 : vector<8x72xf32>, i32 -> vector<8x72xf32>
    %cst_141 = arith.constant dense<0.000000e+00> : vector<8x72xf32>
    %185 = tpu.matmul %183, %184, %cst_141 {dimension_numbers = #tpu.dot_dimension_numbers<[1], [0], [0], [1], [0, 0, 1, 1], [], []>} : vector<8x8xf32>, vector<8x72xf32>, vector<8x72xf32> -> vector<8x72xf32>
    %186 = arith.addf %181, %185 : vector<8x72xf32>
    %c1_142 = arith.constant 1 : index
    %c7_143 = arith.constant 7 : index
    %c0_144 = arith.constant 0 : index
    %c0_145 = arith.constant 0 : index
    %187 = vector.load %arg5[%c1_142, %c7_143, %c0_144, %c0_145] : memref<5x9x8x8xf32, #tpu.memory_space<vmem>>, vector<1x1x8x8xf32>
    %188 = vector.shape_cast %187 : vector<1x1x8x8xf32> to vector<8x8xf32>
    %c59_i32 = arith.constant 59 : i32
    %189 = tpu.dynamic_rotate %151 by %c59_i32 dim 1 : vector<8x72xf32>, i32 -> vector<8x72xf32>
    %cst_146 = arith.constant dense<0.000000e+00> : vector<8x72xf32>
    %190 = tpu.matmul %188, %189, %cst_146 {dimension_numbers = #tpu.dot_dimension_numbers<[1], [0], [0], [1], [0, 0, 1, 1], [], []>} : vector<8x8xf32>, vector<8x72xf32>, vector<8x72xf32> -> vector<8x72xf32>
    %191 = arith.addf %186, %190 : vector<8x72xf32>
    %c1_147 = arith.constant 1 : index
    %c8_148 = arith.constant 8 : index
    %c0_149 = arith.constant 0 : index
    %c0_150 = arith.constant 0 : index
    %192 = vector.load %arg5[%c1_147, %c8_148, %c0_149, %c0_150] : memref<5x9x8x8xf32, #tpu.memory_space<vmem>>, vector<1x1x8x8xf32>
    %193 = vector.shape_cast %192 : vector<1x1x8x8xf32> to vector<8x8xf32>
    %c58_i32 = arith.constant 58 : i32
    %194 = tpu.dynamic_rotate %151 by %c58_i32 dim 1 : vector<8x72xf32>, i32 -> vector<8x72xf32>
    %cst_151 = arith.constant dense<0.000000e+00> : vector<8x72xf32>
    %195 = tpu.matmul %193, %194, %cst_151 {dimension_numbers = #tpu.dot_dimension_numbers<[1], [0], [0], [1], [0, 0, 1, 1], [], []>} : vector<8x8xf32>, vector<8x72xf32>, vector<8x72xf32> -> vector<8x72xf32>
    %196 = arith.addf %191, %195 : vector<8x72xf32>
    %197 = vector.broadcast %153 : vector<8x1xf32> to vector<8x72xf32>
    %198 = arith.addf %196, %197 : vector<8x72xf32>
    %cst_152 = arith.constant 0.000000e+00 : f32
    %199 = vector.broadcast %cst_152 : f32 to vector<8x72xf32>
    %200 = arith.maximumf %198, %199 : vector<8x72xf32>
    %c0_153 = arith.constant 0 : index
    %c0_154 = arith.constant 0 : index
    %201 = vector.load %arg9[%c0_153, %c0_154] : memref<72x72xf32, #tpu.memory_space<vmem>>, vector<72x72xf32>
    %cst_155 = arith.constant dense<0.000000e+00> : vector<8x72xf32>
    %202 = tpu.matmul %200, %201, %cst_155 {dimension_numbers = #tpu.dot_dimension_numbers<[1], [0], [0], [1], [0, 0, 1, 1], [], []>} : vector<8x72xf32>, vector<72x72xf32>, vector<8x72xf32> -> vector<8x72xf32>
    %c2_156 = arith.constant 2 : index
    %c0_157 = arith.constant 0 : index
    %c0_158 = arith.constant 0 : index
    %203 = vector.load %arg6[%c2_156, %c0_157, %c0_158] : memref<5x8x1xf32, #tpu.memory_space<vmem>>, vector<1x8x1xf32>
    %204 = vector.shape_cast %203 : vector<1x8x1xf32> to vector<8x1xf32>
    %c2_159 = arith.constant 2 : index
    %c0_160 = arith.constant 0 : index
    %c0_161 = arith.constant 0 : index
    %c0_162 = arith.constant 0 : index
    %205 = vector.load %arg5[%c2_159, %c0_160, %c0_161, %c0_162] : memref<5x9x8x8xf32, #tpu.memory_space<vmem>>, vector<1x1x8x8xf32>
    %206 = vector.shape_cast %205 : vector<1x1x8x8xf32> to vector<8x8xf32>
    %cst_163 = arith.constant dense<0.000000e+00> : vector<8x72xf32>
    %207 = tpu.matmul %206, %202, %cst_163 {dimension_numbers = #tpu.dot_dimension_numbers<[1], [0], [0], [1], [0, 0, 1, 1], [], []>} : vector<8x8xf32>, vector<8x72xf32>, vector<8x72xf32> -> vector<8x72xf32>
    %c2_164 = arith.constant 2 : index
    %c1_165 = arith.constant 1 : index
    %c0_166 = arith.constant 0 : index
    %c0_167 = arith.constant 0 : index
    %208 = vector.load %arg5[%c2_164, %c1_165, %c0_166, %c0_167] : memref<5x9x8x8xf32, #tpu.memory_space<vmem>>, vector<1x1x8x8xf32>
    %209 = vector.shape_cast %208 : vector<1x1x8x8xf32> to vector<8x8xf32>
    %c71_i32_168 = arith.constant 71 : i32
    %210 = tpu.dynamic_rotate %202 by %c71_i32_168 dim 1 : vector<8x72xf32>, i32 -> vector<8x72xf32>
    %cst_169 = arith.constant dense<0.000000e+00> : vector<8x72xf32>
    %211 = tpu.matmul %209, %210, %cst_169 {dimension_numbers = #tpu.dot_dimension_numbers<[1], [0], [0], [1], [0, 0, 1, 1], [], []>} : vector<8x8xf32>, vector<8x72xf32>, vector<8x72xf32> -> vector<8x72xf32>
    %212 = arith.addf %207, %211 : vector<8x72xf32>
    %c2_170 = arith.constant 2 : index
    %c2_171 = arith.constant 2 : index
    %c0_172 = arith.constant 0 : index
    %c0_173 = arith.constant 0 : index
    %213 = vector.load %arg5[%c2_170, %c2_171, %c0_172, %c0_173] : memref<5x9x8x8xf32, #tpu.memory_space<vmem>>, vector<1x1x8x8xf32>
    %214 = vector.shape_cast %213 : vector<1x1x8x8xf32> to vector<8x8xf32>
    %c70_i32_174 = arith.constant 70 : i32
    %215 = tpu.dynamic_rotate %202 by %c70_i32_174 dim 1 : vector<8x72xf32>, i32 -> vector<8x72xf32>
    %cst_175 = arith.constant dense<0.000000e+00> : vector<8x72xf32>
    %216 = tpu.matmul %214, %215, %cst_175 {dimension_numbers = #tpu.dot_dimension_numbers<[1], [0], [0], [1], [0, 0, 1, 1], [], []>} : vector<8x8xf32>, vector<8x72xf32>, vector<8x72xf32> -> vector<8x72xf32>
    %217 = arith.addf %212, %216 : vector<8x72xf32>
    %c2_176 = arith.constant 2 : index
    %c3_177 = arith.constant 3 : index
    %c0_178 = arith.constant 0 : index
    %c0_179 = arith.constant 0 : index
    %218 = vector.load %arg5[%c2_176, %c3_177, %c0_178, %c0_179] : memref<5x9x8x8xf32, #tpu.memory_space<vmem>>, vector<1x1x8x8xf32>
    %219 = vector.shape_cast %218 : vector<1x1x8x8xf32> to vector<8x8xf32>
    %c66_i32_180 = arith.constant 66 : i32
    %220 = tpu.dynamic_rotate %202 by %c66_i32_180 dim 1 : vector<8x72xf32>, i32 -> vector<8x72xf32>
    %cst_181 = arith.constant dense<0.000000e+00> : vector<8x72xf32>
    %221 = tpu.matmul %219, %220, %cst_181 {dimension_numbers = #tpu.dot_dimension_numbers<[1], [0], [0], [1], [0, 0, 1, 1], [], []>} : vector<8x8xf32>, vector<8x72xf32>, vector<8x72xf32> -> vector<8x72xf32>
    %222 = arith.addf %217, %221 : vector<8x72xf32>
    %c2_182 = arith.constant 2 : index
    %c4_183 = arith.constant 4 : index
    %c0_184 = arith.constant 0 : index
    %c0_185 = arith.constant 0 : index
    %223 = vector.load %arg5[%c2_182, %c4_183, %c0_184, %c0_185] : memref<5x9x8x8xf32, #tpu.memory_space<vmem>>, vector<1x1x8x8xf32>
    %224 = vector.shape_cast %223 : vector<1x1x8x8xf32> to vector<8x8xf32>
    %c65_i32_186 = arith.constant 65 : i32
    %225 = tpu.dynamic_rotate %202 by %c65_i32_186 dim 1 : vector<8x72xf32>, i32 -> vector<8x72xf32>
    %cst_187 = arith.constant dense<0.000000e+00> : vector<8x72xf32>
    %226 = tpu.matmul %224, %225, %cst_187 {dimension_numbers = #tpu.dot_dimension_numbers<[1], [0], [0], [1], [0, 0, 1, 1], [], []>} : vector<8x8xf32>, vector<8x72xf32>, vector<8x72xf32> -> vector<8x72xf32>
    %227 = arith.addf %222, %226 : vector<8x72xf32>
    %c2_188 = arith.constant 2 : index
    %c5_189 = arith.constant 5 : index
    %c0_190 = arith.constant 0 : index
    %c0_191 = arith.constant 0 : index
    %228 = vector.load %arg5[%c2_188, %c5_189, %c0_190, %c0_191] : memref<5x9x8x8xf32, #tpu.memory_space<vmem>>, vector<1x1x8x8xf32>
    %229 = vector.shape_cast %228 : vector<1x1x8x8xf32> to vector<8x8xf32>
    %c64_i32_192 = arith.constant 64 : i32
    %230 = tpu.dynamic_rotate %202 by %c64_i32_192 dim 1 : vector<8x72xf32>, i32 -> vector<8x72xf32>
    %cst_193 = arith.constant dense<0.000000e+00> : vector<8x72xf32>
    %231 = tpu.matmul %229, %230, %cst_193 {dimension_numbers = #tpu.dot_dimension_numbers<[1], [0], [0], [1], [0, 0, 1, 1], [], []>} : vector<8x8xf32>, vector<8x72xf32>, vector<8x72xf32> -> vector<8x72xf32>
    %232 = arith.addf %227, %231 : vector<8x72xf32>
    %c2_194 = arith.constant 2 : index
    %c6_195 = arith.constant 6 : index
    %c0_196 = arith.constant 0 : index
    %c0_197 = arith.constant 0 : index
    %233 = vector.load %arg5[%c2_194, %c6_195, %c0_196, %c0_197] : memref<5x9x8x8xf32, #tpu.memory_space<vmem>>, vector<1x1x8x8xf32>
    %234 = vector.shape_cast %233 : vector<1x1x8x8xf32> to vector<8x8xf32>
    %c60_i32_198 = arith.constant 60 : i32
    %235 = tpu.dynamic_rotate %202 by %c60_i32_198 dim 1 : vector<8x72xf32>, i32 -> vector<8x72xf32>
    %cst_199 = arith.constant dense<0.000000e+00> : vector<8x72xf32>
    %236 = tpu.matmul %234, %235, %cst_199 {dimension_numbers = #tpu.dot_dimension_numbers<[1], [0], [0], [1], [0, 0, 1, 1], [], []>} : vector<8x8xf32>, vector<8x72xf32>, vector<8x72xf32> -> vector<8x72xf32>
    %237 = arith.addf %232, %236 : vector<8x72xf32>
    %c2_200 = arith.constant 2 : index
    %c7_201 = arith.constant 7 : index
    %c0_202 = arith.constant 0 : index
    %c0_203 = arith.constant 0 : index
    %238 = vector.load %arg5[%c2_200, %c7_201, %c0_202, %c0_203] : memref<5x9x8x8xf32, #tpu.memory_space<vmem>>, vector<1x1x8x8xf32>
    %239 = vector.shape_cast %238 : vector<1x1x8x8xf32> to vector<8x8xf32>
    %c59_i32_204 = arith.constant 59 : i32
    %240 = tpu.dynamic_rotate %202 by %c59_i32_204 dim 1 : vector<8x72xf32>, i32 -> vector<8x72xf32>
    %cst_205 = arith.constant dense<0.000000e+00> : vector<8x72xf32>
    %241 = tpu.matmul %239, %240, %cst_205 {dimension_numbers = #tpu.dot_dimension_numbers<[1], [0], [0], [1], [0, 0, 1, 1], [], []>} : vector<8x8xf32>, vector<8x72xf32>, vector<8x72xf32> -> vector<8x72xf32>
    %242 = arith.addf %237, %241 : vector<8x72xf32>
    %c2_206 = arith.constant 2 : index
    %c8_207 = arith.constant 8 : index
    %c0_208 = arith.constant 0 : index
    %c0_209 = arith.constant 0 : index
    %243 = vector.load %arg5[%c2_206, %c8_207, %c0_208, %c0_209] : memref<5x9x8x8xf32, #tpu.memory_space<vmem>>, vector<1x1x8x8xf32>
    %244 = vector.shape_cast %243 : vector<1x1x8x8xf32> to vector<8x8xf32>
    %c58_i32_210 = arith.constant 58 : i32
    %245 = tpu.dynamic_rotate %202 by %c58_i32_210 dim 1 : vector<8x72xf32>, i32 -> vector<8x72xf32>
    %cst_211 = arith.constant dense<0.000000e+00> : vector<8x72xf32>
    %246 = tpu.matmul %244, %245, %cst_211 {dimension_numbers = #tpu.dot_dimension_numbers<[1], [0], [0], [1], [0, 0, 1, 1], [], []>} : vector<8x8xf32>, vector<8x72xf32>, vector<8x72xf32> -> vector<8x72xf32>
    %247 = arith.addf %242, %246 : vector<8x72xf32>
    %248 = vector.broadcast %204 : vector<8x1xf32> to vector<8x72xf32>
    %249 = arith.addf %247, %248 : vector<8x72xf32>
    %cst_212 = arith.constant 0.000000e+00 : f32
    %250 = vector.broadcast %cst_212 : f32 to vector<8x72xf32>
    %251 = arith.maximumf %249, %250 : vector<8x72xf32>
    %c0_213 = arith.constant 0 : index
    %c0_214 = arith.constant 0 : index
    %252 = vector.load %arg9[%c0_213, %c0_214] : memref<72x72xf32, #tpu.memory_space<vmem>>, vector<72x72xf32>
    %cst_215 = arith.constant dense<0.000000e+00> : vector<8x72xf32>
    %253 = tpu.matmul %251, %252, %cst_215 {dimension_numbers = #tpu.dot_dimension_numbers<[1], [0], [0], [1], [0, 0, 1, 1], [], []>} : vector<8x72xf32>, vector<72x72xf32>, vector<8x72xf32> -> vector<8x72xf32>
    %c3_216 = arith.constant 3 : index
    %c0_217 = arith.constant 0 : index
    %c0_218 = arith.constant 0 : index
    %254 = vector.load %arg6[%c3_216, %c0_217, %c0_218] : memref<5x8x1xf32, #tpu.memory_space<vmem>>, vector<1x8x1xf32>
    %255 = vector.shape_cast %254 : vector<1x8x1xf32> to vector<8x1xf32>
    %c3_219 = arith.constant 3 : index
    %c0_220 = arith.constant 0 : index
    %c0_221 = arith.constant 0 : index
    %c0_222 = arith.constant 0 : index
    %256 = vector.load %arg5[%c3_219, %c0_220, %c0_221, %c0_222] : memref<5x9x8x8xf32, #tpu.memory_space<vmem>>, vector<1x1x8x8xf32>
    %257 = vector.shape_cast %256 : vector<1x1x8x8xf32> to vector<8x8xf32>
    %cst_223 = arith.constant dense<0.000000e+00> : vector<8x72xf32>
    %258 = tpu.matmul %257, %253, %cst_223 {dimension_numbers = #tpu.dot_dimension_numbers<[1], [0], [0], [1], [0, 0, 1, 1], [], []>} : vector<8x8xf32>, vector<8x72xf32>, vector<8x72xf32> -> vector<8x72xf32>
    %c3_224 = arith.constant 3 : index
    %c1_225 = arith.constant 1 : index
    %c0_226 = arith.constant 0 : index
    %c0_227 = arith.constant 0 : index
    %259 = vector.load %arg5[%c3_224, %c1_225, %c0_226, %c0_227] : memref<5x9x8x8xf32, #tpu.memory_space<vmem>>, vector<1x1x8x8xf32>
    %260 = vector.shape_cast %259 : vector<1x1x8x8xf32> to vector<8x8xf32>
    %c71_i32_228 = arith.constant 71 : i32
    %261 = tpu.dynamic_rotate %253 by %c71_i32_228 dim 1 : vector<8x72xf32>, i32 -> vector<8x72xf32>
    %cst_229 = arith.constant dense<0.000000e+00> : vector<8x72xf32>
    %262 = tpu.matmul %260, %261, %cst_229 {dimension_numbers = #tpu.dot_dimension_numbers<[1], [0], [0], [1], [0, 0, 1, 1], [], []>} : vector<8x8xf32>, vector<8x72xf32>, vector<8x72xf32> -> vector<8x72xf32>
    %263 = arith.addf %258, %262 : vector<8x72xf32>
    %c3_230 = arith.constant 3 : index
    %c2_231 = arith.constant 2 : index
    %c0_232 = arith.constant 0 : index
    %c0_233 = arith.constant 0 : index
    %264 = vector.load %arg5[%c3_230, %c2_231, %c0_232, %c0_233] : memref<5x9x8x8xf32, #tpu.memory_space<vmem>>, vector<1x1x8x8xf32>
    %265 = vector.shape_cast %264 : vector<1x1x8x8xf32> to vector<8x8xf32>
    %c70_i32_234 = arith.constant 70 : i32
    %266 = tpu.dynamic_rotate %253 by %c70_i32_234 dim 1 : vector<8x72xf32>, i32 -> vector<8x72xf32>
    %cst_235 = arith.constant dense<0.000000e+00> : vector<8x72xf32>
    %267 = tpu.matmul %265, %266, %cst_235 {dimension_numbers = #tpu.dot_dimension_numbers<[1], [0], [0], [1], [0, 0, 1, 1], [], []>} : vector<8x8xf32>, vector<8x72xf32>, vector<8x72xf32> -> vector<8x72xf32>
    %268 = arith.addf %263, %267 : vector<8x72xf32>
    %c3_236 = arith.constant 3 : index
    %c3_237 = arith.constant 3 : index
    %c0_238 = arith.constant 0 : index
    %c0_239 = arith.constant 0 : index
    %269 = vector.load %arg5[%c3_236, %c3_237, %c0_238, %c0_239] : memref<5x9x8x8xf32, #tpu.memory_space<vmem>>, vector<1x1x8x8xf32>
    %270 = vector.shape_cast %269 : vector<1x1x8x8xf32> to vector<8x8xf32>
    %c66_i32_240 = arith.constant 66 : i32
    %271 = tpu.dynamic_rotate %253 by %c66_i32_240 dim 1 : vector<8x72xf32>, i32 -> vector<8x72xf32>
    %cst_241 = arith.constant dense<0.000000e+00> : vector<8x72xf32>
    %272 = tpu.matmul %270, %271, %cst_241 {dimension_numbers = #tpu.dot_dimension_numbers<[1], [0], [0], [1], [0, 0, 1, 1], [], []>} : vector<8x8xf32>, vector<8x72xf32>, vector<8x72xf32> -> vector<8x72xf32>
    %273 = arith.addf %268, %272 : vector<8x72xf32>
    %c3_242 = arith.constant 3 : index
    %c4_243 = arith.constant 4 : index
    %c0_244 = arith.constant 0 : index
    %c0_245 = arith.constant 0 : index
    %274 = vector.load %arg5[%c3_242, %c4_243, %c0_244, %c0_245] : memref<5x9x8x8xf32, #tpu.memory_space<vmem>>, vector<1x1x8x8xf32>
    %275 = vector.shape_cast %274 : vector<1x1x8x8xf32> to vector<8x8xf32>
    %c65_i32_246 = arith.constant 65 : i32
    %276 = tpu.dynamic_rotate %253 by %c65_i32_246 dim 1 : vector<8x72xf32>, i32 -> vector<8x72xf32>
    %cst_247 = arith.constant dense<0.000000e+00> : vector<8x72xf32>
    %277 = tpu.matmul %275, %276, %cst_247 {dimension_numbers = #tpu.dot_dimension_numbers<[1], [0], [0], [1], [0, 0, 1, 1], [], []>} : vector<8x8xf32>, vector<8x72xf32>, vector<8x72xf32> -> vector<8x72xf32>
    %278 = arith.addf %273, %277 : vector<8x72xf32>
    %c3_248 = arith.constant 3 : index
    %c5_249 = arith.constant 5 : index
    %c0_250 = arith.constant 0 : index
    %c0_251 = arith.constant 0 : index
    %279 = vector.load %arg5[%c3_248, %c5_249, %c0_250, %c0_251] : memref<5x9x8x8xf32, #tpu.memory_space<vmem>>, vector<1x1x8x8xf32>
    %280 = vector.shape_cast %279 : vector<1x1x8x8xf32> to vector<8x8xf32>
    %c64_i32_252 = arith.constant 64 : i32
    %281 = tpu.dynamic_rotate %253 by %c64_i32_252 dim 1 : vector<8x72xf32>, i32 -> vector<8x72xf32>
    %cst_253 = arith.constant dense<0.000000e+00> : vector<8x72xf32>
    %282 = tpu.matmul %280, %281, %cst_253 {dimension_numbers = #tpu.dot_dimension_numbers<[1], [0], [0], [1], [0, 0, 1, 1], [], []>} : vector<8x8xf32>, vector<8x72xf32>, vector<8x72xf32> -> vector<8x72xf32>
    %283 = arith.addf %278, %282 : vector<8x72xf32>
    %c3_254 = arith.constant 3 : index
    %c6_255 = arith.constant 6 : index
    %c0_256 = arith.constant 0 : index
    %c0_257 = arith.constant 0 : index
    %284 = vector.load %arg5[%c3_254, %c6_255, %c0_256, %c0_257] : memref<5x9x8x8xf32, #tpu.memory_space<vmem>>, vector<1x1x8x8xf32>
    %285 = vector.shape_cast %284 : vector<1x1x8x8xf32> to vector<8x8xf32>
    %c60_i32_258 = arith.constant 60 : i32
    %286 = tpu.dynamic_rotate %253 by %c60_i32_258 dim 1 : vector<8x72xf32>, i32 -> vector<8x72xf32>
    %cst_259 = arith.constant dense<0.000000e+00> : vector<8x72xf32>
    %287 = tpu.matmul %285, %286, %cst_259 {dimension_numbers = #tpu.dot_dimension_numbers<[1], [0], [0], [1], [0, 0, 1, 1], [], []>} : vector<8x8xf32>, vector<8x72xf32>, vector<8x72xf32> -> vector<8x72xf32>
    %288 = arith.addf %283, %287 : vector<8x72xf32>
    %c3_260 = arith.constant 3 : index
    %c7_261 = arith.constant 7 : index
    %c0_262 = arith.constant 0 : index
    %c0_263 = arith.constant 0 : index
    %289 = vector.load %arg5[%c3_260, %c7_261, %c0_262, %c0_263] : memref<5x9x8x8xf32, #tpu.memory_space<vmem>>, vector<1x1x8x8xf32>
    %290 = vector.shape_cast %289 : vector<1x1x8x8xf32> to vector<8x8xf32>
    %c59_i32_264 = arith.constant 59 : i32
    %291 = tpu.dynamic_rotate %253 by %c59_i32_264 dim 1 : vector<8x72xf32>, i32 -> vector<8x72xf32>
    %cst_265 = arith.constant dense<0.000000e+00> : vector<8x72xf32>
    %292 = tpu.matmul %290, %291, %cst_265 {dimension_numbers = #tpu.dot_dimension_numbers<[1], [0], [0], [1], [0, 0, 1, 1], [], []>} : vector<8x8xf32>, vector<8x72xf32>, vector<8x72xf32> -> vector<8x72xf32>
    %293 = arith.addf %288, %292 : vector<8x72xf32>
    %c3_266 = arith.constant 3 : index
    %c8_267 = arith.constant 8 : index
    %c0_268 = arith.constant 0 : index
    %c0_269 = arith.constant 0 : index
    %294 = vector.load %arg5[%c3_266, %c8_267, %c0_268, %c0_269] : memref<5x9x8x8xf32, #tpu.memory_space<vmem>>, vector<1x1x8x8xf32>
    %295 = vector.shape_cast %294 : vector<1x1x8x8xf32> to vector<8x8xf32>
    %c58_i32_270 = arith.constant 58 : i32
    %296 = tpu.dynamic_rotate %253 by %c58_i32_270 dim 1 : vector<8x72xf32>, i32 -> vector<8x72xf32>
    %cst_271 = arith.constant dense<0.000000e+00> : vector<8x72xf32>
    %297 = tpu.matmul %295, %296, %cst_271 {dimension_numbers = #tpu.dot_dimension_numbers<[1], [0], [0], [1], [0, 0, 1, 1], [], []>} : vector<8x8xf32>, vector<8x72xf32>, vector<8x72xf32> -> vector<8x72xf32>
    %298 = arith.addf %293, %297 : vector<8x72xf32>
    %299 = vector.broadcast %255 : vector<8x1xf32> to vector<8x72xf32>
    %300 = arith.addf %298, %299 : vector<8x72xf32>
    %cst_272 = arith.constant 0.000000e+00 : f32
    %301 = vector.broadcast %cst_272 : f32 to vector<8x72xf32>
    %302 = arith.maximumf %300, %301 : vector<8x72xf32>
    %c0_273 = arith.constant 0 : index
    %c0_274 = arith.constant 0 : index
    %303 = vector.load %arg9[%c0_273, %c0_274] : memref<72x72xf32, #tpu.memory_space<vmem>>, vector<72x72xf32>
    %cst_275 = arith.constant dense<0.000000e+00> : vector<8x72xf32>
    %304 = tpu.matmul %302, %303, %cst_275 {dimension_numbers = #tpu.dot_dimension_numbers<[1], [0], [0], [1], [0, 0, 1, 1], [], []>} : vector<8x72xf32>, vector<72x72xf32>, vector<8x72xf32> -> vector<8x72xf32>
    %c4_276 = arith.constant 4 : index
    %c0_277 = arith.constant 0 : index
    %c0_278 = arith.constant 0 : index
    %305 = vector.load %arg6[%c4_276, %c0_277, %c0_278] : memref<5x8x1xf32, #tpu.memory_space<vmem>>, vector<1x8x1xf32>
    %306 = vector.shape_cast %305 : vector<1x8x1xf32> to vector<8x1xf32>
    %c4_279 = arith.constant 4 : index
    %c0_280 = arith.constant 0 : index
    %c0_281 = arith.constant 0 : index
    %c0_282 = arith.constant 0 : index
    %307 = vector.load %arg5[%c4_279, %c0_280, %c0_281, %c0_282] : memref<5x9x8x8xf32, #tpu.memory_space<vmem>>, vector<1x1x8x8xf32>
    %308 = vector.shape_cast %307 : vector<1x1x8x8xf32> to vector<8x8xf32>
    %cst_283 = arith.constant dense<0.000000e+00> : vector<8x72xf32>
    %309 = tpu.matmul %308, %304, %cst_283 {dimension_numbers = #tpu.dot_dimension_numbers<[1], [0], [0], [1], [0, 0, 1, 1], [], []>} : vector<8x8xf32>, vector<8x72xf32>, vector<8x72xf32> -> vector<8x72xf32>
    %c4_284 = arith.constant 4 : index
    %c1_285 = arith.constant 1 : index
    %c0_286 = arith.constant 0 : index
    %c0_287 = arith.constant 0 : index
    %310 = vector.load %arg5[%c4_284, %c1_285, %c0_286, %c0_287] : memref<5x9x8x8xf32, #tpu.memory_space<vmem>>, vector<1x1x8x8xf32>
    %311 = vector.shape_cast %310 : vector<1x1x8x8xf32> to vector<8x8xf32>
    %c71_i32_288 = arith.constant 71 : i32
    %312 = tpu.dynamic_rotate %304 by %c71_i32_288 dim 1 : vector<8x72xf32>, i32 -> vector<8x72xf32>
    %cst_289 = arith.constant dense<0.000000e+00> : vector<8x72xf32>
    %313 = tpu.matmul %311, %312, %cst_289 {dimension_numbers = #tpu.dot_dimension_numbers<[1], [0], [0], [1], [0, 0, 1, 1], [], []>} : vector<8x8xf32>, vector<8x72xf32>, vector<8x72xf32> -> vector<8x72xf32>
    %314 = arith.addf %309, %313 : vector<8x72xf32>
    %c4_290 = arith.constant 4 : index
    %c2_291 = arith.constant 2 : index
    %c0_292 = arith.constant 0 : index
    %c0_293 = arith.constant 0 : index
    %315 = vector.load %arg5[%c4_290, %c2_291, %c0_292, %c0_293] : memref<5x9x8x8xf32, #tpu.memory_space<vmem>>, vector<1x1x8x8xf32>
    %316 = vector.shape_cast %315 : vector<1x1x8x8xf32> to vector<8x8xf32>
    %c70_i32_294 = arith.constant 70 : i32
    %317 = tpu.dynamic_rotate %304 by %c70_i32_294 dim 1 : vector<8x72xf32>, i32 -> vector<8x72xf32>
    %cst_295 = arith.constant dense<0.000000e+00> : vector<8x72xf32>
    %318 = tpu.matmul %316, %317, %cst_295 {dimension_numbers = #tpu.dot_dimension_numbers<[1], [0], [0], [1], [0, 0, 1, 1], [], []>} : vector<8x8xf32>, vector<8x72xf32>, vector<8x72xf32> -> vector<8x72xf32>
    %319 = arith.addf %314, %318 : vector<8x72xf32>
    %c4_296 = arith.constant 4 : index
    %c3_297 = arith.constant 3 : index
    %c0_298 = arith.constant 0 : index
    %c0_299 = arith.constant 0 : index
    %320 = vector.load %arg5[%c4_296, %c3_297, %c0_298, %c0_299] : memref<5x9x8x8xf32, #tpu.memory_space<vmem>>, vector<1x1x8x8xf32>
    %321 = vector.shape_cast %320 : vector<1x1x8x8xf32> to vector<8x8xf32>
    %c66_i32_300 = arith.constant 66 : i32
    %322 = tpu.dynamic_rotate %304 by %c66_i32_300 dim 1 : vector<8x72xf32>, i32 -> vector<8x72xf32>
    %cst_301 = arith.constant dense<0.000000e+00> : vector<8x72xf32>
    %323 = tpu.matmul %321, %322, %cst_301 {dimension_numbers = #tpu.dot_dimension_numbers<[1], [0], [0], [1], [0, 0, 1, 1], [], []>} : vector<8x8xf32>, vector<8x72xf32>, vector<8x72xf32> -> vector<8x72xf32>
    %324 = arith.addf %319, %323 : vector<8x72xf32>
    %c4_302 = arith.constant 4 : index
    %c4_303 = arith.constant 4 : index
    %c0_304 = arith.constant 0 : index
    %c0_305 = arith.constant 0 : index
    %325 = vector.load %arg5[%c4_302, %c4_303, %c0_304, %c0_305] : memref<5x9x8x8xf32, #tpu.memory_space<vmem>>, vector<1x1x8x8xf32>
    %326 = vector.shape_cast %325 : vector<1x1x8x8xf32> to vector<8x8xf32>
    %c65_i32_306 = arith.constant 65 : i32
    %327 = tpu.dynamic_rotate %304 by %c65_i32_306 dim 1 : vector<8x72xf32>, i32 -> vector<8x72xf32>
    %cst_307 = arith.constant dense<0.000000e+00> : vector<8x72xf32>
    %328 = tpu.matmul %326, %327, %cst_307 {dimension_numbers = #tpu.dot_dimension_numbers<[1], [0], [0], [1], [0, 0, 1, 1], [], []>} : vector<8x8xf32>, vector<8x72xf32>, vector<8x72xf32> -> vector<8x72xf32>
    %329 = arith.addf %324, %328 : vector<8x72xf32>
    %c4_308 = arith.constant 4 : index
    %c5_309 = arith.constant 5 : index
    %c0_310 = arith.constant 0 : index
    %c0_311 = arith.constant 0 : index
    %330 = vector.load %arg5[%c4_308, %c5_309, %c0_310, %c0_311] : memref<5x9x8x8xf32, #tpu.memory_space<vmem>>, vector<1x1x8x8xf32>
    %331 = vector.shape_cast %330 : vector<1x1x8x8xf32> to vector<8x8xf32>
    %c64_i32_312 = arith.constant 64 : i32
    %332 = tpu.dynamic_rotate %304 by %c64_i32_312 dim 1 : vector<8x72xf32>, i32 -> vector<8x72xf32>
    %cst_313 = arith.constant dense<0.000000e+00> : vector<8x72xf32>
    %333 = tpu.matmul %331, %332, %cst_313 {dimension_numbers = #tpu.dot_dimension_numbers<[1], [0], [0], [1], [0, 0, 1, 1], [], []>} : vector<8x8xf32>, vector<8x72xf32>, vector<8x72xf32> -> vector<8x72xf32>
    %334 = arith.addf %329, %333 : vector<8x72xf32>
    %c4_314 = arith.constant 4 : index
    %c6_315 = arith.constant 6 : index
    %c0_316 = arith.constant 0 : index
    %c0_317 = arith.constant 0 : index
    %335 = vector.load %arg5[%c4_314, %c6_315, %c0_316, %c0_317] : memref<5x9x8x8xf32, #tpu.memory_space<vmem>>, vector<1x1x8x8xf32>
    %336 = vector.shape_cast %335 : vector<1x1x8x8xf32> to vector<8x8xf32>
    %c60_i32_318 = arith.constant 60 : i32
    %337 = tpu.dynamic_rotate %304 by %c60_i32_318 dim 1 : vector<8x72xf32>, i32 -> vector<8x72xf32>
    %cst_319 = arith.constant dense<0.000000e+00> : vector<8x72xf32>
    %338 = tpu.matmul %336, %337, %cst_319 {dimension_numbers = #tpu.dot_dimension_numbers<[1], [0], [0], [1], [0, 0, 1, 1], [], []>} : vector<8x8xf32>, vector<8x72xf32>, vector<8x72xf32> -> vector<8x72xf32>
    %339 = arith.addf %334, %338 : vector<8x72xf32>
    %c4_320 = arith.constant 4 : index
    %c7_321 = arith.constant 7 : index
    %c0_322 = arith.constant 0 : index
    %c0_323 = arith.constant 0 : index
    %340 = vector.load %arg5[%c4_320, %c7_321, %c0_322, %c0_323] : memref<5x9x8x8xf32, #tpu.memory_space<vmem>>, vector<1x1x8x8xf32>
    %341 = vector.shape_cast %340 : vector<1x1x8x8xf32> to vector<8x8xf32>
    %c59_i32_324 = arith.constant 59 : i32
    %342 = tpu.dynamic_rotate %304 by %c59_i32_324 dim 1 : vector<8x72xf32>, i32 -> vector<8x72xf32>
    %cst_325 = arith.constant dense<0.000000e+00> : vector<8x72xf32>
    %343 = tpu.matmul %341, %342, %cst_325 {dimension_numbers = #tpu.dot_dimension_numbers<[1], [0], [0], [1], [0, 0, 1, 1], [], []>} : vector<8x8xf32>, vector<8x72xf32>, vector<8x72xf32> -> vector<8x72xf32>
    %344 = arith.addf %339, %343 : vector<8x72xf32>
    %c4_326 = arith.constant 4 : index
    %c8_327 = arith.constant 8 : index
    %c0_328 = arith.constant 0 : index
    %c0_329 = arith.constant 0 : index
    %345 = vector.load %arg5[%c4_326, %c8_327, %c0_328, %c0_329] : memref<5x9x8x8xf32, #tpu.memory_space<vmem>>, vector<1x1x8x8xf32>
    %346 = vector.shape_cast %345 : vector<1x1x8x8xf32> to vector<8x8xf32>
    %c58_i32_330 = arith.constant 58 : i32
    %347 = tpu.dynamic_rotate %304 by %c58_i32_330 dim 1 : vector<8x72xf32>, i32 -> vector<8x72xf32>
    %cst_331 = arith.constant dense<0.000000e+00> : vector<8x72xf32>
    %348 = tpu.matmul %346, %347, %cst_331 {dimension_numbers = #tpu.dot_dimension_numbers<[1], [0], [0], [1], [0, 0, 1, 1], [], []>} : vector<8x8xf32>, vector<8x72xf32>, vector<8x72xf32> -> vector<8x72xf32>
    %349 = arith.addf %344, %348 : vector<8x72xf32>
    %350 = vector.broadcast %306 : vector<8x1xf32> to vector<8x72xf32>
    %351 = arith.addf %349, %350 : vector<8x72xf32>
    %cst_332 = arith.constant 0.000000e+00 : f32
    %352 = vector.broadcast %cst_332 : f32 to vector<8x72xf32>
    %353 = arith.maximumf %351, %352 : vector<8x72xf32>
    %c0_333 = arith.constant 0 : index
    %c0_334 = arith.constant 0 : index
    %c0_335 = arith.constant 0 : index
    %354 = vector.load %arg10[%c0_333, %c0_334, %c0_335] : memref<16x32x8xf32, #tpu.memory_space<vmem>>, vector<1x32x8xf32>
    %355 = vector.shape_cast %354 : vector<1x32x8xf32> to vector<32x8xf32>
    %cst_336 = arith.constant dense<0.000000e+00> : vector<32x72xf32>
    %356 = tpu.matmul %355, %353, %cst_336 {dimension_numbers = #tpu.dot_dimension_numbers<[1], [0], [0], [1], [0, 0, 1, 1], [], []>} : vector<32x8xf32>, vector<8x72xf32>, vector<32x72xf32> -> vector<32x72xf32>
    %c1_337 = arith.constant 1 : index
    %c0_338 = arith.constant 0 : index
    %c0_339 = arith.constant 0 : index
    %357 = vector.load %arg10[%c1_337, %c0_338, %c0_339] : memref<16x32x8xf32, #tpu.memory_space<vmem>>, vector<1x32x8xf32>
    %358 = vector.shape_cast %357 : vector<1x32x8xf32> to vector<32x8xf32>
    %c71_i32_340 = arith.constant 71 : i32
    %359 = tpu.dynamic_rotate %353 by %c71_i32_340 dim 1 : vector<8x72xf32>, i32 -> vector<8x72xf32>
    %cst_341 = arith.constant dense<0.000000e+00> : vector<32x72xf32>
    %360 = tpu.matmul %358, %359, %cst_341 {dimension_numbers = #tpu.dot_dimension_numbers<[1], [0], [0], [1], [0, 0, 1, 1], [], []>} : vector<32x8xf32>, vector<8x72xf32>, vector<32x72xf32> -> vector<32x72xf32>
    %361 = arith.addf %356, %360 : vector<32x72xf32>
    %c2_342 = arith.constant 2 : index
    %c0_343 = arith.constant 0 : index
    %c0_344 = arith.constant 0 : index
    %362 = vector.load %arg10[%c2_342, %c0_343, %c0_344] : memref<16x32x8xf32, #tpu.memory_space<vmem>>, vector<1x32x8xf32>
    %363 = vector.shape_cast %362 : vector<1x32x8xf32> to vector<32x8xf32>
    %c70_i32_345 = arith.constant 70 : i32
    %364 = tpu.dynamic_rotate %353 by %c70_i32_345 dim 1 : vector<8x72xf32>, i32 -> vector<8x72xf32>
    %cst_346 = arith.constant dense<0.000000e+00> : vector<32x72xf32>
    %365 = tpu.matmul %363, %364, %cst_346 {dimension_numbers = #tpu.dot_dimension_numbers<[1], [0], [0], [1], [0, 0, 1, 1], [], []>} : vector<32x8xf32>, vector<8x72xf32>, vector<32x72xf32> -> vector<32x72xf32>
    %366 = arith.addf %361, %365 : vector<32x72xf32>
    %c3_347 = arith.constant 3 : index
    %c0_348 = arith.constant 0 : index
    %c0_349 = arith.constant 0 : index
    %367 = vector.load %arg10[%c3_347, %c0_348, %c0_349] : memref<16x32x8xf32, #tpu.memory_space<vmem>>, vector<1x32x8xf32>
    %368 = vector.shape_cast %367 : vector<1x32x8xf32> to vector<32x8xf32>
    %c69_i32 = arith.constant 69 : i32
    %369 = tpu.dynamic_rotate %353 by %c69_i32 dim 1 : vector<8x72xf32>, i32 -> vector<8x72xf32>
    %cst_350 = arith.constant dense<0.000000e+00> : vector<32x72xf32>
    %370 = tpu.matmul %368, %369, %cst_350 {dimension_numbers = #tpu.dot_dimension_numbers<[1], [0], [0], [1], [0, 0, 1, 1], [], []>} : vector<32x8xf32>, vector<8x72xf32>, vector<32x72xf32> -> vector<32x72xf32>
    %371 = arith.addf %366, %370 : vector<32x72xf32>
    %c4_351 = arith.constant 4 : index
    %c0_352 = arith.constant 0 : index
    %c0_353 = arith.constant 0 : index
    %372 = vector.load %arg10[%c4_351, %c0_352, %c0_353] : memref<16x32x8xf32, #tpu.memory_space<vmem>>, vector<1x32x8xf32>
    %373 = vector.shape_cast %372 : vector<1x32x8xf32> to vector<32x8xf32>
    %c66_i32_354 = arith.constant 66 : i32
    %374 = tpu.dynamic_rotate %353 by %c66_i32_354 dim 1 : vector<8x72xf32>, i32 -> vector<8x72xf32>
    %cst_355 = arith.constant dense<0.000000e+00> : vector<32x72xf32>
    %375 = tpu.matmul %373, %374, %cst_355 {dimension_numbers = #tpu.dot_dimension_numbers<[1], [0], [0], [1], [0, 0, 1, 1], [], []>} : vector<32x8xf32>, vector<8x72xf32>, vector<32x72xf32> -> vector<32x72xf32>
    %376 = arith.addf %371, %375 : vector<32x72xf32>
    %c5_356 = arith.constant 5 : index
    %c0_357 = arith.constant 0 : index
    %c0_358 = arith.constant 0 : index
    %377 = vector.load %arg10[%c5_356, %c0_357, %c0_358] : memref<16x32x8xf32, #tpu.memory_space<vmem>>, vector<1x32x8xf32>
    %378 = vector.shape_cast %377 : vector<1x32x8xf32> to vector<32x8xf32>
    %c65_i32_359 = arith.constant 65 : i32
    %379 = tpu.dynamic_rotate %353 by %c65_i32_359 dim 1 : vector<8x72xf32>, i32 -> vector<8x72xf32>
    %cst_360 = arith.constant dense<0.000000e+00> : vector<32x72xf32>
    %380 = tpu.matmul %378, %379, %cst_360 {dimension_numbers = #tpu.dot_dimension_numbers<[1], [0], [0], [1], [0, 0, 1, 1], [], []>} : vector<32x8xf32>, vector<8x72xf32>, vector<32x72xf32> -> vector<32x72xf32>
    %381 = arith.addf %376, %380 : vector<32x72xf32>
    %c6_361 = arith.constant 6 : index
    %c0_362 = arith.constant 0 : index
    %c0_363 = arith.constant 0 : index
    %382 = vector.load %arg10[%c6_361, %c0_362, %c0_363] : memref<16x32x8xf32, #tpu.memory_space<vmem>>, vector<1x32x8xf32>
    %383 = vector.shape_cast %382 : vector<1x32x8xf32> to vector<32x8xf32>
    %c64_i32_364 = arith.constant 64 : i32
    %384 = tpu.dynamic_rotate %353 by %c64_i32_364 dim 1 : vector<8x72xf32>, i32 -> vector<8x72xf32>
    %cst_365 = arith.constant dense<0.000000e+00> : vector<32x72xf32>
    %385 = tpu.matmul %383, %384, %cst_365 {dimension_numbers = #tpu.dot_dimension_numbers<[1], [0], [0], [1], [0, 0, 1, 1], [], []>} : vector<32x8xf32>, vector<8x72xf32>, vector<32x72xf32> -> vector<32x72xf32>
    %386 = arith.addf %381, %385 : vector<32x72xf32>
    %c7_366 = arith.constant 7 : index
    %c0_367 = arith.constant 0 : index
    %c0_368 = arith.constant 0 : index
    %387 = vector.load %arg10[%c7_366, %c0_367, %c0_368] : memref<16x32x8xf32, #tpu.memory_space<vmem>>, vector<1x32x8xf32>
    %388 = vector.shape_cast %387 : vector<1x32x8xf32> to vector<32x8xf32>
    %c63_i32 = arith.constant 63 : i32
    %389 = tpu.dynamic_rotate %353 by %c63_i32 dim 1 : vector<8x72xf32>, i32 -> vector<8x72xf32>
    %cst_369 = arith.constant dense<0.000000e+00> : vector<32x72xf32>
    %390 = tpu.matmul %388, %389, %cst_369 {dimension_numbers = #tpu.dot_dimension_numbers<[1], [0], [0], [1], [0, 0, 1, 1], [], []>} : vector<32x8xf32>, vector<8x72xf32>, vector<32x72xf32> -> vector<32x72xf32>
    %391 = arith.addf %386, %390 : vector<32x72xf32>
    %c8_370 = arith.constant 8 : index
    %c0_371 = arith.constant 0 : index
    %c0_372 = arith.constant 0 : index
    %392 = vector.load %arg10[%c8_370, %c0_371, %c0_372] : memref<16x32x8xf32, #tpu.memory_space<vmem>>, vector<1x32x8xf32>
    %393 = vector.shape_cast %392 : vector<1x32x8xf32> to vector<32x8xf32>
    %c60_i32_373 = arith.constant 60 : i32
    %394 = tpu.dynamic_rotate %353 by %c60_i32_373 dim 1 : vector<8x72xf32>, i32 -> vector<8x72xf32>
    %cst_374 = arith.constant dense<0.000000e+00> : vector<32x72xf32>
    %395 = tpu.matmul %393, %394, %cst_374 {dimension_numbers = #tpu.dot_dimension_numbers<[1], [0], [0], [1], [0, 0, 1, 1], [], []>} : vector<32x8xf32>, vector<8x72xf32>, vector<32x72xf32> -> vector<32x72xf32>
    %396 = arith.addf %391, %395 : vector<32x72xf32>
    %c9 = arith.constant 9 : index
    %c0_375 = arith.constant 0 : index
    %c0_376 = arith.constant 0 : index
    %397 = vector.load %arg10[%c9, %c0_375, %c0_376] : memref<16x32x8xf32, #tpu.memory_space<vmem>>, vector<1x32x8xf32>
    %398 = vector.shape_cast %397 : vector<1x32x8xf32> to vector<32x8xf32>
    %c59_i32_377 = arith.constant 59 : i32
    %399 = tpu.dynamic_rotate %353 by %c59_i32_377 dim 1 : vector<8x72xf32>, i32 -> vector<8x72xf32>
    %cst_378 = arith.constant dense<0.000000e+00> : vector<32x72xf32>
    %400 = tpu.matmul %398, %399, %cst_378 {dimension_numbers = #tpu.dot_dimension_numbers<[1], [0], [0], [1], [0, 0, 1, 1], [], []>} : vector<32x8xf32>, vector<8x72xf32>, vector<32x72xf32> -> vector<32x72xf32>
    %401 = arith.addf %396, %400 : vector<32x72xf32>
    %c10 = arith.constant 10 : index
    %c0_379 = arith.constant 0 : index
    %c0_380 = arith.constant 0 : index
    %402 = vector.load %arg10[%c10, %c0_379, %c0_380] : memref<16x32x8xf32, #tpu.memory_space<vmem>>, vector<1x32x8xf32>
    %403 = vector.shape_cast %402 : vector<1x32x8xf32> to vector<32x8xf32>
    %c58_i32_381 = arith.constant 58 : i32
    %404 = tpu.dynamic_rotate %353 by %c58_i32_381 dim 1 : vector<8x72xf32>, i32 -> vector<8x72xf32>
    %cst_382 = arith.constant dense<0.000000e+00> : vector<32x72xf32>
    %405 = tpu.matmul %403, %404, %cst_382 {dimension_numbers = #tpu.dot_dimension_numbers<[1], [0], [0], [1], [0, 0, 1, 1], [], []>} : vector<32x8xf32>, vector<8x72xf32>, vector<32x72xf32> -> vector<32x72xf32>
    %406 = arith.addf %401, %405 : vector<32x72xf32>
    %c11 = arith.constant 11 : index
    %c0_383 = arith.constant 0 : index
    %c0_384 = arith.constant 0 : index
    %407 = vector.load %arg10[%c11, %c0_383, %c0_384] : memref<16x32x8xf32, #tpu.memory_space<vmem>>, vector<1x32x8xf32>
    %408 = vector.shape_cast %407 : vector<1x32x8xf32> to vector<32x8xf32>
    %c57_i32 = arith.constant 57 : i32
    %409 = tpu.dynamic_rotate %353 by %c57_i32 dim 1 : vector<8x72xf32>, i32 -> vector<8x72xf32>
    %cst_385 = arith.constant dense<0.000000e+00> : vector<32x72xf32>
    %410 = tpu.matmul %408, %409, %cst_385 {dimension_numbers = #tpu.dot_dimension_numbers<[1], [0], [0], [1], [0, 0, 1, 1], [], []>} : vector<32x8xf32>, vector<8x72xf32>, vector<32x72xf32> -> vector<32x72xf32>
    %411 = arith.addf %406, %410 : vector<32x72xf32>
    %c12 = arith.constant 12 : index
    %c0_386 = arith.constant 0 : index
    %c0_387 = arith.constant 0 : index
    %412 = vector.load %arg10[%c12, %c0_386, %c0_387] : memref<16x32x8xf32, #tpu.memory_space<vmem>>, vector<1x32x8xf32>
    %413 = vector.shape_cast %412 : vector<1x32x8xf32> to vector<32x8xf32>
    %c54_i32 = arith.constant 54 : i32
    %414 = tpu.dynamic_rotate %353 by %c54_i32 dim 1 : vector<8x72xf32>, i32 -> vector<8x72xf32>
    %cst_388 = arith.constant dense<0.000000e+00> : vector<32x72xf32>
    %415 = tpu.matmul %413, %414, %cst_388 {dimension_numbers = #tpu.dot_dimension_numbers<[1], [0], [0], [1], [0, 0, 1, 1], [], []>} : vector<32x8xf32>, vector<8x72xf32>, vector<32x72xf32> -> vector<32x72xf32>
    %416 = arith.addf %411, %415 : vector<32x72xf32>
    %c13 = arith.constant 13 : index
    %c0_389 = arith.constant 0 : index
    %c0_390 = arith.constant 0 : index
    %417 = vector.load %arg10[%c13, %c0_389, %c0_390] : memref<16x32x8xf32, #tpu.memory_space<vmem>>, vector<1x32x8xf32>
    %418 = vector.shape_cast %417 : vector<1x32x8xf32> to vector<32x8xf32>
    %c53_i32 = arith.constant 53 : i32
    %419 = tpu.dynamic_rotate %353 by %c53_i32 dim 1 : vector<8x72xf32>, i32 -> vector<8x72xf32>
    %cst_391 = arith.constant dense<0.000000e+00> : vector<32x72xf32>
    %420 = tpu.matmul %418, %419, %cst_391 {dimension_numbers = #tpu.dot_dimension_numbers<[1], [0], [0], [1], [0, 0, 1, 1], [], []>} : vector<32x8xf32>, vector<8x72xf32>, vector<32x72xf32> -> vector<32x72xf32>
    %421 = arith.addf %416, %420 : vector<32x72xf32>
    %c14 = arith.constant 14 : index
    %c0_392 = arith.constant 0 : index
    %c0_393 = arith.constant 0 : index
    %422 = vector.load %arg10[%c14, %c0_392, %c0_393] : memref<16x32x8xf32, #tpu.memory_space<vmem>>, vector<1x32x8xf32>
    %423 = vector.shape_cast %422 : vector<1x32x8xf32> to vector<32x8xf32>
    %c52_i32 = arith.constant 52 : i32
    %424 = tpu.dynamic_rotate %353 by %c52_i32 dim 1 : vector<8x72xf32>, i32 -> vector<8x72xf32>
    %cst_394 = arith.constant dense<0.000000e+00> : vector<32x72xf32>
    %425 = tpu.matmul %423, %424, %cst_394 {dimension_numbers = #tpu.dot_dimension_numbers<[1], [0], [0], [1], [0, 0, 1, 1], [], []>} : vector<32x8xf32>, vector<8x72xf32>, vector<32x72xf32> -> vector<32x72xf32>
    %426 = arith.addf %421, %425 : vector<32x72xf32>
    %c15 = arith.constant 15 : index
    %c0_395 = arith.constant 0 : index
    %c0_396 = arith.constant 0 : index
    %427 = vector.load %arg10[%c15, %c0_395, %c0_396] : memref<16x32x8xf32, #tpu.memory_space<vmem>>, vector<1x32x8xf32>
    %428 = vector.shape_cast %427 : vector<1x32x8xf32> to vector<32x8xf32>
    %c51_i32 = arith.constant 51 : i32
    %429 = tpu.dynamic_rotate %353 by %c51_i32 dim 1 : vector<8x72xf32>, i32 -> vector<8x72xf32>
    %cst_397 = arith.constant dense<0.000000e+00> : vector<32x72xf32>
    %430 = tpu.matmul %428, %429, %cst_397 {dimension_numbers = #tpu.dot_dimension_numbers<[1], [0], [0], [1], [0, 0, 1, 1], [], []>} : vector<32x8xf32>, vector<8x72xf32>, vector<32x72xf32> -> vector<32x72xf32>
    %431 = arith.addf %426, %430 : vector<32x72xf32>
    %c0_398 = arith.constant 0 : index
    %c0_399 = arith.constant 0 : index
    %432 = vector.load %arg12[%c0_398, %c0_399] : memref<72x2xf32, #tpu.memory_space<vmem>>, vector<72x2xf32>
    %cst_400 = arith.constant dense<0.000000e+00> : vector<32x2xf32>
    %433 = tpu.matmul %431, %432, %cst_400 {dimension_numbers = #tpu.dot_dimension_numbers<[1], [0], [0], [1], [0, 0, 1, 1], [], []>} : vector<32x72xf32>, vector<72x2xf32>, vector<32x2xf32> -> vector<32x2xf32>
    %c0_401 = arith.constant 0 : index
    %c0_402 = arith.constant 0 : index
    %434 = vector.load %arg11[%c0_401, %c0_402] : memref<32x1xf32, #tpu.memory_space<vmem>>, vector<32x1xf32>
    %435 = vector.broadcast %434 : vector<32x1xf32> to vector<32x2xf32>
    %436 = arith.addf %433, %435 : vector<32x2xf32>
    %c0_403 = arith.constant 0 : index
    %c0_404 = arith.constant 0 : index
    %437 = vector.load %arg13[%c0_403, %c0_404] : memref<128x32xf32, #tpu.memory_space<vmem>>, vector<128x32xf32>
    %cst_405 = arith.constant dense<0.000000e+00> : vector<128x2xf32>
    %438 = tpu.matmul %437, %436, %cst_405 {dimension_numbers = #tpu.dot_dimension_numbers<[1], [0], [0], [1], [0, 0, 1, 1], [], []>} : vector<128x32xf32>, vector<32x2xf32>, vector<128x2xf32> -> vector<128x2xf32>
    %c0_406 = arith.constant 0 : index
    %c0_407 = arith.constant 0 : index
    %439 = vector.load %arg15[%c0_406, %c0_407] : memref<128x1xf32, #tpu.memory_space<vmem>>, vector<128x1xf32>
    %440 = vector.broadcast %439 : vector<128x1xf32> to vector<128x2xf32>
    %441 = arith.addf %438, %440 : vector<128x2xf32>
    %cst_408 = arith.constant 0.000000e+00 : f32
    %442 = vector.broadcast %cst_408 : f32 to vector<32x1xf32>
    %cst_409 = arith.constant 0.000000e+00 : f32
    %443 = vector.broadcast %cst_409 : f32 to vector<32x1xf32>
    %444 = vector.extract_strided_slice %441 {offsets = [0, 0], sizes = [128, 1], strides = [1, 1]} : vector<128x2xf32> to vector<128x1xf32>
    %c0_410 = arith.constant 0 : index
    %c0_411 = arith.constant 0 : index
    %445 = vector.load %arg14[%c0_410, %c0_411] : memref<128x32xf32, #tpu.memory_space<vmem>>, vector<128x32xf32>
    %cst_412 = arith.constant dense<0.000000e+00> : vector<128x1xf32>
    %446 = tpu.matmul %445, %442, %cst_412 {dimension_numbers = #tpu.dot_dimension_numbers<[1], [0], [0], [1], [0, 0, 1, 1], [], []>} : vector<128x32xf32>, vector<32x1xf32>, vector<128x1xf32> -> vector<128x1xf32>
    %447 = arith.addf %444, %446 : vector<128x1xf32>
    %448 = arith.negf %447 : vector<128x1xf32>
    %449 = math.exp %448 : vector<128x1xf32>
    %cst_413 = arith.constant 1.000000e+00 : f32
    %450 = vector.broadcast %cst_413 : f32 to vector<128x1xf32>
    %451 = arith.addf %450, %449 : vector<128x1xf32>
    %452 = arith.divf %450, %451 : vector<128x1xf32>
    %453 = math.tanh %447 : vector<128x1xf32>
    %454 = vector.extract_strided_slice %452 {offsets = [0, 0], sizes = [32, 1], strides = [1, 1]} : vector<128x1xf32> to vector<32x1xf32>
    %455 = vector.extract_strided_slice %452 {offsets = [32, 0], sizes = [32, 1], strides = [1, 1]} : vector<128x1xf32> to vector<32x1xf32>
    %456 = vector.extract_strided_slice %453 {offsets = [64, 0], sizes = [32, 1], strides = [1, 1]} : vector<128x1xf32> to vector<32x1xf32>
    %457 = vector.extract_strided_slice %452 {offsets = [96, 0], sizes = [32, 1], strides = [1, 1]} : vector<128x1xf32> to vector<32x1xf32>
    %458 = arith.mulf %455, %443 : vector<32x1xf32>
    %459 = arith.mulf %454, %456 : vector<32x1xf32>
    %460 = arith.addf %458, %459 : vector<32x1xf32>
    %461 = math.tanh %460 : vector<32x1xf32>
    %462 = arith.mulf %457, %461 : vector<32x1xf32>
    %463 = vector.extract_strided_slice %441 {offsets = [0, 1], sizes = [128, 1], strides = [1, 1]} : vector<128x2xf32> to vector<128x1xf32>
    %c0_414 = arith.constant 0 : index
    %c0_415 = arith.constant 0 : index
    %464 = vector.load %arg14[%c0_414, %c0_415] : memref<128x32xf32, #tpu.memory_space<vmem>>, vector<128x32xf32>
    %cst_416 = arith.constant dense<0.000000e+00> : vector<128x1xf32>
    %465 = tpu.matmul %464, %462, %cst_416 {dimension_numbers = #tpu.dot_dimension_numbers<[1], [0], [0], [1], [0, 0, 1, 1], [], []>} : vector<128x32xf32>, vector<32x1xf32>, vector<128x1xf32> -> vector<128x1xf32>
    %466 = arith.addf %463, %465 : vector<128x1xf32>
    %467 = arith.negf %466 : vector<128x1xf32>
    %468 = math.exp %467 : vector<128x1xf32>
    %cst_417 = arith.constant 1.000000e+00 : f32
    %469 = vector.broadcast %cst_417 : f32 to vector<128x1xf32>
    %470 = arith.addf %469, %468 : vector<128x1xf32>
    %471 = arith.divf %469, %470 : vector<128x1xf32>
    %472 = math.tanh %466 : vector<128x1xf32>
    %473 = vector.extract_strided_slice %471 {offsets = [0, 0], sizes = [32, 1], strides = [1, 1]} : vector<128x1xf32> to vector<32x1xf32>
    %474 = vector.extract_strided_slice %471 {offsets = [32, 0], sizes = [32, 1], strides = [1, 1]} : vector<128x1xf32> to vector<32x1xf32>
    %475 = vector.extract_strided_slice %472 {offsets = [64, 0], sizes = [32, 1], strides = [1, 1]} : vector<128x1xf32> to vector<32x1xf32>
    %476 = vector.extract_strided_slice %471 {offsets = [96, 0], sizes = [32, 1], strides = [1, 1]} : vector<128x1xf32> to vector<32x1xf32>
    %477 = arith.mulf %474, %460 : vector<32x1xf32>
    %478 = arith.mulf %473, %475 : vector<32x1xf32>
    %479 = arith.addf %477, %478 : vector<32x1xf32>
    %480 = math.tanh %479 : vector<32x1xf32>
    %481 = arith.mulf %476, %480 : vector<32x1xf32>
    %c0_418 = arith.constant 0 : index
    %c0_419 = arith.constant 0 : index
    %482 = vector.load %arg16[%c0_418, %c0_419] : memref<10x32xf32, #tpu.memory_space<vmem>>, vector<10x32xf32>
    %cst_420 = arith.constant dense<0.000000e+00> : vector<10x1xf32>
    %483 = tpu.matmul %482, %481, %cst_420 {dimension_numbers = #tpu.dot_dimension_numbers<[1], [0], [0], [1], [0, 0, 1, 1], [], []>} : vector<10x32xf32>, vector<32x1xf32>, vector<10x1xf32> -> vector<10x1xf32>
    %c0_421 = arith.constant 0 : index
    %c0_422 = arith.constant 0 : index
    %484 = vector.load %arg17[%c0_421, %c0_422] : memref<10x1xf32, #tpu.memory_space<vmem>>, vector<10x1xf32>
    %485 = arith.addf %483, %484 : vector<10x1xf32>
    %cst_423 = arith.constant dense<0xFF800000> : vector<1xf32>
    %486 = vector.multi_reduction <maximumf>, %485, %cst_423 [0] : vector<10x1xf32> to vector<1xf32>
    %487 = vector.shape_cast %486 : vector<1xf32> to vector<1x1xf32>
    %488 = vector.broadcast %487 : vector<1x1xf32> to vector<10x1xf32>
    %489 = arith.subf %485, %488 : vector<10x1xf32>
    %490 = math.exp %489 : vector<10x1xf32>
    %cst_424 = arith.constant dense<0.000000e+00> : vector<1xf32>
    %491 = vector.multi_reduction <add>, %490, %cst_424 [0] : vector<10x1xf32> to vector<1xf32>
    %492 = vector.shape_cast %491 : vector<1xf32> to vector<1x1xf32>
    %493 = vector.broadcast %492 : vector<1x1xf32> to vector<10x1xf32>
    %494 = arith.divf %490, %493 : vector<10x1xf32>
    %c0_425 = arith.constant 0 : index
    %c0_426 = arith.constant 0 : index
    %495 = vector.load %arg18[%c0_425, %c0_426] : memref<10x1xf32, #tpu.memory_space<vmem>>, vector<10x1xf32>
    tpu.vector_store %arg18[%c0_425, %c0_426], %494 {strides = array<i32>} : memref<10x1xf32, #tpu.memory_space<vmem>>, vector<10x1xf32>,
    return
  }
}

</mosaic_0001>

<llo_original>
// kernel: net_forward.1
$region0: #{net_forward.1}
  #allocation0 [shape = 'u32[]', space=smem, size = 0x4, offset = 0x4, fixed_abs, tag = 'smem constant byte address 0x4 - core index']
  #allocation1 [shape = 'u32[144,128]{1,0:T(1,128)}', space=vmem, size = 0x12000, scoped, tag = 'internal scratch']
  %s0 = inlined_call_operand.vmem [shape: f32[4,648], index: 0, kind: input, shape index: {}]
  %s1 = inlined_call_operand.vmem [shape: f32[9,8,4], index: 1, kind: input, shape index: {}]
  %s2 = inlined_call_operand.vmem [shape: f32[8,1], index: 2, kind: input, shape index: {}]
  %s3 = inlined_call_operand.vmem [shape: f32[648,200], index: 3, kind: input, shape index: {}]
  %s4 = inlined_call_operand.vmem [shape: f32[1,200], index: 4, kind: input, shape index: {}]
  %s5 = inlined_call_operand.vmem [shape: f32[5,9,8,8], index: 5, kind: input, shape index: {}]
  %s6 = inlined_call_operand.vmem [shape: f32[5,8,1], index: 6, kind: input, shape index: {}]
  %s7 = inlined_call_operand.vmem [shape: f32[200,72], index: 7, kind: input, shape index: {}]
  %s8 = inlined_call_operand.vmem [shape: f32[1,72], index: 8, kind: input, shape index: {}]
  %s9 = inlined_call_operand.vmem [shape: f32[72,72], index: 9, kind: input, shape index: {}]
  %s10 = inlined_call_operand.vmem [shape: f32[16,32,8], index: 10, kind: input, shape index: {}]
  %s11 = inlined_call_operand.vmem [shape: f32[32,1], index: 11, kind: input, shape index: {}]
  %s12 = inlined_call_operand.vmem [shape: f32[72,2], index: 12, kind: input, shape index: {}]
  %s13 = inlined_call_operand.vmem [shape: f32[128,32], index: 13, kind: input, shape index: {}]
  %s14 = inlined_call_operand.vmem [shape: f32[128,32], index: 14, kind: input, shape index: {}]
  %s15 = inlined_call_operand.vmem [shape: f32[128,1], index: 15, kind: input, shape index: {}]
  %s16 = inlined_call_operand.vmem [shape: f32[10,32], index: 16, kind: input, shape index: {}]
  %s17 = inlined_call_operand.vmem [shape: f32[10,1], index: 17, kind: input, shape index: {}]
  %s18 = inlined_call_operand.vmem [shape: f32[10,1], index: 18, kind: output, shape index: {}]
  %s19 = sld [smem:[#allocation0]]
  $region82: #{net_forward.1} parent=0
    _
  %s21 = ssub.s32 1, %s19
  %s22 = scalar_select 0, %s21, %s19
  // Predicated region
  $region2: #{net_forward.1} parent=0 // pred_check
    _
  $region3: #{net_forward.1} parent=0 // pred_check_branch
    %24 = sbr.rel (0) target = $region5
  $region4: #{net_forward.1} parent=0 // pred_region
    _
  $region5: #{net_forward.1} parent=0 // pred_fallthru
    _
  // Predicated region
  $region6: #{net_forward.1} parent=0 // pred_check
    _
  $region7: #{net_forward.1} parent=0 // pred_check_branch
    %26 = sbr.rel (0) target = $region9
  $region8: #{net_forward.1} parent=0 // pred_region
    _
  $region9: #{net_forward.1} parent=0 // pred_fallthru
    _
  // Predicated region
  $region10: #{net_forward.1} parent=0 // pred_check
    _
  $region11: #{net_forward.1} parent=0 // pred_check_branch
    %28 = sbr.rel (0) target = $region13
  $region12: #{net_forward.1} parent=0 // pred_region
    _
  $region13: #{net_forward.1} parent=0 // pred_fallthru
    _
  // Predicated region
  $region14: #{net_forward.1} parent=0 // pred_check
    _
  $region15: #{net_forward.1} parent=0 // pred_check_branch
    %30 = sbr.rel (0) target = $region17
  $region16: #{net_forward.1} parent=0 // pred_region
    _
  $region17: #{net_forward.1} parent=0 // pred_fallthru
    _
  // Predicated region
  $region18: #{net_forward.1} parent=0 // pred_check
    _
  $region19: #{net_forward.1} parent=0 // pred_check_branch
    %32 = sbr.rel (0) target = $region21
  $region20: #{net_forward.1} parent=0 // pred_region
    _
  $region21: #{net_forward.1} parent=0 // pred_fallthru
    _
  // Predicated region
  $region22: #{net_forward.1} parent=0 // pred_check
    _
  $region23: #{net_forward.1} parent=0 // pred_check_branch
    %34 = sbr.rel (0) target = $region25
  $region24: #{net_forward.1} parent=0 // pred_region
    _
  $region25: #{net_forward.1} parent=0 // pred_fallthru
    _
  // Predicated region
  $region26: #{net_forward.1} parent=0 // pred_check
    _
  $region27: #{net_forward.1} parent=0 // pred_check_branch
    %36 = sbr.rel (0) target = $region29
  $region28: #{net_forward.1} parent=0 // pred_region
    _
  $region29: #{net_forward.1} parent=0 // pred_fallthru
    _
  // Predicated region
  $region30: #{net_forward.1} parent=0 // pred_check
    _
  $region31: #{net_forward.1} parent=0 // pred_check_branch
    %38 = sbr.rel (0) target = $region33
  $region32: #{net_forward.1} parent=0 // pred_region
    _
  $region33: #{net_forward.1} parent=0 // pred_fallthru
    _
  // Predicated region
  $region34: #{net_forward.1} parent=0 // pred_check
    _
  $region35: #{net_forward.1} parent=0 // pred_check_branch
    %40 = sbr.rel (0) target = $region37
  $region36: #{net_forward.1} parent=0 // pred_region
    _
  $region37: #{net_forward.1} parent=0 // pred_fallthru
    _
  // Predicated region
  $region38: #{net_forward.1} parent=0 // pred_check
    _
  $region39: #{net_forward.1} parent=0 // pred_check_branch
    %42 = sbr.rel (0) target = $region41
  $region40: #{net_forward.1} parent=0 // pred_region
    _
  $region41: #{net_forward.1} parent=0 // pred_fallthru
    _
  // Predicated region
  $region42: #{net_forward.1} parent=0 // pred_check
    _
  $region43: #{net_forward.1} parent=0 // pred_check_branch
    %44 = sbr.rel (0) target = $region45
  $region44: #{net_forward.1} parent=0 // pred_region
    _
  $region45: #{net_forward.1} parent=0 // pred_fallthru
    _
  // Predicated region
  $region46: #{net_forward.1} parent=0 // pred_check
    _
  $region47: #{net_forward.1} parent=0 // pred_check_branch
    %46 = sbr.rel (0) target = $region49
  $region48: #{net_forward.1} parent=0 // pred_region
    _
  $region49: #{net_forward.1} parent=0 // pred_fallthru
    _
  // Predicated region
  $region50: #{net_forward.1} parent=0 // pred_check
    _
  $region51: #{net_forward.1} parent=0 // pred_check_branch
    %48 = sbr.rel (0) target = $region53
  $region52: #{net_forward.1} parent=0 // pred_region
    _
  $region53: #{net_forward.1} parent=0 // pred_fallthru
    _
  // Predicated region
  $region54: #{net_forward.1} parent=0 // pred_check
    _
  $region55: #{net_forward.1} parent=0 // pred_check_branch
    %50 = sbr.rel (0) target = $region57
  $region56: #{net_forward.1} parent=0 // pred_region
    _
  $region57: #{net_forward.1} parent=0 // pred_fallthru
    _
  // Predicated region
  $region58: #{net_forward.1} parent=0 // pred_check
    _
  $region59: #{net_forward.1} parent=0 // pred_check_branch
    %52 = sbr.rel (0) target = $region61
  $region60: #{net_forward.1} parent=0 // pred_region
    _
  $region61: #{net_forward.1} parent=0 // pred_fallthru
    _
  // Predicated region
  $region62: #{net_forward.1} parent=0 // pred_check
    _
  $region63: #{net_forward.1} parent=0 // pred_check_branch
    %54 = sbr.rel (0) target = $region65
  $region64: #{net_forward.1} parent=0 // pred_region
    _
  $region65: #{net_forward.1} parent=0 // pred_fallthru
    _
  // Predicated region
  $region66: #{net_forward.1} parent=0 // pred_check
    _
  $region67: #{net_forward.1} parent=0 // pred_check_branch
    %56 = sbr.rel (0) target = $region69
  $region68: #{net_forward.1} parent=0 // pred_region
    _
  $region69: #{net_forward.1} parent=0 // pred_fallthru
    _
  // Predicated region
  $region70: #{net_forward.1} parent=0 // pred_check
    _
  $region71: #{net_forward.1} parent=0 // pred_check_branch
    %58 = sbr.rel (0) target = $region73
  $region72: #{net_forward.1} parent=0 // pred_region
    _
  $region73: #{net_forward.1} parent=0 // pred_fallthru
    _
  %v59 = vld [vmem:[%s0] sm:$0xff]
  %v60 = vld [vmem:[%s0 + $0x8] sm:$0xff]
  %v61 = vld [vmem:[%s0 + $0x10] sm:$0xff]
  %v62 = vld [vmem:[%s2] sm:$0xff]
  %v63 = vld [vmem:[%s1] sm:$0xff]
  %s64 = scalar_lea.vmem %s1, 8
  %v65 = vld [vmem:[%s64] sm:$0xff]
  %v69 = vcombine.high %v59, %v59
  %v70 = vcombine.high %v60, %v60
  %v71 = vcombine.high %v61, %v61
  %vm73 = vcmask 1047616
  %74 = vrot.lane.b32.xlu0 %v59, 8
  %v75 = vpop.permute.xlu0 %74
  %v76 = vsel %vm73, %v75, %v71
  %78 = vrot.lane.b32.xlu0 %v59, 127
  %v79 = vpop.permute.xlu0 %78
  %80 = vrot.lane.b32.xlu0 %v69, 127
  %v81 = vpop.permute.xlu0 %80
  %82 = vrot.lane.b32.xlu0 %v60, 127
  %v83 = vpop.permute.xlu0 %82
  %84 = vrot.lane.b32.xlu0 %v70, 127
  %v85 = vpop.permute.xlu0 %84
  %86 = vrot.lane.b32.xlu0 %v61, 127
  %v87 = vpop.permute.xlu0 %86
  %88 = vrot.lane.b32.xlu0 %v76, 127
  %v89 = vpop.permute.xlu0 %88
  %vm90 = vcmask 1039360
  %v91 = vsel %vm90, %v79, %v81
  %v92 = vsel %vm90, %v81, %v83
  %v93 = vsel %vm90, %v83, %v85
  %v94 = vsel %vm90, %v85, %v87
  %v95 = vsel %vm90, %v87, %v89
  %vm96 = vcmask 31744
  %v98 = vsel %vm96, %v65, 0
  %vm100 = vcmask 1043456
  %v101 = vsel %vm100, %v91, 0
  %v103 = vsel %vm100, %v92, 0
  %v105 = vsel %vm100, %v93, 0
  %v107 = vsel %vm100, %v94, 0
  %v109 = vsel %vm100, %v95, 0
  %v111 = vsel %vm100, %v89, 0
  %113 = vmatprep.subr.mxu0 %v103
  %114 = vmatpush1.msra.mxu0 %v101
  %115 = vmatprep.subr.mxu0 0.0
  %116 = vmatpush1.msra.mxu0 0.0
  %117 = vmatprep.subr.mxu0 0.0
  %118 = vmatpush1.msra.mxu0 0.0
  %119 = vmatprep.subr.mxu0 0.0
  %120 = vmatpush1.msra.mxu0 0.0
  %121 = vmatprep.subr.mxu0 0.0
  %122 = vmatpush1.msra.mxu0 0.0
  %123 = vmatprep.subr.mxu0 0.0
  %124 = vmatpush1.msra.mxu0 0.0
  %125 = vmatprep.subr.mxu0 0.0
  %126 = vmatpush1.msra.mxu0 0.0
  %127 = vmatprep.subr.mxu0 0.0
  %128 = vmatpush1.msra.mxu0 0.0
  %129 = vmatprep.subr.mxu0 0.0
  %130 = vmatpush1.msra.mxu0 0.0
  %131 = vmatprep.subr.mxu0 0.0
  %132 = vmatpush1.msra.mxu0 0.0
  %133 = vmatprep.subr.mxu0 0.0
  %134 = vmatpush1.msra.mxu0 0.0
  %135 = vmatprep.subr.mxu0 0.0
  %136 = vmatpush1.msra.mxu0 0.0
  %137 = vmatprep.subr.mxu0 0.0
  %138 = vmatpush1.msra.mxu0 0.0
  %139 = vmatprep.subr.mxu0 0.0
  %140 = vmatpush1.msra.mxu0 0.0
  %141 = vmatprep.subr.mxu0 0.0
  %142 = vmatpush1.msra.mxu0 0.0
  %143 = vmatprep.subr.mxu0 0.0
  %144 = vmatpush1.msra.mxu0 0.0
  %145 = vmatprep.subr.mxu0 0.0
  %146 = vmatpush1.msra.mxu0 0.0
  %147 = vmatprep.subr.mxu0 0.0
  %148 = vmatpush1.msra.mxu0 0.0
  %149 = vmatprep.subr.mxu0 0.0
  %150 = vmatpush1.msra.mxu0 0.0
  %151 = vmatprep.subr.mxu0 0.0
  %152 = vmatpush1.msra.mxu0 0.0
  %153 = vmatprep.subr.mxu0 0.0
  %154 = vmatpush1.msra.mxu0 0.0
  %155 = vmatprep.subr.mxu0 0.0
  %156 = vmatpush1.msra.mxu0 0.0
  %157 = vmatprep.subr.mxu0 0.0
  %158 = vmatpush1.msra.mxu0 0.0
  %159 = vmatprep.subr.mxu0 0.0
  %160 = vmatpush1.msra.mxu0 0.0
  %161 = vmatprep.subr.mxu0 0.0
  %162 = vmatpush1.msra.mxu0 0.0
  %163 = vmatprep.subr.mxu0 0.0
  %164 = vmatpush1.msra.mxu0 0.0
  %165 = vmatprep.subr.mxu0 0.0
  %166 = vmatpush1.msra.mxu0 0.0
  %167 = vmatprep.subr.mxu0 0.0
  %168 = vmatpush1.msra.mxu0 0.0
  %169 = vmatprep.subr.mxu0 0.0
  %170 = vmatpush1.msra.mxu0 0.0
  %171 = vmatprep.subr.mxu0 0.0
  %172 = vmatpush1.msra.mxu0 0.0
  %173 = vmatprep.subr.mxu0 0.0
  %174 = vmatpush1.msra.mxu0 0.0
  %175 = vmatprep.subr.mxu0 0.0
  %176 = vmatpush1.msra.mxu0 0.0
  %177 = vmatprep.mubr.f32.mxu0 0.0
  %178 = vmatmul.mubr.f32.gmra.mrb[0].mxu0 %v98
  %v179 = vpop.f32.mrb[0].mxu0
  %v180 = vadd.f32 0.0, %v179
  %v181 = vpop.f32.mrb[0].mxu0
  %v182 = vadd.f32 0.0, %v181
  %183 = vdwg.mxu0
  %184 = vmatprep.subr.mxu0 %v107
  %185 = vmatpush1.msra.mxu0 %v105
  %186 = vmatprep.subr.mxu0 0.0
  %187 = vmatpush1.msra.mxu0 0.0
  %188 = vmatprep.subr.mxu0 0.0
  %189 = vmatpush1.msra.mxu0 0.0
  %190 = vmatprep.subr.mxu0 0.0
  %191 = vmatpush1.msra.mxu0 0.0
  %192 = vmatprep.subr.mxu0 0.0
  %193 = vmatpush1.msra.mxu0 0.0
  %194 = vmatprep.subr.mxu0 0.0
  %195 = vmatpush1.msra.mxu0 0.0
  %196 = vmatprep.subr.mxu0 0.0
  %197 = vmatpush1.msra.mxu0 0.0
  %198 = vmatprep.subr.mxu0 0.0
  %199 = vmatpush1.msra.mxu0 0.0
  %200 = vmatprep.subr.mxu0 0.0
  %201 = vmatpush1.msra.mxu0 0.0
  %202 = vmatprep.subr.mxu0 0.0
  %203 = vmatpush1.msra.mxu0 0.0
  %204 = vmatprep.subr.mxu0 0.0
  %205 = vmatpush1.msra.mxu0 0.0
  %206 = vmatprep.subr.mxu0 0.0
  %207 = vmatpush1.msra.mxu0 0.0
  %208 = vmatprep.subr.mxu0 0.0
  %209 = vmatpush1.msra.mxu0 0.0
  %210 = vmatprep.subr.mxu0 0.0
  %211 = vmatpush1.msra.mxu0 0.0
  %212 = vmatprep.subr.mxu0 0.0
  %213 = vmatpush1.msra.mxu0 0.0
  %214 = vmatprep.subr.mxu0 0.0
  %215 = vmatpush1.msra.mxu0 0.0
  %216 = vmatprep.subr.mxu0 0.0
  %217 = vmatpush1.msra.mxu0 0.0
  %218 = vmatprep.subr.mxu0 0.0
  %219 = vmatpush1.msra.mxu0 0.0
  %220 = vmatprep.subr.mxu0 0.0
  %221 = vmatpush1.msra.mxu0 0.0
  %222 = vmatprep.subr.mxu0 0.0
  %223 = vmatpush1.msra.mxu0 0.0
  %224 = vmatprep.subr.mxu0 0.0
  %225 = vmatpush1.msra.mxu0 0.0
  %226 = vmatprep.subr.mxu0 0.0
  %227 = vmatpush1.msra.mxu0 0.0
  %228 = vmatprep.subr.mxu0 0.0
  %229 = vmatpush1.msra.mxu0 0.0
  %230 = vmatprep.subr.mxu0 0.0
  %231 = vmatpush1.msra.mxu0 0.0
  %232 = vmatprep.subr.mxu0 0.0
  %233 = vmatpush1.msra.mxu0 0.0
  %234 = vmatprep.subr.mxu0 0.0
  %235 = vmatpush1.msra.mxu0 0.0
  %236 = vmatprep.subr.mxu0 0.0
  %237 = vmatpush1.msra.mxu0 0.0
  %238 = vmatprep.subr.mxu0 0.0
  %239 = vmatpush1.msra.mxu0 0.0
  %240 = vmatprep.subr.mxu0 0.0
  %241 = vmatpush1.msra.mxu0 0.0
  %242 = vmatprep.subr.mxu0 0.0
  %243 = vmatpush1.msra.mxu0 0.0
  %244 = vmatprep.subr.mxu0 0.0
  %245 = vmatpush1.msra.mxu0 0.0
  %246 = vmatprep.subr.mxu0 0.0
  %247 = vmatpush1.msra.mxu0 0.0
  %248 = vmatprep.mubr.f32.mxu0 0.0
  %249 = vmatmul.mubr.f32.gmra.mrb[0].mxu0 %v98
  %v250 = vpop.f32.mrb[0].mxu0
  %v251 = vadd.f32 0.0, %v250
  %v252 = vpop.f32.mrb[0].mxu0
  %v253 = vadd.f32 0.0, %v252
  %254 = vdwg.mxu0
  %255 = vmatprep.subr.mxu0 %v111
  %256 = vmatpush1.msra.mxu0 %v109
  %257 = vmatprep.subr.mxu0 0.0
  %258 = vmatpush1.msra.mxu0 0.0
  %259 = vmatprep.subr.mxu0 0.0
  %260 = vmatpush1.msra.mxu0 0.0
  %261 = vmatprep.subr.mxu0 0.0
  %262 = vmatpush1.msra.mxu0 0.0
  %263 = vmatprep.subr.mxu0 0.0
  %264 = vmatpush1.msra.mxu0 0.0
  %265 = vmatprep.subr.mxu0 0.0
  %266 = vmatpush1.msra.mxu0 0.0
  %267 = vmatprep.subr.mxu0 0.0
  %268 = vmatpush1.msra.mxu0 0.0
  %269 = vmatprep.subr.mxu0 0.0
  %270 = vmatpush1.msra.mxu0 0.0
  %271 = vmatprep.subr.mxu0 0.0
  %272 = vmatpush1.msra.mxu0 0.0
  %273 = vmatprep.subr.mxu0 0.0
  %274 = vmatpush1.msra.mxu0 0.0
  %275 = vmatprep.subr.mxu0 0.0
  %276 = vmatpush1.msra.mxu0 0.0
  %277 = vmatprep.subr.mxu0 0.0
  %278 = vmatpush1.msra.mxu0 0.0
  %279 = vmatprep.subr.mxu0 0.0
  %280 = vmatpush1.msra.mxu0 0.0
  %281 = vmatprep.subr.mxu0 0.0
  %282 = vmatpush1.msra.mxu0 0.0
  %283 = vmatprep.subr.mxu0 0.0
  %284 = vmatpush1.msra.mxu0 0.0
  %285 = vmatprep.subr.mxu0 0.0
  %286 = vmatpush1.msra.mxu0 0.0
  %287 = vmatprep.subr.mxu0 0.0
  %288 = vmatpush1.msra.mxu0 0.0
  %289 = vmatprep.subr.mxu0 0.0
  %290 = vmatpush1.msra.mxu0 0.0
  %291 = vmatprep.subr.mxu0 0.0
  %292 = vmatpush1.msra.mxu0 0.0
  %293 = vmatprep.subr.mxu0 0.0
  %294 = vmatpush1.msra.mxu0 0.0
  %295 = vmatprep.subr.mxu0 0.0
  %296 = vmatpush1.msra.mxu0 0.0
  %297 = vmatprep.subr.mxu0 0.0
  %298 = vmatpush1.msra.mxu0 0.0
  %299 = vmatprep.subr.mxu0 0.0
  %300 = vmatpush1.msra.mxu0 0.0
  %301 = vmatprep.subr.mxu0 0.0
  %302 = vmatpush1.msra.mxu0 0.0
  %303 = vmatprep.subr.mxu0 0.0
  %304 = vmatpush1.msra.mxu0 0.0
  %305 = vmatprep.subr.mxu0 0.0
  %306 = vmatpush1.msra.mxu0 0.0
  %307 = vmatprep.subr.mxu0 0.0
  %308 = vmatpush1.msra.mxu0 0.0
  %309 = vmatprep.subr.mxu0 0.0
  %310 = vmatpush1.msra.mxu0 0.0
  %311 = vmatprep.subr.mxu0 0.0
  %312 = vmatpush1.msra.mxu0 0.0
  %313 = vmatprep.subr.mxu0 0.0
  %314 = vmatpush1.msra.mxu0 0.0
  %315 = vmatprep.subr.mxu0 0.0
  %316 = vmatpush1.msra.mxu0 0.0
  %317 = vmatprep.subr.mxu0 0.0
  %318 = vmatpush1.msra.mxu0 0.0
  %319 = vmatprep.mubr.f32.mxu0 0.0
  %320 = vmatmul.mubr.f32.gmra.mrb[0].mxu0 %v98
  %v321 = vpop.f32.mrb[0].mxu0
  %v322 = vadd.f32 0.0, %v321
  %v323 = vpop.f32.mrb[0].mxu0
  %v324 = vadd.f32 0.0, %v323
  %325 = vdwg.mxu0
  %v327 = vsel %vm96, %v63, 0
  %v329 = vsel %vm100, %v59, 0
  %v331 = vsel %vm100, %v69, 0
  %v333 = vsel %vm100, %v60, 0
  %v335 = vsel %vm100, %v70, 0
  %v337 = vsel %vm100, %v61, 0
  %v339 = vsel %vm100, %v71, 0
  %341 = vmatprep.subr.mxu0 %v331
  %342 = vmatpush1.msra.mxu0 %v329
  %343 = vmatprep.subr.mxu0 0.0
  %344 = vmatpush1.msra.mxu0 0.0
  %345 = vmatprep.subr.mxu0 0.0
  %346 = vmatpush1.msra.mxu0 0.0
  %347 = vmatprep.subr.mxu0 0.0
  %348 = vmatpush1.msra.mxu0 0.0
  %349 = vmatprep.subr.mxu0 0.0
  %350 = vmatpush1.msra.mxu0 0.0
  %351 = vmatprep.subr.mxu0 0.0
  %352 = vmatpush1.msra.mxu0 0.0
  %353 = vmatprep.subr.mxu0 0.0
  %354 = vmatpush1.msra.mxu0 0.0
  %355 = vmatprep.subr.mxu0 0.0
  %356 = vmatpush1.msra.mxu0 0.0
  %357 = vmatprep.subr.mxu0 0.0
  %358 = vmatpush1.msra.mxu0 0.0
  %359 = vmatprep.subr.mxu0 0.0
  %360 = vmatpush1.msra.mxu0 0.0
  %361 = vmatprep.subr.mxu0 0.0
  %362 = vmatpush1.msra.mxu0 0.0
  %363 = vmatprep.subr.mxu0 0.0
  %364 = vmatpush1.msra.mxu0 0.0
  %365 = vmatprep.subr.mxu0 0.0
  %366 = vmatpush1.msra.mxu0 0.0
  %367 = vmatprep.subr.mxu0 0.0
  %368 = vmatpush1.msra.mxu0 0.0
  %369 = vmatprep.subr.mxu0 0.0
  %370 = vmatpush1.msra.mxu0 0.0
  %371 = vmatprep.subr.mxu0 0.0
  %372 = vmatpush1.msra.mxu0 0.0
  %373 = vmatprep.subr.mxu0 0.0
  %374 = vmatpush1.msra.mxu0 0.0
  %375 = vmatprep.subr.mxu0 0.0
  %376 = vmatpush1.msra.mxu0 0.0
  %377 = vmatprep.subr.mxu0 0.0
  %378 = vmatpush1.msra.mxu0 0.0
  %379 = vmatprep.subr.mxu0 0.0
  %380 = vmatpush1.msra.mxu0 0.0
  %381 = vmatprep.subr.mxu0 0.0
  %382 = vmatpush1.msra.mxu0 0.0
  %383 = vmatprep.subr.mxu0 0.0
  %384 = vmatpush1.msra.mxu0 0.0
  %385 = vmatprep.subr.mxu0 0.0
  %386 = vmatpush1.msra.mxu0 0.0
  %387 = vmatprep.subr.mxu0 0.0
  %388 = vmatpush1.msra.mxu0 0.0
  %389 = vmatprep.subr.mxu0 0.0
  %390 = vmatpush1.msra.mxu0 0.0
  %391 = vmatprep.subr.mxu0 0.0
  %392 = vmatpush1.msra.mxu0 0.0
  %393 = vmatprep.subr.mxu0 0.0
  %394 = vmatpush1.msra.mxu0 0.0
  %395 = vmatprep.subr.mxu0 0.0
  %396 = vmatpush1.msra.mxu0 0.0
  %397 = vmatprep.subr.mxu0 0.0
  %398 = vmatpush1.msra.mxu0 0.0
  %399 = vmatprep.subr.mxu0 0.0
  %400 = vmatpush1.msra.mxu0 0.0
  %401 = vmatprep.subr.mxu0 0.0
  %402 = vmatpush1.msra.mxu0 0.0
  %403 = vmatprep.subr.mxu0 0.0
  %404 = vmatpush1.msra.mxu0 0.0
  %405 = vmatprep.mubr.f32.mxu0 0.0
  %406 = vmatmul.mubr.f32.gmra.mrb[0].mxu0 %v327
  %v407 = vpop.f32.mrb[0].mxu0
  %v408 = vadd.f32 %v180, %v407
  %v409 = vpop.f32.mrb[0].mxu0
  %v410 = vadd.f32 %v182, %v409
  %411 = vdwg.mxu0
  %412 = vmatprep.subr.mxu0 %v335
  %413 = vmatpush1.msra.mxu0 %v333
  %414 = vmatprep.subr.mxu0 0.0
  %415 = vmatpush1.msra.mxu0 0.0
  %416 = vmatprep.subr.mxu0 0.0
  %417 = vmatpush1.msra.mxu0 0.0
  %418 = vmatprep.subr.mxu0 0.0
  %419 = vmatpush1.msra.mxu0 0.0
  %420 = vmatprep.subr.mxu0 0.0
  %421 = vmatpush1.msra.mxu0 0.0
  %422 = vmatprep.subr.mxu0 0.0
  %423 = vmatpush1.msra.mxu0 0.0
  %424 = vmatprep.subr.mxu0 0.0
  %425 = vmatpush1.msra.mxu0 0.0
  %426 = vmatprep.subr.mxu0 0.0
  %427 = vmatpush1.msra.mxu0 0.0
  %428 = vmatprep.subr.mxu0 0.0
  %429 = vmatpush1.msra.mxu0 0.0
  %430 = vmatprep.subr.mxu0 0.0
  %431 = vmatpush1.msra.mxu0 0.0
  %432 = vmatprep.subr.mxu0 0.0
  %433 = vmatpush1.msra.mxu0 0.0
  %434 = vmatprep.subr.mxu0 0.0
  %435 = vmatpush1.msra.mxu0 0.0
  %436 = vmatprep.subr.mxu0 0.0
  %437 = vmatpush1.msra.mxu0 0.0
  %438 = vmatprep.subr.mxu0 0.0
  %439 = vmatpush1.msra.mxu0 0.0
  %440 = vmatprep.subr.mxu0 0.0
  %441 = vmatpush1.msra.mxu0 0.0
  %442 = vmatprep.subr.mxu0 0.0
  %443 = vmatpush1.msra.mxu0 0.0
  %444 = vmatprep.subr.mxu0 0.0
  %445 = vmatpush1.msra.mxu0 0.0
  %446 = vmatprep.subr.mxu0 0.0
  %447 = vmatpush1.msra.mxu0 0.0
  %448 = vmatprep.subr.mxu0 0.0
  %449 = vmatpush1.msra.mxu0 0.0
  %450 = vmatprep.subr.mxu0 0.0
  %451 = vmatpush1.msra.mxu0 0.0
  %452 = vmatprep.subr.mxu0 0.0
  %453 = vmatpush1.msra.mxu0 0.0
  %454 = vmatprep.subr.mxu0 0.0
  %455 = vmatpush1.msra.mxu0 0.0
  %456 = vmatprep.subr.mxu0 0.0
  %457 = vmatpush1.msra.mxu0 0.0
  %458 = vmatprep.subr.mxu0 0.0
  %459 = vmatpush1.msra.mxu0 0.0
  %460 = vmatprep.subr.mxu0 0.0
  %461 = vmatpush1.msra.mxu0 0.0
  %462 = vmatprep.subr.mxu0 0.0
  %463 = vmatpush1.msra.mxu0 0.0
  %464 = vmatprep.subr.mxu0 0.0
  %465 = vmatpush1.msra.mxu0 0.0
  %466 = vmatprep.subr.mxu0 0.0
  %467 = vmatpush1.msra.mxu0 0.0
  %468 = vmatprep.subr.mxu0 0.0
  %469 = vmatpush1.msra.mxu0 0.0
  %470 = vmatprep.subr.mxu0 0.0
  %471 = vmatpush1.msra.mxu0 0.0
  %472 = vmatprep.subr.mxu0 0.0
  %473 = vmatpush1.msra.mxu0 0.0
  %474 = vmatprep.subr.mxu0 0.0
  %475 = vmatpush1.msra.mxu0 0.0
  %476 = vmatprep.mubr.f32.mxu0 0.0
  %477 = vmatmul.mubr.f32.gmra.mrb[0].mxu0 %v327
  %v478 = vpop.f32.mrb[0].mxu0
  %v479 = vadd.f32 %v251, %v478
  %v480 = vpop.f32.mrb[0].mxu0
  %v481 = vadd.f32 %v253, %v480
  %482 = vdwg.mxu0
  %483 = vmatprep.subr.mxu0 %v339
  %484 = vmatpush1.msra.mxu0 %v337
  %485 = vmatprep.subr.mxu0 0.0
  %486 = vmatpush1.msra.mxu0 0.0
  %487 = vmatprep.subr.mxu0 0.0
  %488 = vmatpush1.msra.mxu0 0.0
  %489 = vmatprep.subr.mxu0 0.0
  %490 = vmatpush1.msra.mxu0 0.0
  %491 = vmatprep.subr.mxu0 0.0
  %492 = vmatpush1.msra.mxu0 0.0
  %493 = vmatprep.subr.mxu0 0.0
  %494 = vmatpush1.msra.mxu0 0.0
  %495 = vmatprep.subr.mxu0 0.0
  %496 = vmatpush1.msra.mxu0 0.0
  %497 = vmatprep.subr.mxu0 0.0
  %498 = vmatpush1.msra.mxu0 0.0
  %499 = vmatprep.subr.mxu0 0.0
  %500 = vmatpush1.msra.mxu0 0.0
  %501 = vmatprep.subr.mxu0 0.0
  %502 = vmatpush1.msra.mxu0 0.0
  %503 = vmatprep.subr.mxu0 0.0
  %504 = vmatpush1.msra.mxu0 0.0
  %505 = vmatprep.subr.mxu0 0.0
  %506 = vmatpush1.msra.mxu0 0.0
  %507 = vmatprep.subr.mxu0 0.0
  %508 = vmatpush1.msra.mxu0 0.0
  %509 = vmatprep.subr.mxu0 0.0
  %510 = vmatpush1.msra.mxu0 0.0
  %511 = vmatprep.subr.mxu0 0.0
  %512 = vmatpush1.msra.mxu0 0.0
  %513 = vmatprep.subr.mxu0 0.0
  %514 = vmatpush1.msra.mxu0 0.0
  %515 = vmatprep.subr.mxu0 0.0
  %516 = vmatpush1.msra.mxu0 0.0
  %517 = vmatprep.subr.mxu0 0.0
  %518 = vmatpush1.msra.mxu0 0.0
  %519 = vmatprep.subr.mxu0 0.0
  %520 = vmatpush1.msra.mxu0 0.0
  %521 = vmatprep.subr.mxu0 0.0
  %522 = vmatpush1.msra.mxu0 0.0
  %523 = vmatprep.subr.mxu0 0.0
  %524 = vmatpush1.msra.mxu0 0.0
  %525 = vmatprep.subr.mxu0 0.0
  %526 = vmatpush1.msra.mxu0 0.0
  %527 = vmatprep.subr.mxu0 0.0
  %528 = vmatpush1.msra.mxu0 0.0
  %529 = vmatprep.subr.mxu0 0.0
  %530 = vmatpush1.msra.mxu0 0.0
  %531 = vmatprep.subr.mxu0 0.0
  %532 = vmatpush1.msra.mxu0 0.0
  %533 = vmatprep.subr.mxu0 0.0
  %534 = vmatpush1.msra.mxu0 0.0
  %535 = vmatprep.subr.mxu0 0.0
  %536 = vmatpush1.msra.mxu0 0.0
  %537 = vmatprep.subr.mxu0 0.0
  %538 = vmatpush1.msra.mxu0 0.0
  %539 = vmatprep.subr.mxu0 0.0
  %540 = vmatpush1.msra.mxu0 0.0
  %541 = vmatprep.subr.mxu0 0.0
  %542 = vmatpush1.msra.mxu0 0.0
  %543 = vmatprep.subr.mxu0 0.0
  %544 = vmatpush1.msra.mxu0 0.0
  %545 = vmatprep.subr.mxu0 0.0
  %546 = vmatpush1.msra.mxu0 0.0
  %547 = vmatprep.mubr.f32.mxu0 0.0
  %548 = vmatmul.mubr.f32.gmra.mrb[0].mxu0 %v327
  %v549 = vpop.f32.mrb[0].mxu0
  %v550 = vadd.f32 %v322, %v549
  %v551 = vpop.f32.mrb[0].mxu0
  %v552 = vadd.f32 %v324, %v551
  %553 = vdwg.mxu0
  %s554 = scalar_lea.vmem %s1, 16
  %v555 = vld [vmem:[%s554] sm:$0xff]
  %556 = vrot.lane.b32.xlu0 %v59, 126
  %v557 = vpop.permute.xlu0 %556
  %558 = vrot.lane.b32.xlu0 %v69, 126
  %v559 = vpop.permute.xlu0 %558
  %560 = vrot.lane.b32.xlu0 %v60, 126
  %v561 = vpop.permute.xlu0 %560
  %562 = vrot.lane.b32.xlu0 %v70, 126
  %v563 = vpop.permute.xlu0 %562
  %564 = vrot.lane.b32.xlu0 %v61, 126
  %v565 = vpop.permute.xlu0 %564
  %566 = vrot.lane.b32.xlu0 %v76, 126
  %v567 = vpop.permute.xlu0 %566
  %vm568 = vcmask 1031168
  %v569 = vsel %vm568, %v557, %v559
  %v570 = vsel %vm568, %v559, %v561
  %v571 = vsel %vm568, %v561, %v563
  %v572 = vsel %vm568, %v563, %v565
  %v573 = vsel %vm568, %v565, %v567
  %v575 = vsel %vm96, %v555, 0
  %v577 = vsel %vm100, %v569, 0
  %v579 = vsel %vm100, %v570, 0
  %v581 = vsel %vm100, %v571, 0
  %v583 = vsel %vm100, %v572, 0
  %v585 = vsel %vm100, %v573, 0
  %v587 = vsel %vm100, %v567, 0
  %589 = vmatprep.subr.mxu0 %v579
  %590 = vmatpush1.msra.mxu0 %v577
  %591 = vmatprep.subr.mxu0 0.0
  %592 = vmatpush1.msra.mxu0 0.0
  %593 = vmatprep.subr.mxu0 0.0
  %594 = vmatpush1.msra.mxu0 0.0
  %595 = vmatprep.subr.mxu0 0.0
  %596 = vmatpush1.msra.mxu0 0.0
  %597 = vmatprep.subr.mxu0 0.0
  %598 = vmatpush1.msra.mxu0 0.0
  %599 = vmatprep.subr.mxu0 0.0
  %600 = vmatpush1.msra.mxu0 0.0
  %601 = vmatprep.subr.mxu0 0.0
  %602 = vmatpush1.msra.mxu0 0.0
  %603 = vmatprep.subr.mxu0 0.0
  %604 = vmatpush1.msra.mxu0 0.0
  %605 = vmatprep.subr.mxu0 0.0
  %606 = vmatpush1.msra.mxu0 0.0
  %607 = vmatprep.subr.mxu0 0.0
  %608 = vmatpush1.msra.mxu0 0.0
  %609 = vmatprep.subr.mxu0 0.0
  %610 = vmatpush1.msra.mxu0 0.0
  %611 = vmatprep.subr.mxu0 0.0
  %612 = vmatpush1.msra.mxu0 0.0
  %613 = vmatprep.subr.mxu0 0.0
  %614 = vmatpush1.msra.mxu0 0.0
  %615 = vmatprep.subr.mxu0 0.0
  %616 = vmatpush1.msra.mxu0 0.0
  %617 = vmatprep.subr.mxu0 0.0
  %618 = vmatpush1.msra.mxu0 0.0
  %619 = vmatprep.subr.mxu0 0.0
  %620 = vmatpush1.msra.mxu0 0.0
  %621 = vmatprep.subr.mxu0 0.0
  %622 = vmatpush1.msra.mxu0 0.0
  %623 = vmatprep.subr.mxu0 0.0
  %624 = vmatpush1.msra.mxu0 0.0
  %625 = vmatprep.subr.mxu0 0.0
  %626 = vmatpush1.msra.mxu0 0.0
  %627 = vmatprep.subr.mxu0 0.0
  %628 = vmatpush1.msra.mxu0 0.0
  %629 = vmatprep.subr.mxu0 0.0
  %630 = vmatpush1.msra.mxu0 0.0
  %631 = vmatprep.subr.mxu0 0.0
  %632 = vmatpush1.msra.mxu0 0.0
  %633 = vmatprep.subr.mxu0 0.0
  %634 = vmatpush1.msra.mxu0 0.0
  %635 = vmatprep.subr.mxu0 0.0
  %636 = vmatpush1.msra.mxu0 0.0
  %637 = vmatprep.subr.mxu0 0.0
  %638 = vmatpush1.msra.mxu0 0.0
  %639 = vmatprep.subr.mxu0 0.0
  %640 = vmatpush1.msra.mxu0 0.0
  %641 = vmatprep.subr.mxu0 0.0
  %642 = vmatpush1.msra.mxu0 0.0
  %643 = vmatprep.subr.mxu0 0.0
  %644 = vmatpush1.msra.mxu0 0.0
  %645 = vmatprep.subr.mxu0 0.0
  %646 = vmatpush1.msra.mxu0 0.0
  %647 = vmatprep.subr.mxu0 0.0
  %648 = vmatpush1.msra.mxu0 0.0
  %649 = vmatprep.subr.mxu0 0.0
  %650 = vmatpush1.msra.mxu0 0.0
  %651 = vmatprep.subr.mxu0 0.0
  %652 = vmatpush1.msra.mxu0 0.0
  %653 = vmatprep.mubr.f32.mxu0 0.0
  %654 = vmatmul.mubr.f32.gmra.mrb[0].mxu0 %v575
  %v655 = vpop.f32.mrb[0].mxu0
  %v656 = vadd.f32 0.0, %v655
  %v657 = vpop.f32.mrb[0].mxu0
  %v658 = vadd.f32 0.0, %v657
  %659 = vdwg.mxu0
  %660 = vmatprep.subr.mxu0 %v583
  %661 = vmatpush1.msra.mxu0 %v581
  %662 = vmatprep.subr.mxu0 0.0
  %663 = vmatpush1.msra.mxu0 0.0
  %664 = vmatprep.subr.mxu0 0.0
  %665 = vmatpush1.msra.mxu0 0.0
  %666 = vmatprep.subr.mxu0 0.0
  %667 = vmatpush1.msra.mxu0 0.0
  %668 = vmatprep.subr.mxu0 0.0
  %669 = vmatpush1.msra.mxu0 0.0
  %670 = vmatprep.subr.mxu0 0.0
  %671 = vmatpush1.msra.mxu0 0.0
  %672 = vmatprep.subr.mxu0 0.0
  %673 = vmatpush1.msra.mxu0 0.0
  %674 = vmatprep.subr.mxu0 0.0
  %675 = vmatpush1.msra.mxu0 0.0
  %676 = vmatprep.subr.mxu0 0.0
  %677 = vmatpush1.msra.mxu0 0.0
  %678 = vmatprep.subr.mxu0 0.0
  %679 = vmatpush1.msra.mxu0 0.0
  %680 = vmatprep.subr.mxu0 0.0
  %681 = vmatpush1.msra.mxu0 0.0
  %682 = vmatprep.subr.mxu0 0.0
  %683 = vmatpush1.msra.mxu0 0.0
  %684 = vmatprep.subr.mxu0 0.0
  %685 = vmatpush1.msra.mxu0 0.0
  %686 = vmatprep.subr.mxu0 0.0
  %687 = vmatpush1.msra.mxu0 0.0
  %688 = vmatprep.subr.mxu0 0.0
  %689 = vmatpush1.msra.mxu0 0.0
  %690 = vmatprep.subr.mxu0 0.0
  %691 = vmatpush1.msra.mxu0 0.0
  %692 = vmatprep.subr.mxu0 0.0
  %693 = vmatpush1.msra.mxu0 0.0
  %694 = vmatprep.subr.mxu0 0.0
  %695 = vmatpush1.msra.mxu0 0.0
  %696 = vmatprep.subr.mxu0 0.0
  %697 = vmatpush1.msra.mxu0 0.0
  %698 = vmatprep.subr.mxu0 0.0
  %699 = vmatpush1.msra.mxu0 0.0
  %700 = vmatprep.subr.mxu0 0.0
  %701 = vmatpush1.msra.mxu0 0.0
  %702 = vmatprep.subr.mxu0 0.0
  %703 = vmatpush1.msra.mxu0 0.0
  %704 = vmatprep.subr.mxu0 0.0
  %705 = vmatpush1.msra.mxu0 0.0
  %706 = vmatprep.subr.mxu0 0.0
  %707 = vmatpush1.msra.mxu0 0.0
  %708 = vmatprep.subr.mxu0 0.0
  %709 = vmatpush1.msra.mxu0 0.0
  %710 = vmatprep.subr.mxu0 0.0
  %711 = vmatpush1.msra.mxu0 0.0
  %712 = vmatprep.subr.mxu0 0.0
  %713 = vmatpush1.msra.mxu0 0.0
  %714 = vmatprep.subr.mxu0 0.0
  %715 = vmatpush1.msra.mxu0 0.0
  %716 = vmatprep.subr.mxu0 0.0
  %717 = vmatpush1.msra.mxu0 0.0
  %718 = vmatprep.subr.mxu0 0.0
  %719 = vmatpush1.msra.mxu0 0.0
  %720 = vmatprep.subr.mxu0 0.0
  %721 = vmatpush1.msra.mxu0 0.0
  %722 = vmatprep.subr.mxu0 0.0
  %723 = vmatpush1.msra.mxu0 0.0
  %724 = vmatprep.mubr.f32.mxu0 0.0
  %725 = vmatmul.mubr.f32.gmra.mrb[0].mxu0 %v575
  %v726 = vpop.f32.mrb[0].mxu0
  %v727 = vadd.f32 0.0, %v726
  %v728 = vpop.f32.mrb[0].mxu0
  %v729 = vadd.f32 0.0, %v728
  %730 = vdwg.mxu0
  %731 = vmatprep.subr.mxu0 %v587
  %732 = vmatpush1.msra.mxu0 %v585
  %733 = vmatprep.subr.mxu0 0.0
  %734 = vmatpush1.msra.mxu0 0.0
  %735 = vmatprep.subr.mxu0 0.0
  %736 = vmatpush1.msra.mxu0 0.0
  %737 = vmatprep.subr.mxu0 0.0
  %738 = vmatpush1.msra.mxu0 0.0
  %739 = vmatprep.subr.mxu0 0.0
  %740 = vmatpush1.msra.mxu0 0.0
  %741 = vmatprep.subr.mxu0 0.0
  %742 = vmatpush1.msra.mxu0 0.0
  %743 = vmatprep.subr.mxu0 0.0
  %744 = vmatpush1.msra.mxu0 0.0
  %745 = vmatprep.subr.mxu0 0.0
  %746 = vmatpush1.msra.mxu0 0.0
  %747 = vmatprep.subr.mxu0 0.0
  %748 = vmatpush1.msra.mxu0 0.0
  %749 = vmatprep.subr.mxu0 0.0
  %750 = vmatpush1.msra.mxu0 0.0
  %751 = vmatprep.subr.mxu0 0.0
  %752 = vmatpush1.msra.mxu0 0.0
  %753 = vmatprep.subr.mxu0 0.0
  %754 = vmatpush1.msra.mxu0 0.0
  %755 = vmatprep.subr.mxu0 0.0
  %756 = vmatpush1.msra.mxu0 0.0
  %757 = vmatprep.subr.mxu0 0.0
  %758 = vmatpush1.msra.mxu0 0.0
  %759 = vmatprep.subr.mxu0 0.0
  %760 = vmatpush1.msra.mxu0 0.0
  %761 = vmatprep.subr.mxu0 0.0
  %762 = vmatpush1.msra.mxu0 0.0
  %763 = vmatprep.subr.mxu0 0.0
  %764 = vmatpush1.msra.mxu0 0.0
  %765 = vmatprep.subr.mxu0 0.0
  %766 = vmatpush1.msra.mxu0 0.0
  %767 = vmatprep.subr.mxu0 0.0
  %768 = vmatpush1.msra.mxu0 0.0
  %769 = vmatprep.subr.mxu0 0.0
  %770 = vmatpush1.msra.mxu0 0.0
  %771 = vmatprep.subr.mxu0 0.0
  %772 = vmatpush1.msra.mxu0 0.0
  %773 = vmatprep.subr.mxu0 0.0
  %774 = vmatpush1.msra.mxu0 0.0
  %775 = vmatprep.subr.mxu0 0.0
  %776 = vmatpush1.msra.mxu0 0.0
  %777 = vmatprep.subr.mxu0 0.0
  %778 = vmatpush1.msra.mxu0 0.0
  %779 = vmatprep.subr.mxu0 0.0
  %780 = vmatpush1.msra.mxu0 0.0
  %781 = vmatprep.subr.mxu0 0.0
  %782 = vmatpush1.msra.mxu0 0.0
  %783 = vmatprep.subr.mxu0 0.0
  %784 = vmatpush1.msra.mxu0 0.0
  %785 = vmatprep.subr.mxu0 0.0
  %786 = vmatpush1.msra.mxu0 0.0
  %787 = vmatprep.subr.mxu0 0.0
  %788 = vmatpush1.msra.mxu0 0.0
  %789 = vmatprep.subr.mxu0 0.0
  %790 = vmatpush1.msra.mxu0 0.0
  %791 = vmatprep.subr.mxu0 0.0
  %792 = vmatpush1.msra.mxu0 0.0
  %793 = vmatprep.subr.mxu0 0.0
  %794 = vmatpush1.msra.mxu0 0.0
  %795 = vmatprep.mubr.f32.mxu0 0.0
  %796 = vmatmul.mubr.f32.gmra.mrb[0].mxu0 %v575
  %v797 = vpop.f32.mrb[0].mxu0
  %v798 = vadd.f32 0.0, %v797
  %v799 = vpop.f32.mrb[0].mxu0
  %v800 = vadd.f32 0.0, %v799
  %801 = vdwg.mxu0
  %v802 = vadd.f32 %v408, %v656
  %v803 = vadd.f32 %v410, %v658
  %v804 = vadd.f32 %v479, %v727
  %v805 = vadd.f32 %v481, %v729
  %v806 = vadd.f32 %v550, %v798
  %v807 = vadd.f32 %v552, %v800
  %s808 = scalar_lea.vmem %s1, 24
  %v809 = vld [vmem:[%s808] sm:$0xff]
  %810 = vrot.lane.b32.xlu0 %v59, 110
  %v811 = vpop.permute.xlu0 %810
  %812 = vrot.lane.b32.xlu0 %v69, 110
  %v813 = vpop.permute.xlu0 %812
  %814 = vrot.lane.b32.xlu0 %v60, 110
  %v815 = vpop.permute.xlu0 %814
  %816 = vrot.lane.b32.xlu0 %v70, 110
  %v817 = vpop.permute.xlu0 %816
  %818 = vrot.lane.b32.xlu0 %v61, 110
  %v819 = vpop.permute.xlu0 %818
  %820 = vrot.lane.b32.xlu0 %v76, 110
  %v821 = vpop.permute.xlu0 %820
  %vm822 = vcmask 900096
  %v823 = vsel %vm822, %v811, %v813
  %v824 = vsel %vm822, %v813, %v815
  %v825 = vsel %vm822, %v815, %v817
  %v826 = vsel %vm822, %v817, %v819
  %v827 = vsel %vm822, %v819, %v821
  %v829 = vsel %vm96, %v809, 0
  %v831 = vsel %vm100, %v823, 0
  %v833 = vsel %vm100, %v824, 0
  %v835 = vsel %vm100, %v825, 0
  %v837 = vsel %vm100, %v826, 0
  %v839 = vsel %vm100, %v827, 0
  %v841 = vsel %vm100, %v821, 0
  %843 = vmatprep.subr.mxu0 %v833
  %844 = vmatpush1.msra.mxu0 %v831
  %845 = vmatprep.subr.mxu0 0.0
  %846 = vmatpush1.msra.mxu0 0.0
  %847 = vmatprep.subr.mxu0 0.0
  %848 = vmatpush1.msra.mxu0 0.0
  %849 = vmatprep.subr.mxu0 0.0
  %850 = vmatpush1.msra.mxu0 0.0
  %851 = vmatprep.subr.mxu0 0.0
  %852 = vmatpush1.msra.mxu0 0.0
  %853 = vmatprep.subr.mxu0 0.0
  %854 = vmatpush1.msra.mxu0 0.0
  %855 = vmatprep.subr.mxu0 0.0
  %856 = vmatpush1.msra.mxu0 0.0
  %857 = vmatprep.subr.mxu0 0.0
  %858 = vmatpush1.msra.mxu0 0.0
  %859 = vmatprep.subr.mxu0 0.0
  %860 = vmatpush1.msra.mxu0 0.0
  %861 = vmatprep.subr.mxu0 0.0
  %862 = vmatpush1.msra.mxu0 0.0
  %863 = vmatprep.subr.mxu0 0.0
  %864 = vmatpush1.msra.mxu0 0.0
  %865 = vmatprep.subr.mxu0 0.0
  %866 = vmatpush1.msra.mxu0 0.0
  %867 = vmatprep.subr.mxu0 0.0
  %868 = vmatpush1.msra.mxu0 0.0
  %869 = vmatprep.subr.mxu0 0.0
  %870 = vmatpush1.msra.mxu0 0.0
  %871 = vmatprep.subr.mxu0 0.0
  %872 = vmatpush1.msra.mxu0 0.0
  %873 = vmatprep.subr.mxu0 0.0
  %874 = vmatpush1.msra.mxu0 0.0
  %875 = vmatprep.subr.mxu0 0.0
  %876 = vmatpush1.msra.mxu0 0.0
  %877 = vmatprep.subr.mxu0 0.0
  %878 = vmatpush1.msra.mxu0 0.0
  %879 = vmatprep.subr.mxu0 0.0
  %880 = vmatpush1.msra.mxu0 0.0
  %881 = vmatprep.subr.mxu0 0.0
  %882 = vmatpush1.msra.mxu0 0.0
  %883 = vmatprep.subr.mxu0 0.0
  %884 = vmatpush1.msra.mxu0 0.0
  %885 = vmatprep.subr.mxu0 0.0
  %886 = vmatpush1.msra.mxu0 0.0
  %887 = vmatprep.subr.mxu0 0.0
  %888 = vmatpush1.msra.mxu0 0.0
  %889 = vmatprep.subr.mxu0 0.0
  %890 = vmatpush1.msra.mxu0 0.0
  %891 = vmatprep.subr.mxu0 0.0
  %892 = vmatpush1.msra.mxu0 0.0
  %893 = vmatprep.subr.mxu0 0.0
  %894 = vmatpush1.msra.mxu0 0.0
  %895 = vmatprep.subr.mxu0 0.0
  %896 = vmatpush1.msra.mxu0 0.0
  %897 = vmatprep.subr.mxu0 0.0
  %898 = vmatpush1.msra.mxu0 0.0
  %899 = vmatprep.subr.mxu0 0.0
  %900 = vmatpush1.msra.mxu0 0.0
  %901 = vmatprep.subr.mxu0 0.0
  %902 = vmatpush1.msra.mxu0 0.0
  %903 = vmatprep.subr.mxu0 0.0
  %904 = vmatpush1.msra.mxu0 0.0
  %905 = vmatprep.subr.mxu0 0.0
  %906 = vmatpush1.msra.mxu0 0.0
  %907 = vmatprep.mubr.f32.mxu0 0.0
  %908 = vmatmul.mubr.f32.gmra.mrb[0].mxu0 %v829
  %v909 = vpop.f32.mrb[0].mxu0
  %v910 = vadd.f32 0.0, %v909
  %v911 = vpop.f32.mrb[0].mxu0
  %v912 = vadd.f32 0.0, %v911
  %913 = vdwg.mxu0
  %914 = vmatprep.subr.mxu0 %v837
  %915 = vmatpush1.msra.mxu0 %v835
  %916 = vmatprep.subr.mxu0 0.0
  %917 = vmatpush1.msra.mxu0 0.0
  %918 = vmatprep.subr.mxu0 0.0
  %919 = vmatpush1.msra.mxu0 0.0
  %920 = vmatprep.subr.mxu0 0.0
  %921 = vmatpush1.msra.mxu0 0.0
  %922 = vmatprep.subr.mxu0 0.0
  %923 = vmatpush1.msra.mxu0 0.0
  %924 = vmatprep.subr.mxu0 0.0
  %925 = vmatpush1.msra.mxu0 0.0
  %926 = vmatprep.subr.mxu0 0.0
  %927 = vmatpush1.msra.mxu0 0.0
  %928 = vmatprep.subr.mxu0 0.0
  %929 = vmatpush1.msra.mxu0 0.0
  %930 = vmatprep.subr.mxu0 0.0
  %931 = vmatpush1.msra.mxu0 0.0
  %932 = vmatprep.subr.mxu0 0.0
  %933 = vmatpush1.msra.mxu0 0.0
  %934 = vmatprep.subr.mxu0 0.0
  %935 = vmatpush1.msra.mxu0 0.0
  %936 = vmatprep.subr.mxu0 0.0
  %937 = vmatpush1.msra.mxu0 0.0
  %938 = vmatprep.subr.mxu0 0.0
  %939 = vmatpush1.msra.mxu0 0.0
  %940 = vmatprep.subr.mxu0 0.0
  %941 = vmatpush1.msra.mxu0 0.0
  %942 = vmatprep.subr.mxu0 0.0
  %943 = vmatpush1.msra.mxu0 0.0
  %944 = vmatprep.subr.mxu0 0.0
  %945 = vmatpush1.msra.mxu0 0.0
  %946 = vmatprep.subr.mxu0 0.0
  %947 = vmatpush1.msra.mxu0 0.0
  %948 = vmatprep.subr.mxu0 0.0
  %949 = vmatpush1.msra.mxu0 0.0
  %950 = vmatprep.subr.mxu0 0.0
  %951 = vmatpush1.msra.mxu0 0.0
  %952 = vmatprep.subr.mxu0 0.0
  %953 = vmatpush1.msra.mxu0 0.0
  %954 = vmatprep.subr.mxu0 0.0
  %955 = vmatpush1.msra.mxu0 0.0
  %956 = vmatprep.subr.mxu0 0.0
  %957 = vmatpush1.msra.mxu0 0.0
  %958 = vmatprep.subr.mxu0 0.0
  %959 = vmatpush1.msra.mxu0 0.0
  %960 = vmatprep.subr.mxu0 0.0
  %961 = vmatpush1.msra.mxu0 0.0
  %962 = vmatprep.subr.mxu0 0.0
  %963 = vmatpush1.msra.mxu0 0.0
  %964 = vmatprep.subr.mxu0 0.0
  %965 = vmatpush1.msra.mxu0 0.0
  %966 = vmatprep.subr.mxu0 0.0
  %967 = vmatpush1.msra.mxu0 0.0
  %968 = vmatprep.subr.mxu0 0.0
  %969 = vmatpush1.msra.mxu0 0.0
  %970 = vmatprep.subr.mxu0 0.0
  %971 = vmatpush1.msra.mxu0 0.0
  %972 = vmatprep.subr.mxu0 0.0
  %973 = vmatpush1.msra.mxu0 0.0
  %974 = vmatprep.subr.mxu0 0.0
  %975 = vmatpush1.msra.mxu0 0.0
  %976 = vmatprep.subr.mxu0 0.0
  %977 = vmatpush1.msra.mxu0 0.0
  %978 = vmatprep.mubr.f32.mxu0 0.0
  %979 = vmatmul.mubr.f32.gmra.mrb[0].mxu0 %v829
  %v980 = vpop.f32.mrb[0].mxu0
  %v981 = vadd.f32 0.0, %v980
  %v982 = vpop.f32.mrb[0].mxu0
  %v983 = vadd.f32 0.0, %v982
  %984 = vdwg.mxu0
  %985 = vmatprep.subr.mxu0 %v841
  %986 = vmatpush1.msra.mxu0 %v839
  %987 = vmatprep.subr.mxu0 0.0
  %988 = vmatpush1.msra.mxu0 0.0
  %989 = vmatprep.subr.mxu0 0.0
  %990 = vmatpush1.msra.mxu0 0.0
  %991 = vmatprep.subr.mxu0 0.0
  %992 = vmatpush1.msra.mxu0 0.0
  %993 = vmatprep.subr.mxu0 0.0
  %994 = vmatpush1.msra.mxu0 0.0
  %995 = vmatprep.subr.mxu0 0.0
  %996 = vmatpush1.msra.mxu0 0.0
  %997 = vmatprep.subr.mxu0 0.0
  %998 = vmatpush1.msra.mxu0 0.0
  %999 = vmatprep.subr.mxu0 0.0
  %1000 = vmatpush1.msra.mxu0 0.0
  %1001 = vmatprep.subr.mxu0 0.0
  %1002 = vmatpush1.msra.mxu0 0.0
  %1003 = vmatprep.subr.mxu0 0.0
  %1004 = vmatpush1.msra.mxu0 0.0
  %1005 = vmatprep.subr.mxu0 0.0
  %1006 = vmatpush1.msra.mxu0 0.0
  %1007 = vmatprep.subr.mxu0 0.0
  %1008 = vmatpush1.msra.mxu0 0.0
  %1009 = vmatprep.subr.mxu0 0.0
  %1010 = vmatpush1.msra.mxu0 0.0
  %1011 = vmatprep.subr.mxu0 0.0
  %1012 = vmatpush1.msra.mxu0 0.0
  %1013 = vmatprep.subr.mxu0 0.0
  %1014 = vmatpush1.msra.mxu0 0.0
  %1015 = vmatprep.subr.mxu0 0.0
  %1016 = vmatpush1.msra.mxu0 0.0
  %1017 = vmatprep.subr.mxu0 0.0
  %1018 = vmatpush1.msra.mxu0 0.0
  %1019 = vmatprep.subr.mxu0 0.0
  %1020 = vmatpush1.msra.mxu0 0.0
  %1021 = vmatprep.subr.mxu0 0.0
  %1022 = vmatpush1.msra.mxu0 0.0
  %1023 = vmatprep.subr.mxu0 0.0
  %1024 = vmatpush1.msra.mxu0 0.0
  %1025 = vmatprep.subr.mxu0 0.0
  %1026 = vmatpush1.msra.mxu0 0.0
  %1027 = vmatprep.subr.mxu0 0.0
  %1028 = vmatpush1.msra.mxu0 0.0
  %1029 = vmatprep.subr.mxu0 0.0
  %1030 = vmatpush1.msra.mxu0 0.0
  %1031 = vmatprep.subr.mxu0 0.0
  %1032 = vmatpush1.msra.mxu0 0.0
  %1033 = vmatprep.subr.mxu0 0.0
  %1034 = vmatpush1.msra.mxu0 0.0
  %1035 = vmatprep.subr.mxu0 0.0
  %1036 = vmatpush1.msra.mxu0 0.0
  %1037 = vmatprep.subr.mxu0 0.0
  %1038 = vmatpush1.msra.mxu0 0.0
  %1039 = vmatprep.subr.mxu0 0.0
  %1040 = vmatpush1.msra.mxu0 0.0
  %1041 = vmatprep.subr.mxu0 0.0
  %1042 = vmatpush1.msra.mxu0 0.0
  %1043 = vmatprep.subr.mxu0 0.0
  %1044 = vmatpush1.msra.mxu0 0.0
  %1045 = vmatprep.subr.mxu0 0.0
  %1046 = vmatpush1.msra.mxu0 0.0
  %1047 = vmatprep.subr.mxu0 0.0
  %1048 = vmatpush1.msra.mxu0 0.0
  %1049 = vmatprep.mubr.f32.mxu0 0.0
  %1050 = vmatmul.mubr.f32.gmra.mrb[0].mxu0 %v829
  %v1051 = vpop.f32.mrb[0].mxu0
  %v1052 = vadd.f32 0.0, %v1051
  %v1053 = vpop.f32.mrb[0].mxu0
  %v1054 = vadd.f32 0.0, %v1053
  %1055 = vdwg.mxu0
  %v1056 = vadd.f32 %v802, %v910
  %v1057 = vadd.f32 %v803, %v912
  %v1058 = vadd.f32 %v804, %v981
  %v1059 = vadd.f32 %v805, %v983
  %v1060 = vadd.f32 %v806, %v1052
  %v1061 = vadd.f32 %v807, %v1054
  %s1062 = scalar_lea.vmem %s1, 32
  %v1063 = vld [vmem:[%s1062] sm:$0xff]
  %1064 = vrot.lane.b32.xlu0 %v59, 109
  %v1065 = vpop.permute.xlu0 %1064
  %1066 = vrot.lane.b32.xlu0 %v69, 109
  %v1067 = vpop.permute.xlu0 %1066
  %1068 = vrot.lane.b32.xlu0 %v60, 109
  %v1069 = vpop.permute.xlu0 %1068
  %1070 = vrot.lane.b32.xlu0 %v70, 109
  %v1071 = vpop.permute.xlu0 %1070
  %1072 = vrot.lane.b32.xlu0 %v61, 109
  %v1073 = vpop.permute.xlu0 %1072
  %1074 = vrot.lane.b32.xlu0 %v76, 109
  %v1075 = vpop.permute.xlu0 %1074
  %vm1076 = vcmask 891904
  %v1077 = vsel %vm1076, %v1065, %v1067
  %v1078 = vsel %vm1076, %v1067, %v1069
  %v1079 = vsel %vm1076, %v1069, %v1071
  %v1080 = vsel %vm1076, %v1071, %v1073
  %v1081 = vsel %vm1076, %v1073, %v1075
  %v1083 = vsel %vm96, %v1063, 0
  %v1085 = vsel %vm100, %v1077, 0
  %v1087 = vsel %vm100, %v1078, 0
  %v1089 = vsel %vm100, %v1079, 0
  %v1091 = vsel %vm100, %v1080, 0
  %v1093 = vsel %vm100, %v1081, 0
  %v1095 = vsel %vm100, %v1075, 0
  %1097 = vmatprep.subr.mxu0 %v1087
  %1098 = vmatpush1.msra.mxu0 %v1085
  %1099 = vmatprep.subr.mxu0 0.0
  %1100 = vmatpush1.msra.mxu0 0.0
  %1101 = vmatprep.subr.mxu0 0.0
  %1102 = vmatpush1.msra.mxu0 0.0
  %1103 = vmatprep.subr.mxu0 0.0
  %1104 = vmatpush1.msra.mxu0 0.0
  %1105 = vmatprep.subr.mxu0 0.0
  %1106 = vmatpush1.msra.mxu0 0.0
  %1107 = vmatprep.subr.mxu0 0.0
  %1108 = vmatpush1.msra.mxu0 0.0
  %1109 = vmatprep.subr.mxu0 0.0
  %1110 = vmatpush1.msra.mxu0 0.0
  %1111 = vmatprep.subr.mxu0 0.0
  %1112 = vmatpush1.msra.mxu0 0.0
  %1113 = vmatprep.subr.mxu0 0.0
  %1114 = vmatpush1.msra.mxu0 0.0
  %1115 = vmatprep.subr.mxu0 0.0
  %1116 = vmatpush1.msra.mxu0 0.0
  %1117 = vmatprep.subr.mxu0 0.0
  %1118 = vmatpush1.msra.mxu0 0.0
  %1119 = vmatprep.subr.mxu0 0.0
  %1120 = vmatpush1.msra.mxu0 0.0
  %1121 = vmatprep.subr.mxu0 0.0
  %1122 = vmatpush1.msra.mxu0 0.0
  %1123 = vmatprep.subr.mxu0 0.0
  %1124 = vmatpush1.msra.mxu0 0.0
  %1125 = vmatprep.subr.mxu0 0.0
  %1126 = vmatpush1.msra.mxu0 0.0
  %1127 = vmatprep.subr.mxu0 0.0
  %1128 = vmatpush1.msra.mxu0 0.0
  %1129 = vmatprep.subr.mxu0 0.0
  %1130 = vmatpush1.msra.mxu0 0.0
  %1131 = vmatprep.subr.mxu0 0.0
  %1132 = vmatpush1.msra.mxu0 0.0
  %1133 = vmatprep.subr.mxu0 0.0
  %1134 = vmatpush1.msra.mxu0 0.0
  %1135 = vmatprep.subr.mxu0 0.0
  %1136 = vmatpush1.msra.mxu0 0.0
  %1137 = vmatprep.subr.mxu0 0.0
  %1138 = vmatpush1.msra.mxu0 0.0
  %1139 = vmatprep.subr.mxu0 0.0
  %1140 = vmatpush1.msra.mxu0 0.0
  %1141 = vmatprep.subr.mxu0 0.0
  %1142 = vmatpush1.msra.mxu0 0.0
  %1143 = vmatprep.subr.mxu0 0.0
  %1144 = vmatpush1.msra.mxu0 0.0
  %1145 = vmatprep.subr.mxu0 0.0
  %1146 = vmatpush1.msra.mxu0 0.0
  %1147 = vmatprep.subr.mxu0 0.0
  %1148 = vmatpush1.msra.mxu0 0.0
  %1149 = vmatprep.subr.mxu0 0.0
  %1150 = vmatpush1.msra.mxu0 0.0
  %1151 = vmatprep.subr.mxu0 0.0
  %1152 = vmatpush1.msra.mxu0 0.0
  %1153 = vmatprep.subr.mxu0 0.0
  %1154 = vmatpush1.msra.mxu0 0.0
  %1155 = vmatprep.subr.mxu0 0.0
  %1156 = vmatpush1.msra.mxu0 0.0
  %1157 = vmatprep.subr.mxu0 0.0
  %1158 = vmatpush1.msra.mxu0 0.0
  %1159 = vmatprep.subr.mxu0 0.0
  %1160 = vmatpush1.msra.mxu0 0.0
  %1161 = vmatprep.mubr.f32.mxu0 0.0
  %1162 = vmatmul.mubr.f32.gmra.mrb[0].mxu0 %v1083
  %v1163 = vpop.f32.mrb[0].mxu0
  %v1164 = vadd.f32 0.0, %v1163
  %v1165 = vpop.f32.mrb[0].mxu0
  %v1166 = vadd.f32 0.0, %v1165
  %1167 = vdwg.mxu0
  %1168 = vmatprep.subr.mxu0 %v1091
  %1169 = vmatpush1.msra.mxu0 %v1089
  %1170 = vmatprep.subr.mxu0 0.0
  %1171 = vmatpush1.msra.mxu0 0.0
  %1172 = vmatprep.subr.mxu0 0.0
  %1173 = vmatpush1.msra.mxu0 0.0
  %1174 = vmatprep.subr.mxu0 0.0
  %1175 = vmatpush1.msra.mxu0 0.0
  %1176 = vmatprep.subr.mxu0 0.0
  %1177 = vmatpush1.msra.mxu0 0.0
  %1178 = vmatprep.subr.mxu0 0.0
  %1179 = vmatpush1.msra.mxu0 0.0
  %1180 = vmatprep.subr.mxu0 0.0
  %1181 = vmatpush1.msra.mxu0 0.0
  %1182 = vmatprep.subr.mxu0 0.0
  %1183 = vmatpush1.msra.mxu0 0.0
  %1184 = vmatprep.subr.mxu0 0.0
  %1185 = vmatpush1.msra.mxu0 0.0
  %1186 = vmatprep.subr.mxu0 0.0
  %1187 = vmatpush1.msra.mxu0 0.0
  %1188 = vmatprep.subr.mxu0 0.0
  %1189 = vmatpush1.msra.mxu0 0.0
  %1190 = vmatprep.subr.mxu0 0.0
  %1191 = vmatpush1.msra.mxu0 0.0
  %1192 = vmatprep.subr.mxu0 0.0
  %1193 = vmatpush1.msra.mxu0 0.0
  %1194 = vmatprep.subr.mxu0 0.0
  %1195 = vmatpush1.msra.mxu0 0.0
  %1196 = vmatprep.subr.mxu0 0.0
  %1197 = vmatpush1.msra.mxu0 0.0
  %1198 = vmatprep.subr.mxu0 0.0
  %1199 = vmatpush1.msra.mxu0 0.0
  %1200 = vmatprep.subr.mxu0 0.0
  %1201 = vmatpush1.msra.mxu0 0.0
  %1202 = vmatprep.subr.mxu0 0.0
  %1203 = vmatpush1.msra.mxu0 0.0
  %1204 = vmatprep.subr.mxu0 0.0
  %1205 = vmatpush1.msra.mxu0 0.0
  %1206 = vmatprep.subr.mxu0 0.0
  %1207 = vmatpush1.msra.mxu0 0.0
  %1208 = vmatprep.subr.mxu0 0.0
  %1209 = vmatpush1.msra.mxu0 0.0
  %1210 = vmatprep.subr.mxu0 0.0
  %1211 = vmatpush1.msra.mxu0 0.0
  %1212 = vmatprep.subr.mxu0 0.0
  %1213 = vmatpush1.msra.mxu0 0.0
  %1214 = vmatprep.subr.mxu0 0.0
  %1215 = vmatpush1.msra.mxu0 0.0
  %1216 = vmatprep.subr.mxu0 0.0
  %1217 = vmatpush1.msra.mxu0 0.0
  %1218 = vmatprep.subr.mxu0 0.0
  %1219 = vmatpush1.msra.mxu0 0.0
  %1220 = vmatprep.subr.mxu0 0.0
  %1221 = vmatpush1.msra.mxu0 0.0
  %1222 = vmatprep.subr.mxu0 0.0
  %1223 = vmatpush1.msra.mxu0 0.0
  %1224 = vmatprep.subr.mxu0 0.0
  %1225 = vmatpush1.msra.mxu0 0.0
  %1226 = vmatprep.subr.mxu0 0.0
  %1227 = vmatpush1.msra.mxu0 0.0
  %1228 = vmatprep.subr.mxu0 0.0
  %1229 = vmatpush1.msra.mxu0 0.0
  %1230 = vmatprep.subr.mxu0 0.0
  %1231 = vmatpush1.msra.mxu0 0.0
  %1232 = vmatprep.mubr.f32.mxu0 0.0
  %1233 = vmatmul.mubr.f32.gmra.mrb[0].mxu0 %v1083
  %v1234 = vpop.f32.mrb[0].mxu0
  %v1235 = vadd.f32 0.0, %v1234
  %v1236 = vpop.f32.mrb[0].mxu0
  %v1237 = vadd.f32 0.0, %v1236
  %1238 = vdwg.mxu0
  %1239 = vmatprep.subr.mxu0 %v1095
  %1240 = vmatpush1.msra.mxu0 %v1093
  %1241 = vmatprep.subr.mxu0 0.0
  %1242 = vmatpush1.msra.mxu0 0.0
  %1243 = vmatprep.subr.mxu0 0.0
  %1244 = vmatpush1.msra.mxu0 0.0
  %1245 = vmatprep.subr.mxu0 0.0
  %1246 = vmatpush1.msra.mxu0 0.0
  %1247 = vmatprep.subr.mxu0 0.0
  %1248 = vmatpush1.msra.mxu0 0.0
  %1249 = vmatprep.subr.mxu0 0.0
  %1250 = vmatpush1.msra.mxu0 0.0
  %1251 = vmatprep.subr.mxu0 0.0
  %1252 = vmatpush1.msra.mxu0 0.0
  %1253 = vmatprep.subr.mxu0 0.0
  %1254 = vmatpush1.msra.mxu0 0.0
  %1255 = vmatprep.subr.mxu0 0.0
  %1256 = vmatpush1.msra.mxu0 0.0
  %1257 = vmatprep.subr.mxu0 0.0
  %1258 = vmatpush1.msra.mxu0 0.0
  %1259 = vmatprep.subr.mxu0 0.0
  %1260 = vmatpush1.msra.mxu0 0.0
  %1261 = vmatprep.subr.mxu0 0.0
  %1262 = vmatpush1.msra.mxu0 0.0
  %1263 = vmatprep.subr.mxu0 0.0
  %1264 = vmatpush1.msra.mxu0 0.0
  %1265 = vmatprep.subr.mxu0 0.0
  %1266 = vmatpush1.msra.mxu0 0.0
  %1267 = vmatprep.subr.mxu0 0.0
  %1268 = vmatpush1.msra.mxu0 0.0
  %1269 = vmatprep.subr.mxu0 0.0
  %1270 = vmatpush1.msra.mxu0 0.0
  %1271 = vmatprep.subr.mxu0 0.0
  %1272 = vmatpush1.msra.mxu0 0.0
  %1273 = vmatprep.subr.mxu0 0.0
  %1274 = vmatpush1.msra.mxu0 0.0
  %1275 = vmatprep.subr.mxu0 0.0
  %1276 = vmatpush1.msra.mxu0 0.0
  %1277 = vmatprep.subr.mxu0 0.0
  %1278 = vmatpush1.msra.mxu0 0.0
  %1279 = vmatprep.subr.mxu0 0.0
  %1280 = vmatpush1.msra.mxu0 0.0
  %1281 = vmatprep.subr.mxu0 0.0
  %1282 = vmatpush1.msra.mxu0 0.0
  %1283 = vmatprep.subr.mxu0 0.0
  %1284 = vmatpush1.msra.mxu0 0.0
  %1285 = vmatprep.subr.mxu0 0.0
  %1286 = vmatpush1.msra.mxu0 0.0
  %1287 = vmatprep.subr.mxu0 0.0
  %1288 = vmatpush1.msra.mxu0 0.0
  %1289 = vmatprep.subr.mxu0 0.0
  %1290 = vmatpush1.msra.mxu0 0.0
  %1291 = vmatprep.subr.mxu0 0.0
  %1292 = vmatpush1.msra.mxu0 0.0
  %1293 = vmatprep.subr.mxu0 0.0
  %1294 = vmatpush1.msra.mxu0 0.0
  %1295 = vmatprep.subr.mxu0 0.0
  %1296 = vmatpush1.msra.mxu0 0.0
  %1297 = vmatprep.subr.mxu0 0.0
  %1298 = vmatpush1.msra.mxu0 0.0
  %1299 = vmatprep.subr.mxu0 0.0
  %1300 = vmatpush1.msra.mxu0 0.0
  %1301 = vmatprep.subr.mxu0 0.0
  %1302 = vmatpush1.msra.mxu0 0.0
  %1303 = vmatprep.mubr.f32.mxu0 0.0
  %1304 = vmatmul.mubr.f32.gmra.mrb[0].mxu0 %v1083
  %v1305 = vpop.f32.mrb[0].mxu0
  %v1306 = vadd.f32 0.0, %v1305
  %v1307 = vpop.f32.mrb[0].mxu0
  %v1308 = vadd.f32 0.0, %v1307
  %1309 = vdwg.mxu0
  %v1310 = vadd.f32 %v1056, %v1164
  %v1311 = vadd.f32 %v1057, %v1166
  %v1312 = vadd.f32 %v1058, %v1235
  %v1313 = vadd.f32 %v1059, %v1237
  %v1314 = vadd.f32 %v1060, %v1306
  %v1315 = vadd.f32 %v1061, %v1308
  %s1316 = scalar_lea.vmem %s1, 40
  %v1317 = vld [vmem:[%s1316] sm:$0xff]
  %1318 = vrot.lane.b32.xlu0 %v59, 108
  %v1319 = vpop.permute.xlu0 %1318
  %1320 = vrot.lane.b32.xlu0 %v69, 108
  %v1321 = vpop.permute.xlu0 %1320
  %1322 = vrot.lane.b32.xlu0 %v60, 108
  %v1323 = vpop.permute.xlu0 %1322
  %1324 = vrot.lane.b32.xlu0 %v70, 108
  %v1325 = vpop.permute.xlu0 %1324
  %1326 = vrot.lane.b32.xlu0 %v61, 108
  %v1327 = vpop.permute.xlu0 %1326
  %1328 = vrot.lane.b32.xlu0 %v76, 108
  %v1329 = vpop.permute.xlu0 %1328
  %vm1330 = vcmask 883712
  %v1331 = vsel %vm1330, %v1319, %v1321
  %v1332 = vsel %vm1330, %v1321, %v1323
  %v1333 = vsel %vm1330, %v1323, %v1325
  %v1334 = vsel %vm1330, %v1325, %v1327
  %v1335 = vsel %vm1330, %v1327, %v1329
  %v1337 = vsel %vm96, %v1317, 0
  %v1339 = vsel %vm100, %v1331, 0
  %v1341 = vsel %vm100, %v1332, 0
  %v1343 = vsel %vm100, %v1333, 0
  %v1345 = vsel %vm100, %v1334, 0
  %v1347 = vsel %vm100, %v1335, 0
  %v1349 = vsel %vm100, %v1329, 0
  %1351 = vmatprep.subr.mxu0 %v1341
  %1352 = vmatpush1.msra.mxu0 %v1339
  %1353 = vmatprep.subr.mxu0 0.0
  %1354 = vmatpush1.msra.mxu0 0.0
  %1355 = vmatprep.subr.mxu0 0.0
  %1356 = vmatpush1.msra.mxu0 0.0
  %1357 = vmatprep.subr.mxu0 0.0
  %1358 = vmatpush1.msra.mxu0 0.0
  %1359 = vmatprep.subr.mxu0 0.0
  %1360 = vmatpush1.msra.mxu0 0.0
  %1361 = vmatprep.subr.mxu0 0.0
  %1362 = vmatpush1.msra.mxu0 0.0
  %1363 = vmatprep.subr.mxu0 0.0
  %1364 = vmatpush1.msra.mxu0 0.0
  %1365 = vmatprep.subr.mxu0 0.0
  %1366 = vmatpush1.msra.mxu0 0.0
  %1367 = vmatprep.subr.mxu0 0.0
  %1368 = vmatpush1.msra.mxu0 0.0
  %1369 = vmatprep.subr.mxu0 0.0
  %1370 = vmatpush1.msra.mxu0 0.0
  %1371 = vmatprep.subr.mxu0 0.0
  %1372 = vmatpush1.msra.mxu0 0.0
  %1373 = vmatprep.subr.mxu0 0.0
  %1374 = vmatpush1.msra.mxu0 0.0
  %1375 = vmatprep.subr.mxu0 0.0
  %1376 = vmatpush1.msra.mxu0 0.0
  %1377 = vmatprep.subr.mxu0 0.0
  %1378 = vmatpush1.msra.mxu0 0.0
  %1379 = vmatprep.subr.mxu0 0.0
  %1380 = vmatpush1.msra.mxu0 0.0
  %1381 = vmatprep.subr.mxu0 0.0
  %1382 = vmatpush1.msra.mxu0 0.0
  %1383 = vmatprep.subr.mxu0 0.0
  %1384 = vmatpush1.msra.mxu0 0.0
  %1385 = vmatprep.subr.mxu0 0.0
  %1386 = vmatpush1.msra.mxu0 0.0
  %1387 = vmatprep.subr.mxu0 0.0
  %1388 = vmatpush1.msra.mxu0 0.0
  %1389 = vmatprep.subr.mxu0 0.0
  %1390 = vmatpush1.msra.mxu0 0.0
  %1391 = vmatprep.subr.mxu0 0.0
  %1392 = vmatpush1.msra.mxu0 0.0
  %1393 = vmatprep.subr.mxu0 0.0
  %1394 = vmatpush1.msra.mxu0 0.0
  %1395 = vmatprep.subr.mxu0 0.0
  %1396 = vmatpush1.msra.mxu0 0.0
  %1397 = vmatprep.subr.mxu0 0.0
  %1398 = vmatpush1.msra.mxu0 0.0
  %1399 = vmatprep.subr.mxu0 0.0
  %1400 = vmatpush1.msra.mxu0 0.0
  %1401 = vmatprep.subr.mxu0 0.0
  %1402 = vmatpush1.msra.mxu0 0.0
  %1403 = vmatprep.subr.mxu0 0.0
  %1404 = vmatpush1.msra.mxu0 0.0
  %1405 = vmatprep.subr.mxu0 0.0
  %1406 = vmatpush1.msra.mxu0 0.0
  %1407 = vmatprep.subr.mxu0 0.0
  %1408 = vmatpush1.msra.mxu0 0.0
  %1409 = vmatprep.subr.mxu0 0.0
  %1410 = vmatpush1.msra.mxu0 0.0
  %1411 = vmatprep.subr.mxu0 0.0
  %1412 = vmatpush1.msra.mxu0 0.0
  %1413 = vmatprep.subr.mxu0 0.0
  %1414 = vmatpush1.msra.mxu0 0.0
  %1415 = vmatprep.mubr.f32.mxu0 0.0
  %1416 = vmatmul.mubr.f32.gmra.mrb[0].mxu0 %v1337
  %v1417 = vpop.f32.mrb[0].mxu0
  %v1418 = vadd.f32 0.0, %v1417
  %v1419 = vpop.f32.mrb[0].mxu0
  %v1420 = vadd.f32 0.0, %v1419
  %1421 = vdwg.mxu0
  %1422 = vmatprep.subr.mxu0 %v1345
  %1423 = vmatpush1.msra.mxu0 %v1343
  %1424 = vmatprep.subr.mxu0 0.0
  %1425 = vmatpush1.msra.mxu0 0.0
  %1426 = vmatprep.subr.mxu0 0.0
  %1427 = vmatpush1.msra.mxu0 0.0
  %1428 = vmatprep.subr.mxu0 0.0
  %1429 = vmatpush1.msra.mxu0 0.0
  %1430 = vmatprep.subr.mxu0 0.0
  %1431 = vmatpush1.msra.mxu0 0.0
  %1432 = vmatprep.subr.mxu0 0.0
  %1433 = vmatpush1.msra.mxu0 0.0
  %1434 = vmatprep.subr.mxu0 0.0
  %1435 = vmatpush1.msra.mxu0 0.0
  %1436 = vmatprep.subr.mxu0 0.0
  %1437 = vmatpush1.msra.mxu0 0.0
  %1438 = vmatprep.subr.mxu0 0.0
  %1439 = vmatpush1.msra.mxu0 0.0
  %1440 = vmatprep.subr.mxu0 0.0
  %1441 = vmatpush1.msra.mxu0 0.0
  %1442 = vmatprep.subr.mxu0 0.0
  %1443 = vmatpush1.msra.mxu0 0.0
  %1444 = vmatprep.subr.mxu0 0.0
  %1445 = vmatpush1.msra.mxu0 0.0
  %1446 = vmatprep.subr.mxu0 0.0
  %1447 = vmatpush1.msra.mxu0 0.0
  %1448 = vmatprep.subr.mxu0 0.0
  %1449 = vmatpush1.msra.mxu0 0.0
  %1450 = vmatprep.subr.mxu0 0.0
  %1451 = vmatpush1.msra.mxu0 0.0
  %1452 = vmatprep.subr.mxu0 0.0
  %1453 = vmatpush1.msra.mxu0 0.0
  %1454 = vmatprep.subr.mxu0 0.0
  %1455 = vmatpush1.msra.mxu0 0.0
  %1456 = vmatprep.subr.mxu0 0.0
  %1457 = vmatpush1.msra.mxu0 0.0
  %1458 = vmatprep.subr.mxu0 0.0
  %1459 = vmatpush1.msra.mxu0 0.0
  %1460 = vmatprep.subr.mxu0 0.0
  %1461 = vmatpush1.msra.mxu0 0.0
  %1462 = vmatprep.subr.mxu0 0.0
  %1463 = vmatpush1.msra.mxu0 0.0
  %1464 = vmatprep.subr.mxu0 0.0
  %1465 = vmatpush1.msra.mxu0 0.0
  %1466 = vmatprep.subr.mxu0 0.0
  %1467 = vmatpush1.msra.mxu0 0.0
  %1468 = vmatprep.subr.mxu0 0.0
  %1469 = vmatpush1.msra.mxu0 0.0
  %1470 = vmatprep.subr.mxu0 0.0
  %1471 = vmatpush1.msra.mxu0 0.0
  %1472 = vmatprep.subr.mxu0 0.0
  %1473 = vmatpush1.msra.mxu0 0.0
  %1474 = vmatprep.subr.mxu0 0.0
  %1475 = vmatpush1.msra.mxu0 0.0
  %1476 = vmatprep.subr.mxu0 0.0
  %1477 = vmatpush1.msra.mxu0 0.0
  %1478 = vmatprep.subr.mxu0 0.0
  %1479 = vmatpush1.msra.mxu0 0.0
  %1480 = vmatprep.subr.mxu0 0.0
  %1481 = vmatpush1.msra.mxu0 0.0
  %1482 = vmatprep.subr.mxu0 0.0
  %1483 = vmatpush1.msra.mxu0 0.0
  %1484 = vmatprep.subr.mxu0 0.0
  %1485 = vmatpush1.msra.mxu0 0.0
  %1486 = vmatprep.mubr.f32.mxu0 0.0
  %1487 = vmatmul.mubr.f32.gmra.mrb[0].mxu0 %v1337
  %v1488 = vpop.f32.mrb[0].mxu0
  %v1489 = vadd.f32 0.0, %v1488
  %v1490 = vpop.f32.mrb[0].mxu0
  %v1491 = vadd.f32 0.0, %v1490
  %1492 = vdwg.mxu0
  %1493 = vmatprep.subr.mxu0 %v1349
  %1494 = vmatpush1.msra.mxu0 %v1347
  %1495 = vmatprep.subr.mxu0 0.0
  %1496 = vmatpush1.msra.mxu0 0.0
  %1497 = vmatprep.subr.mxu0 0.0
  %1498 = vmatpush1.msra.mxu0 0.0
  %1499 = vmatprep.subr.mxu0 0.0
  %1500 = vmatpush1.msra.mxu0 0.0
  %1501 = vmatprep.subr.mxu0 0.0
  %1502 = vmatpush1.msra.mxu0 0.0
  %1503 = vmatprep.subr.mxu0 0.0
  %1504 = vmatpush1.msra.mxu0 0.0
  %1505 = vmatprep.subr.mxu0 0.0
  %1506 = vmatpush1.msra.mxu0 0.0
  %1507 = vmatprep.subr.mxu0 0.0
  %1508 = vmatpush1.msra.mxu0 0.0
  %1509 = vmatprep.subr.mxu0 0.0
  %1510 = vmatpush1.msra.mxu0 0.0
  %1511 = vmatprep.subr.mxu0 0.0
  %1512 = vmatpush1.msra.mxu0 0.0
  %1513 = vmatprep.subr.mxu0 0.0
  %1514 = vmatpush1.msra.mxu0 0.0
  %1515 = vmatprep.subr.mxu0 0.0
  %1516 = vmatpush1.msra.mxu0 0.0
  %1517 = vmatprep.subr.mxu0 0.0
  %1518 = vmatpush1.msra.mxu0 0.0
  %1519 = vmatprep.subr.mxu0 0.0
  %1520 = vmatpush1.msra.mxu0 0.0
  %1521 = vmatprep.subr.mxu0 0.0
  %1522 = vmatpush1.msra.mxu0 0.0
  %1523 = vmatprep.subr.mxu0 0.0
  %1524 = vmatpush1.msra.mxu0 0.0
  %1525 = vmatprep.subr.mxu0 0.0
  %1526 = vmatpush1.msra.mxu0 0.0
  %1527 = vmatprep.subr.mxu0 0.0
  %1528 = vmatpush1.msra.mxu0 0.0
  %1529 = vmatprep.subr.mxu0 0.0
  %1530 = vmatpush1.msra.mxu0 0.0
  %1531 = vmatprep.subr.mxu0 0.0
  %1532 = vmatpush1.msra.mxu0 0.0
  %1533 = vmatprep.subr.mxu0 0.0
  %1534 = vmatpush1.msra.mxu0 0.0
  %1535 = vmatprep.subr.mxu0 0.0
  %1536 = vmatpush1.msra.mxu0 0.0
  %1537 = vmatprep.subr.mxu0 0.0
  %1538 = vmatpush1.msra.mxu0 0.0
  %1539 = vmatprep.subr.mxu0 0.0
  %1540 = vmatpush1.msra.mxu0 0.0
  %1541 = vmatprep.subr.mxu0 0.0
  %1542 = vmatpush1.msra.mxu0 0.0
  %1543 = vmatprep.subr.mxu0 0.0
  %1544 = vmatpush1.msra.mxu0 0.0
  %1545 = vmatprep.subr.mxu0 0.0
  %1546 = vmatpush1.msra.mxu0 0.0
  %1547 = vmatprep.subr.mxu0 0.0
  %1548 = vmatpush1.msra.mxu0 0.0
  %1549 = vmatprep.subr.mxu0 0.0
  %1550 = vmatpush1.msra.mxu0 0.0
  %1551 = vmatprep.subr.mxu0 0.0
  %1552 = vmatpush1.msra.mxu0 0.0
  %1553 = vmatprep.subr.mxu0 0.0
  %1554 = vmatpush1.msra.mxu0 0.0
  %1555 = vmatprep.subr.mxu0 0.0
  %1556 = vmatpush1.msra.mxu0 0.0
  %1557 = vmatprep.mubr.f32.mxu0 0.0
  %1558 = vmatmul.mubr.f32.gmra.mrb[0].mxu0 %v1337
  %v1559 = vpop.f32.mrb[0].mxu0
  %v1560 = vadd.f32 0.0, %v1559
  %v1561 = vpop.f32.mrb[0].mxu0
  %v1562 = vadd.f32 0.0, %v1561
  %1563 = vdwg.mxu0
  %v1564 = vadd.f32 %v1310, %v1418
  %v1565 = vadd.f32 %v1311, %v1420
  %v1566 = vadd.f32 %v1312, %v1489
  %v1567 = vadd.f32 %v1313, %v1491
  %v1568 = vadd.f32 %v1314, %v1560
  %v1569 = vadd.f32 %v1315, %v1562
  %s1570 = scalar_lea.vmem %s1, 48
  %v1571 = vld [vmem:[%s1570] sm:$0xff]
  %1572 = vrot.lane.b32.xlu0 %v59, 92
  %v1573 = vpop.permute.xlu0 %1572
  %1574 = vrot.lane.b32.xlu0 %v69, 92
  %v1575 = vpop.permute.xlu0 %1574
  %1576 = vrot.lane.b32.xlu0 %v60, 92
  %v1577 = vpop.permute.xlu0 %1576
  %1578 = vrot.lane.b32.xlu0 %v70, 92
  %v1579 = vpop.permute.xlu0 %1578
  %1580 = vrot.lane.b32.xlu0 %v61, 92
  %v1581 = vpop.permute.xlu0 %1580
  %1582 = vrot.lane.b32.xlu0 %v76, 92
  %v1583 = vpop.permute.xlu0 %1582
  %vm1584 = vcmask 752640
  %v1585 = vsel %vm1584, %v1573, %v1575
  %v1586 = vsel %vm1584, %v1575, %v1577
  %v1587 = vsel %vm1584, %v1577, %v1579
  %v1588 = vsel %vm1584, %v1579, %v1581
  %v1589 = vsel %vm1584, %v1581, %v1583
  %v1591 = vsel %vm96, %v1571, 0
  %v1593 = vsel %vm100, %v1585, 0
  %v1595 = vsel %vm100, %v1586, 0
  %v1597 = vsel %vm100, %v1587, 0
  %v1599 = vsel %vm100, %v1588, 0
  %v1601 = vsel %vm100, %v1589, 0
  %v1603 = vsel %vm100, %v1583, 0
  %1605 = vmatprep.subr.mxu0 %v1595
  %1606 = vmatpush1.msra.mxu0 %v1593
  %1607 = vmatprep.subr.mxu0 0.0
  %1608 = vmatpush1.msra.mxu0 0.0
  %1609 = vmatprep.subr.mxu0 0.0
  %1610 = vmatpush1.msra.mxu0 0.0
  %1611 = vmatprep.subr.mxu0 0.0
  %1612 = vmatpush1.msra.mxu0 0.0
  %1613 = vmatprep.subr.mxu0 0.0
  %1614 = vmatpush1.msra.mxu0 0.0
  %1615 = vmatprep.subr.mxu0 0.0
  %1616 = vmatpush1.msra.mxu0 0.0
  %1617 = vmatprep.subr.mxu0 0.0
  %1618 = vmatpush1.msra.mxu0 0.0
  %1619 = vmatprep.subr.mxu0 0.0
  %1620 = vmatpush1.msra.mxu0 0.0
  %1621 = vmatprep.subr.mxu0 0.0
  %1622 = vmatpush1.msra.mxu0 0.0
  %1623 = vmatprep.subr.mxu0 0.0
  %1624 = vmatpush1.msra.mxu0 0.0
  %1625 = vmatprep.subr.mxu0 0.0
  %1626 = vmatpush1.msra.mxu0 0.0
  %1627 = vmatprep.subr.mxu0 0.0
  %1628 = vmatpush1.msra.mxu0 0.0
  %1629 = vmatprep.subr.mxu0 0.0
  %1630 = vmatpush1.msra.mxu0 0.0
  %1631 = vmatprep.subr.mxu0 0.0
  %1632 = vmatpush1.msra.mxu0 0.0
  %1633 = vmatprep.subr.mxu0 0.0
  %1634 = vmatpush1.msra.mxu0 0.0
  %1635 = vmatprep.subr.mxu0 0.0
  %1636 = vmatpush1.msra.mxu0 0.0
  %1637 = vmatprep.subr.mxu0 0.0
  %1638 = vmatpush1.msra.mxu0 0.0
  %1639 = vmatprep.subr.mxu0 0.0
  %1640 = vmatpush1.msra.mxu0 0.0
  %1641 = vmatprep.subr.mxu0 0.0
  %1642 = vmatpush1.msra.mxu0 0.0
  %1643 = vmatprep.subr.mxu0 0.0
  %1644 = vmatpush1.msra.mxu0 0.0
  %1645 = vmatprep.subr.mxu0 0.0
  %1646 = vmatpush1.msra.mxu0 0.0
  %1647 = vmatprep.subr.mxu0 0.0
  %1648 = vmatpush1.msra.mxu0 0.0
  %1649 = vmatprep.subr.mxu0 0.0
  %1650 = vmatpush1.msra.mxu0 0.0
  %1651 = vmatprep.subr.mxu0 0.0
  %1652 = vmatpush1.msra.mxu0 0.0
  %1653 = vmatprep.subr.mxu0 0.0
  %1654 = vmatpush1.msra.mxu0 0.0
  %1655 = vmatprep.subr.mxu0 0.0
  %1656 = vmatpush1.msra.mxu0 0.0
  %1657 = vmatprep.subr.mxu0 0.0
  %1658 = vmatpush1.msra.mxu0 0.0
  %1659 = vmatprep.subr.mxu0 0.0
  %1660 = vmatpush1.msra.mxu0 0.0
  %1661 = vmatprep.subr.mxu0 0.0
  %1662 = vmatpush1.msra.mxu0 0.0
  %1663 = vmatprep.subr.mxu0 0.0
  %1664 = vmatpush1.msra.mxu0 0.0
  %1665 = vmatprep.subr.mxu0 0.0
  %1666 = vmatpush1.msra.mxu0 0.0
  %1667 = vmatprep.subr.mxu0 0.0
  %1668 = vmatpush1.msra.mxu0 0.0
  %1669 = vmatprep.mubr.f32.mxu0 0.0
  %1670 = vmatmul.mubr.f32.gmra.mrb[0].mxu0 %v1591
  %v1671 = vpop.f32.mrb[0].mxu0
  %v1672 = vadd.f32 0.0, %v1671
  %v1673 = vpop.f32.mrb[0].mxu0
  %v1674 = vadd.f32 0.0, %v1673
  %1675 = vdwg.mxu0
  %1676 = vmatprep.subr.mxu0 %v1599
  %1677 = vmatpush1.msra.mxu0 %v1597
  %1678 = vmatprep.subr.mxu0 0.0
  %1679 = vmatpush1.msra.mxu0 0.0
  %1680 = vmatprep.subr.mxu0 0.0
  %1681 = vmatpush1.msra.mxu0 0.0
  %1682 = vmatprep.subr.mxu0 0.0
  %1683 = vmatpush1.msra.mxu0 0.0
  %1684 = vmatprep.subr.mxu0 0.0
  %1685 = vmatpush1.msra.mxu0 0.0
  %1686 = vmatprep.subr.mxu0 0.0
  %1687 = vmatpush1.msra.mxu0 0.0
  %1688 = vmatprep.subr.mxu0 0.0
  %1689 = vmatpush1.msra.mxu0 0.0
  %1690 = vmatprep.subr.mxu0 0.0
  %1691 = vmatpush1.msra.mxu0 0.0
  %1692 = vmatprep.subr.mxu0 0.0
  %1693 = vmatpush1.msra.mxu0 0.0
  %1694 = vmatprep.subr.mxu0 0.0
  %1695 = vmatpush1.msra.mxu0 0.0
  %1696 = vmatprep.subr.mxu0 0.0
  %1697 = vmatpush1.msra.mxu0 0.0
  %1698 = vmatprep.subr.mxu0 0.0
  %1699 = vmatpush1.msra.mxu0 0.0
  %1700 = vmatprep.subr.mxu0 0.0
  %1701 = vmatpush1.msra.mxu0 0.0
  %1702 = vmatprep.subr.mxu0 0.0
  %1703 = vmatpush1.msra.mxu0 0.0
  %1704 = vmatprep.subr.mxu0 0.0
  %1705 = vmatpush1.msra.mxu0 0.0
  %1706 = vmatprep.subr.mxu0 0.0
  %1707 = vmatpush1.msra.mxu0 0.0
  %1708 = vmatprep.subr.mxu0 0.0
  %1709 = vmatpush1.msra.mxu0 0.0
  %1710 = vmatprep.subr.mxu0 0.0
  %1711 = vmatpush1.msra.mxu0 0.0
  %1712 = vmatprep.subr.mxu0 0.0
  %1713 = vmatpush1.msra.mxu0 0.0
  %1714 = vmatprep.subr.mxu0 0.0
  %1715 = vmatpush1.msra.mxu0 0.0
  %1716 = vmatprep.subr.mxu0 0.0
  %1717 = vmatpush1.msra.mxu0 0.0
  %1718 = vmatprep.subr.mxu0 0.0
  %1719 = vmatpush1.msra.mxu0 0.0
  %1720 = vmatprep.subr.mxu0 0.0
  %1721 = vmatpush1.msra.mxu0 0.0
  %1722 = vmatprep.subr.mxu0 0.0
  %1723 = vmatpush1.msra.mxu0 0.0
  %1724 = vmatprep.subr.mxu0 0.0
  %1725 = vmatpush1.msra.mxu0 0.0
  %1726 = vmatprep.subr.mxu0 0.0
  %1727 = vmatpush1.msra.mxu0 0.0
  %1728 = vmatprep.subr.mxu0 0.0
  %1729 = vmatpush1.msra.mxu0 0.0
  %1730 = vmatprep.subr.mxu0 0.0
  %1731 = vmatpush1.msra.mxu0 0.0
  %1732 = vmatprep.subr.mxu0 0.0
  %1733 = vmatpush1.msra.mxu0 0.0
  %1734 = vmatprep.subr.mxu0 0.0
  %1735 = vmatpush1.msra.mxu0 0.0
  %1736 = vmatprep.subr.mxu0 0.0
  %1737 = vmatpush1.msra.mxu0 0.0
  %1738 = vmatprep.subr.mxu0 0.0
  %1739 = vmatpush1.msra.mxu0 0.0
  %1740 = vmatprep.mubr.f32.mxu0 0.0
  %1741 = vmatmul.mubr.f32.gmra.mrb[0].mxu0 %v1591
  %v1742 = vpop.f32.mrb[0].mxu0
  %v1743 = vadd.f32 0.0, %v1742
  %v1744 = vpop.f32.mrb[0].mxu0
  %v1745 = vadd.f32 0.0, %v1744
  %1746 = vdwg.mxu0
  %1747 = vmatprep.subr.mxu0 %v1603
  %1748 = vmatpush1.msra.mxu0 %v1601
  %1749 = vmatprep.subr.mxu0 0.0
  %1750 = vmatpush1.msra.mxu0 0.0
  %1751 = vmatprep.subr.mxu0 0.0
  %1752 = vmatpush1.msra.mxu0 0.0
  %1753 = vmatprep.subr.mxu0 0.0
  %1754 = vmatpush1.msra.mxu0 0.0
  %1755 = vmatprep.subr.mxu0 0.0
  %1756 = vmatpush1.msra.mxu0 0.0
  %1757 = vmatprep.subr.mxu0 0.0
  %1758 = vmatpush1.msra.mxu0 0.0
  %1759 = vmatprep.subr.mxu0 0.0
  %1760 = vmatpush1.msra.mxu0 0.0
  %1761 = vmatprep.subr.mxu0 0.0
  %1762 = vmatpush1.msra.mxu0 0.0
  %1763 = vmatprep.subr.mxu0 0.0
  %1764 = vmatpush1.msra.mxu0 0.0
  %1765 = vmatprep.subr.mxu0 0.0
  %1766 = vmatpush1.msra.mxu0 0.0
  %1767 = vmatprep.subr.mxu0 0.0
  %1768 = vmatpush1.msra.mxu0 0.0
  %1769 = vmatprep.subr.mxu0 0.0
  %1770 = vmatpush1.msra.mxu0 0.0
  %1771 = vmatprep.subr.mxu0 0.0
  %1772 = vmatpush1.msra.mxu0 0.0
  %1773 = vmatprep.subr.mxu0 0.0
  %1774 = vmatpush1.msra.mxu0 0.0
  %1775 = vmatprep.subr.mxu0 0.0
  %1776 = vmatpush1.msra.mxu0 0.0
  %1777 = vmatprep.subr.mxu0 0.0
  %1778 = vmatpush1.msra.mxu0 0.0
  %1779 = vmatprep.subr.mxu0 0.0
  %1780 = vmatpush1.msra.mxu0 0.0
  %1781 = vmatprep.subr.mxu0 0.0
  %1782 = vmatpush1.msra.mxu0 0.0
  %1783 = vmatprep.subr.mxu0 0.0
  %1784 = vmatpush1.msra.mxu0 0.0
  %1785 = vmatprep.subr.mxu0 0.0
  %1786 = vmatpush1.msra.mxu0 0.0
  %1787 = vmatprep.subr.mxu0 0.0
  %1788 = vmatpush1.msra.mxu0 0.0
  %1789 = vmatprep.subr.mxu0 0.0
  %1790 = vmatpush1.msra.mxu0 0.0
  %1791 = vmatprep.subr.mxu0 0.0
  %1792 = vmatpush1.msra.mxu0 0.0
  %1793 = vmatprep.subr.mxu0 0.0
  %1794 = vmatpush1.msra.mxu0 0.0
  %1795 = vmatprep.subr.mxu0 0.0
  %1796 = vmatpush1.msra.mxu0 0.0
  %1797 = vmatprep.subr.mxu0 0.0
  %1798 = vmatpush1.msra.mxu0 0.0
  %1799 = vmatprep.subr.mxu0 0.0
  %1800 = vmatpush1.msra.mxu0 0.0
  %1801 = vmatprep.subr.mxu0 0.0
  %1802 = vmatpush1.msra.mxu0 0.0
  %1803 = vmatprep.subr.mxu0 0.0
  %1804 = vmatpush1.msra.mxu0 0.0
  %1805 = vmatprep.subr.mxu0 0.0
  %1806 = vmatpush1.msra.mxu0 0.0
  %1807 = vmatprep.subr.mxu0 0.0
  %1808 = vmatpush1.msra.mxu0 0.0
  %1809 = vmatprep.subr.mxu0 0.0
  %1810 = vmatpush1.msra.mxu0 0.0
  %1811 = vmatprep.mubr.f32.mxu0 0.0
  %1812 = vmatmul.mubr.f32.gmra.mrb[0].mxu0 %v1591
  %v1813 = vpop.f32.mrb[0].mxu0
  %v1814 = vadd.f32 0.0, %v1813
  %v1815 = vpop.f32.mrb[0].mxu0
  %v1816 = vadd.f32 0.0, %v1815
  %1817 = vdwg.mxu0
  %v1818 = vadd.f32 %v1564, %v1672
  %v1819 = vadd.f32 %v1565, %v1674
  %v1820 = vadd.f32 %v1566, %v1743
  %v1821 = vadd.f32 %v1567, %v1745
  %v1822 = vadd.f32 %v1568, %v1814
  %v1823 = vadd.f32 %v1569, %v1816
  %s1824 = scalar_lea.vmem %s1, 56
  %v1825 = vld [vmem:[%s1824] sm:$0xff]
  %1826 = vrot.lane.b32.xlu0 %v59, 91
  %v1827 = vpop.permute.xlu0 %1826
  %1828 = vrot.lane.b32.xlu0 %v69, 91
  %v1829 = vpop.permute.xlu0 %1828
  %1830 = vrot.lane.b32.xlu0 %v60, 91
  %v1831 = vpop.permute.xlu0 %1830
  %1832 = vrot.lane.b32.xlu0 %v70, 91
  %v1833 = vpop.permute.xlu0 %1832
  %1834 = vrot.lane.b32.xlu0 %v61, 91
  %v1835 = vpop.permute.xlu0 %1834
  %1836 = vrot.lane.b32.xlu0 %v76, 91
  %v1837 = vpop.permute.xlu0 %1836
  %vm1838 = vcmask 744448
  %v1839 = vsel %vm1838, %v1827, %v1829
  %v1840 = vsel %vm1838, %v1829, %v1831
  %v1841 = vsel %vm1838, %v1831, %v1833
  %v1842 = vsel %vm1838, %v1833, %v1835
  %v1843 = vsel %vm1838, %v1835, %v1837
  %v1845 = vsel %vm96, %v1825, 0
  %v1847 = vsel %vm100, %v1839, 0
  %v1849 = vsel %vm100, %v1840, 0
  %v1851 = vsel %vm100, %v1841, 0
  %v1853 = vsel %vm100, %v1842, 0
  %v1855 = vsel %vm100, %v1843, 0
  %v1857 = vsel %vm100, %v1837, 0
  %1859 = vmatprep.subr.mxu0 %v1849
  %1860 = vmatpush1.msra.mxu0 %v1847
  %1861 = vmatprep.subr.mxu0 0.0
  %1862 = vmatpush1.msra.mxu0 0.0
  %1863 = vmatprep.subr.mxu0 0.0
  %1864 = vmatpush1.msra.mxu0 0.0
  %1865 = vmatprep.subr.mxu0 0.0
  %1866 = vmatpush1.msra.mxu0 0.0
  %1867 = vmatprep.subr.mxu0 0.0
  %1868 = vmatpush1.msra.mxu0 0.0
  %1869 = vmatprep.subr.mxu0 0.0
  %1870 = vmatpush1.msra.mxu0 0.0
  %1871 = vmatprep.subr.mxu0 0.0
  %1872 = vmatpush1.msra.mxu0 0.0
  %1873 = vmatprep.subr.mxu0 0.0
  %1874 = vmatpush1.msra.mxu0 0.0
  %1875 = vmatprep.subr.mxu0 0.0
  %1876 = vmatpush1.msra.mxu0 0.0
  %1877 = vmatprep.subr.mxu0 0.0
  %1878 = vmatpush1.msra.mxu0 0.0
  %1879 = vmatprep.subr.mxu0 0.0
  %1880 = vmatpush1.msra.mxu0 0.0
  %1881 = vmatprep.subr.mxu0 0.0
  %1882 = vmatpush1.msra.mxu0 0.0
  %1883 = vmatprep.subr.mxu0 0.0
  %1884 = vmatpush1.msra.mxu0 0.0
  %1885 = vmatprep.subr.mxu0 0.0
  %1886 = vmatpush1.msra.mxu0 0.0
  %1887 = vmatprep.subr.mxu0 0.0
  %1888 = vmatpush1.msra.mxu0 0.0
  %1889 = vmatprep.subr.mxu0 0.0
  %1890 = vmatpush1.msra.mxu0 0.0
  %1891 = vmatprep.subr.mxu0 0.0
  %1892 = vmatpush1.msra.mxu0 0.0
  %1893 = vmatprep.subr.mxu0 0.0
  %1894 = vmatpush1.msra.mxu0 0.0
  %1895 = vmatprep.subr.mxu0 0.0
  %1896 = vmatpush1.msra.mxu0 0.0
  %1897 = vmatprep.subr.mxu0 0.0
  %1898 = vmatpush1.msra.mxu0 0.0
  %1899 = vmatprep.subr.mxu0 0.0
  %1900 = vmatpush1.msra.mxu0 0.0
  %1901 = vmatprep.subr.mxu0 0.0
  %1902 = vmatpush1.msra.mxu0 0.0
  %1903 = vmatprep.subr.mxu0 0.0
  %1904 = vmatpush1.msra.mxu0 0.0
  %1905 = vmatprep.subr.mxu0 0.0
  %1906 = vmatpush1.msra.mxu0 0.0
  %1907 = vmatprep.subr.mxu0 0.0
  %1908 = vmatpush1.msra.mxu0 0.0
  %1909 = vmatprep.subr.mxu0 0.0
  %1910 = vmatpush1.msra.mxu0 0.0
  %1911 = vmatprep.subr.mxu0 0.0
  %1912 = vmatpush1.msra.mxu0 0.0
  %1913 = vmatprep.subr.mxu0 0.0
  %1914 = vmatpush1.msra.mxu0 0.0
  %1915 = vmatprep.subr.mxu0 0.0
  %1916 = vmatpush1.msra.mxu0 0.0
  %1917 = vmatprep.subr.mxu0 0.0
  %1918 = vmatpush1.msra.mxu0 0.0
  %1919 = vmatprep.subr.mxu0 0.0
  %1920 = vmatpush1.msra.mxu0 0.0
  %1921 = vmatprep.subr.mxu0 0.0
  %1922 = vmatpush1.msra.mxu0 0.0
  %1923 = vmatprep.mubr.f32.mxu0 0.0
  %1924 = vmatmul.mubr.f32.gmra.mrb[0].mxu0 %v1845
  %v1925 = vpop.f32.mrb[0].mxu0
  %v1926 = vadd.f32 0.0, %v1925
  %v1927 = vpop.f32.mrb[0].mxu0
  %v1928 = vadd.f32 0.0, %v1927
  %1929 = vdwg.mxu0
  %1930 = vmatprep.subr.mxu0 %v1853
  %1931 = vmatpush1.msra.mxu0 %v1851
  %1932 = vmatprep.subr.mxu0 0.0
  %1933 = vmatpush1.msra.mxu0 0.0
  %1934 = vmatprep.subr.mxu0 0.0
  %1935 = vmatpush1.msra.mxu0 0.0
  %1936 = vmatprep.subr.mxu0 0.0
  %1937 = vmatpush1.msra.mxu0 0.0
  %1938 = vmatprep.subr.mxu0 0.0
  %1939 = vmatpush1.msra.mxu0 0.0
  %1940 = vmatprep.subr.mxu0 0.0
  %1941 = vmatpush1.msra.mxu0 0.0
  %1942 = vmatprep.subr.mxu0 0.0
  %1943 = vmatpush1.msra.mxu0 0.0
  %1944 = vmatprep.subr.mxu0 0.0
  %1945 = vmatpush1.msra.mxu0 0.0
  %1946 = vmatprep.subr.mxu0 0.0
  %1947 = vmatpush1.msra.mxu0 0.0
  %1948 = vmatprep.subr.mxu0 0.0
  %1949 = vmatpush1.msra.mxu0 0.0
  %1950 = vmatprep.subr.mxu0 0.0
  %1951 = vmatpush1.msra.mxu0 0.0
  %1952 = vmatprep.subr.mxu0 0.0
  %1953 = vmatpush1.msra.mxu0 0.0
  %1954 = vmatprep.subr.mxu0 0.0
  %1955 = vmatpush1.msra.mxu0 0.0
  %1956 = vmatprep.subr.mxu0 0.0
  %1957 = vmatpush1.msra.mxu0 0.0
  %1958 = vmatprep.subr.mxu0 0.0
  %1959 = vmatpush1.msra.mxu0 0.0
  %1960 = vmatprep.subr.mxu0 0.0
  %1961 = vmatpush1.msra.mxu0 0.0
  %1962 = vmatprep.subr.mxu0 0.0
  %1963 = vmatpush1.msra.mxu0 0.0
  %1964 = vmatprep.subr.mxu0 0.0
  %1965 = vmatpush1.msra.mxu0 0.0
  %1966 = vmatprep.subr.mxu0 0.0
  %1967 = vmatpush1.msra.mxu0 0.0
  %1968 = vmatprep.subr.mxu0 0.0
  %1969 = vmatpush1.msra.mxu0 0.0
  %1970 = vmatprep.subr.mxu0 0.0
  %1971 = vmatpush1.msra.mxu0 0.0
  %1972 = vmatprep.subr.mxu0 0.0
  %1973 = vmatpush1.msra.mxu0 0.0
  %1974 = vmatprep.subr.mxu0 0.0
  %1975 = vmatpush1.msra.mxu0 0.0
  %1976 = vmatprep.subr.mxu0 0.0
  %1977 = vmatpush1.msra.mxu0 0.0
  %1978 = vmatprep.subr.mxu0 0.0
  %1979 = vmatpush1.msra.mxu0 0.0
  %1980 = vmatprep.subr.mxu0 0.0
  %1981 = vmatpush1.msra.mxu0 0.0
  %1982 = vmatprep.subr.mxu0 0.0
  %1983 = vmatpush1.msra.mxu0 0.0
  %1984 = vmatprep.subr.mxu0 0.0
  %1985 = vmatpush1.msra.mxu0 0.0
  %1986 = vmatprep.subr.mxu0 0.0
  %1987 = vmatpush1.msra.mxu0 0.0
  %1988 = vmatprep.subr.mxu0 0.0
  %1989 = vmatpush1.msra.mxu0 0.0
  %1990 = vmatprep.subr.mxu0 0.0
  %1991 = vmatpush1.msra.mxu0 0.0
  %1992 = vmatprep.subr.mxu0 0.0
  %1993 = vmatpush1.msra.mxu0 0.0
  %1994 = vmatprep.mubr.f32.mxu0 0.0
  %1995 = vmatmul.mubr.f32.gmra.mrb[0].mxu0 %v1845
  %v1996 = vpop.f32.mrb[0].mxu0
  %v1997 = vadd.f32 0.0, %v1996
  %v1998 = vpop.f32.mrb[0].mxu0
  %v1999 = vadd.f32 0.0, %v1998
  %2000 = vdwg.mxu0
  %2001 = vmatprep.subr.mxu0 %v1857
  %2002 = vmatpush1.msra.mxu0 %v1855
  %2003 = vmatprep.subr.mxu0 0.0
  %2004 = vmatpush1.msra.mxu0 0.0
  %2005 = vmatprep.subr.mxu0 0.0
  %2006 = vmatpush1.msra.mxu0 0.0
  %2007 = vmatprep.subr.mxu0 0.0
  %2008 = vmatpush1.msra.mxu0 0.0
  %2009 = vmatprep.subr.mxu0 0.0
  %2010 = vmatpush1.msra.mxu0 0.0
  %2011 = vmatprep.subr.mxu0 0.0
  %2012 = vmatpush1.msra.mxu0 0.0
  %2013 = vmatprep.subr.mxu0 0.0
  %2014 = vmatpush1.msra.mxu0 0.0
  %2015 = vmatprep.subr.mxu0 0.0
  %2016 = vmatpush1.msra.mxu0 0.0
  %2017 = vmatprep.subr.mxu0 0.0
  %2018 = vmatpush1.msra.mxu0 0.0
  %2019 = vmatprep.subr.mxu0 0.0
  %2020 = vmatpush1.msra.mxu0 0.0
  %2021 = vmatprep.subr.mxu0 0.0
  %2022 = vmatpush1.msra.mxu0 0.0
  %2023 = vmatprep.subr.mxu0 0.0
  %2024 = vmatpush1.msra.mxu0 0.0
  %2025 = vmatprep.subr.mxu0 0.0
  %2026 = vmatpush1.msra.mxu0 0.0
  %2027 = vmatprep.subr.mxu0 0.0
  %2028 = vmatpush1.msra.mxu0 0.0
  %2029 = vmatprep.subr.mxu0 0.0
  %2030 = vmatpush1.msra.mxu0 0.0
  %2031 = vmatprep.subr.mxu0 0.0
  %2032 = vmatpush1.msra.mxu0 0.0
  %2033 = vmatprep.subr.mxu0 0.0
  %2034 = vmatpush1.msra.mxu0 0.0
  %2035 = vmatprep.subr.mxu0 0.0
  %2036 = vmatpush1.msra.mxu0 0.0
  %2037 = vmatprep.subr.mxu0 0.0
  %2038 = vmatpush1.msra.mxu0 0.0
  %2039 = vmatprep.subr.mxu0 0.0
  %2040 = vmatpush1.msra.mxu0 0.0
  %2041 = vmatprep.subr.mxu0 0.0
  %2042 = vmatpush1.msra.mxu0 0.0
  %2043 = vmatprep.subr.mxu0 0.0
  %2044 = vmatpush1.msra.mxu0 0.0
  %2045 = vmatprep.subr.mxu0 0.0
  %2046 = vmatpush1.msra.mxu0 0.0
  %2047 = vmatprep.subr.mxu0 0.0
  %2048 = vmatpush1.msra.mxu0 0.0
  %2049 = vmatprep.subr.mxu0 0.0
  %2050 = vmatpush1.msra.mxu0 0.0
  %2051 = vmatprep.subr.mxu0 0.0
  %2052 = vmatpush1.msra.mxu0 0.0
  %2053 = vmatprep.subr.mxu0 0.0
  %2054 = vmatpush1.msra.mxu0 0.0
  %2055 = vmatprep.subr.mxu0 0.0
  %2056 = vmatpush1.msra.mxu0 0.0
  %2057 = vmatprep.subr.mxu0 0.0
  %2058 = vmatpush1.msra.mxu0 0.0
  %2059 = vmatprep.subr.mxu0 0.0
  %2060 = vmatpush1.msra.mxu0 0.0
  %2061 = vmatprep.subr.mxu0 0.0
  %2062 = vmatpush1.msra.mxu0 0.0
  %2063 = vmatprep.subr.mxu0 0.0
  %2064 = vmatpush1.msra.mxu0 0.0
  %2065 = vmatprep.mubr.f32.mxu0 0.0
  %2066 = vmatmul.mubr.f32.gmra.mrb[0].mxu0 %v1845
  %v2067 = vpop.f32.mrb[0].mxu0
  %v2068 = vadd.f32 0.0, %v2067
  %v2069 = vpop.f32.mrb[0].mxu0
  %v2070 = vadd.f32 0.0, %v2069
  %2071 = vdwg.mxu0
  %v2072 = vadd.f32 %v1818, %v1926
  %v2073 = vadd.f32 %v1819, %v1928
  %v2074 = vadd.f32 %v1820, %v1997
  %v2075 = vadd.f32 %v1821, %v1999
  %v2076 = vadd.f32 %v1822, %v2068
  %v2077 = vadd.f32 %v1823, %v2070
  %s2078 = scalar_lea.vmem %s1, 64
  %v2079 = vld [vmem:[%s2078] sm:$0xff]
  %2080 = vrot.lane.b32.xlu0 %v59, 90
  %v2081 = vpop.permute.xlu0 %2080
  %2082 = vrot.lane.b32.xlu0 %v69, 90
  %v2083 = vpop.permute.xlu0 %2082
  %2084 = vrot.lane.b32.xlu0 %v60, 90
  %v2085 = vpop.permute.xlu0 %2084
  %2086 = vrot.lane.b32.xlu0 %v70, 90
  %v2087 = vpop.permute.xlu0 %2086
  %2088 = vrot.lane.b32.xlu0 %v61, 90
  %v2089 = vpop.permute.xlu0 %2088
  %2090 = vrot.lane.b32.xlu0 %v76, 90
  %v2091 = vpop.permute.xlu0 %2090
  %vm2092 = vcmask 736256
  %v2093 = vsel %vm2092, %v2081, %v2083
  %v2094 = vsel %vm2092, %v2083, %v2085
  %v2095 = vsel %vm2092, %v2085, %v2087
  %v2096 = vsel %vm2092, %v2087, %v2089
  %v2097 = vsel %vm2092, %v2089, %v2091
  %v2099 = vsel %vm96, %v2079, 0
  %v2101 = vsel %vm100, %v2093, 0
  %v2103 = vsel %vm100, %v2094, 0
  %v2105 = vsel %vm100, %v2095, 0
  %v2107 = vsel %vm100, %v2096, 0
  %v2109 = vsel %vm100, %v2097, 0
  %v2111 = vsel %vm100, %v2091, 0
  %2113 = vmatprep.subr.mxu0 %v2103
  %2114 = vmatpush1.msra.mxu0 %v2101
  %2115 = vmatprep.subr.mxu0 0.0
  %2116 = vmatpush1.msra.mxu0 0.0
  %2117 = vmatprep.subr.mxu0 0.0
  %2118 = vmatpush1.msra.mxu0 0.0
  %2119 = vmatprep.subr.mxu0 0.0
  %2120 = vmatpush1.msra.mxu0 0.0
  %2121 = vmatprep.subr.mxu0 0.0
  %2122 = vmatpush1.msra.mxu0 0.0
  %2123 = vmatprep.subr.mxu0 0.0
  %2124 = vmatpush1.msra.mxu0 0.0
  %2125 = vmatprep.subr.mxu0 0.0
  %2126 = vmatpush1.msra.mxu0 0.0
  %2127 = vmatprep.subr.mxu0 0.0
  %2128 = vmatpush1.msra.mxu0 0.0
  %2129 = vmatprep.subr.mxu0 0.0
  %2130 = vmatpush1.msra.mxu0 0.0
  %2131 = vmatprep.subr.mxu0 0.0
  %2132 = vmatpush1.msra.mxu0 0.0
  %2133 = vmatprep.subr.mxu0 0.0
  %2134 = vmatpush1.msra.mxu0 0.0
  %2135 = vmatprep.subr.mxu0 0.0
  %2136 = vmatpush1.msra.mxu0 0.0
  %2137 = vmatprep.subr.mxu0 0.0
  %2138 = vmatpush1.msra.mxu0 0.0
  %2139 = vmatprep.subr.mxu0 0.0
  %2140 = vmatpush1.msra.mxu0 0.0
  %2141 = vmatprep.subr.mxu0 0.0
  %2142 = vmatpush1.msra.mxu0 0.0
  %2143 = vmatprep.subr.mxu0 0.0
  %2144 = vmatpush1.msra.mxu0 0.0
  %2145 = vmatprep.subr.mxu0 0.0
  %2146 = vmatpush1.msra.mxu0 0.0
  %2147 = vmatprep.subr.mxu0 0.0
  %2148 = vmatpush1.msra.mxu0 0.0
  %2149 = vmatprep.subr.mxu0 0.0
  %2150 = vmatpush1.msra.mxu0 0.0
  %2151 = vmatprep.subr.mxu0 0.0
  %2152 = vmatpush1.msra.mxu0 0.0
  %2153 = vmatprep.subr.mxu0 0.0
  %2154 = vmatpush1.msra.mxu0 0.0
  %2155 = vmatprep.subr.mxu0 0.0
  %2156 = vmatpush1.msra.mxu0 0.0
  %2157 = vmatprep.subr.mxu0 0.0
  %2158 = vmatpush1.msra.mxu0 0.0
  %2159 = vmatprep.subr.mxu0 0.0
  %2160 = vmatpush1.msra.mxu0 0.0
  %2161 = vmatprep.subr.mxu0 0.0
  %2162 = vmatpush1.msra.mxu0 0.0
  %2163 = vmatprep.subr.mxu0 0.0
  %2164 = vmatpush1.msra.mxu0 0.0
  %2165 = vmatprep.subr.mxu0 0.0
  %2166 = vmatpush1.msra.mxu0 0.0
  %2167 = vmatprep.subr.mxu0 0.0
  %2168 = vmatpush1.msra.mxu0 0.0
  %2169 = vmatprep.subr.mxu0 0.0
  %2170 = vmatpush1.msra.mxu0 0.0
  %2171 = vmatprep.subr.mxu0 0.0
  %2172 = vmatpush1.msra.mxu0 0.0
  %2173 = vmatprep.subr.mxu0 0.0
  %2174 = vmatpush1.msra.mxu0 0.0
  %2175 = vmatprep.subr.mxu0 0.0
  %2176 = vmatpush1.msra.mxu0 0.0
  %2177 = vmatprep.mubr.f32.mxu0 0.0
  %2178 = vmatmul.mubr.f32.gmra.mrb[0].mxu0 %v2099
  %v2179 = vpop.f32.mrb[0].mxu0
  %v2180 = vadd.f32 0.0, %v2179
  %v2181 = vpop.f32.mrb[0].mxu0
  %v2182 = vadd.f32 0.0, %v2181
  %2183 = vdwg.mxu0
  %2184 = vmatprep.subr.mxu0 %v2107
  %2185 = vmatpush1.msra.mxu0 %v2105
  %2186 = vmatprep.subr.mxu0 0.0
  %2187 = vmatpush1.msra.mxu0 0.0
  %2188 = vmatprep.subr.mxu0 0.0
  %2189 = vmatpush1.msra.mxu0 0.0
  %2190 = vmatprep.subr.mxu0 0.0
  %2191 = vmatpush1.msra.mxu0 0.0
  %2192 = vmatprep.subr.mxu0 0.0
  %2193 = vmatpush1.msra.mxu0 0.0
  %2194 = vmatprep.subr.mxu0 0.0
  %2195 = vmatpush1.msra.mxu0 0.0
  %2196 = vmatprep.subr.mxu0 0.0
  %2197 = vmatpush1.msra.mxu0 0.0
  %2198 = vmatprep.subr.mxu0 0.0
  %2199 = vmatpush1.msra.mxu0 0.0
  %2200 = vmatprep.subr.mxu0 0.0
  %2201 = vmatpush1.msra.mxu0 0.0
  %2202 = vmatprep.subr.mxu0 0.0
  %2203 = vmatpush1.msra.mxu0 0.0
  %2204 = vmatprep.subr.mxu0 0.0
  %2205 = vmatpush1.msra.mxu0 0.0
  %2206 = vmatprep.subr.mxu0 0.0
  %2207 = vmatpush1.msra.mxu0 0.0
  %2208 = vmatprep.subr.mxu0 0.0
  %2209 = vmatpush1.msra.mxu0 0.0
  %2210 = vmatprep.subr.mxu0 0.0
  %2211 = vmatpush1.msra.mxu0 0.0
  %2212 = vmatprep.subr.mxu0 0.0
  %2213 = vmatpush1.msra.mxu0 0.0
  %2214 = vmatprep.subr.mxu0 0.0
  %2215 = vmatpush1.msra.mxu0 0.0
  %2216 = vmatprep.subr.mxu0 0.0
  %2217 = vmatpush1.msra.mxu0 0.0
  %2218 = vmatprep.subr.mxu0 0.0
  %2219 = vmatpush1.msra.mxu0 0.0
  %2220 = vmatprep.subr.mxu0 0.0
  %2221 = vmatpush1.msra.mxu0 0.0
  %2222 = vmatprep.subr.mxu0 0.0
  %2223 = vmatpush1.msra.mxu0 0.0
  %2224 = vmatprep.subr.mxu0 0.0
  %2225 = vmatpush1.msra.mxu0 0.0
  %2226 = vmatprep.subr.mxu0 0.0
  %2227 = vmatpush1.msra.mxu0 0.0
  %2228 = vmatprep.subr.mxu0 0.0
  %2229 = vmatpush1.msra.mxu0 0.0
  %2230 = vmatprep.subr.mxu0 0.0
  %2231 = vmatpush1.msra.mxu0 0.0
  %2232 = vmatprep.subr.mxu0 0.0
  %2233 = vmatpush1.msra.mxu0 0.0
  %2234 = vmatprep.subr.mxu0 0.0
  %2235 = vmatpush1.msra.mxu0 0.0
  %2236 = vmatprep.subr.mxu0 0.0
  %2237 = vmatpush1.msra.mxu0 0.0
  %2238 = vmatprep.subr.mxu0 0.0
  %2239 = vmatpush1.msra.mxu0 0.0
  %2240 = vmatprep.subr.mxu0 0.0
  %2241 = vmatpush1.msra.mxu0 0.0
  %2242 = vmatprep.subr.mxu0 0.0
  %2243 = vmatpush1.msra.mxu0 0.0
  %2244 = vmatprep.subr.mxu0 0.0
  %2245 = vmatpush1.msra.mxu0 0.0
  %2246 = vmatprep.subr.mxu0 0.0
  %2247 = vmatpush1.msra.mxu0 0.0
  %2248 = vmatprep.mubr.f32.mxu0 0.0
  %2249 = vmatmul.mubr.f32.gmra.mrb[0].mxu0 %v2099
  %v2250 = vpop.f32.mrb[0].mxu0
  %v2251 = vadd.f32 0.0, %v2250
  %v2252 = vpop.f32.mrb[0].mxu0
  %v2253 = vadd.f32 0.0, %v2252
  %2254 = vdwg.mxu0
  %2255 = vmatprep.subr.mxu0 %v2111
  %2256 = vmatpush1.msra.mxu0 %v2109
  %2257 = vmatprep.subr.mxu0 0.0
  %2258 = vmatpush1.msra.mxu0 0.0
  %2259 = vmatprep.subr.mxu0 0.0
  %2260 = vmatpush1.msra.mxu0 0.0
  %2261 = vmatprep.subr.mxu0 0.0
  %2262 = vmatpush1.msra.mxu0 0.0
  %2263 = vmatprep.subr.mxu0 0.0
  %2264 = vmatpush1.msra.mxu0 0.0
  %2265 = vmatprep.subr.mxu0 0.0
  %2266 = vmatpush1.msra.mxu0 0.0
  %2267 = vmatprep.subr.mxu0 0.0
  %2268 = vmatpush1.msra.mxu0 0.0
  %2269 = vmatprep.subr.mxu0 0.0
  %2270 = vmatpush1.msra.mxu0 0.0
  %2271 = vmatprep.subr.mxu0 0.0
  %2272 = vmatpush1.msra.mxu0 0.0
  %2273 = vmatprep.subr.mxu0 0.0
  %2274 = vmatpush1.msra.mxu0 0.0
  %2275 = vmatprep.subr.mxu0 0.0
  %2276 = vmatpush1.msra.mxu0 0.0
  %2277 = vmatprep.subr.mxu0 0.0
  %2278 = vmatpush1.msra.mxu0 0.0
  %2279 = vmatprep.subr.mxu0 0.0
  %2280 = vmatpush1.msra.mxu0 0.0
  %2281 = vmatprep.subr.mxu0 0.0
  %2282 = vmatpush1.msra.mxu0 0.0
  %2283 = vmatprep.subr.mxu0 0.0
  %2284 = vmatpush1.msra.mxu0 0.0
  %2285 = vmatprep.subr.mxu0 0.0
  %2286 = vmatpush1.msra.mxu0 0.0
  %2287 = vmatprep.subr.mxu0 0.0
  %2288 = vmatpush1.msra.mxu0 0.0
  %2289 = vmatprep.subr.mxu0 0.0
  %2290 = vmatpush1.msra.mxu0 0.0
  %2291 = vmatprep.subr.mxu0 0.0
  %2292 = vmatpush1.msra.mxu0 0.0
  %2293 = vmatprep.subr.mxu0 0.0
  %2294 = vmatpush1.msra.mxu0 0.0
  %2295 = vmatprep.subr.mxu0 0.0
  %2296 = vmatpush1.msra.mxu0 0.0
  %2297 = vmatprep.subr.mxu0 0.0
  %2298 = vmatpush1.msra.mxu0 0.0
  %2299 = vmatprep.subr.mxu0 0.0
  %2300 = vmatpush1.msra.mxu0 0.0
  %2301 = vmatprep.subr.mxu0 0.0
  %2302 = vmatpush1.msra.mxu0 0.0
  %2303 = vmatprep.subr.mxu0 0.0
  %2304 = vmatpush1.msra.mxu0 0.0
  %2305 = vmatprep.subr.mxu0 0.0
  %2306 = vmatpush1.msra.mxu0 0.0
  %2307 = vmatprep.subr.mxu0 0.0
  %2308 = vmatpush1.msra.mxu0 0.0
  %2309 = vmatprep.subr.mxu0 0.0
  %2310 = vmatpush1.msra.mxu0 0.0
  %2311 = vmatprep.subr.mxu0 0.0
  %2312 = vmatpush1.msra.mxu0 0.0
  %2313 = vmatprep.subr.mxu0 0.0
  %2314 = vmatpush1.msra.mxu0 0.0
  %2315 = vmatprep.subr.mxu0 0.0
  %2316 = vmatpush1.msra.mxu0 0.0
  %2317 = vmatprep.subr.mxu0 0.0
  %2318 = vmatpush1.msra.mxu0 0.0
  %2319 = vmatprep.mubr.f32.mxu0 0.0
  %2320 = vmatmul.mubr.f32.gmra.mrb[0].mxu0 %v2099
  %v2321 = vpop.f32.mrb[0].mxu0
  %v2322 = vadd.f32 0.0, %v2321
  %v2323 = vpop.f32.mrb[0].mxu0
  %v2324 = vadd.f32 0.0, %v2323
  %2325 = vdwg.mxu0
  %v2326 = vadd.f32 %v2072, %v2180
  %v2327 = vadd.f32 %v2073, %v2182
  %v2328 = vadd.f32 %v2074, %v2251
  %v2329 = vadd.f32 %v2075, %v2253
  %v2330 = vadd.f32 %v2076, %v2322
  %v2331 = vadd.f32 %v2077, %v2324
  %2333 = vset.pattern.permute.xlu0 0
  %2334 = vperm.xlu0 %2333, %v62
  %v2335 = vpop.permute.xlu0 %2334
  %v2337 = vadd.f32 %v2326, %v2335
  %v2338 = vadd.f32 %v2327, %v2335
  %v2339 = vadd.f32 %v2328, %v2335
  %v2340 = vadd.f32 %v2329, %v2335
  %v2341 = vadd.f32 %v2330, %v2335
  %v2342 = vadd.f32 %v2331, %v2335
  %v2343 = vmax.f32 %v2337, 0.0
  %v2344 = vmax.f32 %v2338, 0.0
  %v2345 = vmax.f32 %v2339, 0.0
  %v2346 = vmax.f32 %v2340, 0.0
  %v2347 = vmax.f32 %v2341, 0.0
  %v2348 = vmax.f32 %v2342, 0.0
  %2349 = vrot.lane.b32.xlu0 %v2343, 8
  %v2350 = vpop.permute.xlu0 %2349
  %v2351 = vsel %vm73, %v2350, %v2348
  %2358 = vrot.lane.b32.xlu0 %v2343, 127
  %v2359 = vpop.permute.xlu0 %2358
  %2360 = vrot.lane.b32.xlu0 %v2344, 127
  %v2361 = vpop.permute.xlu0 %2360
  %2362 = vrot.lane.b32.xlu0 %v2345, 127
  %v2363 = vpop.permute.xlu0 %2362
  %2364 = vrot.lane.b32.xlu0 %v2346, 127
  %v2365 = vpop.permute.xlu0 %2364
  %2366 = vrot.lane.b32.xlu0 %v2347, 127
  %v2367 = vpop.permute.xlu0 %2366
  %2368 = vrot.lane.b32.xlu0 %v2351, 127
  %v2369 = vpop.permute.xlu0 %2368
  %v2370 = vsel %vm90, %v2359, %v2361
  %v2371 = vsel %vm90, %v2361, %v2363
  %v2372 = vsel %vm90, %v2363, %v2365
  %v2373 = vsel %vm90, %v2365, %v2367
  %v2374 = vsel %vm90, %v2367, %v2369
  %v2381 = vmax.f32 %v2343, %v2370
  %v2382 = vmax.f32 %v2344, %v2371
  %v2383 = vmax.f32 %v2345, %v2372
  %v2384 = vmax.f32 %v2346, %v2373
  %v2385 = vmax.f32 %v2347, %v2374
  %v2386 = vmax.f32 %v2348, %v2369
  %2387 = vrot.lane.b32.xlu0 %v2381, 8
  %v2388 = vpop.permute.xlu0 %2387
  %v2389 = vsel %vm73, %v2388, %v2386
  %2396 = vrot.lane.b32.xlu0 %v2381, 110
  %v2397 = vpop.permute.xlu0 %2396
  %2398 = vrot.lane.b32.xlu0 %v2382, 110
  %v2399 = vpop.permute.xlu0 %2398
  %2400 = vrot.lane.b32.xlu0 %v2383, 110
  %v2401 = vpop.permute.xlu0 %2400
  %2402 = vrot.lane.b32.xlu0 %v2384, 110
  %v2403 = vpop.permute.xlu0 %2402
  %2404 = vrot.lane.b32.xlu0 %v2385, 110
  %v2405 = vpop.permute.xlu0 %2404
  %2406 = vrot.lane.b32.xlu0 %v2389, 110
  %v2407 = vpop.permute.xlu0 %2406
  %v2408 = vsel %vm822, %v2397, %v2399
  %v2409 = vsel %vm822, %v2399, %v2401
  %v2410 = vsel %vm822, %v2401, %v2403
  %v2411 = vsel %vm822, %v2403, %v2405
  %v2412 = vsel %vm822, %v2405, %v2407
  %v2419 = vmax.f32 %v2381, %v2408
  %v2420 = vmax.f32 %v2382, %v2409
  %v2421 = vmax.f32 %v2383, %v2410
  %v2422 = vmax.f32 %v2384, %v2411
  %v2423 = vmax.f32 %v2385, %v2412
  %v2424 = vmax.f32 %v2386, %v2407
  %v2425 = vld [vmem:[%s3] sm:$0xff]
  %v2426 = vld [vmem:[%s3 + $0x8] sm:$0xff]
  %v2427 = vld [vmem:[%s3 + $0x10] sm:$0xff]
  %v2428 = vld [vmem:[%s3 + $0x18] sm:$0xff]
  %v2429 = vld [vmem:[%s3 + $0x20] sm:$0xff]
  %v2430 = vld [vmem:[%s3 + $0x28] sm:$0xff]
  %v2431 = vld [vmem:[%s3 + $0x30] sm:$0xff]
  %v2432 = vld [vmem:[%s3 + $0x38] sm:$0xff]
  %v2433 = vld [vmem:[%s3 + $0x40] sm:$0xff]
  %v2434 = vld [vmem:[%s3 + $0x48] sm:$0xff]
  %v2435 = vld [vmem:[%s3 + $0x50] sm:$0xff]
  %v2436 = vld [vmem:[%s3 + $0x58] sm:$0xff]
  %v2437 = vld [vmem:[%s3 + $0x60] sm:$0xff]
  %v2438 = vld [vmem:[%s3 + $0x68] sm:$0xff]
  %v2439 = vld [vmem:[%s3 + $0x70] sm:$0xff]
  %v2440 = vld [vmem:[%s3 + $0x78] sm:$0xff]
  %v2441 = vld [vmem:[%s3 + $0x80] sm:$0xff]
  %v2442 = vld [vmem:[%s3 + $0x88] sm:$0xff]
  %v2443 = vld [vmem:[%s3 + $0x90] sm:$0xff]
  %v2444 = vld [vmem:[%s3 + $0x98] sm:$0xff]
  %v2445 = vld [vmem:[%s3 + $0xa0] sm:$0xff]
  %v2446 = vld [vmem:[%s3 + $0xa8] sm:$0xff]
  %v2447 = vld [vmem:[%s3 + $0xb0] sm:$0xff]
  %v2448 = vld [vmem:[%s3 + $0xb8] sm:$0xff]
  %v2449 = vld [vmem:[%s3 + $0xc0] sm:$0xff]
  %v2450 = vld [vmem:[%s3 + $0xc8] sm:$0xff]
  %v2451 = vld [vmem:[%s3 + $0xd0] sm:$0xff]
  %v2452 = vld [vmem:[%s3 + $0xd8] sm:$0xff]
  %v2453 = vld [vmem:[%s3 + $0xe0] sm:$0xff]
  %v2454 = vld [vmem:[%s3 + $0xe8] sm:$0xff]
  %v2455 = vld [vmem:[%s3 + $0xf0] sm:$0xff]
  %v2456 = vld [vmem:[%s3 + $0xf8] sm:$0xff]
  %v2457 = vld [vmem:[%s3 + $0x100] sm:$0xff]
  %v2458 = vld [vmem:[%s3 + $0x108] sm:$0xff]
  %v2459 = vld [vmem:[%s3 + $0x110] sm:$0xff]
  %v2460 = vld [vmem:[%s3 + $0x118] sm:$0xff]
  %v2461 = vld [vmem:[%s3 + $0x120] sm:$0xff]
  %v2462 = vld [vmem:[%s3 + $0x128] sm:$0xff]
  %v2463 = vld [vmem:[%s3 + $0x130] sm:$0xff]
  %v2464 = vld [vmem:[%s3 + $0x138] sm:$0xff]
  %v2465 = vld [vmem:[%s3 + $0x140] sm:$0xff]
  %v2466 = vld [vmem:[%s3 + $0x148] sm:$0xff]
  %v2467 = vld [vmem:[%s3 + $0x150] sm:$0xff]
  %v2468 = vld [vmem:[%s3 + $0x158] sm:$0xff]
  %v2469 = vld [vmem:[%s3 + $0x160] sm:$0xff]
  %v2470 = vld [vmem:[%s3 + $0x168] sm:$0xff]
  %v2471 = vld [vmem:[%s3 + $0x170] sm:$0xff]
  %v2472 = vld [vmem:[%s3 + $0x178] sm:$0xff]
  %v2473 = vld [vmem:[%s3 + $0x180] sm:$0xff]
  %v2474 = vld [vmem:[%s3 + $0x188] sm:$0xff]
  %v2475 = vld [vmem:[%s3 + $0x190] sm:$0xff]
  %v2476 = vld [vmem:[%s3 + $0x198] sm:$0xff]
  %v2477 = vld [vmem:[%s3 + $0x1a0] sm:$0xff]
  %v2478 = vld [vmem:[%s3 + $0x1a8] sm:$0xff]
  %v2479 = vld [vmem:[%s3 + $0x1b0] sm:$0xff]
  %v2480 = vld [vmem:[%s3 + $0x1b8] sm:$0xff]
  %v2481 = vld [vmem:[%s3 + $0x1c0] sm:$0xff]
  %v2482 = vld [vmem:[%s3 + $0x1c8] sm:$0xff]
  %v2483 = vld [vmem:[%s3 + $0x1d0] sm:$0xff]
  %v2484 = vld [vmem:[%s3 + $0x1d8] sm:$0xff]
  %v2485 = vld [vmem:[%s3 + $0x1e0] sm:$0xff]
  %v2486 = vld [vmem:[%s3 + $0x1e8] sm:$0xff]
  %v2487 = vld [vmem:[%s3 + $0x1f0] sm:$0xff]
  %v2488 = vld [vmem:[%s3 + $0x1f8] sm:$0xff]
  %v2489 = vld [vmem:[%s3 + $0x200] sm:$0xff]
  %v2490 = vld [vmem:[%s3 + $0x208] sm:$0xff]
  %v2491 = vld [vmem:[%s3 + $0x210] sm:$0xff]
  %v2492 = vld [vmem:[%s3 + $0x218] sm:$0xff]
  %v2493 = vld [vmem:[%s3 + $0x220] sm:$0xff]
  %v2494 = vld [vmem:[%s3 + $0x228] sm:$0xff]
  %v2495 = vld [vmem:[%s3 + $0x230] sm:$0xff]
  %v2496 = vld [vmem:[%s3 + $0x238] sm:$0xff]
  %v2497 = vld [vmem:[%s3 + $0x240] sm:$0xff]
  %v2498 = vld [vmem:[%s3 + $0x248] sm:$0xff]
  %v2499 = vld [vmem:[%s3 + $0x250] sm:$0xff]
  %v2500 = vld [vmem:[%s3 + $0x258] sm:$0xff]
  %v2501 = vld [vmem:[%s3 + $0x260] sm:$0xff]
  %v2502 = vld [vmem:[%s3 + $0x268] sm:$0xff]
  %v2503 = vld [vmem:[%s3 + $0x270] sm:$0xff]
  %v2504 = vld [vmem:[%s3 + $0x278] sm:$0xff]
  %v2505 = vld [vmem:[%s3 + $0x280] sm:$0xff]
  %v2506 = vld [vmem:[%s3 + $0x288] sm:$0xff]
  %v2507 = vld [vmem:[%s3 + $0x290] sm:$0xff]
  %v2508 = vld [vmem:[%s3 + $0x298] sm:$0xff]
  %v2509 = vld [vmem:[%s3 + $0x2a0] sm:$0xff]
  %v2510 = vld [vmem:[%s3 + $0x2a8] sm:$0xff]
  %v2511 = vld [vmem:[%s3 + $0x2b0] sm:$0xff]
  %v2512 = vld [vmem:[%s3 + $0x2b8] sm:$0xff]
  %v2513 = vld [vmem:[%s3 + $0x2c0] sm:$0xff]
  %v2514 = vld [vmem:[%s3 + $0x2c8] sm:$0xff]
  %v2515 = vld [vmem:[%s3 + $0x2d0] sm:$0xff]
  %v2516 = vld [vmem:[%s3 + $0x2d8] sm:$0xff]
  %v2517 = vld [vmem:[%s3 + $0x2e0] sm:$0xff]
  %v2518 = vld [vmem:[%s3 + $0x2e8] sm:$0xff]
  %v2519 = vld [vmem:[%s3 + $0x2f0] sm:$0xff]
  %v2520 = vld [vmem:[%s3 + $0x2f8] sm:$0xff]
  %v2521 = vld [vmem:[%s3 + $0x300] sm:$0xff]
  %v2522 = vld [vmem:[%s3 + $0x308] sm:$0xff]
  %v2523 = vld [vmem:[%s3 + $0x310] sm:$0xff]
  %v2524 = vld [vmem:[%s3 + $0x318] sm:$0xff]
  %v2525 = vld [vmem:[%s3 + $0x320] sm:$0xff]
  %v2526 = vld [vmem:[%s3 + $0x328] sm:$0xff]
  %v2527 = vld [vmem:[%s3 + $0x330] sm:$0xff]
  %v2528 = vld [vmem:[%s3 + $0x338] sm:$0xff]
  %v2529 = vld [vmem:[%s3 + $0x340] sm:$0xff]
  %v2530 = vld [vmem:[%s3 + $0x348] sm:$0xff]
  %v2531 = vld [vmem:[%s3 + $0x350] sm:$0xff]
  %v2532 = vld [vmem:[%s3 + $0x358] sm:$0xff]
  %v2533 = vld [vmem:[%s3 + $0x360] sm:$0xff]
  %v2534 = vld [vmem:[%s3 + $0x368] sm:$0xff]
  %v2535 = vld [vmem:[%s3 + $0x370] sm:$0xff]
  %v2536 = vld [vmem:[%s3 + $0x378] sm:$0xff]
  %v2537 = vld [vmem:[%s3 + $0x380] sm:$0xff]
  %v2538 = vld [vmem:[%s3 + $0x388] sm:$0xff]
  %v2539 = vld [vmem:[%s3 + $0x390] sm:$0xff]
  %v2540 = vld [vmem:[%s3 + $0x398] sm:$0xff]
  %v2541 = vld [vmem:[%s3 + $0x3a0] sm:$0xff]
  %v2542 = vld [vmem:[%s3 + $0x3a8] sm:$0xff]
  %v2543 = vld [vmem:[%s3 + $0x3b0] sm:$0xff]
  %v2544 = vld [vmem:[%s3 + $0x3b8] sm:$0xff]
  %v2545 = vld [vmem:[%s3 + $0x3c0] sm:$0xff]
  %v2546 = vld [vmem:[%s3 + $0x3c8] sm:$0xff]
  %v2547 = vld [vmem:[%s3 + $0x3d0] sm:$0xff]
  %v2548 = vld [vmem:[%s3 + $0x3d8] sm:$0xff]
  %v2549 = vld [vmem:[%s3 + $0x3e0] sm:$0xff]
  %v2550 = vld [vmem:[%s3 + $0x3e8] sm:$0xff]
  %v2551 = vld [vmem:[%s3 + $0x3f0] sm:$0xff]
  %v2552 = vld [vmem:[%s3 + $0x3f8] sm:$0xff]
  %v2553 = vld [vmem:[%s3 + $0x400] sm:$0xff]
  %v2554 = vld [vmem:[%s3 + $0x408] sm:$0xff]
  %v2555 = vld [vmem:[%s3 + $0x410] sm:$0xff]
  %v2556 = vld [vmem:[%s3 + $0x418] sm:$0xff]
  %v2557 = vld [vmem:[%s3 + $0x420] sm:$0xff]
  %v2558 = vld [vmem:[%s3 + $0x428] sm:$0xff]
  %v2559 = vld [vmem:[%s3 + $0x430] sm:$0xff]
  %v2560 = vld [vmem:[%s3 + $0x438] sm:$0xff]
  %v2561 = vld [vmem:[%s3 + $0x440] sm:$0xff]
  %v2562 = vld [vmem:[%s3 + $0x448] sm:$0xff]
  %v2563 = vld [vmem:[%s3 + $0x450] sm:$0xff]
  %v2564 = vld [vmem:[%s3 + $0x458] sm:$0xff]
  %v2565 = vld [vmem:[%s3 + $0x460] sm:$0xff]
  %v2566 = vld [vmem:[%s3 + $0x468] sm:$0xff]
  %v2567 = vld [vmem:[%s3 + $0x470] sm:$0xff]
  %v2568 = vld [vmem:[%s3 + $0x478] sm:$0xff]
  %v2569 = vld [vmem:[%s3 + $0x480] sm:$0xff]
  %v2570 = vld [vmem:[%s3 + $0x488] sm:$0xff]
  %v2571 = vld [vmem:[%s3 + $0x490] sm:$0xff]
  %v2572 = vld [vmem:[%s3 + $0x498] sm:$0xff]
  %v2573 = vld [vmem:[%s3 + $0x4a0] sm:$0xff]
  %v2574 = vld [vmem:[%s3 + $0x4a8] sm:$0xff]
  %v2575 = vld [vmem:[%s3 + $0x4b0] sm:$0xff]
  %v2576 = vld [vmem:[%s3 + $0x4b8] sm:$0xff]
  %v2577 = vld [vmem:[%s3 + $0x4c0] sm:$0xff]
  %v2578 = vld [vmem:[%s3 + $0x4c8] sm:$0xff]
  %v2579 = vld [vmem:[%s3 + $0x4d0] sm:$0xff]
  %v2580 = vld [vmem:[%s3 + $0x4d8] sm:$0xff]
  %v2581 = vld [vmem:[%s3 + $0x4e0] sm:$0xff]
  %v2582 = vld [vmem:[%s3 + $0x4e8] sm:$0xff]
  %v2583 = vld [vmem:[%s3 + $0x4f0] sm:$0xff]
  %v2584 = vld [vmem:[%s3 + $0x4f8] sm:$0xff]
  %v2585 = vld [vmem:[%s3 + $0x500] sm:$0xff]
  %v2586 = vld [vmem:[%s3 + $0x508] sm:$0xff]
  %vm2587 = vcmask 64512
  %v2589 = vsel %vm2587, %v2424, 0
  %2591 = vmatprep.subr.mxu0 %v2426
  %2592 = vmatpush1.msra.mxu0 %v2425
  %2593 = vmatprep.subr.mxu0 %v2428
  %2594 = vmatpush1.msra.mxu0 %v2427
  %2595 = vmatprep.subr.mxu0 %v2430
  %2596 = vmatpush1.msra.mxu0 %v2429
  %2597 = vmatprep.subr.mxu0 %v2432
  %2598 = vmatpush1.msra.mxu0 %v2431
  %2599 = vmatprep.subr.mxu0 %v2434
  %2600 = vmatpush1.msra.mxu0 %v2433
  %2601 = vmatprep.subr.mxu0 %v2436
  %2602 = vmatpush1.msra.mxu0 %v2435
  %2603 = vmatprep.subr.mxu0 %v2438
  %2604 = vmatpush1.msra.mxu0 %v2437
  %2605 = vmatprep.subr.mxu0 %v2440
  %2606 = vmatpush1.msra.mxu0 %v2439
  %2607 = vmatprep.subr.mxu0 %v2442
  %2608 = vmatpush1.msra.mxu0 %v2441
  %2609 = vmatprep.subr.mxu0 %v2444
  %2610 = vmatpush1.msra.mxu0 %v2443
  %2611 = vmatprep.subr.mxu0 %v2446
  %2612 = vmatpush1.msra.mxu0 %v2445
  %2613 = vmatprep.subr.mxu0 %v2448
  %2614 = vmatpush1.msra.mxu0 %v2447
  %2615 = vmatprep.subr.mxu0 %v2450
  %2616 = vmatpush1.msra.mxu0 %v2449
  %2617 = vmatprep.subr.mxu0 %v2452
  %2618 = vmatpush1.msra.mxu0 %v2451
  %2619 = vmatprep.subr.mxu0 %v2454
  %2620 = vmatpush1.msra.mxu0 %v2453
  %2621 = vmatprep.subr.mxu0 %v2456
  %2622 = vmatpush1.msra.mxu0 %v2455
  %2623 = vmatprep.subr.mxu0 %v2458
  %2624 = vmatpush1.msra.mxu0 %v2457
  %2625 = vmatprep.subr.mxu0 %v2460
  %2626 = vmatpush1.msra.mxu0 %v2459
  %2627 = vmatprep.subr.mxu0 %v2462
  %2628 = vmatpush1.msra.mxu0 %v2461
  %2629 = vmatprep.subr.mxu0 %v2464
  %2630 = vmatpush1.msra.mxu0 %v2463
  %2631 = vmatprep.subr.mxu0 %v2466
  %2632 = vmatpush1.msra.mxu0 %v2465
  %2633 = vmatprep.subr.mxu0 %v2468
  %2634 = vmatpush1.msra.mxu0 %v2467
  %2635 = vmatprep.subr.mxu0 %v2470
  %2636 = vmatpush1.msra.mxu0 %v2469
  %2637 = vmatprep.subr.mxu0 %v2472
  %2638 = vmatpush1.msra.mxu0 %v2471
  %2639 = vmatprep.subr.mxu0 %v2474
  %2640 = vmatpush1.msra.mxu0 %v2473
  %2641 = vmatprep.subr.mxu0 %v2476
  %2642 = vmatpush1.msra.mxu0 %v2475
  %2643 = vmatprep.subr.mxu0 %v2478
  %2644 = vmatpush1.msra.mxu0 %v2477
  %2645 = vmatprep.subr.mxu0 %v2480
  %2646 = vmatpush1.msra.mxu0 %v2479
  %2647 = vmatprep.subr.mxu0 %v2482
  %2648 = vmatpush1.msra.mxu0 %v2481
  %2649 = vmatprep.subr.mxu0 %v2484
  %2650 = vmatpush1.msra.mxu0 %v2483
  %2651 = vmatprep.subr.mxu0 %v2486
  %2652 = vmatpush1.msra.mxu0 %v2485
  %2653 = vmatprep.subr.mxu0 %v2488
  %2654 = vmatpush1.msra.mxu0 %v2487
  %2655 = vmatprep.mubr.f32.mxu0 %v2420
  %2656 = vmatmul.mubr.f32.gmra.mrb[0].mxu0 %v2419
  %v2657 = vpop.f32.mrb[0].mxu0
  %v2658 = vadd.f32 0.0, %v2657
  %v2659 = vpop.f32.mrb[0].mxu0
  %v2660 = vadd.f32 0.0, %v2659
  %2661 = vdwg.mxu0
  %2662 = vmatprep.subr.mxu0 %v2490
  %2663 = vmatpush1.msra.mxu0 %v2489
  %2664 = vmatprep.subr.mxu0 %v2492
  %2665 = vmatpush1.msra.mxu0 %v2491
  %2666 = vmatprep.subr.mxu0 %v2494
  %2667 = vmatpush1.msra.mxu0 %v2493
  %2668 = vmatprep.subr.mxu0 %v2496
  %2669 = vmatpush1.msra.mxu0 %v2495
  %2670 = vmatprep.subr.mxu0 %v2498
  %2671 = vmatpush1.msra.mxu0 %v2497
  %2672 = vmatprep.subr.mxu0 %v2500
  %2673 = vmatpush1.msra.mxu0 %v2499
  %2674 = vmatprep.subr.mxu0 %v2502
  %2675 = vmatpush1.msra.mxu0 %v2501
  %2676 = vmatprep.subr.mxu0 %v2504
  %2677 = vmatpush1.msra.mxu0 %v2503
  %2678 = vmatprep.subr.mxu0 %v2506
  %2679 = vmatpush1.msra.mxu0 %v2505
  %2680 = vmatprep.subr.mxu0 %v2508
  %2681 = vmatpush1.msra.mxu0 %v2507
  %2682 = vmatprep.subr.mxu0 %v2510
  %2683 = vmatpush1.msra.mxu0 %v2509
  %2684 = vmatprep.subr.mxu0 %v2512
  %2685 = vmatpush1.msra.mxu0 %v2511
  %2686 = vmatprep.subr.mxu0 %v2514
  %2687 = vmatpush1.msra.mxu0 %v2513
  %2688 = vmatprep.subr.mxu0 %v2516
  %2689 = vmatpush1.msra.mxu0 %v2515
  %2690 = vmatprep.subr.mxu0 %v2518
  %2691 = vmatpush1.msra.mxu0 %v2517
  %2692 = vmatprep.subr.mxu0 %v2520
  %2693 = vmatpush1.msra.mxu0 %v2519
  %2694 = vmatprep.subr.mxu0 %v2522
  %2695 = vmatpush1.msra.mxu0 %v2521
  %2696 = vmatprep.subr.mxu0 %v2524
  %2697 = vmatpush1.msra.mxu0 %v2523
  %2698 = vmatprep.subr.mxu0 %v2526
  %2699 = vmatpush1.msra.mxu0 %v2525
  %2700 = vmatprep.subr.mxu0 %v2528
  %2701 = vmatpush1.msra.mxu0 %v2527
  %2702 = vmatprep.subr.mxu0 %v2530
  %2703 = vmatpush1.msra.mxu0 %v2529
  %2704 = vmatprep.subr.mxu0 %v2532
  %2705 = vmatpush1.msra.mxu0 %v2531
  %2706 = vmatprep.subr.mxu0 %v2534
  %2707 = vmatpush1.msra.mxu0 %v2533
  %2708 = vmatprep.subr.mxu0 %v2536
  %2709 = vmatpush1.msra.mxu0 %v2535
  %2710 = vmatprep.subr.mxu0 %v2538
  %2711 = vmatpush1.msra.mxu0 %v2537
  %2712 = vmatprep.subr.mxu0 %v2540
  %2713 = vmatpush1.msra.mxu0 %v2539
  %2714 = vmatprep.subr.mxu0 %v2542
  %2715 = vmatpush1.msra.mxu0 %v2541
  %2716 = vmatprep.subr.mxu0 %v2544
  %2717 = vmatpush1.msra.mxu0 %v2543
  %2718 = vmatprep.subr.mxu0 %v2546
  %2719 = vmatpush1.msra.mxu0 %v2545
  %2720 = vmatprep.subr.mxu0 %v2548
  %2721 = vmatpush1.msra.mxu0 %v2547
  %2722 = vmatprep.subr.mxu0 %v2550
  %2723 = vmatpush1.msra.mxu0 %v2549
  %2724 = vmatprep.subr.mxu0 %v2552
  %2725 = vmatpush1.msra.mxu0 %v2551
  %2726 = vmatprep.mubr.f32.mxu0 %v2422
  %2727 = vmatmul.mubr.f32.gmra.mrb[0].mxu0 %v2421
  %v2728 = vpop.f32.mrb[0].mxu0
  %v2729 = vadd.f32 %v2658, %v2728
  %v2730 = vpop.f32.mrb[0].mxu0
  %v2731 = vadd.f32 %v2660, %v2730
  %2732 = vdwg.mxu0
  %2733 = vmatprep.subr.mxu0 %v2554
  %2734 = vmatpush1.msra.mxu0 %v2553
  %2735 = vmatprep.subr.mxu0 %v2556
  %2736 = vmatpush1.msra.mxu0 %v2555
  %2737 = vmatprep.subr.mxu0 %v2558
  %2738 = vmatpush1.msra.mxu0 %v2557
  %2739 = vmatprep.subr.mxu0 %v2560
  %2740 = vmatpush1.msra.mxu0 %v2559
  %2741 = vmatprep.subr.mxu0 %v2562
  %2742 = vmatpush1.msra.mxu0 %v2561
  %2743 = vmatprep.subr.mxu0 %v2564
  %2744 = vmatpush1.msra.mxu0 %v2563
  %2745 = vmatprep.subr.mxu0 %v2566
  %2746 = vmatpush1.msra.mxu0 %v2565
  %2747 = vmatprep.subr.mxu0 %v2568
  %2748 = vmatpush1.msra.mxu0 %v2567
  %2749 = vmatprep.subr.mxu0 %v2570
  %2750 = vmatpush1.msra.mxu0 %v2569
  %2751 = vmatprep.subr.mxu0 %v2572
  %2752 = vmatpush1.msra.mxu0 %v2571
  %2753 = vmatprep.subr.mxu0 %v2574
  %2754 = vmatpush1.msra.mxu0 %v2573
  %2755 = vmatprep.subr.mxu0 %v2576
  %2756 = vmatpush1.msra.mxu0 %v2575
  %2757 = vmatprep.subr.mxu0 %v2578
  %2758 = vmatpush1.msra.mxu0 %v2577
  %2759 = vmatprep.subr.mxu0 %v2580
  %2760 = vmatpush1.msra.mxu0 %v2579
  %2761 = vmatprep.subr.mxu0 %v2582
  %2762 = vmatpush1.msra.mxu0 %v2581
  %2763 = vmatprep.subr.mxu0 %v2584
  %2764 = vmatpush1.msra.mxu0 %v2583
  %2765 = vmatprep.subr.mxu0 %v2586
  %2766 = vmatpush1.msra.mxu0 %v2585
  %2767 = vmatprep.subr.mxu0 0.0
  %2768 = vmatpush1.msra.mxu0 0.0
  %2769 = vmatprep.subr.mxu0 0.0
  %2770 = vmatpush1.msra.mxu0 0.0
  %2771 = vmatprep.subr.mxu0 0.0
  %2772 = vmatpush1.msra.mxu0 0.0
  %2773 = vmatprep.subr.mxu0 0.0
  %2774 = vmatpush1.msra.mxu0 0.0
  %2775 = vmatprep.subr.mxu0 0.0
  %2776 = vmatpush1.msra.mxu0 0.0
  %2777 = vmatprep.subr.mxu0 0.0
  %2778 = vmatpush1.msra.mxu0 0.0
  %2779 = vmatprep.subr.mxu0 0.0
  %2780 = vmatpush1.msra.mxu0 0.0
  %2781 = vmatprep.subr.mxu0 0.0
  %2782 = vmatpush1.msra.mxu0 0.0
  %2783 = vmatprep.subr.mxu0 0.0
  %2784 = vmatpush1.msra.mxu0 0.0
  %2785 = vmatprep.subr.mxu0 0.0
  %2786 = vmatpush1.msra.mxu0 0.0
  %2787 = vmatprep.subr.mxu0 0.0
  %2788 = vmatpush1.msra.mxu0 0.0
  %2789 = vmatprep.subr.mxu0 0.0
  %2790 = vmatpush1.msra.mxu0 0.0
  %2791 = vmatprep.subr.mxu0 0.0
  %2792 = vmatpush1.msra.mxu0 0.0
  %2793 = vmatprep.subr.mxu0 0.0
  %2794 = vmatpush1.msra.mxu0 0.0
  %2795 = vmatprep.subr.mxu0 0.0
  %2796 = vmatpush1.msra.mxu0 0.0
  %2797 = vmatprep.mubr.f32.mxu0 %v2589
  %2798 = vmatmul.mubr.f32.gmra.mrb[0].mxu0 %v2423
  %v2799 = vpop.f32.mrb[0].mxu0
  %v2800 = vadd.f32 %v2729, %v2799
  %v2801 = vpop.f32.mrb[0].mxu0
  %v2802 = vadd.f32 %v2731, %v2801
  %2803 = vdwg.mxu0
  %v2804 = vld [vmem:[%s4] sm:$0x3]
  %vm2805 = vcmask 588800
  %v2806 = vsel %vm2805, %v2802, 0.0
  %v2807 = vadd.f32 %v2800, %v2806
  %2808 = vadd.xlane.f32.xlu0 %v2807
  %v2809 = vpop.xlane.xlu0 %2808
  %v2810 = vmul.f32 %v2809, 0.0078125
  %v2811 = vmul.f32 %v2800, %v2800
  %v2812 = vmul.f32 %v2802, %v2802
  %v2813 = vsel %vm2805, %v2812, 0.0
  %v2814 = vadd.f32 %v2811, %v2813
  %2815 = vadd.xlane.f32.xlu0 %v2814
  %v2816 = vpop.xlane.xlu0 %2815
  %v2817 = vmul.f32 %v2816, 0.0078125
  %v2818 = vmul.f32 %v2810, %v2810
  %v2819 = vsub.f32 %v2817, %v2818
  %v2820 = vsub.f32 %v2800, %v2810
  %v2821 = vsub.f32 %v2802, %v2810
  %v2822 = vadd.f32 %v2819, 1e-05
  %v2823 = vrsqrt.pop %v2822
  %v2824 = vmul.f32 %v2820, %v2823
  %v2825 = vmul.f32 %v2821, %v2823
  %v2827 = vlaneseq
  %v2828 = vshrl.u32 %v2827, 7
  %v2829 = vsub.s32 0, %v2828
  %v2830 = vrot.slane %v2804, %v2829
  %v2831 = vlaneseq
  %v2832 = vshrl.u32 %v2831, 7
  %v2833 = vsub.s32 1, %v2832
  %v2834 = vrot.slane %v2804, %v2833
  %v2837 = vmul.f32 %v2824, %v2830
  %v2838 = vmul.f32 %v2825, %v2834
  %v2839 = vld [vmem:[%s6] sm:$0xff]
  %v2840 = vld [vmem:[%s5] sm:$0xff]
  %s2841 = scalar_lea.vmem %s5, 8
  %v2842 = vld [vmem:[%s2841] sm:$0xff]
  %vm2843 = vcmask 1048128
  %2844 = vrot.lane.b32.xlu0 %v2837, 72
  %v2845 = vpop.permute.xlu0 %2844
  %v2846 = vsel %vm2843, %v2845, %v2838
  %2849 = vrot.lane.b32.xlu0 %v2837, 127
  %v2850 = vpop.permute.xlu0 %2849
  %2851 = vrot.lane.b32.xlu0 %v2846, 127
  %v2852 = vpop.permute.xlu0 %2851
  %v2853 = vsel %vm90, %v2850, %v2852
  %v2857 = vsel %vm2587, %v2842, 0
  %2859 = vmatprep.subr.mxu0 %v2852
  %2860 = vmatpush1.msra.mxu0 %v2853
  %2861 = vmatprep.subr.mxu0 0.0
  %2862 = vmatpush1.msra.mxu0 0.0
  %2863 = vmatprep.subr.mxu0 0.0
  %2864 = vmatpush1.msra.mxu0 0.0
  %2865 = vmatprep.subr.mxu0 0.0
  %2866 = vmatpush1.msra.mxu0 0.0
  %2867 = vmatprep.subr.mxu0 0.0
  %2868 = vmatpush1.msra.mxu0 0.0
  %2869 = vmatprep.subr.mxu0 0.0
  %2870 = vmatpush1.msra.mxu0 0.0
  %2871 = vmatprep.subr.mxu0 0.0
  %2872 = vmatpush1.msra.mxu0 0.0
  %2873 = vmatprep.subr.mxu0 0.0
  %2874 = vmatpush1.msra.mxu0 0.0
  %2875 = vmatprep.subr.mxu0 0.0
  %2876 = vmatpush1.msra.mxu0 0.0
  %2877 = vmatprep.subr.mxu0 0.0
  %2878 = vmatpush1.msra.mxu0 0.0
  %2879 = vmatprep.subr.mxu0 0.0
  %2880 = vmatpush1.msra.mxu0 0.0
  %2881 = vmatprep.subr.mxu0 0.0
  %2882 = vmatpush1.msra.mxu0 0.0
  %2883 = vmatprep.subr.mxu0 0.0
  %2884 = vmatpush1.msra.mxu0 0.0
  %2885 = vmatprep.subr.mxu0 0.0
  %2886 = vmatpush1.msra.mxu0 0.0
  %2887 = vmatprep.subr.mxu0 0.0
  %2888 = vmatpush1.msra.mxu0 0.0
  %2889 = vmatprep.subr.mxu0 0.0
  %2890 = vmatpush1.msra.mxu0 0.0
  %2891 = vmatprep.subr.mxu0 0.0
  %2892 = vmatpush1.msra.mxu0 0.0
  %2893 = vmatprep.subr.mxu0 0.0
  %2894 = vmatpush1.msra.mxu0 0.0
  %2895 = vmatprep.subr.mxu0 0.0
  %2896 = vmatpush1.msra.mxu0 0.0
  %2897 = vmatprep.subr.mxu0 0.0
  %2898 = vmatpush1.msra.mxu0 0.0
  %2899 = vmatprep.subr.mxu0 0.0
  %2900 = vmatpush1.msra.mxu0 0.0
  %2901 = vmatprep.subr.mxu0 0.0
  %2902 = vmatpush1.msra.mxu0 0.0
  %2903 = vmatprep.subr.mxu0 0.0
  %2904 = vmatpush1.msra.mxu0 0.0
  %2905 = vmatprep.subr.mxu0 0.0
  %2906 = vmatpush1.msra.mxu0 0.0
  %2907 = vmatprep.subr.mxu0 0.0
  %2908 = vmatpush1.msra.mxu0 0.0
  %2909 = vmatprep.subr.mxu0 0.0
  %2910 = vmatpush1.msra.mxu0 0.0
  %2911 = vmatprep.subr.mxu0 0.0
  %2912 = vmatpush1.msra.mxu0 0.0
  %2913 = vmatprep.subr.mxu0 0.0
  %2914 = vmatpush1.msra.mxu0 0.0
  %2915 = vmatprep.subr.mxu0 0.0
  %2916 = vmatpush1.msra.mxu0 0.0
  %2917 = vmatprep.subr.mxu0 0.0
  %2918 = vmatpush1.msra.mxu0 0.0
  %2919 = vmatprep.subr.mxu0 0.0
  %2920 = vmatpush1.msra.mxu0 0.0
  %2921 = vmatprep.subr.mxu0 0.0
  %2922 = vmatpush1.msra.mxu0 0.0
  %2923 = vmatprep.mubr.f32.mxu0 0.0
  %2924 = vmatmul.mubr.f32.gmra.mrb[0].mxu0 %v2857
  %v2925 = vpop.f32.mrb[0].mxu0
  %v2926 = vadd.f32 0.0, %v2925
  %v2927 = vpop.f32.mrb[0].mxu0
  %v2928 = vadd.f32 0.0, %v2927
  %2929 = vdwg.mxu0
  %v2931 = vsel %vm2587, %v2840, 0
  %2933 = vmatprep.subr.mxu0 %v2838
  %2934 = vmatpush1.msra.mxu0 %v2837
  %2935 = vmatprep.subr.mxu0 0.0
  %2936 = vmatpush1.msra.mxu0 0.0
  %2937 = vmatprep.subr.mxu0 0.0
  %2938 = vmatpush1.msra.mxu0 0.0
  %2939 = vmatprep.subr.mxu0 0.0
  %2940 = vmatpush1.msra.mxu0 0.0
  %2941 = vmatprep.subr.mxu0 0.0
  %2942 = vmatpush1.msra.mxu0 0.0
  %2943 = vmatprep.subr.mxu0 0.0
  %2944 = vmatpush1.msra.mxu0 0.0
  %2945 = vmatprep.subr.mxu0 0.0
  %2946 = vmatpush1.msra.mxu0 0.0
  %2947 = vmatprep.subr.mxu0 0.0
  %2948 = vmatpush1.msra.mxu0 0.0
  %2949 = vmatprep.subr.mxu0 0.0
  %2950 = vmatpush1.msra.mxu0 0.0
  %2951 = vmatprep.subr.mxu0 0.0
  %2952 = vmatpush1.msra.mxu0 0.0
  %2953 = vmatprep.subr.mxu0 0.0
  %2954 = vmatpush1.msra.mxu0 0.0
  %2955 = vmatprep.subr.mxu0 0.0
  %2956 = vmatpush1.msra.mxu0 0.0
  %2957 = vmatprep.subr.mxu0 0.0
  %2958 = vmatpush1.msra.mxu0 0.0
  %2959 = vmatprep.subr.mxu0 0.0
  %2960 = vmatpush1.msra.mxu0 0.0
  %2961 = vmatprep.subr.mxu0 0.0
  %2962 = vmatpush1.msra.mxu0 0.0
  %2963 = vmatprep.subr.mxu0 0.0
  %2964 = vmatpush1.msra.mxu0 0.0
  %2965 = vmatprep.subr.mxu0 0.0
  %2966 = vmatpush1.msra.mxu0 0.0
  %2967 = vmatprep.subr.mxu0 0.0
  %2968 = vmatpush1.msra.mxu0 0.0
  %2969 = vmatprep.subr.mxu0 0.0
  %2970 = vmatpush1.msra.mxu0 0.0
  %2971 = vmatprep.subr.mxu0 0.0
  %2972 = vmatpush1.msra.mxu0 0.0
  %2973 = vmatprep.subr.mxu0 0.0
  %2974 = vmatpush1.msra.mxu0 0.0
  %2975 = vmatprep.subr.mxu0 0.0
  %2976 = vmatpush1.msra.mxu0 0.0
  %2977 = vmatprep.subr.mxu0 0.0
  %2978 = vmatpush1.msra.mxu0 0.0
  %2979 = vmatprep.subr.mxu0 0.0
  %2980 = vmatpush1.msra.mxu0 0.0
  %2981 = vmatprep.subr.mxu0 0.0
  %2982 = vmatpush1.msra.mxu0 0.0
  %2983 = vmatprep.subr.mxu0 0.0
  %2984 = vmatpush1.msra.mxu0 0.0
  %2985 = vmatprep.subr.mxu0 0.0
  %2986 = vmatpush1.msra.mxu0 0.0
  %2987 = vmatprep.subr.mxu0 0.0
  %2988 = vmatpush1.msra.mxu0 0.0
  %2989 = vmatprep.subr.mxu0 0.0
  %2990 = vmatpush1.msra.mxu0 0.0
  %2991 = vmatprep.subr.mxu0 0.0
  %2992 = vmatpush1.msra.mxu0 0.0
  %2993 = vmatprep.subr.mxu0 0.0
  %2994 = vmatpush1.msra.mxu0 0.0
  %2995 = vmatprep.subr.mxu0 0.0
  %2996 = vmatpush1.msra.mxu0 0.0
  %2997 = vmatprep.mubr.f32.mxu0 0.0
  %2998 = vmatmul.mubr.f32.gmra.mrb[0].mxu0 %v2931
  %v2999 = vpop.f32.mrb[0].mxu0
  %v3000 = vadd.f32 %v2926, %v2999
  %v3001 = vpop.f32.mrb[0].mxu0
  %v3002 = vadd.f32 %v2928, %v3001
  %3003 = vdwg.mxu0
  %s3004 = scalar_lea.vmem %s5, 16
  %v3005 = vld [vmem:[%s3004] sm:$0xff]
  %3006 = vrot.lane.b32.xlu0 %v2837, 126
  %v3007 = vpop.permute.xlu0 %3006
  %3008 = vrot.lane.b32.xlu0 %v2846, 126
  %v3009 = vpop.permute.xlu0 %3008
  %v3010 = vsel %vm568, %v3007, %v3009
  %v3014 = vsel %vm2587, %v3005, 0
  %3016 = vmatprep.subr.mxu0 %v3009
  %3017 = vmatpush1.msra.mxu0 %v3010
  %3018 = vmatprep.subr.mxu0 0.0
  %3019 = vmatpush1.msra.mxu0 0.0
  %3020 = vmatprep.subr.mxu0 0.0
  %3021 = vmatpush1.msra.mxu0 0.0
  %3022 = vmatprep.subr.mxu0 0.0
  %3023 = vmatpush1.msra.mxu0 0.0
  %3024 = vmatprep.subr.mxu0 0.0
  %3025 = vmatpush1.msra.mxu0 0.0
  %3026 = vmatprep.subr.mxu0 0.0
  %3027 = vmatpush1.msra.mxu0 0.0
  %3028 = vmatprep.subr.mxu0 0.0
  %3029 = vmatpush1.msra.mxu0 0.0
  %3030 = vmatprep.subr.mxu0 0.0
  %3031 = vmatpush1.msra.mxu0 0.0
  %3032 = vmatprep.subr.mxu0 0.0
  %3033 = vmatpush1.msra.mxu0 0.0
  %3034 = vmatprep.subr.mxu0 0.0
  %3035 = vmatpush1.msra.mxu0 0.0
  %3036 = vmatprep.subr.mxu0 0.0
  %3037 = vmatpush1.msra.mxu0 0.0
  %3038 = vmatprep.subr.mxu0 0.0
  %3039 = vmatpush1.msra.mxu0 0.0
  %3040 = vmatprep.subr.mxu0 0.0
  %3041 = vmatpush1.msra.mxu0 0.0
  %3042 = vmatprep.subr.mxu0 0.0
  %3043 = vmatpush1.msra.mxu0 0.0
  %3044 = vmatprep.subr.mxu0 0.0
  %3045 = vmatpush1.msra.mxu0 0.0
  %3046 = vmatprep.subr.mxu0 0.0
  %3047 = vmatpush1.msra.mxu0 0.0
  %3048 = vmatprep.subr.mxu0 0.0
  %3049 = vmatpush1.msra.mxu0 0.0
  %3050 = vmatprep.subr.mxu0 0.0
  %3051 = vmatpush1.msra.mxu0 0.0
  %3052 = vmatprep.subr.mxu0 0.0
  %3053 = vmatpush1.msra.mxu0 0.0
  %3054 = vmatprep.subr.mxu0 0.0
  %3055 = vmatpush1.msra.mxu0 0.0
  %3056 = vmatprep.subr.mxu0 0.0
  %3057 = vmatpush1.msra.mxu0 0.0
  %3058 = vmatprep.subr.mxu0 0.0
  %3059 = vmatpush1.msra.mxu0 0.0
  %3060 = vmatprep.subr.mxu0 0.0
  %3061 = vmatpush1.msra.mxu0 0.0
  %3062 = vmatprep.subr.mxu0 0.0
  %3063 = vmatpush1.msra.mxu0 0.0
  %3064 = vmatprep.subr.mxu0 0.0
  %3065 = vmatpush1.msra.mxu0 0.0
  %3066 = vmatprep.subr.mxu0 0.0
  %3067 = vmatpush1.msra.mxu0 0.0
  %3068 = vmatprep.subr.mxu0 0.0
  %3069 = vmatpush1.msra.mxu0 0.0
  %3070 = vmatprep.subr.mxu0 0.0
  %3071 = vmatpush1.msra.mxu0 0.0
  %3072 = vmatprep.subr.mxu0 0.0
  %3073 = vmatpush1.msra.mxu0 0.0
  %3074 = vmatprep.subr.mxu0 0.0
  %3075 = vmatpush1.msra.mxu0 0.0
  %3076 = vmatprep.subr.mxu0 0.0
  %3077 = vmatpush1.msra.mxu0 0.0
  %3078 = vmatprep.subr.mxu0 0.0
  %3079 = vmatpush1.msra.mxu0 0.0
  %3080 = vmatprep.mubr.f32.mxu0 0.0
  %3081 = vmatmul.mubr.f32.gmra.mrb[0].mxu0 %v3014
  %v3082 = vpop.f32.mrb[0].mxu0
  %v3083 = vadd.f32 0.0, %v3082
  %v3084 = vpop.f32.mrb[0].mxu0
  %v3085 = vadd.f32 0.0, %v3084
  %3086 = vdwg.mxu0
  %v3087 = vadd.f32 %v3000, %v3083
  %v3088 = vadd.f32 %v3002, %v3085
  %s3089 = scalar_lea.vmem %s5, 24
  %v3090 = vld [vmem:[%s3089] sm:$0xff]
  %3091 = vrot.lane.b32.xlu0 %v2837, 118
  %v3092 = vpop.permute.xlu0 %3091
  %3093 = vrot.lane.b32.xlu0 %v2846, 118
  %v3094 = vpop.permute.xlu0 %3093
  %vm3095 = vcmask 965632
  %v3096 = vsel %vm3095, %v3092, %v3094
  %v3100 = vsel %vm2587, %v3090, 0
  %3102 = vmatprep.subr.mxu0 %v3094
  %3103 = vmatpush1.msra.mxu0 %v3096
  %3104 = vmatprep.subr.mxu0 0.0
  %3105 = vmatpush1.msra.mxu0 0.0
  %3106 = vmatprep.subr.mxu0 0.0
  %3107 = vmatpush1.msra.mxu0 0.0
  %3108 = vmatprep.subr.mxu0 0.0
  %3109 = vmatpush1.msra.mxu0 0.0
  %3110 = vmatprep.subr.mxu0 0.0
  %3111 = vmatpush1.msra.mxu0 0.0
  %3112 = vmatprep.subr.mxu0 0.0
  %3113 = vmatpush1.msra.mxu0 0.0
  %3114 = vmatprep.subr.mxu0 0.0
  %3115 = vmatpush1.msra.mxu0 0.0
  %3116 = vmatprep.subr.mxu0 0.0
  %3117 = vmatpush1.msra.mxu0 0.0
  %3118 = vmatprep.subr.mxu0 0.0
  %3119 = vmatpush1.msra.mxu0 0.0
  %3120 = vmatprep.subr.mxu0 0.0
  %3121 = vmatpush1.msra.mxu0 0.0
  %3122 = vmatprep.subr.mxu0 0.0
  %3123 = vmatpush1.msra.mxu0 0.0
  %3124 = vmatprep.subr.mxu0 0.0
  %3125 = vmatpush1.msra.mxu0 0.0
  %3126 = vmatprep.subr.mxu0 0.0
  %3127 = vmatpush1.msra.mxu0 0.0
  %3128 = vmatprep.subr.mxu0 0.0
  %3129 = vmatpush1.msra.mxu0 0.0
  %3130 = vmatprep.subr.mxu0 0.0
  %3131 = vmatpush1.msra.mxu0 0.0
  %3132 = vmatprep.subr.mxu0 0.0
  %3133 = vmatpush1.msra.mxu0 0.0
  %3134 = vmatprep.subr.mxu0 0.0
  %3135 = vmatpush1.msra.mxu0 0.0
  %3136 = vmatprep.subr.mxu0 0.0
  %3137 = vmatpush1.msra.mxu0 0.0
  %3138 = vmatprep.subr.mxu0 0.0
  %3139 = vmatpush1.msra.mxu0 0.0
  %3140 = vmatprep.subr.mxu0 0.0
  %3141 = vmatpush1.msra.mxu0 0.0
  %3142 = vmatprep.subr.mxu0 0.0
  %3143 = vmatpush1.msra.mxu0 0.0
  %3144 = vmatprep.subr.mxu0 0.0
  %3145 = vmatpush1.msra.mxu0 0.0
  %3146 = vmatprep.subr.mxu0 0.0
  %3147 = vmatpush1.msra.mxu0 0.0
  %3148 = vmatprep.subr.mxu0 0.0
  %3149 = vmatpush1.msra.mxu0 0.0
  %3150 = vmatprep.subr.mxu0 0.0
  %3151 = vmatpush1.msra.mxu0 0.0
  %3152 = vmatprep.subr.mxu0 0.0
  %3153 = vmatpush1.msra.mxu0 0.0
  %3154 = vmatprep.subr.mxu0 0.0
  %3155 = vmatpush1.msra.mxu0 0.0
  %3156 = vmatprep.subr.mxu0 0.0
  %3157 = vmatpush1.msra.mxu0 0.0
  %3158 = vmatprep.subr.mxu0 0.0
  %3159 = vmatpush1.msra.mxu0 0.0
  %3160 = vmatprep.subr.mxu0 0.0
  %3161 = vmatpush1.msra.mxu0 0.0
  %3162 = vmatprep.subr.mxu0 0.0
  %3163 = vmatpush1.msra.mxu0 0.0
  %3164 = vmatprep.subr.mxu0 0.0
  %3165 = vmatpush1.msra.mxu0 0.0
  %3166 = vmatprep.mubr.f32.mxu0 0.0
  %3167 = vmatmul.mubr.f32.gmra.mrb[0].mxu0 %v3100
  %v3168 = vpop.f32.mrb[0].mxu0
  %v3169 = vadd.f32 0.0, %v3168
  %v3170 = vpop.f32.mrb[0].mxu0
  %v3171 = vadd.f32 0.0, %v3170
  %3172 = vdwg.mxu0
  %v3173 = vadd.f32 %v3087, %v3169
  %v3174 = vadd.f32 %v3088, %v3171
  %s3175 = scalar_lea.vmem %s5, 32
  %v3176 = vld [vmem:[%s3175] sm:$0xff]
  %3177 = vrot.lane.b32.xlu0 %v2837, 117
  %v3178 = vpop.permute.xlu0 %3177
  %3179 = vrot.lane.b32.xlu0 %v2846, 117
  %v3180 = vpop.permute.xlu0 %3179
  %vm3181 = vcmask 957440
  %v3182 = vsel %vm3181, %v3178, %v3180
  %v3186 = vsel %vm2587, %v3176, 0
  %3188 = vmatprep.subr.mxu0 %v3180
  %3189 = vmatpush1.msra.mxu0 %v3182
  %3190 = vmatprep.subr.mxu0 0.0
  %3191 = vmatpush1.msra.mxu0 0.0
  %3192 = vmatprep.subr.mxu0 0.0
  %3193 = vmatpush1.msra.mxu0 0.0
  %3194 = vmatprep.subr.mxu0 0.0
  %3195 = vmatpush1.msra.mxu0 0.0
  %3196 = vmatprep.subr.mxu0 0.0
  %3197 = vmatpush1.msra.mxu0 0.0
  %3198 = vmatprep.subr.mxu0 0.0
  %3199 = vmatpush1.msra.mxu0 0.0
  %3200 = vmatprep.subr.mxu0 0.0
  %3201 = vmatpush1.msra.mxu0 0.0
  %3202 = vmatprep.subr.mxu0 0.0
  %3203 = vmatpush1.msra.mxu0 0.0
  %3204 = vmatprep.subr.mxu0 0.0
  %3205 = vmatpush1.msra.mxu0 0.0
  %3206 = vmatprep.subr.mxu0 0.0
  %3207 = vmatpush1.msra.mxu0 0.0
  %3208 = vmatprep.subr.mxu0 0.0
  %3209 = vmatpush1.msra.mxu0 0.0
  %3210 = vmatprep.subr.mxu0 0.0
  %3211 = vmatpush1.msra.mxu0 0.0
  %3212 = vmatprep.subr.mxu0 0.0
  %3213 = vmatpush1.msra.mxu0 0.0
  %3214 = vmatprep.subr.mxu0 0.0
  %3215 = vmatpush1.msra.mxu0 0.0
  %3216 = vmatprep.subr.mxu0 0.0
  %3217 = vmatpush1.msra.mxu0 0.0
  %3218 = vmatprep.subr.mxu0 0.0
  %3219 = vmatpush1.msra.mxu0 0.0
  %3220 = vmatprep.subr.mxu0 0.0
  %3221 = vmatpush1.msra.mxu0 0.0
  %3222 = vmatprep.subr.mxu0 0.0
  %3223 = vmatpush1.msra.mxu0 0.0
  %3224 = vmatprep.subr.mxu0 0.0
  %3225 = vmatpush1.msra.mxu0 0.0
  %3226 = vmatprep.subr.mxu0 0.0
  %3227 = vmatpush1.msra.mxu0 0.0
  %3228 = vmatprep.subr.mxu0 0.0
  %3229 = vmatpush1.msra.mxu0 0.0
  %3230 = vmatprep.subr.mxu0 0.0
  %3231 = vmatpush1.msra.mxu0 0.0
  %3232 = vmatprep.subr.mxu0 0.0
  %3233 = vmatpush1.msra.mxu0 0.0
  %3234 = vmatprep.subr.mxu0 0.0
  %3235 = vmatpush1.msra.mxu0 0.0
  %3236 = vmatprep.subr.mxu0 0.0
  %3237 = vmatpush1.msra.mxu0 0.0
  %3238 = vmatprep.subr.mxu0 0.0
  %3239 = vmatpush1.msra.mxu0 0.0
  %3240 = vmatprep.subr.mxu0 0.0
  %3241 = vmatpush1.msra.mxu0 0.0
  %3242 = vmatprep.subr.mxu0 0.0
  %3243 = vmatpush1.msra.mxu0 0.0
  %3244 = vmatprep.subr.mxu0 0.0
  %3245 = vmatpush1.msra.mxu0 0.0
  %3246 = vmatprep.subr.mxu0 0.0
  %3247 = vmatpush1.msra.mxu0 0.0
  %3248 = vmatprep.subr.mxu0 0.0
  %3249 = vmatpush1.msra.mxu0 0.0
  %3250 = vmatprep.subr.mxu0 0.0
  %3251 = vmatpush1.msra.mxu0 0.0
  %3252 = vmatprep.mubr.f32.mxu0 0.0
  %3253 = vmatmul.mubr.f32.gmra.mrb[0].mxu0 %v3186
  %v3254 = vpop.f32.mrb[0].mxu0
  %v3255 = vadd.f32 0.0, %v3254
  %v3256 = vpop.f32.mrb[0].mxu0
  %v3257 = vadd.f32 0.0, %v3256
  %3258 = vdwg.mxu0
  %v3259 = vadd.f32 %v3173, %v3255
  %v3260 = vadd.f32 %v3174, %v3257
  %s3261 = scalar_lea.vmem %s5, 40
  %v3262 = vld [vmem:[%s3261] sm:$0xff]
  %3263 = vrot.lane.b32.xlu0 %v2837, 116
  %v3264 = vpop.permute.xlu0 %3263
  %3265 = vrot.lane.b32.xlu0 %v2846, 116
  %v3266 = vpop.permute.xlu0 %3265
  %vm3267 = vcmask 949248
  %v3268 = vsel %vm3267, %v3264, %v3266
  %v3272 = vsel %vm2587, %v3262, 0
  %3274 = vmatprep.subr.mxu0 %v3266
  %3275 = vmatpush1.msra.mxu0 %v3268
  %3276 = vmatprep.subr.mxu0 0.0
  %3277 = vmatpush1.msra.mxu0 0.0
  %3278 = vmatprep.subr.mxu0 0.0
  %3279 = vmatpush1.msra.mxu0 0.0
  %3280 = vmatprep.subr.mxu0 0.0
  %3281 = vmatpush1.msra.mxu0 0.0
  %3282 = vmatprep.subr.mxu0 0.0
  %3283 = vmatpush1.msra.mxu0 0.0
  %3284 = vmatprep.subr.mxu0 0.0
  %3285 = vmatpush1.msra.mxu0 0.0
  %3286 = vmatprep.subr.mxu0 0.0
  %3287 = vmatpush1.msra.mxu0 0.0
  %3288 = vmatprep.subr.mxu0 0.0
  %3289 = vmatpush1.msra.mxu0 0.0
  %3290 = vmatprep.subr.mxu0 0.0
  %3291 = vmatpush1.msra.mxu0 0.0
  %3292 = vmatprep.subr.mxu0 0.0
  %3293 = vmatpush1.msra.mxu0 0.0
  %3294 = vmatprep.subr.mxu0 0.0
  %3295 = vmatpush1.msra.mxu0 0.0
  %3296 = vmatprep.subr.mxu0 0.0
  %3297 = vmatpush1.msra.mxu0 0.0
  %3298 = vmatprep.subr.mxu0 0.0
  %3299 = vmatpush1.msra.mxu0 0.0
  %3300 = vmatprep.subr.mxu0 0.0
  %3301 = vmatpush1.msra.mxu0 0.0
  %3302 = vmatprep.subr.mxu0 0.0
  %3303 = vmatpush1.msra.mxu0 0.0
  %3304 = vmatprep.subr.mxu0 0.0
  %3305 = vmatpush1.msra.mxu0 0.0
  %3306 = vmatprep.subr.mxu0 0.0
  %3307 = vmatpush1.msra.mxu0 0.0
  %3308 = vmatprep.subr.mxu0 0.0
  %3309 = vmatpush1.msra.mxu0 0.0
  %3310 = vmatprep.subr.mxu0 0.0
  %3311 = vmatpush1.msra.mxu0 0.0
  %3312 = vmatprep.subr.mxu0 0.0
  %3313 = vmatpush1.msra.mxu0 0.0
  %3314 = vmatprep.subr.mxu0 0.0
  %3315 = vmatpush1.msra.mxu0 0.0
  %3316 = vmatprep.subr.mxu0 0.0
  %3317 = vmatpush1.msra.mxu0 0.0
  %3318 = vmatprep.subr.mxu0 0.0
  %3319 = vmatpush1.msra.mxu0 0.0
  %3320 = vmatprep.subr.mxu0 0.0
  %3321 = vmatpush1.msra.mxu0 0.0
  %3322 = vmatprep.subr.mxu0 0.0
  %3323 = vmatpush1.msra.mxu0 0.0
  %3324 = vmatprep.subr.mxu0 0.0
  %3325 = vmatpush1.msra.mxu0 0.0
  %3326 = vmatprep.subr.mxu0 0.0
  %3327 = vmatpush1.msra.mxu0 0.0
  %3328 = vmatprep.subr.mxu0 0.0
  %3329 = vmatpush1.msra.mxu0 0.0
  %3330 = vmatprep.subr.mxu0 0.0
  %3331 = vmatpush1.msra.mxu0 0.0
  %3332 = vmatprep.subr.mxu0 0.0
  %3333 = vmatpush1.msra.mxu0 0.0
  %3334 = vmatprep.subr.mxu0 0.0
  %3335 = vmatpush1.msra.mxu0 0.0
  %3336 = vmatprep.subr.mxu0 0.0
  %3337 = vmatpush1.msra.mxu0 0.0
  %3338 = vmatprep.mubr.f32.mxu0 0.0
  %3339 = vmatmul.mubr.f32.gmra.mrb[0].mxu0 %v3272
  %v3340 = vpop.f32.mrb[0].mxu0
  %v3341 = vadd.f32 0.0, %v3340
  %v3342 = vpop.f32.mrb[0].mxu0
  %v3343 = vadd.f32 0.0, %v3342
  %3344 = vdwg.mxu0
  %v3345 = vadd.f32 %v3259, %v3341
  %v3346 = vadd.f32 %v3260, %v3343
  %s3347 = scalar_lea.vmem %s5, 48
  %v3348 = vld [vmem:[%s3347] sm:$0xff]
  %3349 = vrot.lane.b32.xlu0 %v2837, 108
  %v3350 = vpop.permute.xlu0 %3349
  %3351 = vrot.lane.b32.xlu0 %v2846, 108
  %v3352 = vpop.permute.xlu0 %3351
  %v3353 = vsel %vm1330, %v3350, %v3352
  %v3357 = vsel %vm2587, %v3348, 0
  %3359 = vmatprep.subr.mxu0 %v3352
  %3360 = vmatpush1.msra.mxu0 %v3353
  %3361 = vmatprep.subr.mxu0 0.0
  %3362 = vmatpush1.msra.mxu0 0.0
  %3363 = vmatprep.subr.mxu0 0.0
  %3364 = vmatpush1.msra.mxu0 0.0
  %3365 = vmatprep.subr.mxu0 0.0
  %3366 = vmatpush1.msra.mxu0 0.0
  %3367 = vmatprep.subr.mxu0 0.0
  %3368 = vmatpush1.msra.mxu0 0.0
  %3369 = vmatprep.subr.mxu0 0.0
  %3370 = vmatpush1.msra.mxu0 0.0
  %3371 = vmatprep.subr.mxu0 0.0
  %3372 = vmatpush1.msra.mxu0 0.0
  %3373 = vmatprep.subr.mxu0 0.0
  %3374 = vmatpush1.msra.mxu0 0.0
  %3375 = vmatprep.subr.mxu0 0.0
  %3376 = vmatpush1.msra.mxu0 0.0
  %3377 = vmatprep.subr.mxu0 0.0
  %3378 = vmatpush1.msra.mxu0 0.0
  %3379 = vmatprep.subr.mxu0 0.0
  %3380 = vmatpush1.msra.mxu0 0.0
  %3381 = vmatprep.subr.mxu0 0.0
  %3382 = vmatpush1.msra.mxu0 0.0
  %3383 = vmatprep.subr.mxu0 0.0
  %3384 = vmatpush1.msra.mxu0 0.0
  %3385 = vmatprep.subr.mxu0 0.0
  %3386 = vmatpush1.msra.mxu0 0.0
  %3387 = vmatprep.subr.mxu0 0.0
  %3388 = vmatpush1.msra.mxu0 0.0
  %3389 = vmatprep.subr.mxu0 0.0
  %3390 = vmatpush1.msra.mxu0 0.0
  %3391 = vmatprep.subr.mxu0 0.0
  %3392 = vmatpush1.msra.mxu0 0.0
  %3393 = vmatprep.subr.mxu0 0.0
  %3394 = vmatpush1.msra.mxu0 0.0
  %3395 = vmatprep.subr.mxu0 0.0
  %3396 = vmatpush1.msra.mxu0 0.0
  %3397 = vmatprep.subr.mxu0 0.0
  %3398 = vmatpush1.msra.mxu0 0.0
  %3399 = vmatprep.subr.mxu0 0.0
  %3400 = vmatpush1.msra.mxu0 0.0
  %3401 = vmatprep.subr.mxu0 0.0
  %3402 = vmatpush1.msra.mxu0 0.0
  %3403 = vmatprep.subr.mxu0 0.0
  %3404 = vmatpush1.msra.mxu0 0.0
  %3405 = vmatprep.subr.mxu0 0.0
  %3406 = vmatpush1.msra.mxu0 0.0
  %3407 = vmatprep.subr.mxu0 0.0
  %3408 = vmatpush1.msra.mxu0 0.0
  %3409 = vmatprep.subr.mxu0 0.0
  %3410 = vmatpush1.msra.mxu0 0.0
  %3411 = vmatprep.subr.mxu0 0.0
  %3412 = vmatpush1.msra.mxu0 0.0
  %3413 = vmatprep.subr.mxu0 0.0
  %3414 = vmatpush1.msra.mxu0 0.0
  %3415 = vmatprep.subr.mxu0 0.0
  %3416 = vmatpush1.msra.mxu0 0.0
  %3417 = vmatprep.subr.mxu0 0.0
  %3418 = vmatpush1.msra.mxu0 0.0
  %3419 = vmatprep.subr.mxu0 0.0
  %3420 = vmatpush1.msra.mxu0 0.0
  %3421 = vmatprep.subr.mxu0 0.0
  %3422 = vmatpush1.msra.mxu0 0.0
  %3423 = vmatprep.mubr.f32.mxu0 0.0
  %3424 = vmatmul.mubr.f32.gmra.mrb[0].mxu0 %v3357
  %v3425 = vpop.f32.mrb[0].mxu0
  %v3426 = vadd.f32 0.0, %v3425
  %v3427 = vpop.f32.mrb[0].mxu0
  %v3428 = vadd.f32 0.0, %v3427
  %3429 = vdwg.mxu0
  %v3430 = vadd.f32 %v3345, %v3426
  %v3431 = vadd.f32 %v3346, %v3428
  %s3432 = scalar_lea.vmem %s5, 56
  %v3433 = vld [vmem:[%s3432] sm:$0xff]
  %3434 = vrot.lane.b32.xlu0 %v2837, 107
  %v3435 = vpop.permute.xlu0 %3434
  %3436 = vrot.lane.b32.xlu0 %v2846, 107
  %v3437 = vpop.permute.xlu0 %3436
  %vm3438 = vcmask 875520
  %v3439 = vsel %vm3438, %v3435, %v3437
  %v3443 = vsel %vm2587, %v3433, 0
  %3445 = vmatprep.subr.mxu0 %v3437
  %3446 = vmatpush1.msra.mxu0 %v3439
  %3447 = vmatprep.subr.mxu0 0.0
  %3448 = vmatpush1.msra.mxu0 0.0
  %3449 = vmatprep.subr.mxu0 0.0
  %3450 = vmatpush1.msra.mxu0 0.0
  %3451 = vmatprep.subr.mxu0 0.0
  %3452 = vmatpush1.msra.mxu0 0.0
  %3453 = vmatprep.subr.mxu0 0.0
  %3454 = vmatpush1.msra.mxu0 0.0
  %3455 = vmatprep.subr.mxu0 0.0
  %3456 = vmatpush1.msra.mxu0 0.0
  %3457 = vmatprep.subr.mxu0 0.0
  %3458 = vmatpush1.msra.mxu0 0.0
  %3459 = vmatprep.subr.mxu0 0.0
  %3460 = vmatpush1.msra.mxu0 0.0
  %3461 = vmatprep.subr.mxu0 0.0
  %3462 = vmatpush1.msra.mxu0 0.0
  %3463 = vmatprep.subr.mxu0 0.0
  %3464 = vmatpush1.msra.mxu0 0.0
  %3465 = vmatprep.subr.mxu0 0.0
  %3466 = vmatpush1.msra.mxu0 0.0
  %3467 = vmatprep.subr.mxu0 0.0
  %3468 = vmatpush1.msra.mxu0 0.0
  %3469 = vmatprep.subr.mxu0 0.0
  %3470 = vmatpush1.msra.mxu0 0.0
  %3471 = vmatprep.subr.mxu0 0.0
  %3472 = vmatpush1.msra.mxu0 0.0
  %3473 = vmatprep.subr.mxu0 0.0
  %3474 = vmatpush1.msra.mxu0 0.0
  %3475 = vmatprep.subr.mxu0 0.0
  %3476 = vmatpush1.msra.mxu0 0.0
  %3477 = vmatprep.subr.mxu0 0.0
  %3478 = vmatpush1.msra.mxu0 0.0
  %3479 = vmatprep.subr.mxu0 0.0
  %3480 = vmatpush1.msra.mxu0 0.0
  %3481 = vmatprep.subr.mxu0 0.0
  %3482 = vmatpush1.msra.mxu0 0.0
  %3483 = vmatprep.subr.mxu0 0.0
  %3484 = vmatpush1.msra.mxu0 0.0
  %3485 = vmatprep.subr.mxu0 0.0
  %3486 = vmatpush1.msra.mxu0 0.0
  %3487 = vmatprep.subr.mxu0 0.0
  %3488 = vmatpush1.msra.mxu0 0.0
  %3489 = vmatprep.subr.mxu0 0.0
  %3490 = vmatpush1.msra.mxu0 0.0
  %3491 = vmatprep.subr.mxu0 0.0
  %3492 = vmatpush1.msra.mxu0 0.0
  %3493 = vmatprep.subr.mxu0 0.0
  %3494 = vmatpush1.msra.mxu0 0.0
  %3495 = vmatprep.subr.mxu0 0.0
  %3496 = vmatpush1.msra.mxu0 0.0
  %3497 = vmatprep.subr.mxu0 0.0
  %3498 = vmatpush1.msra.mxu0 0.0
  %3499 = vmatprep.subr.mxu0 0.0
  %3500 = vmatpush1.msra.mxu0 0.0
  %3501 = vmatprep.subr.mxu0 0.0
  %3502 = vmatpush1.msra.mxu0 0.0
  %3503 = vmatprep.subr.mxu0 0.0
  %3504 = vmatpush1.msra.mxu0 0.0
  %3505 = vmatprep.subr.mxu0 0.0
  %3506 = vmatpush1.msra.mxu0 0.0
  %3507 = vmatprep.subr.mxu0 0.0
  %3508 = vmatpush1.msra.mxu0 0.0
  %3509 = vmatprep.mubr.f32.mxu0 0.0
  %3510 = vmatmul.mubr.f32.gmra.mrb[0].mxu0 %v3443
  %v3511 = vpop.f32.mrb[0].mxu0
  %v3512 = vadd.f32 0.0, %v3511
  %v3513 = vpop.f32.mrb[0].mxu0
  %v3514 = vadd.f32 0.0, %v3513
  %3515 = vdwg.mxu0
  %v3516 = vadd.f32 %v3430, %v3512
  %v3517 = vadd.f32 %v3431, %v3514
  %s3518 = scalar_lea.vmem %s5, 64
  %v3519 = vld [vmem:[%s3518] sm:$0xff]
  %3520 = vrot.lane.b32.xlu0 %v2837, 106
  %v3521 = vpop.permute.xlu0 %3520
  %3522 = vrot.lane.b32.xlu0 %v2846, 106
  %v3523 = vpop.permute.xlu0 %3522
  %vm3524 = vcmask 867328
  %v3525 = vsel %vm3524, %v3521, %v3523
  %v3529 = vsel %vm2587, %v3519, 0
  %3531 = vmatprep.subr.mxu0 %v3523
  %3532 = vmatpush1.msra.mxu0 %v3525
  %3533 = vmatprep.subr.mxu0 0.0
  %3534 = vmatpush1.msra.mxu0 0.0
  %3535 = vmatprep.subr.mxu0 0.0
  %3536 = vmatpush1.msra.mxu0 0.0
  %3537 = vmatprep.subr.mxu0 0.0
  %3538 = vmatpush1.msra.mxu0 0.0
  %3539 = vmatprep.subr.mxu0 0.0
  %3540 = vmatpush1.msra.mxu0 0.0
  %3541 = vmatprep.subr.mxu0 0.0
  %3542 = vmatpush1.msra.mxu0 0.0
  %3543 = vmatprep.subr.mxu0 0.0
  %3544 = vmatpush1.msra.mxu0 0.0
  %3545 = vmatprep.subr.mxu0 0.0
  %3546 = vmatpush1.msra.mxu0 0.0
  %3547 = vmatprep.subr.mxu0 0.0
  %3548 = vmatpush1.msra.mxu0 0.0
  %3549 = vmatprep.subr.mxu0 0.0
  %3550 = vmatpush1.msra.mxu0 0.0
  %3551 = vmatprep.subr.mxu0 0.0
  %3552 = vmatpush1.msra.mxu0 0.0
  %3553 = vmatprep.subr.mxu0 0.0
  %3554 = vmatpush1.msra.mxu0 0.0
  %3555 = vmatprep.subr.mxu0 0.0
  %3556 = vmatpush1.msra.mxu0 0.0
  %3557 = vmatprep.subr.mxu0 0.0
  %3558 = vmatpush1.msra.mxu0 0.0
  %3559 = vmatprep.subr.mxu0 0.0
  %3560 = vmatpush1.msra.mxu0 0.0
  %3561 = vmatprep.subr.mxu0 0.0
  %3562 = vmatpush1.msra.mxu0 0.0
  %3563 = vmatprep.subr.mxu0 0.0
  %3564 = vmatpush1.msra.mxu0 0.0
  %3565 = vmatprep.subr.mxu0 0.0
  %3566 = vmatpush1.msra.mxu0 0.0
  %3567 = vmatprep.subr.mxu0 0.0
  %3568 = vmatpush1.msra.mxu0 0.0
  %3569 = vmatprep.subr.mxu0 0.0
  %3570 = vmatpush1.msra.mxu0 0.0
  %3571 = vmatprep.subr.mxu0 0.0
  %3572 = vmatpush1.msra.mxu0 0.0
  %3573 = vmatprep.subr.mxu0 0.0
  %3574 = vmatpush1.msra.mxu0 0.0
  %3575 = vmatprep.subr.mxu0 0.0
  %3576 = vmatpush1.msra.mxu0 0.0
  %3577 = vmatprep.subr.mxu0 0.0
  %3578 = vmatpush1.msra.mxu0 0.0
  %3579 = vmatprep.subr.mxu0 0.0
  %3580 = vmatpush1.msra.mxu0 0.0
  %3581 = vmatprep.subr.mxu0 0.0
  %3582 = vmatpush1.msra.mxu0 0.0
  %3583 = vmatprep.subr.mxu0 0.0
  %3584 = vmatpush1.msra.mxu0 0.0
  %3585 = vmatprep.subr.mxu0 0.0
  %3586 = vmatpush1.msra.mxu0 0.0
  %3587 = vmatprep.subr.mxu0 0.0
  %3588 = vmatpush1.msra.mxu0 0.0
  %3589 = vmatprep.subr.mxu0 0.0
  %3590 = vmatpush1.msra.mxu0 0.0
  %3591 = vmatprep.subr.mxu0 0.0
  %3592 = vmatpush1.msra.mxu0 0.0
  %3593 = vmatprep.subr.mxu0 0.0
  %3594 = vmatpush1.msra.mxu0 0.0
  %3595 = vmatprep.mubr.f32.mxu0 0.0
  %3596 = vmatmul.mubr.f32.gmra.mrb[0].mxu0 %v3529
  %v3597 = vpop.f32.mrb[0].mxu0
  %v3598 = vadd.f32 0.0, %v3597
  %v3599 = vpop.f32.mrb[0].mxu0
  %v3600 = vadd.f32 0.0, %v3599
  %3601 = vdwg.mxu0
  %v3602 = vadd.f32 %v3516, %v3598
  %v3603 = vadd.f32 %v3517, %v3600
  %3605 = vset.pattern.permute.xlu0 0
  %3606 = vperm.xlu0 %3605, %v2839
  %v3607 = vpop.permute.xlu0 %3606
  %v3609 = vadd.f32 %v3602, %v3607
  %v3610 = vadd.f32 %v3603, %v3607
  %v3611 = vmax.f32 %v3609, 0.0
  %v3612 = vmax.f32 %v3610, 0.0
  %3613 = vrot.lane.b32.xlu0 %v3611, 72
  %v3614 = vpop.permute.xlu0 %3613
  %v3615 = vsel %vm2843, %v3614, %v3612
  %3618 = vrot.lane.b32.xlu0 %v3611, 127
  %v3619 = vpop.permute.xlu0 %3618
  %3620 = vrot.lane.b32.xlu0 %v3615, 127
  %v3621 = vpop.permute.xlu0 %3620
  %v3622 = vsel %vm90, %v3619, %v3621
  %v3625 = vmax.f32 %v3611, %v3622
  %v3626 = vmax.f32 %v3612, %v3621
  %3627 = vrot.lane.b32.xlu0 %v3625, 72
  %v3628 = vpop.permute.xlu0 %3627
  %v3629 = vsel %vm2843, %v3628, %v3626
  %3632 = vrot.lane.b32.xlu0 %v3625, 118
  %v3633 = vpop.permute.xlu0 %3632
  %3634 = vrot.lane.b32.xlu0 %v3629, 118
  %v3635 = vpop.permute.xlu0 %3634
  %v3636 = vsel %vm3095, %v3633, %v3635
  %v3639 = vmax.f32 %v3625, %v3636
  %v3640 = vmax.f32 %v3626, %v3635
  %v3641 = vld [vmem:[%s7] sm:$0xff]
  %v3642 = vld [vmem:[%s7 + $0x8] sm:$0xff]
  %v3643 = vld [vmem:[%s7 + $0x10] sm:$0xff]
  %v3644 = vld [vmem:[%s7 + $0x18] sm:$0xff]
  %v3645 = vld [vmem:[%s7 + $0x20] sm:$0xff]
  %v3646 = vld [vmem:[%s7 + $0x28] sm:$0xff]
  %v3647 = vld [vmem:[%s7 + $0x30] sm:$0xff]
  %v3648 = vld [vmem:[%s7 + $0x38] sm:$0xff]
  %v3649 = vld [vmem:[%s7 + $0x40] sm:$0xff]
  %v3650 = vld [vmem:[%s7 + $0x48] sm:$0xff]
  %v3651 = vld [vmem:[%s7 + $0x50] sm:$0xff]
  %v3652 = vld [vmem:[%s7 + $0x58] sm:$0xff]
  %v3653 = vld [vmem:[%s7 + $0x60] sm:$0xff]
  %v3654 = vld [vmem:[%s7 + $0x68] sm:$0xff]
  %v3655 = vld [vmem:[%s7 + $0x70] sm:$0xff]
  %v3656 = vld [vmem:[%s7 + $0x78] sm:$0xff]
  %v3657 = vld [vmem:[%s7 + $0x80] sm:$0xff]
  %v3658 = vld [vmem:[%s7 + $0x88] sm:$0xff]
  %v3659 = vld [vmem:[%s7 + $0x90] sm:$0xff]
  %v3660 = vld [vmem:[%s7 + $0x98] sm:$0xff]
  %v3661 = vld [vmem:[%s7 + $0xa0] sm:$0xff]
  %v3662 = vld [vmem:[%s7 + $0xa8] sm:$0xff]
  %v3663 = vld [vmem:[%s7 + $0xb0] sm:$0xff]
  %v3664 = vld [vmem:[%s7 + $0xb8] sm:$0xff]
  %v3665 = vld [vmem:[%s7 + $0xc0] sm:$0xff]
  %v3667 = vsel %vm2805, %v3640, 0
  %3669 = vmatprep.subr.mxu0 0.0
  %3670 = vmatpush1.msra.mxu0 %v3641
  %3671 = vmatprep.subr.mxu0 0.0
  %3672 = vmatpush1.msra.mxu0 %v3642
  %3673 = vmatprep.subr.mxu0 0.0
  %3674 = vmatpush1.msra.mxu0 %v3643
  %3675 = vmatprep.subr.mxu0 0.0
  %3676 = vmatpush1.msra.mxu0 %v3644
  %3677 = vmatprep.subr.mxu0 0.0
  %3678 = vmatpush1.msra.mxu0 %v3645
  %3679 = vmatprep.subr.mxu0 0.0
  %3680 = vmatpush1.msra.mxu0 %v3646
  %3681 = vmatprep.subr.mxu0 0.0
  %3682 = vmatpush1.msra.mxu0 %v3647
  %3683 = vmatprep.subr.mxu0 0.0
  %3684 = vmatpush1.msra.mxu0 %v3648
  %3685 = vmatprep.subr.mxu0 0.0
  %3686 = vmatpush1.msra.mxu0 %v3649
  %3687 = vmatprep.subr.mxu0 0.0
  %3688 = vmatpush1.msra.mxu0 %v3650
  %3689 = vmatprep.subr.mxu0 0.0
  %3690 = vmatpush1.msra.mxu0 %v3651
  %3691 = vmatprep.subr.mxu0 0.0
  %3692 = vmatpush1.msra.mxu0 %v3652
  %3693 = vmatprep.subr.mxu0 0.0
  %3694 = vmatpush1.msra.mxu0 %v3653
  %3695 = vmatprep.subr.mxu0 0.0
  %3696 = vmatpush1.msra.mxu0 %v3654
  %3697 = vmatprep.subr.mxu0 0.0
  %3698 = vmatpush1.msra.mxu0 %v3655
  %3699 = vmatprep.subr.mxu0 0.0
  %3700 = vmatpush1.msra.mxu0 %v3656
  %3701 = vmatprep.subr.mxu0 0.0
  %3702 = vmatpush1.msra.mxu0 %v3657
  %3703 = vmatprep.subr.mxu0 0.0
  %3704 = vmatpush1.msra.mxu0 %v3658
  %3705 = vmatprep.subr.mxu0 0.0
  %3706 = vmatpush1.msra.mxu0 %v3659
  %3707 = vmatprep.subr.mxu0 0.0
  %3708 = vmatpush1.msra.mxu0 %v3660
  %3709 = vmatprep.subr.mxu0 0.0
  %3710 = vmatpush1.msra.mxu0 %v3661
  %3711 = vmatprep.subr.mxu0 0.0
  %3712 = vmatpush1.msra.mxu0 %v3662
  %3713 = vmatprep.subr.mxu0 0.0
  %3714 = vmatpush1.msra.mxu0 %v3663
  %3715 = vmatprep.subr.mxu0 0.0
  %3716 = vmatpush1.msra.mxu0 %v3664
  %3717 = vmatprep.subr.mxu0 0.0
  %3718 = vmatpush1.msra.mxu0 %v3665
  %3719 = vmatprep.subr.mxu0 0.0
  %3720 = vmatpush1.msra.mxu0 0.0
  %3721 = vmatprep.subr.mxu0 0.0
  %3722 = vmatpush1.msra.mxu0 0.0
  %3723 = vmatprep.subr.mxu0 0.0
  %3724 = vmatpush1.msra.mxu0 0.0
  %3725 = vmatprep.subr.mxu0 0.0
  %3726 = vmatpush1.msra.mxu0 0.0
  %3727 = vmatprep.subr.mxu0 0.0
  %3728 = vmatpush1.msra.mxu0 0.0
  %3729 = vmatprep.subr.mxu0 0.0
  %3730 = vmatpush1.msra.mxu0 0.0
  %3731 = vmatprep.subr.mxu0 0.0
  %3732 = vmatpush1.msra.mxu0 0.0
  %3733 = vmatprep.mubr.f32.mxu0 %v3667
  %3734 = vmatmul.mubr.f32.gmra.mrb[0].mxu0 %v3639
  %v3735 = vpop.f32.mrb[0].mxu0
  %v3736 = vadd.f32 0.0, %v3735
  %v3737 = vpop.f32.mrb[0].mxu0
  %3738 = vdwg.mxu0
  %v3739 = vld [vmem:[%s8] sm:$0x1]
  %v3740 = vsel %vm2805, %v3736, 0.0
  %3741 = vadd.xlane.f32.xlu0 %v3740
  %v3742 = vpop.xlane.xlu0 %3741
  %v3743 = vmul.f32 %v3742, 0.03125
  %v3744 = vmul.f32 %v3736, %v3736
  %v3745 = vsel %vm2805, %v3744, 0.0
  %3746 = vadd.xlane.f32.xlu0 %v3745
  %v3747 = vpop.xlane.xlu0 %3746
  %v3748 = vmul.f32 %v3747, 0.03125
  %v3749 = vmul.f32 %v3743, %v3743
  %v3750 = vsub.f32 %v3748, %v3749
  %v3751 = vsub.f32 %v3736, %v3743
  %v3752 = vadd.f32 %v3750, 1e-05
  %v3753 = vrsqrt.pop %v3752
  %v3754 = vmul.f32 %v3751, %v3753
  %v3756 = vlaneseq
  %v3757 = vshrl.u32 %v3756, 7
  %v3758 = vsub.s32 0, %v3757
  %v3759 = vrot.slane %v3739, %v3758
  %v3761 = vmul.f32 %v3754, %v3759
  %s3762 = scalar_lea.vmem %s6, 8
  %v3763 = vld [vmem:[%s3762] sm:$0xff]
  %s3764 = scalar_lea.vmem %s5, 72
  %v3765 = vld [vmem:[%s3764] sm:$0xff]
  %s3766 = scalar_lea.vmem %s5, 80
  %v3767 = vld [vmem:[%s3766] sm:$0xff]
  %3768 = vrot.lane.b32.xlu0 %v3761, 72
  %v3769 = vpop.permute.xlu0 %3768
  %v3770 = vsel %vm2843, %v3769, %v3761
  %3771 = vrot.lane.b32.xlu0 %v3770, 72
  %v3772 = vpop.permute.xlu0 %3771
  %v3773 = vsel %vm2843, %v3772, %v3761
  %3775 = vrot.lane.b32.xlu0 %v3773, 127
  %v3776 = vpop.permute.xlu0 %3775
  %v3779 = vsel %vm2587, %v3767, 0
  %3781 = vmatprep.subr.mxu0 0.0
  %3782 = vmatpush1.msra.mxu0 %v3776
  %3783 = vmatprep.subr.mxu0 0.0
  %3784 = vmatpush1.msra.mxu0 0.0
  %3785 = vmatprep.subr.mxu0 0.0
  %3786 = vmatpush1.msra.mxu0 0.0
  %3787 = vmatprep.subr.mxu0 0.0
  %3788 = vmatpush1.msra.mxu0 0.0
  %3789 = vmatprep.subr.mxu0 0.0
  %3790 = vmatpush1.msra.mxu0 0.0
  %3791 = vmatprep.subr.mxu0 0.0
  %3792 = vmatpush1.msra.mxu0 0.0
  %3793 = vmatprep.subr.mxu0 0.0
  %3794 = vmatpush1.msra.mxu0 0.0
  %3795 = vmatprep.subr.mxu0 0.0
  %3796 = vmatpush1.msra.mxu0 0.0
  %3797 = vmatprep.subr.mxu0 0.0
  %3798 = vmatpush1.msra.mxu0 0.0
  %3799 = vmatprep.subr.mxu0 0.0
  %3800 = vmatpush1.msra.mxu0 0.0
  %3801 = vmatprep.subr.mxu0 0.0
  %3802 = vmatpush1.msra.mxu0 0.0
  %3803 = vmatprep.subr.mxu0 0.0
  %3804 = vmatpush1.msra.mxu0 0.0
  %3805 = vmatprep.subr.mxu0 0.0
  %3806 = vmatpush1.msra.mxu0 0.0
  %3807 = vmatprep.subr.mxu0 0.0
  %3808 = vmatpush1.msra.mxu0 0.0
  %3809 = vmatprep.subr.mxu0 0.0
  %3810 = vmatpush1.msra.mxu0 0.0
  %3811 = vmatprep.subr.mxu0 0.0
  %3812 = vmatpush1.msra.mxu0 0.0
  %3813 = vmatprep.subr.mxu0 0.0
  %3814 = vmatpush1.msra.mxu0 0.0
  %3815 = vmatprep.subr.mxu0 0.0
  %3816 = vmatpush1.msra.mxu0 0.0
  %3817 = vmatprep.subr.mxu0 0.0
  %3818 = vmatpush1.msra.mxu0 0.0
  %3819 = vmatprep.subr.mxu0 0.0
  %3820 = vmatpush1.msra.mxu0 0.0
  %3821 = vmatprep.subr.mxu0 0.0
  %3822 = vmatpush1.msra.mxu0 0.0
  %3823 = vmatprep.subr.mxu0 0.0
  %3824 = vmatpush1.msra.mxu0 0.0
  %3825 = vmatprep.subr.mxu0 0.0
  %3826 = vmatpush1.msra.mxu0 0.0
  %3827 = vmatprep.subr.mxu0 0.0
  %3828 = vmatpush1.msra.mxu0 0.0
  %3829 = vmatprep.subr.mxu0 0.0
  %3830 = vmatpush1.msra.mxu0 0.0
  %3831 = vmatprep.subr.mxu0 0.0
  %3832 = vmatpush1.msra.mxu0 0.0
  %3833 = vmatprep.subr.mxu0 0.0
  %3834 = vmatpush1.msra.mxu0 0.0
  %3835 = vmatprep.subr.mxu0 0.0
  %3836 = vmatpush1.msra.mxu0 0.0
  %3837 = vmatprep.subr.mxu0 0.0
  %3838 = vmatpush1.msra.mxu0 0.0
  %3839 = vmatprep.subr.mxu0 0.0
  %3840 = vmatpush1.msra.mxu0 0.0
  %3841 = vmatprep.subr.mxu0 0.0
  %3842 = vmatpush1.msra.mxu0 0.0
  %3843 = vmatprep.subr.mxu0 0.0
  %3844 = vmatpush1.msra.mxu0 0.0
  %3845 = vmatprep.mubr.f32.mxu0 0.0
  %3846 = vmatmul.mubr.f32.gmra.mrb[0].mxu0 %v3779
  %v3847 = vpop.f32.mrb[0].mxu0
  %v3848 = vadd.f32 0.0, %v3847
  %v3849 = vpop.f32.mrb[0].mxu0
  %3850 = vdwg.mxu0
  %v3852 = vsel %vm2587, %v3765, 0
  %3854 = vmatprep.subr.mxu0 0.0
  %3855 = vmatpush1.msra.mxu0 %v3761
  %3856 = vmatprep.subr.mxu0 0.0
  %3857 = vmatpush1.msra.mxu0 0.0
  %3858 = vmatprep.subr.mxu0 0.0
  %3859 = vmatpush1.msra.mxu0 0.0
  %3860 = vmatprep.subr.mxu0 0.0
  %3861 = vmatpush1.msra.mxu0 0.0
  %3862 = vmatprep.subr.mxu0 0.0
  %3863 = vmatpush1.msra.mxu0 0.0
  %3864 = vmatprep.subr.mxu0 0.0
  %3865 = vmatpush1.msra.mxu0 0.0
  %3866 = vmatprep.subr.mxu0 0.0
  %3867 = vmatpush1.msra.mxu0 0.0
  %3868 = vmatprep.subr.mxu0 0.0
  %3869 = vmatpush1.msra.mxu0 0.0
  %3870 = vmatprep.subr.mxu0 0.0
  %3871 = vmatpush1.msra.mxu0 0.0
  %3872 = vmatprep.subr.mxu0 0.0
  %3873 = vmatpush1.msra.mxu0 0.0
  %3874 = vmatprep.subr.mxu0 0.0
  %3875 = vmatpush1.msra.mxu0 0.0
  %3876 = vmatprep.subr.mxu0 0.0
  %3877 = vmatpush1.msra.mxu0 0.0
  %3878 = vmatprep.subr.mxu0 0.0
  %3879 = vmatpush1.msra.mxu0 0.0
  %3880 = vmatprep.subr.mxu0 0.0
  %3881 = vmatpush1.msra.mxu0 0.0
  %3882 = vmatprep.subr.mxu0 0.0
  %3883 = vmatpush1.msra.mxu0 0.0
  %3884 = vmatprep.subr.mxu0 0.0
  %3885 = vmatpush1.msra.mxu0 0.0
  %3886 = vmatprep.subr.mxu0 0.0
  %3887 = vmatpush1.msra.mxu0 0.0
  %3888 = vmatprep.subr.mxu0 0.0
  %3889 = vmatpush1.msra.mxu0 0.0
  %3890 = vmatprep.subr.mxu0 0.0
  %3891 = vmatpush1.msra.mxu0 0.0
  %3892 = vmatprep.subr.mxu0 0.0
  %3893 = vmatpush1.msra.mxu0 0.0
  %3894 = vmatprep.subr.mxu0 0.0
  %3895 = vmatpush1.msra.mxu0 0.0
  %3896 = vmatprep.subr.mxu0 0.0
  %3897 = vmatpush1.msra.mxu0 0.0
  %3898 = vmatprep.subr.mxu0 0.0
  %3899 = vmatpush1.msra.mxu0 0.0
  %3900 = vmatprep.subr.mxu0 0.0
  %3901 = vmatpush1.msra.mxu0 0.0
  %3902 = vmatprep.subr.mxu0 0.0
  %3903 = vmatpush1.msra.mxu0 0.0
  %3904 = vmatprep.subr.mxu0 0.0
  %3905 = vmatpush1.msra.mxu0 0.0
  %3906 = vmatprep.subr.mxu0 0.0
  %3907 = vmatpush1.msra.mxu0 0.0
  %3908 = vmatprep.subr.mxu0 0.0
  %3909 = vmatpush1.msra.mxu0 0.0
  %3910 = vmatprep.subr.mxu0 0.0
  %3911 = vmatpush1.msra.mxu0 0.0
  %3912 = vmatprep.subr.mxu0 0.0
  %3913 = vmatpush1.msra.mxu0 0.0
  %3914 = vmatprep.subr.mxu0 0.0
  %3915 = vmatpush1.msra.mxu0 0.0
  %3916 = vmatprep.subr.mxu0 0.0
  %3917 = vmatpush1.msra.mxu0 0.0
  %3918 = vmatprep.mubr.f32.mxu0 0.0
  %3919 = vmatmul.mubr.f32.gmra.mrb[0].mxu0 %v3852
  %v3920 = vpop.f32.mrb[0].mxu0
  %v3921 = vadd.f32 %v3848, %v3920
  %v3922 = vpop.f32.mrb[0].mxu0
  %3923 = vdwg.mxu0
  %s3924 = scalar_lea.vmem %s5, 88
  %v3925 = vld [vmem:[%s3924] sm:$0xff]
  %3926 = vrot.lane.b32.xlu0 %v3773, 126
  %v3927 = vpop.permute.xlu0 %3926
  %v3930 = vsel %vm2587, %v3925, 0
  %3932 = vmatprep.subr.mxu0 0.0
  %3933 = vmatpush1.msra.mxu0 %v3927
  %3934 = vmatprep.subr.mxu0 0.0
  %3935 = vmatpush1.msra.mxu0 0.0
  %3936 = vmatprep.subr.mxu0 0.0
  %3937 = vmatpush1.msra.mxu0 0.0
  %3938 = vmatprep.subr.mxu0 0.0
  %3939 = vmatpush1.msra.mxu0 0.0
  %3940 = vmatprep.subr.mxu0 0.0
  %3941 = vmatpush1.msra.mxu0 0.0
  %3942 = vmatprep.subr.mxu0 0.0
  %3943 = vmatpush1.msra.mxu0 0.0
  %3944 = vmatprep.subr.mxu0 0.0
  %3945 = vmatpush1.msra.mxu0 0.0
  %3946 = vmatprep.subr.mxu0 0.0
  %3947 = vmatpush1.msra.mxu0 0.0
  %3948 = vmatprep.subr.mxu0 0.0
  %3949 = vmatpush1.msra.mxu0 0.0
  %3950 = vmatprep.subr.mxu0 0.0
  %3951 = vmatpush1.msra.mxu0 0.0
  %3952 = vmatprep.subr.mxu0 0.0
  %3953 = vmatpush1.msra.mxu0 0.0
  %3954 = vmatprep.subr.mxu0 0.0
  %3955 = vmatpush1.msra.mxu0 0.0
  %3956 = vmatprep.subr.mxu0 0.0
  %3957 = vmatpush1.msra.mxu0 0.0
  %3958 = vmatprep.subr.mxu0 0.0
  %3959 = vmatpush1.msra.mxu0 0.0
  %3960 = vmatprep.subr.mxu0 0.0
  %3961 = vmatpush1.msra.mxu0 0.0
  %3962 = vmatprep.subr.mxu0 0.0
  %3963 = vmatpush1.msra.mxu0 0.0
  %3964 = vmatprep.subr.mxu0 0.0
  %3965 = vmatpush1.msra.mxu0 0.0
  %3966 = vmatprep.subr.mxu0 0.0
  %3967 = vmatpush1.msra.mxu0 0.0
  %3968 = vmatprep.subr.mxu0 0.0
  %3969 = vmatpush1.msra.mxu0 0.0
  %3970 = vmatprep.subr.mxu0 0.0
  %3971 = vmatpush1.msra.mxu0 0.0
  %3972 = vmatprep.subr.mxu0 0.0
  %3973 = vmatpush1.msra.mxu0 0.0
  %3974 = vmatprep.subr.mxu0 0.0
  %3975 = vmatpush1.msra.mxu0 0.0
  %3976 = vmatprep.subr.mxu0 0.0
  %3977 = vmatpush1.msra.mxu0 0.0
  %3978 = vmatprep.subr.mxu0 0.0
  %3979 = vmatpush1.msra.mxu0 0.0
  %3980 = vmatprep.subr.mxu0 0.0
  %3981 = vmatpush1.msra.mxu0 0.0
  %3982 = vmatprep.subr.mxu0 0.0
  %3983 = vmatpush1.msra.mxu0 0.0
  %3984 = vmatprep.subr.mxu0 0.0
  %3985 = vmatpush1.msra.mxu0 0.0
  %3986 = vmatprep.subr.mxu0 0.0
  %3987 = vmatpush1.msra.mxu0 0.0
  %3988 = vmatprep.subr.mxu0 0.0
  %3989 = vmatpush1.msra.mxu0 0.0
  %3990 = vmatprep.subr.mxu0 0.0
  %3991 = vmatpush1.msra.mxu0 0.0
  %3992 = vmatprep.subr.mxu0 0.0
  %3993 = vmatpush1.msra.mxu0 0.0
  %3994 = vmatprep.subr.mxu0 0.0
  %3995 = vmatpush1.msra.mxu0 0.0
  %3996 = vmatprep.mubr.f32.mxu0 0.0
  %3997 = vmatmul.mubr.f32.gmra.mrb[0].mxu0 %v3930
  %v3998 = vpop.f32.mrb[0].mxu0
  %v3999 = vadd.f32 0.0, %v3998
  %v4000 = vpop.f32.mrb[0].mxu0
  %4001 = vdwg.mxu0
  %v4002 = vadd.f32 %v3921, %v3999
  %s4003 = scalar_lea.vmem %s5, 96
  %v4004 = vld [vmem:[%s4003] sm:$0xff]
  %4005 = vrot.lane.b32.xlu0 %v3773, 122
  %v4006 = vpop.permute.xlu0 %4005
  %v4009 = vsel %vm2587, %v4004, 0
  %4011 = vmatprep.subr.mxu0 0.0
  %4012 = vmatpush1.msra.mxu0 %v4006
  %4013 = vmatprep.subr.mxu0 0.0
  %4014 = vmatpush1.msra.mxu0 0.0
  %4015 = vmatprep.subr.mxu0 0.0
  %4016 = vmatpush1.msra.mxu0 0.0
  %4017 = vmatprep.subr.mxu0 0.0
  %4018 = vmatpush1.msra.mxu0 0.0
  %4019 = vmatprep.subr.mxu0 0.0
  %4020 = vmatpush1.msra.mxu0 0.0
  %4021 = vmatprep.subr.mxu0 0.0
  %4022 = vmatpush1.msra.mxu0 0.0
  %4023 = vmatprep.subr.mxu0 0.0
  %4024 = vmatpush1.msra.mxu0 0.0
  %4025 = vmatprep.subr.mxu0 0.0
  %4026 = vmatpush1.msra.mxu0 0.0
  %4027 = vmatprep.subr.mxu0 0.0
  %4028 = vmatpush1.msra.mxu0 0.0
  %4029 = vmatprep.subr.mxu0 0.0
  %4030 = vmatpush1.msra.mxu0 0.0
  %4031 = vmatprep.subr.mxu0 0.0
  %4032 = vmatpush1.msra.mxu0 0.0
  %4033 = vmatprep.subr.mxu0 0.0
  %4034 = vmatpush1.msra.mxu0 0.0
  %4035 = vmatprep.subr.mxu0 0.0
  %4036 = vmatpush1.msra.mxu0 0.0
  %4037 = vmatprep.subr.mxu0 0.0
  %4038 = vmatpush1.msra.mxu0 0.0
  %4039 = vmatprep.subr.mxu0 0.0
  %4040 = vmatpush1.msra.mxu0 0.0
  %4041 = vmatprep.subr.mxu0 0.0
  %4042 = vmatpush1.msra.mxu0 0.0
  %4043 = vmatprep.subr.mxu0 0.0
  %4044 = vmatpush1.msra.mxu0 0.0
  %4045 = vmatprep.subr.mxu0 0.0
  %4046 = vmatpush1.msra.mxu0 0.0
  %4047 = vmatprep.subr.mxu0 0.0
  %4048 = vmatpush1.msra.mxu0 0.0
  %4049 = vmatprep.subr.mxu0 0.0
  %4050 = vmatpush1.msra.mxu0 0.0
  %4051 = vmatprep.subr.mxu0 0.0
  %4052 = vmatpush1.msra.mxu0 0.0
  %4053 = vmatprep.subr.mxu0 0.0
  %4054 = vmatpush1.msra.mxu0 0.0
  %4055 = vmatprep.subr.mxu0 0.0
  %4056 = vmatpush1.msra.mxu0 0.0
  %4057 = vmatprep.subr.mxu0 0.0
  %4058 = vmatpush1.msra.mxu0 0.0
  %4059 = vmatprep.subr.mxu0 0.0
  %4060 = vmatpush1.msra.mxu0 0.0
  %4061 = vmatprep.subr.mxu0 0.0
  %4062 = vmatpush1.msra.mxu0 0.0
  %4063 = vmatprep.subr.mxu0 0.0
  %4064 = vmatpush1.msra.mxu0 0.0
  %4065 = vmatprep.subr.mxu0 0.0
  %4066 = vmatpush1.msra.mxu0 0.0
  %4067 = vmatprep.subr.mxu0 0.0
  %4068 = vmatpush1.msra.mxu0 0.0
  %4069 = vmatprep.subr.mxu0 0.0
  %4070 = vmatpush1.msra.mxu0 0.0
  %4071 = vmatprep.subr.mxu0 0.0
  %4072 = vmatpush1.msra.mxu0 0.0
  %4073 = vmatprep.subr.mxu0 0.0
  %4074 = vmatpush1.msra.mxu0 0.0
  %4075 = vmatprep.mubr.f32.mxu0 0.0
  %4076 = vmatmul.mubr.f32.gmra.mrb[0].mxu0 %v4009
  %v4077 = vpop.f32.mrb[0].mxu0
  %v4078 = vadd.f32 0.0, %v4077
  %v4079 = vpop.f32.mrb[0].mxu0
  %4080 = vdwg.mxu0
  %v4081 = vadd.f32 %v4002, %v4078
  %s4082 = scalar_lea.vmem %s5, 104
  %v4083 = vld [vmem:[%s4082] sm:$0xff]
  %4084 = vrot.lane.b32.xlu0 %v3773, 121
  %v4085 = vpop.permute.xlu0 %4084
  %v4088 = vsel %vm2587, %v4083, 0
  %4090 = vmatprep.subr.mxu0 0.0
  %4091 = vmatpush1.msra.mxu0 %v4085
  %4092 = vmatprep.subr.mxu0 0.0
  %4093 = vmatpush1.msra.mxu0 0.0
  %4094 = vmatprep.subr.mxu0 0.0
  %4095 = vmatpush1.msra.mxu0 0.0
  %4096 = vmatprep.subr.mxu0 0.0
  %4097 = vmatpush1.msra.mxu0 0.0
  %4098 = vmatprep.subr.mxu0 0.0
  %4099 = vmatpush1.msra.mxu0 0.0
  %4100 = vmatprep.subr.mxu0 0.0
  %4101 = vmatpush1.msra.mxu0 0.0
  %4102 = vmatprep.subr.mxu0 0.0
  %4103 = vmatpush1.msra.mxu0 0.0
  %4104 = vmatprep.subr.mxu0 0.0
  %4105 = vmatpush1.msra.mxu0 0.0
  %4106 = vmatprep.subr.mxu0 0.0
  %4107 = vmatpush1.msra.mxu0 0.0
  %4108 = vmatprep.subr.mxu0 0.0
  %4109 = vmatpush1.msra.mxu0 0.0
  %4110 = vmatprep.subr.mxu0 0.0
  %4111 = vmatpush1.msra.mxu0 0.0
  %4112 = vmatprep.subr.mxu0 0.0
  %4113 = vmatpush1.msra.mxu0 0.0
  %4114 = vmatprep.subr.mxu0 0.0
  %4115 = vmatpush1.msra.mxu0 0.0
  %4116 = vmatprep.subr.mxu0 0.0
  %4117 = vmatpush1.msra.mxu0 0.0
  %4118 = vmatprep.subr.mxu0 0.0
  %4119 = vmatpush1.msra.mxu0 0.0
  %4120 = vmatprep.subr.mxu0 0.0
  %4121 = vmatpush1.msra.mxu0 0.0
  %4122 = vmatprep.subr.mxu0 0.0
  %4123 = vmatpush1.msra.mxu0 0.0
  %4124 = vmatprep.subr.mxu0 0.0
  %4125 = vmatpush1.msra.mxu0 0.0
  %4126 = vmatprep.subr.mxu0 0.0
  %4127 = vmatpush1.msra.mxu0 0.0
  %4128 = vmatprep.subr.mxu0 0.0
  %4129 = vmatpush1.msra.mxu0 0.0
  %4130 = vmatprep.subr.mxu0 0.0
  %4131 = vmatpush1.msra.mxu0 0.0
  %4132 = vmatprep.subr.mxu0 0.0
  %4133 = vmatpush1.msra.mxu0 0.0
  %4134 = vmatprep.subr.mxu0 0.0
  %4135 = vmatpush1.msra.mxu0 0.0
  %4136 = vmatprep.subr.mxu0 0.0
  %4137 = vmatpush1.msra.mxu0 0.0
  %4138 = vmatprep.subr.mxu0 0.0
  %4139 = vmatpush1.msra.mxu0 0.0
  %4140 = vmatprep.subr.mxu0 0.0
  %4141 = vmatpush1.msra.mxu0 0.0
  %4142 = vmatprep.subr.mxu0 0.0
  %4143 = vmatpush1.msra.mxu0 0.0
  %4144 = vmatprep.subr.mxu0 0.0
  %4145 = vmatpush1.msra.mxu0 0.0
  %4146 = vmatprep.subr.mxu0 0.0
  %4147 = vmatpush1.msra.mxu0 0.0
  %4148 = vmatprep.subr.mxu0 0.0
  %4149 = vmatpush1.msra.mxu0 0.0
  %4150 = vmatprep.subr.mxu0 0.0
  %4151 = vmatpush1.msra.mxu0 0.0
  %4152 = vmatprep.subr.mxu0 0.0
  %4153 = vmatpush1.msra.mxu0 0.0
  %4154 = vmatprep.mubr.f32.mxu0 0.0
  %4155 = vmatmul.mubr.f32.gmra.mrb[0].mxu0 %v4088
  %v4156 = vpop.f32.mrb[0].mxu0
  %v4157 = vadd.f32 0.0, %v4156
  %v4158 = vpop.f32.mrb[0].mxu0
  %4159 = vdwg.mxu0
  %v4160 = vadd.f32 %v4081, %v4157
  %s4161 = scalar_lea.vmem %s5, 112
  %v4162 = vld [vmem:[%s4161] sm:$0xff]
  %4163 = vrot.lane.b32.xlu0 %v3773, 120
  %v4164 = vpop.permute.xlu0 %4163
  %v4167 = vsel %vm2587, %v4162, 0
  %4169 = vmatprep.subr.mxu0 0.0
  %4170 = vmatpush1.msra.mxu0 %v4164
  %4171 = vmatprep.subr.mxu0 0.0
  %4172 = vmatpush1.msra.mxu0 0.0
  %4173 = vmatprep.subr.mxu0 0.0
  %4174 = vmatpush1.msra.mxu0 0.0
  %4175 = vmatprep.subr.mxu0 0.0
  %4176 = vmatpush1.msra.mxu0 0.0
  %4177 = vmatprep.subr.mxu0 0.0
  %4178 = vmatpush1.msra.mxu0 0.0
  %4179 = vmatprep.subr.mxu0 0.0
  %4180 = vmatpush1.msra.mxu0 0.0
  %4181 = vmatprep.subr.mxu0 0.0
  %4182 = vmatpush1.msra.mxu0 0.0
  %4183 = vmatprep.subr.mxu0 0.0
  %4184 = vmatpush1.msra.mxu0 0.0
  %4185 = vmatprep.subr.mxu0 0.0
  %4186 = vmatpush1.msra.mxu0 0.0
  %4187 = vmatprep.subr.mxu0 0.0
  %4188 = vmatpush1.msra.mxu0 0.0
  %4189 = vmatprep.subr.mxu0 0.0
  %4190 = vmatpush1.msra.mxu0 0.0
  %4191 = vmatprep.subr.mxu0 0.0
  %4192 = vmatpush1.msra.mxu0 0.0
  %4193 = vmatprep.subr.mxu0 0.0
  %4194 = vmatpush1.msra.mxu0 0.0
  %4195 = vmatprep.subr.mxu0 0.0
  %4196 = vmatpush1.msra.mxu0 0.0
  %4197 = vmatprep.subr.mxu0 0.0
  %4198 = vmatpush1.msra.mxu0 0.0
  %4199 = vmatprep.subr.mxu0 0.0
  %4200 = vmatpush1.msra.mxu0 0.0
  %4201 = vmatprep.subr.mxu0 0.0
  %4202 = vmatpush1.msra.mxu0 0.0
  %4203 = vmatprep.subr.mxu0 0.0
  %4204 = vmatpush1.msra.mxu0 0.0
  %4205 = vmatprep.subr.mxu0 0.0
  %4206 = vmatpush1.msra.mxu0 0.0
  %4207 = vmatprep.subr.mxu0 0.0
  %4208 = vmatpush1.msra.mxu0 0.0
  %4209 = vmatprep.subr.mxu0 0.0
  %4210 = vmatpush1.msra.mxu0 0.0
  %4211 = vmatprep.subr.mxu0 0.0
  %4212 = vmatpush1.msra.mxu0 0.0
  %4213 = vmatprep.subr.mxu0 0.0
  %4214 = vmatpush1.msra.mxu0 0.0
  %4215 = vmatprep.subr.mxu0 0.0
  %4216 = vmatpush1.msra.mxu0 0.0
  %4217 = vmatprep.subr.mxu0 0.0
  %4218 = vmatpush1.msra.mxu0 0.0
  %4219 = vmatprep.subr.mxu0 0.0
  %4220 = vmatpush1.msra.mxu0 0.0
  %4221 = vmatprep.subr.mxu0 0.0
  %4222 = vmatpush1.msra.mxu0 0.0
  %4223 = vmatprep.subr.mxu0 0.0
  %4224 = vmatpush1.msra.mxu0 0.0
  %4225 = vmatprep.subr.mxu0 0.0
  %4226 = vmatpush1.msra.mxu0 0.0
  %4227 = vmatprep.subr.mxu0 0.0
  %4228 = vmatpush1.msra.mxu0 0.0
  %4229 = vmatprep.subr.mxu0 0.0
  %4230 = vmatpush1.msra.mxu0 0.0
  %4231 = vmatprep.subr.mxu0 0.0
  %4232 = vmatpush1.msra.mxu0 0.0
  %4233 = vmatprep.mubr.f32.mxu0 0.0
  %4234 = vmatmul.mubr.f32.gmra.mrb[0].mxu0 %v4167
  %v4235 = vpop.f32.mrb[0].mxu0
  %v4236 = vadd.f32 0.0, %v4235
  %v4237 = vpop.f32.mrb[0].mxu0
  %4238 = vdwg.mxu0
  %v4239 = vadd.f32 %v4160, %v4236
  %s4240 = scalar_lea.vmem %s5, 120
  %v4241 = vld [vmem:[%s4240] sm:$0xff]
  %4242 = vrot.lane.b32.xlu0 %v3773, 116
  %v4243 = vpop.permute.xlu0 %4242
  %v4246 = vsel %vm2587, %v4241, 0
  %4248 = vmatprep.subr.mxu0 0.0
  %4249 = vmatpush1.msra.mxu0 %v4243
  %4250 = vmatprep.subr.mxu0 0.0
  %4251 = vmatpush1.msra.mxu0 0.0
  %4252 = vmatprep.subr.mxu0 0.0
  %4253 = vmatpush1.msra.mxu0 0.0
  %4254 = vmatprep.subr.mxu0 0.0
  %4255 = vmatpush1.msra.mxu0 0.0
  %4256 = vmatprep.subr.mxu0 0.0
  %4257 = vmatpush1.msra.mxu0 0.0
  %4258 = vmatprep.subr.mxu0 0.0
  %4259 = vmatpush1.msra.mxu0 0.0
  %4260 = vmatprep.subr.mxu0 0.0
  %4261 = vmatpush1.msra.mxu0 0.0
  %4262 = vmatprep.subr.mxu0 0.0
  %4263 = vmatpush1.msra.mxu0 0.0
  %4264 = vmatprep.subr.mxu0 0.0
  %4265 = vmatpush1.msra.mxu0 0.0
  %4266 = vmatprep.subr.mxu0 0.0
  %4267 = vmatpush1.msra.mxu0 0.0
  %4268 = vmatprep.subr.mxu0 0.0
  %4269 = vmatpush1.msra.mxu0 0.0
  %4270 = vmatprep.subr.mxu0 0.0
  %4271 = vmatpush1.msra.mxu0 0.0
  %4272 = vmatprep.subr.mxu0 0.0
  %4273 = vmatpush1.msra.mxu0 0.0
  %4274 = vmatprep.subr.mxu0 0.0
  %4275 = vmatpush1.msra.mxu0 0.0
  %4276 = vmatprep.subr.mxu0 0.0
  %4277 = vmatpush1.msra.mxu0 0.0
  %4278 = vmatprep.subr.mxu0 0.0
  %4279 = vmatpush1.msra.mxu0 0.0
  %4280 = vmatprep.subr.mxu0 0.0
  %4281 = vmatpush1.msra.mxu0 0.0
  %4282 = vmatprep.subr.mxu0 0.0
  %4283 = vmatpush1.msra.mxu0 0.0
  %4284 = vmatprep.subr.mxu0 0.0
  %4285 = vmatpush1.msra.mxu0 0.0
  %4286 = vmatprep.subr.mxu0 0.0
  %4287 = vmatpush1.msra.mxu0 0.0
  %4288 = vmatprep.subr.mxu0 0.0
  %4289 = vmatpush1.msra.mxu0 0.0
  %4290 = vmatprep.subr.mxu0 0.0
  %4291 = vmatpush1.msra.mxu0 0.0
  %4292 = vmatprep.subr.mxu0 0.0
  %4293 = vmatpush1.msra.mxu0 0.0
  %4294 = vmatprep.subr.mxu0 0.0
  %4295 = vmatpush1.msra.mxu0 0.0
  %4296 = vmatprep.subr.mxu0 0.0
  %4297 = vmatpush1.msra.mxu0 0.0
  %4298 = vmatprep.subr.mxu0 0.0
  %4299 = vmatpush1.msra.mxu0 0.0
  %4300 = vmatprep.subr.mxu0 0.0
  %4301 = vmatpush1.msra.mxu0 0.0
  %4302 = vmatprep.subr.mxu0 0.0
  %4303 = vmatpush1.msra.mxu0 0.0
  %4304 = vmatprep.subr.mxu0 0.0
  %4305 = vmatpush1.msra.mxu0 0.0
  %4306 = vmatprep.subr.mxu0 0.0
  %4307 = vmatpush1.msra.mxu0 0.0
  %4308 = vmatprep.subr.mxu0 0.0
  %4309 = vmatpush1.msra.mxu0 0.0
  %4310 = vmatprep.subr.mxu0 0.0
  %4311 = vmatpush1.msra.mxu0 0.0
  %4312 = vmatprep.mubr.f32.mxu0 0.0
  %4313 = vmatmul.mubr.f32.gmra.mrb[0].mxu0 %v4246
  %v4314 = vpop.f32.mrb[0].mxu0
  %v4315 = vadd.f32 0.0, %v4314
  %v4316 = vpop.f32.mrb[0].mxu0
  %4317 = vdwg.mxu0
  %v4318 = vadd.f32 %v4239, %v4315
  %s4319 = scalar_lea.vmem %s5, 128
  %v4320 = vld [vmem:[%s4319] sm:$0xff]
  %4321 = vrot.lane.b32.xlu0 %v3773, 115
  %v4322 = vpop.permute.xlu0 %4321
  %v4325 = vsel %vm2587, %v4320, 0
  %4327 = vmatprep.subr.mxu0 0.0
  %4328 = vmatpush1.msra.mxu0 %v4322
  %4329 = vmatprep.subr.mxu0 0.0
  %4330 = vmatpush1.msra.mxu0 0.0
  %4331 = vmatprep.subr.mxu0 0.0
  %4332 = vmatpush1.msra.mxu0 0.0
  %4333 = vmatprep.subr.mxu0 0.0
  %4334 = vmatpush1.msra.mxu0 0.0
  %4335 = vmatprep.subr.mxu0 0.0
  %4336 = vmatpush1.msra.mxu0 0.0
  %4337 = vmatprep.subr.mxu0 0.0
  %4338 = vmatpush1.msra.mxu0 0.0
  %4339 = vmatprep.subr.mxu0 0.0
  %4340 = vmatpush1.msra.mxu0 0.0
  %4341 = vmatprep.subr.mxu0 0.0
  %4342 = vmatpush1.msra.mxu0 0.0
  %4343 = vmatprep.subr.mxu0 0.0
  %4344 = vmatpush1.msra.mxu0 0.0
  %4345 = vmatprep.subr.mxu0 0.0
  %4346 = vmatpush1.msra.mxu0 0.0
  %4347 = vmatprep.subr.mxu0 0.0
  %4348 = vmatpush1.msra.mxu0 0.0
  %4349 = vmatprep.subr.mxu0 0.0
  %4350 = vmatpush1.msra.mxu0 0.0
  %4351 = vmatprep.subr.mxu0 0.0
  %4352 = vmatpush1.msra.mxu0 0.0
  %4353 = vmatprep.subr.mxu0 0.0
  %4354 = vmatpush1.msra.mxu0 0.0
  %4355 = vmatprep.subr.mxu0 0.0
  %4356 = vmatpush1.msra.mxu0 0.0
  %4357 = vmatprep.subr.mxu0 0.0
  %4358 = vmatpush1.msra.mxu0 0.0
  %4359 = vmatprep.subr.mxu0 0.0
  %4360 = vmatpush1.msra.mxu0 0.0
  %4361 = vmatprep.subr.mxu0 0.0
  %4362 = vmatpush1.msra.mxu0 0.0
  %4363 = vmatprep.subr.mxu0 0.0
  %4364 = vmatpush1.msra.mxu0 0.0
  %4365 = vmatprep.subr.mxu0 0.0
  %4366 = vmatpush1.msra.mxu0 0.0
  %4367 = vmatprep.subr.mxu0 0.0
  %4368 = vmatpush1.msra.mxu0 0.0
  %4369 = vmatprep.subr.mxu0 0.0
  %4370 = vmatpush1.msra.mxu0 0.0
  %4371 = vmatprep.subr.mxu0 0.0
  %4372 = vmatpush1.msra.mxu0 0.0
  %4373 = vmatprep.subr.mxu0 0.0
  %4374 = vmatpush1.msra.mxu0 0.0
  %4375 = vmatprep.subr.mxu0 0.0
  %4376 = vmatpush1.msra.mxu0 0.0
  %4377 = vmatprep.subr.mxu0 0.0
  %4378 = vmatpush1.msra.mxu0 0.0
  %4379 = vmatprep.subr.mxu0 0.0
  %4380 = vmatpush1.msra.mxu0 0.0
  %4381 = vmatprep.subr.mxu0 0.0
  %4382 = vmatpush1.msra.mxu0 0.0
  %4383 = vmatprep.subr.mxu0 0.0
  %4384 = vmatpush1.msra.mxu0 0.0
  %4385 = vmatprep.subr.mxu0 0.0
  %4386 = vmatpush1.msra.mxu0 0.0
  %4387 = vmatprep.subr.mxu0 0.0
  %4388 = vmatpush1.msra.mxu0 0.0
  %4389 = vmatprep.subr.mxu0 0.0
  %4390 = vmatpush1.msra.mxu0 0.0
  %4391 = vmatprep.mubr.f32.mxu0 0.0
  %4392 = vmatmul.mubr.f32.gmra.mrb[0].mxu0 %v4325
  %v4393 = vpop.f32.mrb[0].mxu0
  %v4394 = vadd.f32 0.0, %v4393
  %v4395 = vpop.f32.mrb[0].mxu0
  %4396 = vdwg.mxu0
  %v4397 = vadd.f32 %v4318, %v4394
  %s4398 = scalar_lea.vmem %s5, 136
  %v4399 = vld [vmem:[%s4398] sm:$0xff]
  %4400 = vrot.lane.b32.xlu0 %v3773, 114
  %v4401 = vpop.permute.xlu0 %4400
  %v4404 = vsel %vm2587, %v4399, 0
  %4406 = vmatprep.subr.mxu0 0.0
  %4407 = vmatpush1.msra.mxu0 %v4401
  %4408 = vmatprep.subr.mxu0 0.0
  %4409 = vmatpush1.msra.mxu0 0.0
  %4410 = vmatprep.subr.mxu0 0.0
  %4411 = vmatpush1.msra.mxu0 0.0
  %4412 = vmatprep.subr.mxu0 0.0
  %4413 = vmatpush1.msra.mxu0 0.0
  %4414 = vmatprep.subr.mxu0 0.0
  %4415 = vmatpush1.msra.mxu0 0.0
  %4416 = vmatprep.subr.mxu0 0.0
  %4417 = vmatpush1.msra.mxu0 0.0
  %4418 = vmatprep.subr.mxu0 0.0
  %4419 = vmatpush1.msra.mxu0 0.0
  %4420 = vmatprep.subr.mxu0 0.0
  %4421 = vmatpush1.msra.mxu0 0.0
  %4422 = vmatprep.subr.mxu0 0.0
  %4423 = vmatpush1.msra.mxu0 0.0
  %4424 = vmatprep.subr.mxu0 0.0
  %4425 = vmatpush1.msra.mxu0 0.0
  %4426 = vmatprep.subr.mxu0 0.0
  %4427 = vmatpush1.msra.mxu0 0.0
  %4428 = vmatprep.subr.mxu0 0.0
  %4429 = vmatpush1.msra.mxu0 0.0
  %4430 = vmatprep.subr.mxu0 0.0
  %4431 = vmatpush1.msra.mxu0 0.0
  %4432 = vmatprep.subr.mxu0 0.0
  %4433 = vmatpush1.msra.mxu0 0.0
  %4434 = vmatprep.subr.mxu0 0.0
  %4435 = vmatpush1.msra.mxu0 0.0
  %4436 = vmatprep.subr.mxu0 0.0
  %4437 = vmatpush1.msra.mxu0 0.0
  %4438 = vmatprep.subr.mxu0 0.0
  %4439 = vmatpush1.msra.mxu0 0.0
  %4440 = vmatprep.subr.mxu0 0.0
  %4441 = vmatpush1.msra.mxu0 0.0
  %4442 = vmatprep.subr.mxu0 0.0
  %4443 = vmatpush1.msra.mxu0 0.0
  %4444 = vmatprep.subr.mxu0 0.0
  %4445 = vmatpush1.msra.mxu0 0.0
  %4446 = vmatprep.subr.mxu0 0.0
  %4447 = vmatpush1.msra.mxu0 0.0
  %4448 = vmatprep.subr.mxu0 0.0
  %4449 = vmatpush1.msra.mxu0 0.0
  %4450 = vmatprep.subr.mxu0 0.0
  %4451 = vmatpush1.msra.mxu0 0.0
  %4452 = vmatprep.subr.mxu0 0.0
  %4453 = vmatpush1.msra.mxu0 0.0
  %4454 = vmatprep.subr.mxu0 0.0
  %4455 = vmatpush1.msra.mxu0 0.0
  %4456 = vmatprep.subr.mxu0 0.0
  %4457 = vmatpush1.msra.mxu0 0.0
  %4458 = vmatprep.subr.mxu0 0.0
  %4459 = vmatpush1.msra.mxu0 0.0
  %4460 = vmatprep.subr.mxu0 0.0
  %4461 = vmatpush1.msra.mxu0 0.0
  %4462 = vmatprep.subr.mxu0 0.0
  %4463 = vmatpush1.msra.mxu0 0.0
  %4464 = vmatprep.subr.mxu0 0.0
  %4465 = vmatpush1.msra.mxu0 0.0
  %4466 = vmatprep.subr.mxu0 0.0
  %4467 = vmatpush1.msra.mxu0 0.0
  %4468 = vmatprep.subr.mxu0 0.0
  %4469 = vmatpush1.msra.mxu0 0.0
  %4470 = vmatprep.mubr.f32.mxu0 0.0
  %4471 = vmatmul.mubr.f32.gmra.mrb[0].mxu0 %v4404
  %v4472 = vpop.f32.mrb[0].mxu0
  %v4473 = vadd.f32 0.0, %v4472
  %v4474 = vpop.f32.mrb[0].mxu0
  %4475 = vdwg.mxu0
  %v4476 = vadd.f32 %v4397, %v4473
  %4478 = vset.pattern.permute.xlu0 0
  %4479 = vperm.xlu0 %4478, %v3763
  %v4480 = vpop.permute.xlu0 %4479
  %v4482 = vadd.f32 %v4476, %v4480
  %v4483 = vmax.f32 %v4482, 0.0
  %v4484 = vld [vmem:[%s9] sm:$0xff]
  %v4485 = vld [vmem:[%s9 + $0x8] sm:$0xff]
  %v4486 = vld [vmem:[%s9 + $0x10] sm:$0xff]
  %v4487 = vld [vmem:[%s9 + $0x18] sm:$0xff]
  %v4488 = vld [vmem:[%s9 + $0x20] sm:$0xff]
  %v4489 = vld [vmem:[%s9 + $0x28] sm:$0xff]
  %v4490 = vld [vmem:[%s9 + $0x30] sm:$0xff]
  %v4491 = vld [vmem:[%s9 + $0x38] sm:$0xff]
  %v4492 = vld [vmem:[%s9 + $0x40] sm:$0xff]
  %v4494 = vsel %vm2805, %v4483, 0
  %4496 = vmatprep.subr.mxu0 0.0
  %4497 = vmatpush1.msra.mxu0 %v4484
  %4498 = vmatprep.subr.mxu0 0.0
  %4499 = vmatpush1.msra.mxu0 %v4485
  %4500 = vmatprep.subr.mxu0 0.0
  %4501 = vmatpush1.msra.mxu0 %v4486
  %4502 = vmatprep.subr.mxu0 0.0
  %4503 = vmatpush1.msra.mxu0 %v4487
  %4504 = vmatprep.subr.mxu0 0.0
  %4505 = vmatpush1.msra.mxu0 %v4488
  %4506 = vmatprep.subr.mxu0 0.0
  %4507 = vmatpush1.msra.mxu0 %v4489
  %4508 = vmatprep.subr.mxu0 0.0
  %4509 = vmatpush1.msra.mxu0 %v4490
  %4510 = vmatprep.subr.mxu0 0.0
  %4511 = vmatpush1.msra.mxu0 %v4491
  %4512 = vmatprep.subr.mxu0 0.0
  %4513 = vmatpush1.msra.mxu0 %v4492
  %4514 = vmatprep.subr.mxu0 0.0
  %4515 = vmatpush1.msra.mxu0 0.0
  %4516 = vmatprep.subr.mxu0 0.0
  %4517 = vmatpush1.msra.mxu0 0.0
  %4518 = vmatprep.subr.mxu0 0.0
  %4519 = vmatpush1.msra.mxu0 0.0
  %4520 = vmatprep.subr.mxu0 0.0
  %4521 = vmatpush1.msra.mxu0 0.0
  %4522 = vmatprep.subr.mxu0 0.0
  %4523 = vmatpush1.msra.mxu0 0.0
  %4524 = vmatprep.subr.mxu0 0.0
  %4525 = vmatpush1.msra.mxu0 0.0
  %4526 = vmatprep.subr.mxu0 0.0
  %4527 = vmatpush1.msra.mxu0 0.0
  %4528 = vmatprep.subr.mxu0 0.0
  %4529 = vmatpush1.msra.mxu0 0.0
  %4530 = vmatprep.subr.mxu0 0.0
  %4531 = vmatpush1.msra.mxu0 0.0
  %4532 = vmatprep.subr.mxu0 0.0
  %4533 = vmatpush1.msra.mxu0 0.0
  %4534 = vmatprep.subr.mxu0 0.0
  %4535 = vmatpush1.msra.mxu0 0.0
  %4536 = vmatprep.subr.mxu0 0.0
  %4537 = vmatpush1.msra.mxu0 0.0
  %4538 = vmatprep.subr.mxu0 0.0
  %4539 = vmatpush1.msra.mxu0 0.0
  %4540 = vmatprep.subr.mxu0 0.0
  %4541 = vmatpush1.msra.mxu0 0.0
  %4542 = vmatprep.subr.mxu0 0.0
  %4543 = vmatpush1.msra.mxu0 0.0
  %4544 = vmatprep.subr.mxu0 0.0
  %4545 = vmatpush1.msra.mxu0 0.0
  %4546 = vmatprep.subr.mxu0 0.0
  %4547 = vmatpush1.msra.mxu0 0.0
  %4548 = vmatprep.subr.mxu0 0.0
  %4549 = vmatpush1.msra.mxu0 0.0
  %4550 = vmatprep.subr.mxu0 0.0
  %4551 = vmatpush1.msra.mxu0 0.0
  %4552 = vmatprep.subr.mxu0 0.0
  %4553 = vmatpush1.msra.mxu0 0.0
  %4554 = vmatprep.subr.mxu0 0.0
  %4555 = vmatpush1.msra.mxu0 0.0
  %4556 = vmatprep.subr.mxu0 0.0
  %4557 = vmatpush1.msra.mxu0 0.0
  %4558 = vmatprep.subr.mxu0 0.0
  %4559 = vmatpush1.msra.mxu0 0.0
  %4560 = vmatprep.mubr.f32.mxu0 0.0
  %4561 = vmatmul.mubr.f32.gmra.mrb[0].mxu0 %v4494
  %v4562 = vpop.f32.mrb[0].mxu0
  %v4563 = vadd.f32 0.0, %v4562
  %v4564 = vpop.f32.mrb[0].mxu0
  %4565 = vdwg.mxu0
  %s4566 = scalar_lea.vmem %s6, 16
  %v4567 = vld [vmem:[%s4566] sm:$0xff]
  %s4568 = scalar_lea.vmem %s5, 144
  %v4569 = vld [vmem:[%s4568] sm:$0xff]
  %s4570 = scalar_lea.vmem %s5, 152
  %v4571 = vld [vmem:[%s4570] sm:$0xff]
  %4572 = vrot.lane.b32.xlu0 %v4563, 72
  %v4573 = vpop.permute.xlu0 %4572
  %v4574 = vsel %vm2843, %v4573, %v4563
  %4575 = vrot.lane.b32.xlu0 %v4574, 72
  %v4576 = vpop.permute.xlu0 %4575
  %v4577 = vsel %vm2843, %v4576, %v4563
  %4579 = vrot.lane.b32.xlu0 %v4577, 127
  %v4580 = vpop.permute.xlu0 %4579
  %v4583 = vsel %vm2587, %v4571, 0
  %4585 = vmatprep.subr.mxu0 0.0
  %4586 = vmatpush1.msra.mxu0 %v4580
  %4587 = vmatprep.subr.mxu0 0.0
  %4588 = vmatpush1.msra.mxu0 0.0
  %4589 = vmatprep.subr.mxu0 0.0
  %4590 = vmatpush1.msra.mxu0 0.0
  %4591 = vmatprep.subr.mxu0 0.0
  %4592 = vmatpush1.msra.mxu0 0.0
  %4593 = vmatprep.subr.mxu0 0.0
  %4594 = vmatpush1.msra.mxu0 0.0
  %4595 = vmatprep.subr.mxu0 0.0
  %4596 = vmatpush1.msra.mxu0 0.0
  %4597 = vmatprep.subr.mxu0 0.0
  %4598 = vmatpush1.msra.mxu0 0.0
  %4599 = vmatprep.subr.mxu0 0.0
  %4600 = vmatpush1.msra.mxu0 0.0
  %4601 = vmatprep.subr.mxu0 0.0
  %4602 = vmatpush1.msra.mxu0 0.0
  %4603 = vmatprep.subr.mxu0 0.0
  %4604 = vmatpush1.msra.mxu0 0.0
  %4605 = vmatprep.subr.mxu0 0.0
  %4606 = vmatpush1.msra.mxu0 0.0
  %4607 = vmatprep.subr.mxu0 0.0
  %4608 = vmatpush1.msra.mxu0 0.0
  %4609 = vmatprep.subr.mxu0 0.0
  %4610 = vmatpush1.msra.mxu0 0.0
  %4611 = vmatprep.subr.mxu0 0.0
  %4612 = vmatpush1.msra.mxu0 0.0
  %4613 = vmatprep.subr.mxu0 0.0
  %4614 = vmatpush1.msra.mxu0 0.0
  %4615 = vmatprep.subr.mxu0 0.0
  %4616 = vmatpush1.msra.mxu0 0.0
  %4617 = vmatprep.subr.mxu0 0.0
  %4618 = vmatpush1.msra.mxu0 0.0
  %4619 = vmatprep.subr.mxu0 0.0
  %4620 = vmatpush1.msra.mxu0 0.0
  %4621 = vmatprep.subr.mxu0 0.0
  %4622 = vmatpush1.msra.mxu0 0.0
  %4623 = vmatprep.subr.mxu0 0.0
  %4624 = vmatpush1.msra.mxu0 0.0
  %4625 = vmatprep.subr.mxu0 0.0
  %4626 = vmatpush1.msra.mxu0 0.0
  %4627 = vmatprep.subr.mxu0 0.0
  %4628 = vmatpush1.msra.mxu0 0.0
  %4629 = vmatprep.subr.mxu0 0.0
  %4630 = vmatpush1.msra.mxu0 0.0
  %4631 = vmatprep.subr.mxu0 0.0
  %4632 = vmatpush1.msra.mxu0 0.0
  %4633 = vmatprep.subr.mxu0 0.0
  %4634 = vmatpush1.msra.mxu0 0.0
  %4635 = vmatprep.subr.mxu0 0.0
  %4636 = vmatpush1.msra.mxu0 0.0
  %4637 = vmatprep.subr.mxu0 0.0
  %4638 = vmatpush1.msra.mxu0 0.0
  %4639 = vmatprep.subr.mxu0 0.0
  %4640 = vmatpush1.msra.mxu0 0.0
  %4641 = vmatprep.subr.mxu0 0.0
  %4642 = vmatpush1.msra.mxu0 0.0
  %4643 = vmatprep.subr.mxu0 0.0
  %4644 = vmatpush1.msra.mxu0 0.0
  %4645 = vmatprep.subr.mxu0 0.0
  %4646 = vmatpush1.msra.mxu0 0.0
  %4647 = vmatprep.subr.mxu0 0.0
  %4648 = vmatpush1.msra.mxu0 0.0
  %4649 = vmatprep.mubr.f32.mxu0 0.0
  %4650 = vmatmul.mubr.f32.gmra.mrb[0].mxu0 %v4583
  %v4651 = vpop.f32.mrb[0].mxu0
  %v4652 = vadd.f32 0.0, %v4651
  %v4653 = vpop.f32.mrb[0].mxu0
  %4654 = vdwg.mxu0
  %v4656 = vsel %vm2587, %v4569, 0
  %4658 = vmatprep.subr.mxu0 0.0
  %4659 = vmatpush1.msra.mxu0 %v4563
  %4660 = vmatprep.subr.mxu0 0.0
  %4661 = vmatpush1.msra.mxu0 0.0
  %4662 = vmatprep.subr.mxu0 0.0
  %4663 = vmatpush1.msra.mxu0 0.0
  %4664 = vmatprep.subr.mxu0 0.0
  %4665 = vmatpush1.msra.mxu0 0.0
  %4666 = vmatprep.subr.mxu0 0.0
  %4667 = vmatpush1.msra.mxu0 0.0
  %4668 = vmatprep.subr.mxu0 0.0
  %4669 = vmatpush1.msra.mxu0 0.0
  %4670 = vmatprep.subr.mxu0 0.0
  %4671 = vmatpush1.msra.mxu0 0.0
  %4672 = vmatprep.subr.mxu0 0.0
  %4673 = vmatpush1.msra.mxu0 0.0
  %4674 = vmatprep.subr.mxu0 0.0
  %4675 = vmatpush1.msra.mxu0 0.0
  %4676 = vmatprep.subr.mxu0 0.0
  %4677 = vmatpush1.msra.mxu0 0.0
  %4678 = vmatprep.subr.mxu0 0.0
  %4679 = vmatpush1.msra.mxu0 0.0
  %4680 = vmatprep.subr.mxu0 0.0
  %4681 = vmatpush1.msra.mxu0 0.0
  %4682 = vmatprep.subr.mxu0 0.0
  %4683 = vmatpush1.msra.mxu0 0.0
  %4684 = vmatprep.subr.mxu0 0.0
  %4685 = vmatpush1.msra.mxu0 0.0
  %4686 = vmatprep.subr.mxu0 0.0
  %4687 = vmatpush1.msra.mxu0 0.0
  %4688 = vmatprep.subr.mxu0 0.0
  %4689 = vmatpush1.msra.mxu0 0.0
  %4690 = vmatprep.subr.mxu0 0.0
  %4691 = vmatpush1.msra.mxu0 0.0
  %4692 = vmatprep.subr.mxu0 0.0
  %4693 = vmatpush1.msra.mxu0 0.0
  %4694 = vmatprep.subr.mxu0 0.0
  %4695 = vmatpush1.msra.mxu0 0.0
  %4696 = vmatprep.subr.mxu0 0.0
  %4697 = vmatpush1.msra.mxu0 0.0
  %4698 = vmatprep.subr.mxu0 0.0
  %4699 = vmatpush1.msra.mxu0 0.0
  %4700 = vmatprep.subr.mxu0 0.0
  %4701 = vmatpush1.msra.mxu0 0.0
  %4702 = vmatprep.subr.mxu0 0.0
  %4703 = vmatpush1.msra.mxu0 0.0
  %4704 = vmatprep.subr.mxu0 0.0
  %4705 = vmatpush1.msra.mxu0 0.0
  %4706 = vmatprep.subr.mxu0 0.0
  %4707 = vmatpush1.msra.mxu0 0.0
  %4708 = vmatprep.subr.mxu0 0.0
  %4709 = vmatpush1.msra.mxu0 0.0
  %4710 = vmatprep.subr.mxu0 0.0
  %4711 = vmatpush1.msra.mxu0 0.0
  %4712 = vmatprep.subr.mxu0 0.0
  %4713 = vmatpush1.msra.mxu0 0.0
  %4714 = vmatprep.subr.mxu0 0.0
  %4715 = vmatpush1.msra.mxu0 0.0
  %4716 = vmatprep.subr.mxu0 0.0
  %4717 = vmatpush1.msra.mxu0 0.0
  %4718 = vmatprep.subr.mxu0 0.0
  %4719 = vmatpush1.msra.mxu0 0.0
  %4720 = vmatprep.subr.mxu0 0.0
  %4721 = vmatpush1.msra.mxu0 0.0
  %4722 = vmatprep.mubr.f32.mxu0 0.0
  %4723 = vmatmul.mubr.f32.gmra.mrb[0].mxu0 %v4656
  %v4724 = vpop.f32.mrb[0].mxu0
  %v4725 = vadd.f32 %v4652, %v4724
  %v4726 = vpop.f32.mrb[0].mxu0
  %4727 = vdwg.mxu0
  %s4728 = scalar_lea.vmem %s5, 160
  %v4729 = vld [vmem:[%s4728] sm:$0xff]
  %4730 = vrot.lane.b32.xlu0 %v4577, 126
  %v4731 = vpop.permute.xlu0 %4730
  %v4734 = vsel %vm2587, %v4729, 0
  %4736 = vmatprep.subr.mxu0 0.0
  %4737 = vmatpush1.msra.mxu0 %v4731
  %4738 = vmatprep.subr.mxu0 0.0
  %4739 = vmatpush1.msra.mxu0 0.0
  %4740 = vmatprep.subr.mxu0 0.0
  %4741 = vmatpush1.msra.mxu0 0.0
  %4742 = vmatprep.subr.mxu0 0.0
  %4743 = vmatpush1.msra.mxu0 0.0
  %4744 = vmatprep.subr.mxu0 0.0
  %4745 = vmatpush1.msra.mxu0 0.0
  %4746 = vmatprep.subr.mxu0 0.0
  %4747 = vmatpush1.msra.mxu0 0.0
  %4748 = vmatprep.subr.mxu0 0.0
  %4749 = vmatpush1.msra.mxu0 0.0
  %4750 = vmatprep.subr.mxu0 0.0
  %4751 = vmatpush1.msra.mxu0 0.0
  %4752 = vmatprep.subr.mxu0 0.0
  %4753 = vmatpush1.msra.mxu0 0.0
  %4754 = vmatprep.subr.mxu0 0.0
  %4755 = vmatpush1.msra.mxu0 0.0
  %4756 = vmatprep.subr.mxu0 0.0
  %4757 = vmatpush1.msra.mxu0 0.0
  %4758 = vmatprep.subr.mxu0 0.0
  %4759 = vmatpush1.msra.mxu0 0.0
  %4760 = vmatprep.subr.mxu0 0.0
  %4761 = vmatpush1.msra.mxu0 0.0
  %4762 = vmatprep.subr.mxu0 0.0
  %4763 = vmatpush1.msra.mxu0 0.0
  %4764 = vmatprep.subr.mxu0 0.0
  %4765 = vmatpush1.msra.mxu0 0.0
  %4766 = vmatprep.subr.mxu0 0.0
  %4767 = vmatpush1.msra.mxu0 0.0
  %4768 = vmatprep.subr.mxu0 0.0
  %4769 = vmatpush1.msra.mxu0 0.0
  %4770 = vmatprep.subr.mxu0 0.0
  %4771 = vmatpush1.msra.mxu0 0.0
  %4772 = vmatprep.subr.mxu0 0.0
  %4773 = vmatpush1.msra.mxu0 0.0
  %4774 = vmatprep.subr.mxu0 0.0
  %4775 = vmatpush1.msra.mxu0 0.0
  %4776 = vmatprep.subr.mxu0 0.0
  %4777 = vmatpush1.msra.mxu0 0.0
  %4778 = vmatprep.subr.mxu0 0.0
  %4779 = vmatpush1.msra.mxu0 0.0
  %4780 = vmatprep.subr.mxu0 0.0
  %4781 = vmatpush1.msra.mxu0 0.0
  %4782 = vmatprep.subr.mxu0 0.0
  %4783 = vmatpush1.msra.mxu0 0.0
  %4784 = vmatprep.subr.mxu0 0.0
  %4785 = vmatpush1.msra.mxu0 0.0
  %4786 = vmatprep.subr.mxu0 0.0
  %4787 = vmatpush1.msra.mxu0 0.0
  %4788 = vmatprep.subr.mxu0 0.0
  %4789 = vmatpush1.msra.mxu0 0.0
  %4790 = vmatprep.subr.mxu0 0.0
  %4791 = vmatpush1.msra.mxu0 0.0
  %4792 = vmatprep.subr.mxu0 0.0
  %4793 = vmatpush1.msra.mxu0 0.0
  %4794 = vmatprep.subr.mxu0 0.0
  %4795 = vmatpush1.msra.mxu0 0.0
  %4796 = vmatprep.subr.mxu0 0.0
  %4797 = vmatpush1.msra.mxu0 0.0
  %4798 = vmatprep.subr.mxu0 0.0
  %4799 = vmatpush1.msra.mxu0 0.0
  %4800 = vmatprep.mubr.f32.mxu0 0.0
  %4801 = vmatmul.mubr.f32.gmra.mrb[0].mxu0 %v4734
  %v4802 = vpop.f32.mrb[0].mxu0
  %v4803 = vadd.f32 0.0, %v4802
  %v4804 = vpop.f32.mrb[0].mxu0
  %4805 = vdwg.mxu0
  %v4806 = vadd.f32 %v4725, %v4803
  %s4807 = scalar_lea.vmem %s5, 168
  %v4808 = vld [vmem:[%s4807] sm:$0xff]
  %4809 = vrot.lane.b32.xlu0 %v4577, 122
  %v4810 = vpop.permute.xlu0 %4809
  %v4813 = vsel %vm2587, %v4808, 0
  %4815 = vmatprep.subr.mxu0 0.0
  %4816 = vmatpush1.msra.mxu0 %v4810
  %4817 = vmatprep.subr.mxu0 0.0
  %4818 = vmatpush1.msra.mxu0 0.0
  %4819 = vmatprep.subr.mxu0 0.0
  %4820 = vmatpush1.msra.mxu0 0.0
  %4821 = vmatprep.subr.mxu0 0.0
  %4822 = vmatpush1.msra.mxu0 0.0
  %4823 = vmatprep.subr.mxu0 0.0
  %4824 = vmatpush1.msra.mxu0 0.0
  %4825 = vmatprep.subr.mxu0 0.0
  %4826 = vmatpush1.msra.mxu0 0.0
  %4827 = vmatprep.subr.mxu0 0.0
  %4828 = vmatpush1.msra.mxu0 0.0
  %4829 = vmatprep.subr.mxu0 0.0
  %4830 = vmatpush1.msra.mxu0 0.0
  %4831 = vmatprep.subr.mxu0 0.0
  %4832 = vmatpush1.msra.mxu0 0.0
  %4833 = vmatprep.subr.mxu0 0.0
  %4834 = vmatpush1.msra.mxu0 0.0
  %4835 = vmatprep.subr.mxu0 0.0
  %4836 = vmatpush1.msra.mxu0 0.0
  %4837 = vmatprep.subr.mxu0 0.0
  %4838 = vmatpush1.msra.mxu0 0.0
  %4839 = vmatprep.subr.mxu0 0.0
  %4840 = vmatpush1.msra.mxu0 0.0
  %4841 = vmatprep.subr.mxu0 0.0
  %4842 = vmatpush1.msra.mxu0 0.0
  %4843 = vmatprep.subr.mxu0 0.0
  %4844 = vmatpush1.msra.mxu0 0.0
  %4845 = vmatprep.subr.mxu0 0.0
  %4846 = vmatpush1.msra.mxu0 0.0
  %4847 = vmatprep.subr.mxu0 0.0
  %4848 = vmatpush1.msra.mxu0 0.0
  %4849 = vmatprep.subr.mxu0 0.0
  %4850 = vmatpush1.msra.mxu0 0.0
  %4851 = vmatprep.subr.mxu0 0.0
  %4852 = vmatpush1.msra.mxu0 0.0
  %4853 = vmatprep.subr.mxu0 0.0
  %4854 = vmatpush1.msra.mxu0 0.0
  %4855 = vmatprep.subr.mxu0 0.0
  %4856 = vmatpush1.msra.mxu0 0.0
  %4857 = vmatprep.subr.mxu0 0.0
  %4858 = vmatpush1.msra.mxu0 0.0
  %4859 = vmatprep.subr.mxu0 0.0
  %4860 = vmatpush1.msra.mxu0 0.0
  %4861 = vmatprep.subr.mxu0 0.0
  %4862 = vmatpush1.msra.mxu0 0.0
  %4863 = vmatprep.subr.mxu0 0.0
  %4864 = vmatpush1.msra.mxu0 0.0
  %4865 = vmatprep.subr.mxu0 0.0
  %4866 = vmatpush1.msra.mxu0 0.0
  %4867 = vmatprep.subr.mxu0 0.0
  %4868 = vmatpush1.msra.mxu0 0.0
  %4869 = vmatprep.subr.mxu0 0.0
  %4870 = vmatpush1.msra.mxu0 0.0
  %4871 = vmatprep.subr.mxu0 0.0
  %4872 = vmatpush1.msra.mxu0 0.0
  %4873 = vmatprep.subr.mxu0 0.0
  %4874 = vmatpush1.msra.mxu0 0.0
  %4875 = vmatprep.subr.mxu0 0.0
  %4876 = vmatpush1.msra.mxu0 0.0
  %4877 = vmatprep.subr.mxu0 0.0
  %4878 = vmatpush1.msra.mxu0 0.0
  %4879 = vmatprep.mubr.f32.mxu0 0.0
  %4880 = vmatmul.mubr.f32.gmra.mrb[0].mxu0 %v4813
  %v4881 = vpop.f32.mrb[0].mxu0
  %v4882 = vadd.f32 0.0, %v4881
  %v4883 = vpop.f32.mrb[0].mxu0
  %4884 = vdwg.mxu0
  %v4885 = vadd.f32 %v4806, %v4882
  %s4886 = scalar_lea.vmem %s5, 176
  %v4887 = vld [vmem:[%s4886] sm:$0xff]
  %4888 = vrot.lane.b32.xlu0 %v4577, 121
  %v4889 = vpop.permute.xlu0 %4888
  %v4892 = vsel %vm2587, %v4887, 0
  %4894 = vmatprep.subr.mxu0 0.0
  %4895 = vmatpush1.msra.mxu0 %v4889
  %4896 = vmatprep.subr.mxu0 0.0
  %4897 = vmatpush1.msra.mxu0 0.0
  %4898 = vmatprep.subr.mxu0 0.0
  %4899 = vmatpush1.msra.mxu0 0.0
  %4900 = vmatprep.subr.mxu0 0.0
  %4901 = vmatpush1.msra.mxu0 0.0
  %4902 = vmatprep.subr.mxu0 0.0
  %4903 = vmatpush1.msra.mxu0 0.0
  %4904 = vmatprep.subr.mxu0 0.0
  %4905 = vmatpush1.msra.mxu0 0.0
  %4906 = vmatprep.subr.mxu0 0.0
  %4907 = vmatpush1.msra.mxu0 0.0
  %4908 = vmatprep.subr.mxu0 0.0
  %4909 = vmatpush1.msra.mxu0 0.0
  %4910 = vmatprep.subr.mxu0 0.0
  %4911 = vmatpush1.msra.mxu0 0.0
  %4912 = vmatprep.subr.mxu0 0.0
  %4913 = vmatpush1.msra.mxu0 0.0
  %4914 = vmatprep.subr.mxu0 0.0
  %4915 = vmatpush1.msra.mxu0 0.0
  %4916 = vmatprep.subr.mxu0 0.0
  %4917 = vmatpush1.msra.mxu0 0.0
  %4918 = vmatprep.subr.mxu0 0.0
  %4919 = vmatpush1.msra.mxu0 0.0
  %4920 = vmatprep.subr.mxu0 0.0
  %4921 = vmatpush1.msra.mxu0 0.0
  %4922 = vmatprep.subr.mxu0 0.0
  %4923 = vmatpush1.msra.mxu0 0.0
  %4924 = vmatprep.subr.mxu0 0.0
  %4925 = vmatpush1.msra.mxu0 0.0
  %4926 = vmatprep.subr.mxu0 0.0
  %4927 = vmatpush1.msra.mxu0 0.0
  %4928 = vmatprep.subr.mxu0 0.0
  %4929 = vmatpush1.msra.mxu0 0.0
  %4930 = vmatprep.subr.mxu0 0.0
  %4931 = vmatpush1.msra.mxu0 0.0
  %4932 = vmatprep.subr.mxu0 0.0
  %4933 = vmatpush1.msra.mxu0 0.0
  %4934 = vmatprep.subr.mxu0 0.0
  %4935 = vmatpush1.msra.mxu0 0.0
  %4936 = vmatprep.subr.mxu0 0.0
  %4937 = vmatpush1.msra.mxu0 0.0
  %4938 = vmatprep.subr.mxu0 0.0
  %4939 = vmatpush1.msra.mxu0 0.0
  %4940 = vmatprep.subr.mxu0 0.0
  %4941 = vmatpush1.msra.mxu0 0.0
  %4942 = vmatprep.subr.mxu0 0.0
  %4943 = vmatpush1.msra.mxu0 0.0
  %4944 = vmatprep.subr.mxu0 0.0
  %4945 = vmatpush1.msra.mxu0 0.0
  %4946 = vmatprep.subr.mxu0 0.0
  %4947 = vmatpush1.msra.mxu0 0.0
  %4948 = vmatprep.subr.mxu0 0.0
  %4949 = vmatpush1.msra.mxu0 0.0
  %4950 = vmatprep.subr.mxu0 0.0
  %4951 = vmatpush1.msra.mxu0 0.0
  %4952 = vmatprep.subr.mxu0 0.0
  %4953 = vmatpush1.msra.mxu0 0.0
  %4954 = vmatprep.subr.mxu0 0.0
  %4955 = vmatpush1.msra.mxu0 0.0
  %4956 = vmatprep.subr.mxu0 0.0
  %4957 = vmatpush1.msra.mxu0 0.0
  %4958 = vmatprep.mubr.f32.mxu0 0.0
  %4959 = vmatmul.mubr.f32.gmra.mrb[0].mxu0 %v4892
  %v4960 = vpop.f32.mrb[0].mxu0
  %v4961 = vadd.f32 0.0, %v4960
  %v4962 = vpop.f32.mrb[0].mxu0
  %4963 = vdwg.mxu0
  %v4964 = vadd.f32 %v4885, %v4961
  %s4965 = scalar_lea.vmem %s5, 184
  %v4966 = vld [vmem:[%s4965] sm:$0xff]
  %4967 = vrot.lane.b32.xlu0 %v4577, 120
  %v4968 = vpop.permute.xlu0 %4967
  %v4971 = vsel %vm2587, %v4966, 0
  %4973 = vmatprep.subr.mxu0 0.0
  %4974 = vmatpush1.msra.mxu0 %v4968
  %4975 = vmatprep.subr.mxu0 0.0
  %4976 = vmatpush1.msra.mxu0 0.0
  %4977 = vmatprep.subr.mxu0 0.0
  %4978 = vmatpush1.msra.mxu0 0.0
  %4979 = vmatprep.subr.mxu0 0.0
  %4980 = vmatpush1.msra.mxu0 0.0
  %4981 = vmatprep.subr.mxu0 0.0
  %4982 = vmatpush1.msra.mxu0 0.0
  %4983 = vmatprep.subr.mxu0 0.0
  %4984 = vmatpush1.msra.mxu0 0.0
  %4985 = vmatprep.subr.mxu0 0.0
  %4986 = vmatpush1.msra.mxu0 0.0
  %4987 = vmatprep.subr.mxu0 0.0
  %4988 = vmatpush1.msra.mxu0 0.0
  %4989 = vmatprep.subr.mxu0 0.0
  %4990 = vmatpush1.msra.mxu0 0.0
  %4991 = vmatprep.subr.mxu0 0.0
  %4992 = vmatpush1.msra.mxu0 0.0
  %4993 = vmatprep.subr.mxu0 0.0
  %4994 = vmatpush1.msra.mxu0 0.0
  %4995 = vmatprep.subr.mxu0 0.0
  %4996 = vmatpush1.msra.mxu0 0.0
  %4997 = vmatprep.subr.mxu0 0.0
  %4998 = vmatpush1.msra.mxu0 0.0
  %4999 = vmatprep.subr.mxu0 0.0
  %5000 = vmatpush1.msra.mxu0 0.0
  %5001 = vmatprep.subr.mxu0 0.0
  %5002 = vmatpush1.msra.mxu0 0.0
  %5003 = vmatprep.subr.mxu0 0.0
  %5004 = vmatpush1.msra.mxu0 0.0
  %5005 = vmatprep.subr.mxu0 0.0
  %5006 = vmatpush1.msra.mxu0 0.0
  %5007 = vmatprep.subr.mxu0 0.0
  %5008 = vmatpush1.msra.mxu0 0.0
  %5009 = vmatprep.subr.mxu0 0.0
  %5010 = vmatpush1.msra.mxu0 0.0
  %5011 = vmatprep.subr.mxu0 0.0
  %5012 = vmatpush1.msra.mxu0 0.0
  %5013 = vmatprep.subr.mxu0 0.0
  %5014 = vmatpush1.msra.mxu0 0.0
  %5015 = vmatprep.subr.mxu0 0.0
  %5016 = vmatpush1.msra.mxu0 0.0
  %5017 = vmatprep.subr.mxu0 0.0
  %5018 = vmatpush1.msra.mxu0 0.0
  %5019 = vmatprep.subr.mxu0 0.0
  %5020 = vmatpush1.msra.mxu0 0.0
  %5021 = vmatprep.subr.mxu0 0.0
  %5022 = vmatpush1.msra.mxu0 0.0
  %5023 = vmatprep.subr.mxu0 0.0
  %5024 = vmatpush1.msra.mxu0 0.0
  %5025 = vmatprep.subr.mxu0 0.0
  %5026 = vmatpush1.msra.mxu0 0.0
  %5027 = vmatprep.subr.mxu0 0.0
  %5028 = vmatpush1.msra.mxu0 0.0
  %5029 = vmatprep.subr.mxu0 0.0
  %5030 = vmatpush1.msra.mxu0 0.0
  %5031 = vmatprep.subr.mxu0 0.0
  %5032 = vmatpush1.msra.mxu0 0.0
  %5033 = vmatprep.subr.mxu0 0.0
  %5034 = vmatpush1.msra.mxu0 0.0
  %5035 = vmatprep.subr.mxu0 0.0
  %5036 = vmatpush1.msra.mxu0 0.0
  %5037 = vmatprep.mubr.f32.mxu0 0.0
  %5038 = vmatmul.mubr.f32.gmra.mrb[0].mxu0 %v4971
  %v5039 = vpop.f32.mrb[0].mxu0
  %v5040 = vadd.f32 0.0, %v5039
  %v5041 = vpop.f32.mrb[0].mxu0
  %5042 = vdwg.mxu0
  %v5043 = vadd.f32 %v4964, %v5040
  %s5044 = scalar_lea.vmem %s5, 192
  %v5045 = vld [vmem:[%s5044] sm:$0xff]
  %5046 = vrot.lane.b32.xlu0 %v4577, 116
  %v5047 = vpop.permute.xlu0 %5046
  %v5050 = vsel %vm2587, %v5045, 0
  %5052 = vmatprep.subr.mxu0 0.0
  %5053 = vmatpush1.msra.mxu0 %v5047
  %5054 = vmatprep.subr.mxu0 0.0
  %5055 = vmatpush1.msra.mxu0 0.0
  %5056 = vmatprep.subr.mxu0 0.0
  %5057 = vmatpush1.msra.mxu0 0.0
  %5058 = vmatprep.subr.mxu0 0.0
  %5059 = vmatpush1.msra.mxu0 0.0
  %5060 = vmatprep.subr.mxu0 0.0
  %5061 = vmatpush1.msra.mxu0 0.0
  %5062 = vmatprep.subr.mxu0 0.0
  %5063 = vmatpush1.msra.mxu0 0.0
  %5064 = vmatprep.subr.mxu0 0.0
  %5065 = vmatpush1.msra.mxu0 0.0
  %5066 = vmatprep.subr.mxu0 0.0
  %5067 = vmatpush1.msra.mxu0 0.0
  %5068 = vmatprep.subr.mxu0 0.0
  %5069 = vmatpush1.msra.mxu0 0.0
  %5070 = vmatprep.subr.mxu0 0.0
  %5071 = vmatpush1.msra.mxu0 0.0
  %5072 = vmatprep.subr.mxu0 0.0
  %5073 = vmatpush1.msra.mxu0 0.0
  %5074 = vmatprep.subr.mxu0 0.0
  %5075 = vmatpush1.msra.mxu0 0.0
  %5076 = vmatprep.subr.mxu0 0.0
  %5077 = vmatpush1.msra.mxu0 0.0
  %5078 = vmatprep.subr.mxu0 0.0
  %5079 = vmatpush1.msra.mxu0 0.0
  %5080 = vmatprep.subr.mxu0 0.0
  %5081 = vmatpush1.msra.mxu0 0.0
  %5082 = vmatprep.subr.mxu0 0.0
  %5083 = vmatpush1.msra.mxu0 0.0
  %5084 = vmatprep.subr.mxu0 0.0
  %5085 = vmatpush1.msra.mxu0 0.0
  %5086 = vmatprep.subr.mxu0 0.0
  %5087 = vmatpush1.msra.mxu0 0.0
  %5088 = vmatprep.subr.mxu0 0.0
  %5089 = vmatpush1.msra.mxu0 0.0
  %5090 = vmatprep.subr.mxu0 0.0
  %5091 = vmatpush1.msra.mxu0 0.0
  %5092 = vmatprep.subr.mxu0 0.0
  %5093 = vmatpush1.msra.mxu0 0.0
  %5094 = vmatprep.subr.mxu0 0.0
  %5095 = vmatpush1.msra.mxu0 0.0
  %5096 = vmatprep.subr.mxu0 0.0
  %5097 = vmatpush1.msra.mxu0 0.0
  %5098 = vmatprep.subr.mxu0 0.0
  %5099 = vmatpush1.msra.mxu0 0.0
  %5100 = vmatprep.subr.mxu0 0.0
  %5101 = vmatpush1.msra.mxu0 0.0
  %5102 = vmatprep.subr.mxu0 0.0
  %5103 = vmatpush1.msra.mxu0 0.0
  %5104 = vmatprep.subr.mxu0 0.0
  %5105 = vmatpush1.msra.mxu0 0.0
  %5106 = vmatprep.subr.mxu0 0.0
  %5107 = vmatpush1.msra.mxu0 0.0
  %5108 = vmatprep.subr.mxu0 0.0
  %5109 = vmatpush1.msra.mxu0 0.0
  %5110 = vmatprep.subr.mxu0 0.0
  %5111 = vmatpush1.msra.mxu0 0.0
  %5112 = vmatprep.subr.mxu0 0.0
  %5113 = vmatpush1.msra.mxu0 0.0
  %5114 = vmatprep.subr.mxu0 0.0
  %5115 = vmatpush1.msra.mxu0 0.0
  %5116 = vmatprep.mubr.f32.mxu0 0.0
  %5117 = vmatmul.mubr.f32.gmra.mrb[0].mxu0 %v5050
  %v5118 = vpop.f32.mrb[0].mxu0
  %v5119 = vadd.f32 0.0, %v5118
  %v5120 = vpop.f32.mrb[0].mxu0
  %5121 = vdwg.mxu0
  %v5122 = vadd.f32 %v5043, %v5119
  %s5123 = scalar_lea.vmem %s5, 200
  %v5124 = vld [vmem:[%s5123] sm:$0xff]
  %5125 = vrot.lane.b32.xlu0 %v4577, 115
  %v5126 = vpop.permute.xlu0 %5125
  %v5129 = vsel %vm2587, %v5124, 0
  %5131 = vmatprep.subr.mxu0 0.0
  %5132 = vmatpush1.msra.mxu0 %v5126
  %5133 = vmatprep.subr.mxu0 0.0
  %5134 = vmatpush1.msra.mxu0 0.0
  %5135 = vmatprep.subr.mxu0 0.0
  %5136 = vmatpush1.msra.mxu0 0.0
  %5137 = vmatprep.subr.mxu0 0.0
  %5138 = vmatpush1.msra.mxu0 0.0
  %5139 = vmatprep.subr.mxu0 0.0
  %5140 = vmatpush1.msra.mxu0 0.0
  %5141 = vmatprep.subr.mxu0 0.0
  %5142 = vmatpush1.msra.mxu0 0.0
  %5143 = vmatprep.subr.mxu0 0.0
  %5144 = vmatpush1.msra.mxu0 0.0
  %5145 = vmatprep.subr.mxu0 0.0
  %5146 = vmatpush1.msra.mxu0 0.0
  %5147 = vmatprep.subr.mxu0 0.0
  %5148 = vmatpush1.msra.mxu0 0.0
  %5149 = vmatprep.subr.mxu0 0.0
  %5150 = vmatpush1.msra.mxu0 0.0
  %5151 = vmatprep.subr.mxu0 0.0
  %5152 = vmatpush1.msra.mxu0 0.0
  %5153 = vmatprep.subr.mxu0 0.0
  %5154 = vmatpush1.msra.mxu0 0.0
  %5155 = vmatprep.subr.mxu0 0.0
  %5156 = vmatpush1.msra.mxu0 0.0
  %5157 = vmatprep.subr.mxu0 0.0
  %5158 = vmatpush1.msra.mxu0 0.0
  %5159 = vmatprep.subr.mxu0 0.0
  %5160 = vmatpush1.msra.mxu0 0.0
  %5161 = vmatprep.subr.mxu0 0.0
  %5162 = vmatpush1.msra.mxu0 0.0
  %5163 = vmatprep.subr.mxu0 0.0
  %5164 = vmatpush1.msra.mxu0 0.0
  %5165 = vmatprep.subr.mxu0 0.0
  %5166 = vmatpush1.msra.mxu0 0.0
  %5167 = vmatprep.subr.mxu0 0.0
  %5168 = vmatpush1.msra.mxu0 0.0
  %5169 = vmatprep.subr.mxu0 0.0
  %5170 = vmatpush1.msra.mxu0 0.0
  %5171 = vmatprep.subr.mxu0 0.0
  %5172 = vmatpush1.msra.mxu0 0.0
  %5173 = vmatprep.subr.mxu0 0.0
  %5174 = vmatpush1.msra.mxu0 0.0
  %5175 = vmatprep.subr.mxu0 0.0
  %5176 = vmatpush1.msra.mxu0 0.0
  %5177 = vmatprep.subr.mxu0 0.0
  %5178 = vmatpush1.msra.mxu0 0.0
  %5179 = vmatprep.subr.mxu0 0.0
  %5180 = vmatpush1.msra.mxu0 0.0
  %5181 = vmatprep.subr.mxu0 0.0
  %5182 = vmatpush1.msra.mxu0 0.0
  %5183 = vmatprep.subr.mxu0 0.0
  %5184 = vmatpush1.msra.mxu0 0.0
  %5185 = vmatprep.subr.mxu0 0.0
  %5186 = vmatpush1.msra.mxu0 0.0
  %5187 = vmatprep.subr.mxu0 0.0
  %5188 = vmatpush1.msra.mxu0 0.0
  %5189 = vmatprep.subr.mxu0 0.0
  %5190 = vmatpush1.msra.mxu0 0.0
  %5191 = vmatprep.subr.mxu0 0.0
  %5192 = vmatpush1.msra.mxu0 0.0
  %5193 = vmatprep.subr.mxu0 0.0
  %5194 = vmatpush1.msra.mxu0 0.0
  %5195 = vmatprep.mubr.f32.mxu0 0.0
  %5196 = vmatmul.mubr.f32.gmra.mrb[0].mxu0 %v5129
  %v5197 = vpop.f32.mrb[0].mxu0
  %v5198 = vadd.f32 0.0, %v5197
  %v5199 = vpop.f32.mrb[0].mxu0
  %5200 = vdwg.mxu0
  %v5201 = vadd.f32 %v5122, %v5198
  %s5202 = scalar_lea.vmem %s5, 208
  %v5203 = vld [vmem:[%s5202] sm:$0xff]
  %5204 = vrot.lane.b32.xlu0 %v4577, 114
  %v5205 = vpop.permute.xlu0 %5204
  %v5208 = vsel %vm2587, %v5203, 0
  %5210 = vmatprep.subr.mxu0 0.0
  %5211 = vmatpush1.msra.mxu0 %v5205
  %5212 = vmatprep.subr.mxu0 0.0
  %5213 = vmatpush1.msra.mxu0 0.0
  %5214 = vmatprep.subr.mxu0 0.0
  %5215 = vmatpush1.msra.mxu0 0.0
  %5216 = vmatprep.subr.mxu0 0.0
  %5217 = vmatpush1.msra.mxu0 0.0
  %5218 = vmatprep.subr.mxu0 0.0
  %5219 = vmatpush1.msra.mxu0 0.0
  %5220 = vmatprep.subr.mxu0 0.0
  %5221 = vmatpush1.msra.mxu0 0.0
  %5222 = vmatprep.subr.mxu0 0.0
  %5223 = vmatpush1.msra.mxu0 0.0
  %5224 = vmatprep.subr.mxu0 0.0
  %5225 = vmatpush1.msra.mxu0 0.0
  %5226 = vmatprep.subr.mxu0 0.0
  %5227 = vmatpush1.msra.mxu0 0.0
  %5228 = vmatprep.subr.mxu0 0.0
  %5229 = vmatpush1.msra.mxu0 0.0
  %5230 = vmatprep.subr.mxu0 0.0
  %5231 = vmatpush1.msra.mxu0 0.0
  %5232 = vmatprep.subr.mxu0 0.0
  %5233 = vmatpush1.msra.mxu0 0.0
  %5234 = vmatprep.subr.mxu0 0.0
  %5235 = vmatpush1.msra.mxu0 0.0
  %5236 = vmatprep.subr.mxu0 0.0
  %5237 = vmatpush1.msra.mxu0 0.0
  %5238 = vmatprep.subr.mxu0 0.0
  %5239 = vmatpush1.msra.mxu0 0.0
  %5240 = vmatprep.subr.mxu0 0.0
  %5241 = vmatpush1.msra.mxu0 0.0
  %5242 = vmatprep.subr.mxu0 0.0
  %5243 = vmatpush1.msra.mxu0 0.0
  %5244 = vmatprep.subr.mxu0 0.0
  %5245 = vmatpush1.msra.mxu0 0.0
  %5246 = vmatprep.subr.mxu0 0.0
  %5247 = vmatpush1.msra.mxu0 0.0
  %5248 = vmatprep.subr.mxu0 0.0
  %5249 = vmatpush1.msra.mxu0 0.0
  %5250 = vmatprep.subr.mxu0 0.0
  %5251 = vmatpush1.msra.mxu0 0.0
  %5252 = vmatprep.subr.mxu0 0.0
  %5253 = vmatpush1.msra.mxu0 0.0
  %5254 = vmatprep.subr.mxu0 0.0
  %5255 = vmatpush1.msra.mxu0 0.0
  %5256 = vmatprep.subr.mxu0 0.0
  %5257 = vmatpush1.msra.mxu0 0.0
  %5258 = vmatprep.subr.mxu0 0.0
  %5259 = vmatpush1.msra.mxu0 0.0
  %5260 = vmatprep.subr.mxu0 0.0
  %5261 = vmatpush1.msra.mxu0 0.0
  %5262 = vmatprep.subr.mxu0 0.0
  %5263 = vmatpush1.msra.mxu0 0.0
  %5264 = vmatprep.subr.mxu0 0.0
  %5265 = vmatpush1.msra.mxu0 0.0
  %5266 = vmatprep.subr.mxu0 0.0
  %5267 = vmatpush1.msra.mxu0 0.0
  %5268 = vmatprep.subr.mxu0 0.0
  %5269 = vmatpush1.msra.mxu0 0.0
  %5270 = vmatprep.subr.mxu0 0.0
  %5271 = vmatpush1.msra.mxu0 0.0
  %5272 = vmatprep.subr.mxu0 0.0
  %5273 = vmatpush1.msra.mxu0 0.0
  %5274 = vmatprep.mubr.f32.mxu0 0.0
  %5275 = vmatmul.mubr.f32.gmra.mrb[0].mxu0 %v5208
  %v5276 = vpop.f32.mrb[0].mxu0
  %v5277 = vadd.f32 0.0, %v5276
  %v5278 = vpop.f32.mrb[0].mxu0
  %5279 = vdwg.mxu0
  %v5280 = vadd.f32 %v5201, %v5277
  %5282 = vset.pattern.permute.xlu0 0
  %5283 = vperm.xlu0 %5282, %v4567
  %v5284 = vpop.permute.xlu0 %5283
  %v5286 = vadd.f32 %v5280, %v5284
  %v5287 = vmax.f32 %v5286, 0.0
  %v5289 = vsel %vm2805, %v5287, 0
  %5291 = vmatprep.subr.mxu0 0.0
  %5292 = vmatpush1.msra.mxu0 %v4484
  %5293 = vmatprep.subr.mxu0 0.0
  %5294 = vmatpush1.msra.mxu0 %v4485
  %5295 = vmatprep.subr.mxu0 0.0
  %5296 = vmatpush1.msra.mxu0 %v4486
  %5297 = vmatprep.subr.mxu0 0.0
  %5298 = vmatpush1.msra.mxu0 %v4487
  %5299 = vmatprep.subr.mxu0 0.0
  %5300 = vmatpush1.msra.mxu0 %v4488
  %5301 = vmatprep.subr.mxu0 0.0
  %5302 = vmatpush1.msra.mxu0 %v4489
  %5303 = vmatprep.subr.mxu0 0.0
  %5304 = vmatpush1.msra.mxu0 %v4490
  %5305 = vmatprep.subr.mxu0 0.0
  %5306 = vmatpush1.msra.mxu0 %v4491
  %5307 = vmatprep.subr.mxu0 0.0
  %5308 = vmatpush1.msra.mxu0 %v4492
  %5309 = vmatprep.subr.mxu0 0.0
  %5310 = vmatpush1.msra.mxu0 0.0
  %5311 = vmatprep.subr.mxu0 0.0
  %5312 = vmatpush1.msra.mxu0 0.0
  %5313 = vmatprep.subr.mxu0 0.0
  %5314 = vmatpush1.msra.mxu0 0.0
  %5315 = vmatprep.subr.mxu0 0.0
  %5316 = vmatpush1.msra.mxu0 0.0
  %5317 = vmatprep.subr.mxu0 0.0
  %5318 = vmatpush1.msra.mxu0 0.0
  %5319 = vmatprep.subr.mxu0 0.0
  %5320 = vmatpush1.msra.mxu0 0.0
  %5321 = vmatprep.subr.mxu0 0.0
  %5322 = vmatpush1.msra.mxu0 0.0
  %5323 = vmatprep.subr.mxu0 0.0
  %5324 = vmatpush1.msra.mxu0 0.0
  %5325 = vmatprep.subr.mxu0 0.0
  %5326 = vmatpush1.msra.mxu0 0.0
  %5327 = vmatprep.subr.mxu0 0.0
  %5328 = vmatpush1.msra.mxu0 0.0
  %5329 = vmatprep.subr.mxu0 0.0
  %5330 = vmatpush1.msra.mxu0 0.0
  %5331 = vmatprep.subr.mxu0 0.0
  %5332 = vmatpush1.msra.mxu0 0.0
  %5333 = vmatprep.subr.mxu0 0.0
  %5334 = vmatpush1.msra.mxu0 0.0
  %5335 = vmatprep.subr.mxu0 0.0
  %5336 = vmatpush1.msra.mxu0 0.0
  %5337 = vmatprep.subr.mxu0 0.0
  %5338 = vmatpush1.msra.mxu0 0.0
  %5339 = vmatprep.subr.mxu0 0.0
  %5340 = vmatpush1.msra.mxu0 0.0
  %5341 = vmatprep.subr.mxu0 0.0
  %5342 = vmatpush1.msra.mxu0 0.0
  %5343 = vmatprep.subr.mxu0 0.0
  %5344 = vmatpush1.msra.mxu0 0.0
  %5345 = vmatprep.subr.mxu0 0.0
  %5346 = vmatpush1.msra.mxu0 0.0
  %5347 = vmatprep.subr.mxu0 0.0
  %5348 = vmatpush1.msra.mxu0 0.0
  %5349 = vmatprep.subr.mxu0 0.0
  %5350 = vmatpush1.msra.mxu0 0.0
  %5351 = vmatprep.subr.mxu0 0.0
  %5352 = vmatpush1.msra.mxu0 0.0
  %5353 = vmatprep.subr.mxu0 0.0
  %5354 = vmatpush1.msra.mxu0 0.0
  %5355 = vmatprep.mubr.f32.mxu0 0.0
  %5356 = vmatmul.mubr.f32.gmra.mrb[0].mxu0 %v5289
  %v5357 = vpop.f32.mrb[0].mxu0
  %v5358 = vadd.f32 0.0, %v5357
  %v5359 = vpop.f32.mrb[0].mxu0
  %5360 = vdwg.mxu0
  %s5361 = scalar_lea.vmem %s6, 24
  %v5362 = vld [vmem:[%s5361] sm:$0xff]
  %s5363 = scalar_lea.vmem %s5, 216
  %v5364 = vld [vmem:[%s5363] sm:$0xff]
  %s5365 = scalar_lea.vmem %s5, 224
  %v5366 = vld [vmem:[%s5365] sm:$0xff]
  %5367 = vrot.lane.b32.xlu0 %v5358, 72
  %v5368 = vpop.permute.xlu0 %5367
  %v5369 = vsel %vm2843, %v5368, %v5358
  %5370 = vrot.lane.b32.xlu0 %v5369, 72
  %v5371 = vpop.permute.xlu0 %5370
  %v5372 = vsel %vm2843, %v5371, %v5358
  %5374 = vrot.lane.b32.xlu0 %v5372, 127
  %v5375 = vpop.permute.xlu0 %5374
  %v5378 = vsel %vm2587, %v5366, 0
  %5380 = vmatprep.subr.mxu0 0.0
  %5381 = vmatpush1.msra.mxu0 %v5375
  %5382 = vmatprep.subr.mxu0 0.0
  %5383 = vmatpush1.msra.mxu0 0.0
  %5384 = vmatprep.subr.mxu0 0.0
  %5385 = vmatpush1.msra.mxu0 0.0
  %5386 = vmatprep.subr.mxu0 0.0
  %5387 = vmatpush1.msra.mxu0 0.0
  %5388 = vmatprep.subr.mxu0 0.0
  %5389 = vmatpush1.msra.mxu0 0.0
  %5390 = vmatprep.subr.mxu0 0.0
  %5391 = vmatpush1.msra.mxu0 0.0
  %5392 = vmatprep.subr.mxu0 0.0
  %5393 = vmatpush1.msra.mxu0 0.0
  %5394 = vmatprep.subr.mxu0 0.0
  %5395 = vmatpush1.msra.mxu0 0.0
  %5396 = vmatprep.subr.mxu0 0.0
  %5397 = vmatpush1.msra.mxu0 0.0
  %5398 = vmatprep.subr.mxu0 0.0
  %5399 = vmatpush1.msra.mxu0 0.0
  %5400 = vmatprep.subr.mxu0 0.0
  %5401 = vmatpush1.msra.mxu0 0.0
  %5402 = vmatprep.subr.mxu0 0.0
  %5403 = vmatpush1.msra.mxu0 0.0
  %5404 = vmatprep.subr.mxu0 0.0
  %5405 = vmatpush1.msra.mxu0 0.0
  %5406 = vmatprep.subr.mxu0 0.0
  %5407 = vmatpush1.msra.mxu0 0.0
  %5408 = vmatprep.subr.mxu0 0.0
  %5409 = vmatpush1.msra.mxu0 0.0
  %5410 = vmatprep.subr.mxu0 0.0
  %5411 = vmatpush1.msra.mxu0 0.0
  %5412 = vmatprep.subr.mxu0 0.0
  %5413 = vmatpush1.msra.mxu0 0.0
  %5414 = vmatprep.subr.mxu0 0.0
  %5415 = vmatpush1.msra.mxu0 0.0
  %5416 = vmatprep.subr.mxu0 0.0
  %5417 = vmatpush1.msra.mxu0 0.0
  %5418 = vmatprep.subr.mxu0 0.0
  %5419 = vmatpush1.msra.mxu0 0.0
  %5420 = vmatprep.subr.mxu0 0.0
  %5421 = vmatpush1.msra.mxu0 0.0
  %5422 = vmatprep.subr.mxu0 0.0
  %5423 = vmatpush1.msra.mxu0 0.0
  %5424 = vmatprep.subr.mxu0 0.0
  %5425 = vmatpush1.msra.mxu0 0.0
  %5426 = vmatprep.subr.mxu0 0.0
  %5427 = vmatpush1.msra.mxu0 0.0
  %5428 = vmatprep.subr.mxu0 0.0
  %5429 = vmatpush1.msra.mxu0 0.0
  %5430 = vmatprep.subr.mxu0 0.0
  %5431 = vmatpush1.msra.mxu0 0.0
  %5432 = vmatprep.subr.mxu0 0.0
  %5433 = vmatpush1.msra.mxu0 0.0
  %5434 = vmatprep.subr.mxu0 0.0
  %5435 = vmatpush1.msra.mxu0 0.0
  %5436 = vmatprep.subr.mxu0 0.0
  %5437 = vmatpush1.msra.mxu0 0.0
  %5438 = vmatprep.subr.mxu0 0.0
  %5439 = vmatpush1.msra.mxu0 0.0
  %5440 = vmatprep.subr.mxu0 0.0
  %5441 = vmatpush1.msra.mxu0 0.0
  %5442 = vmatprep.subr.mxu0 0.0
  %5443 = vmatpush1.msra.mxu0 0.0
  %5444 = vmatprep.mubr.f32.mxu0 0.0
  %5445 = vmatmul.mubr.f32.gmra.mrb[0].mxu0 %v5378
  %v5446 = vpop.f32.mrb[0].mxu0
  %v5447 = vadd.f32 0.0, %v5446
  %v5448 = vpop.f32.mrb[0].mxu0
  %5449 = vdwg.mxu0
  %v5451 = vsel %vm2587, %v5364, 0
  %5453 = vmatprep.subr.mxu0 0.0
  %5454 = vmatpush1.msra.mxu0 %v5358
  %5455 = vmatprep.subr.mxu0 0.0
  %5456 = vmatpush1.msra.mxu0 0.0
  %5457 = vmatprep.subr.mxu0 0.0
  %5458 = vmatpush1.msra.mxu0 0.0
  %5459 = vmatprep.subr.mxu0 0.0
  %5460 = vmatpush1.msra.mxu0 0.0
  %5461 = vmatprep.subr.mxu0 0.0
  %5462 = vmatpush1.msra.mxu0 0.0
  %5463 = vmatprep.subr.mxu0 0.0
  %5464 = vmatpush1.msra.mxu0 0.0
  %5465 = vmatprep.subr.mxu0 0.0
  %5466 = vmatpush1.msra.mxu0 0.0
  %5467 = vmatprep.subr.mxu0 0.0
  %5468 = vmatpush1.msra.mxu0 0.0
  %5469 = vmatprep.subr.mxu0 0.0
  %5470 = vmatpush1.msra.mxu0 0.0
  %5471 = vmatprep.subr.mxu0 0.0
  %5472 = vmatpush1.msra.mxu0 0.0
  %5473 = vmatprep.subr.mxu0 0.0
  %5474 = vmatpush1.msra.mxu0 0.0
  %5475 = vmatprep.subr.mxu0 0.0
  %5476 = vmatpush1.msra.mxu0 0.0
  %5477 = vmatprep.subr.mxu0 0.0
  %5478 = vmatpush1.msra.mxu0 0.0
  %5479 = vmatprep.subr.mxu0 0.0
  %5480 = vmatpush1.msra.mxu0 0.0
  %5481 = vmatprep.subr.mxu0 0.0
  %5482 = vmatpush1.msra.mxu0 0.0
  %5483 = vmatprep.subr.mxu0 0.0
  %5484 = vmatpush1.msra.mxu0 0.0
  %5485 = vmatprep.subr.mxu0 0.0
  %5486 = vmatpush1.msra.mxu0 0.0
  %5487 = vmatprep.subr.mxu0 0.0
  %5488 = vmatpush1.msra.mxu0 0.0
  %5489 = vmatprep.subr.mxu0 0.0
  %5490 = vmatpush1.msra.mxu0 0.0
  %5491 = vmatprep.subr.mxu0 0.0
  %5492 = vmatpush1.msra.mxu0 0.0
  %5493 = vmatprep.subr.mxu0 0.0
  %5494 = vmatpush1.msra.mxu0 0.0
  %5495 = vmatprep.subr.mxu0 0.0
  %5496 = vmatpush1.msra.mxu0 0.0
  %5497 = vmatprep.subr.mxu0 0.0
  %5498 = vmatpush1.msra.mxu0 0.0
  %5499 = vmatprep.subr.mxu0 0.0
  %5500 = vmatpush1.msra.mxu0 0.0
  %5501 = vmatprep.subr.mxu0 0.0
  %5502 = vmatpush1.msra.mxu0 0.0
  %5503 = vmatprep.subr.mxu0 0.0
  %5504 = vmatpush1.msra.mxu0 0.0
  %5505 = vmatprep.subr.mxu0 0.0
  %5506 = vmatpush1.msra.mxu0 0.0
  %5507 = vmatprep.subr.mxu0 0.0
  %5508 = vmatpush1.msra.mxu0 0.0
  %5509 = vmatprep.subr.mxu0 0.0
  %5510 = vmatpush1.msra.mxu0 0.0
  %5511 = vmatprep.subr.mxu0 0.0
  %5512 = vmatpush1.msra.mxu0 0.0
  %5513 = vmatprep.subr.mxu0 0.0
  %5514 = vmatpush1.msra.mxu0 0.0
  %5515 = vmatprep.subr.mxu0 0.0
  %5516 = vmatpush1.msra.mxu0 0.0
  %5517 = vmatprep.mubr.f32.mxu0 0.0
  %5518 = vmatmul.mubr.f32.gmra.mrb[0].mxu0 %v5451
  %v5519 = vpop.f32.mrb[0].mxu0
  %v5520 = vadd.f32 %v5447, %v5519
  %v5521 = vpop.f32.mrb[0].mxu0
  %5522 = vdwg.mxu0
  %s5523 = scalar_lea.vmem %s5, 232
  %v5524 = vld [vmem:[%s5523] sm:$0xff]
  %5525 = vrot.lane.b32.xlu0 %v5372, 126
  %v5526 = vpop.permute.xlu0 %5525
  %v5529 = vsel %vm2587, %v5524, 0
  %5531 = vmatprep.subr.mxu0 0.0
  %5532 = vmatpush1.msra.mxu0 %v5526
  %5533 = vmatprep.subr.mxu0 0.0
  %5534 = vmatpush1.msra.mxu0 0.0
  %5535 = vmatprep.subr.mxu0 0.0
  %5536 = vmatpush1.msra.mxu0 0.0
  %5537 = vmatprep.subr.mxu0 0.0
  %5538 = vmatpush1.msra.mxu0 0.0
  %5539 = vmatprep.subr.mxu0 0.0
  %5540 = vmatpush1.msra.mxu0 0.0
  %5541 = vmatprep.subr.mxu0 0.0
  %5542 = vmatpush1.msra.mxu0 0.0
  %5543 = vmatprep.subr.mxu0 0.0
  %5544 = vmatpush1.msra.mxu0 0.0
  %5545 = vmatprep.subr.mxu0 0.0
  %5546 = vmatpush1.msra.mxu0 0.0
  %5547 = vmatprep.subr.mxu0 0.0
  %5548 = vmatpush1.msra.mxu0 0.0
  %5549 = vmatprep.subr.mxu0 0.0
  %5550 = vmatpush1.msra.mxu0 0.0
  %5551 = vmatprep.subr.mxu0 0.0
  %5552 = vmatpush1.msra.mxu0 0.0
  %5553 = vmatprep.subr.mxu0 0.0
  %5554 = vmatpush1.msra.mxu0 0.0
  %5555 = vmatprep.subr.mxu0 0.0
  %5556 = vmatpush1.msra.mxu0 0.0
  %5557 = vmatprep.subr.mxu0 0.0
  %5558 = vmatpush1.msra.mxu0 0.0
  %5559 = vmatprep.subr.mxu0 0.0
  %5560 = vmatpush1.msra.mxu0 0.0
  %5561 = vmatprep.subr.mxu0 0.0
  %5562 = vmatpush1.msra.mxu0 0.0
  %5563 = vmatprep.subr.mxu0 0.0
  %5564 = vmatpush1.msra.mxu0 0.0
  %5565 = vmatprep.subr.mxu0 0.0
  %5566 = vmatpush1.msra.mxu0 0.0
  %5567 = vmatprep.subr.mxu0 0.0
  %5568 = vmatpush1.msra.mxu0 0.0
  %5569 = vmatprep.subr.mxu0 0.0
  %5570 = vmatpush1.msra.mxu0 0.0
  %5571 = vmatprep.subr.mxu0 0.0
  %5572 = vmatpush1.msra.mxu0 0.0
  %5573 = vmatprep.subr.mxu0 0.0
  %5574 = vmatpush1.msra.mxu0 0.0
  %5575 = vmatprep.subr.mxu0 0.0
  %5576 = vmatpush1.msra.mxu0 0.0
  %5577 = vmatprep.subr.mxu0 0.0
  %5578 = vmatpush1.msra.mxu0 0.0
  %5579 = vmatprep.subr.mxu0 0.0
  %5580 = vmatpush1.msra.mxu0 0.0
  %5581 = vmatprep.subr.mxu0 0.0
  %5582 = vmatpush1.msra.mxu0 0.0
  %5583 = vmatprep.subr.mxu0 0.0
  %5584 = vmatpush1.msra.mxu0 0.0
  %5585 = vmatprep.subr.mxu0 0.0
  %5586 = vmatpush1.msra.mxu0 0.0
  %5587 = vmatprep.subr.mxu0 0.0
  %5588 = vmatpush1.msra.mxu0 0.0
  %5589 = vmatprep.subr.mxu0 0.0
  %5590 = vmatpush1.msra.mxu0 0.0
  %5591 = vmatprep.subr.mxu0 0.0
  %5592 = vmatpush1.msra.mxu0 0.0
  %5593 = vmatprep.subr.mxu0 0.0
  %5594 = vmatpush1.msra.mxu0 0.0
  %5595 = vmatprep.mubr.f32.mxu0 0.0
  %5596 = vmatmul.mubr.f32.gmra.mrb[0].mxu0 %v5529
  %v5597 = vpop.f32.mrb[0].mxu0
  %v5598 = vadd.f32 0.0, %v5597
  %v5599 = vpop.f32.mrb[0].mxu0
  %5600 = vdwg.mxu0
  %v5601 = vadd.f32 %v5520, %v5598
  %s5602 = scalar_lea.vmem %s5, 240
  %v5603 = vld [vmem:[%s5602] sm:$0xff]
  %5604 = vrot.lane.b32.xlu0 %v5372, 122
  %v5605 = vpop.permute.xlu0 %5604
  %v5608 = vsel %vm2587, %v5603, 0
  %5610 = vmatprep.subr.mxu0 0.0
  %5611 = vmatpush1.msra.mxu0 %v5605
  %5612 = vmatprep.subr.mxu0 0.0
  %5613 = vmatpush1.msra.mxu0 0.0
  %5614 = vmatprep.subr.mxu0 0.0
  %5615 = vmatpush1.msra.mxu0 0.0
  %5616 = vmatprep.subr.mxu0 0.0
  %5617 = vmatpush1.msra.mxu0 0.0
  %5618 = vmatprep.subr.mxu0 0.0
  %5619 = vmatpush1.msra.mxu0 0.0
  %5620 = vmatprep.subr.mxu0 0.0
  %5621 = vmatpush1.msra.mxu0 0.0
  %5622 = vmatprep.subr.mxu0 0.0
  %5623 = vmatpush1.msra.mxu0 0.0
  %5624 = vmatprep.subr.mxu0 0.0
  %5625 = vmatpush1.msra.mxu0 0.0
  %5626 = vmatprep.subr.mxu0 0.0
  %5627 = vmatpush1.msra.mxu0 0.0
  %5628 = vmatprep.subr.mxu0 0.0
  %5629 = vmatpush1.msra.mxu0 0.0
  %5630 = vmatprep.subr.mxu0 0.0
  %5631 = vmatpush1.msra.mxu0 0.0
  %5632 = vmatprep.subr.mxu0 0.0
  %5633 = vmatpush1.msra.mxu0 0.0
  %5634 = vmatprep.subr.mxu0 0.0
  %5635 = vmatpush1.msra.mxu0 0.0
  %5636 = vmatprep.subr.mxu0 0.0
  %5637 = vmatpush1.msra.mxu0 0.0
  %5638 = vmatprep.subr.mxu0 0.0
  %5639 = vmatpush1.msra.mxu0 0.0
  %5640 = vmatprep.subr.mxu0 0.0
  %5641 = vmatpush1.msra.mxu0 0.0
  %5642 = vmatprep.subr.mxu0 0.0
  %5643 = vmatpush1.msra.mxu0 0.0
  %5644 = vmatprep.subr.mxu0 0.0
  %5645 = vmatpush1.msra.mxu0 0.0
  %5646 = vmatprep.subr.mxu0 0.0
  %5647 = vmatpush1.msra.mxu0 0.0
  %5648 = vmatprep.subr.mxu0 0.0
  %5649 = vmatpush1.msra.mxu0 0.0
  %5650 = vmatprep.subr.mxu0 0.0
  %5651 = vmatpush1.msra.mxu0 0.0
  %5652 = vmatprep.subr.mxu0 0.0
  %5653 = vmatpush1.msra.mxu0 0.0
  %5654 = vmatprep.subr.mxu0 0.0
  %5655 = vmatpush1.msra.mxu0 0.0
  %5656 = vmatprep.subr.mxu0 0.0
  %5657 = vmatpush1.msra.mxu0 0.0
  %5658 = vmatprep.subr.mxu0 0.0
  %5659 = vmatpush1.msra.mxu0 0.0
  %5660 = vmatprep.subr.mxu0 0.0
  %5661 = vmatpush1.msra.mxu0 0.0
  %5662 = vmatprep.subr.mxu0 0.0
  %5663 = vmatpush1.msra.mxu0 0.0
  %5664 = vmatprep.subr.mxu0 0.0
  %5665 = vmatpush1.msra.mxu0 0.0
  %5666 = vmatprep.subr.mxu0 0.0
  %5667 = vmatpush1.msra.mxu0 0.0
  %5668 = vmatprep.subr.mxu0 0.0
  %5669 = vmatpush1.msra.mxu0 0.0
  %5670 = vmatprep.subr.mxu0 0.0
  %5671 = vmatpush1.msra.mxu0 0.0
  %5672 = vmatprep.subr.mxu0 0.0
  %5673 = vmatpush1.msra.mxu0 0.0
  %5674 = vmatprep.mubr.f32.mxu0 0.0
  %5675 = vmatmul.mubr.f32.gmra.mrb[0].mxu0 %v5608
  %v5676 = vpop.f32.mrb[0].mxu0
  %v5677 = vadd.f32 0.0, %v5676
  %v5678 = vpop.f32.mrb[0].mxu0
  %5679 = vdwg.mxu0
  %v5680 = vadd.f32 %v5601, %v5677
  %s5681 = scalar_lea.vmem %s5, 248
  %v5682 = vld [vmem:[%s5681] sm:$0xff]
  %5683 = vrot.lane.b32.xlu0 %v5372, 121
  %v5684 = vpop.permute.xlu0 %5683
  %v5687 = vsel %vm2587, %v5682, 0
  %5689 = vmatprep.subr.mxu0 0.0
  %5690 = vmatpush1.msra.mxu0 %v5684
  %5691 = vmatprep.subr.mxu0 0.0
  %5692 = vmatpush1.msra.mxu0 0.0
  %5693 = vmatprep.subr.mxu0 0.0
  %5694 = vmatpush1.msra.mxu0 0.0
  %5695 = vmatprep.subr.mxu0 0.0
  %5696 = vmatpush1.msra.mxu0 0.0
  %5697 = vmatprep.subr.mxu0 0.0
  %5698 = vmatpush1.msra.mxu0 0.0
  %5699 = vmatprep.subr.mxu0 0.0
  %5700 = vmatpush1.msra.mxu0 0.0
  %5701 = vmatprep.subr.mxu0 0.0
  %5702 = vmatpush1.msra.mxu0 0.0
  %5703 = vmatprep.subr.mxu0 0.0
  %5704 = vmatpush1.msra.mxu0 0.0
  %5705 = vmatprep.subr.mxu0 0.0
  %5706 = vmatpush1.msra.mxu0 0.0
  %5707 = vmatprep.subr.mxu0 0.0
  %5708 = vmatpush1.msra.mxu0 0.0
  %5709 = vmatprep.subr.mxu0 0.0
  %5710 = vmatpush1.msra.mxu0 0.0
  %5711 = vmatprep.subr.mxu0 0.0
  %5712 = vmatpush1.msra.mxu0 0.0
  %5713 = vmatprep.subr.mxu0 0.0
  %5714 = vmatpush1.msra.mxu0 0.0
  %5715 = vmatprep.subr.mxu0 0.0
  %5716 = vmatpush1.msra.mxu0 0.0
  %5717 = vmatprep.subr.mxu0 0.0
  %5718 = vmatpush1.msra.mxu0 0.0
  %5719 = vmatprep.subr.mxu0 0.0
  %5720 = vmatpush1.msra.mxu0 0.0
  %5721 = vmatprep.subr.mxu0 0.0
  %5722 = vmatpush1.msra.mxu0 0.0
  %5723 = vmatprep.subr.mxu0 0.0
  %5724 = vmatpush1.msra.mxu0 0.0
  %5725 = vmatprep.subr.mxu0 0.0
  %5726 = vmatpush1.msra.mxu0 0.0
  %5727 = vmatprep.subr.mxu0 0.0
  %5728 = vmatpush1.msra.mxu0 0.0
  %5729 = vmatprep.subr.mxu0 0.0
  %5730 = vmatpush1.msra.mxu0 0.0
  %5731 = vmatprep.subr.mxu0 0.0
  %5732 = vmatpush1.msra.mxu0 0.0
  %5733 = vmatprep.subr.mxu0 0.0
  %5734 = vmatpush1.msra.mxu0 0.0
  %5735 = vmatprep.subr.mxu0 0.0
  %5736 = vmatpush1.msra.mxu0 0.0
  %5737 = vmatprep.subr.mxu0 0.0
  %5738 = vmatpush1.msra.mxu0 0.0
  %5739 = vmatprep.subr.mxu0 0.0
  %5740 = vmatpush1.msra.mxu0 0.0
  %5741 = vmatprep.subr.mxu0 0.0
  %5742 = vmatpush1.msra.mxu0 0.0
  %5743 = vmatprep.subr.mxu0 0.0
  %5744 = vmatpush1.msra.mxu0 0.0
  %5745 = vmatprep.subr.mxu0 0.0
  %5746 = vmatpush1.msra.mxu0 0.0
  %5747 = vmatprep.subr.mxu0 0.0
  %5748 = vmatpush1.msra.mxu0 0.0
  %5749 = vmatprep.subr.mxu0 0.0
  %5750 = vmatpush1.msra.mxu0 0.0
  %5751 = vmatprep.subr.mxu0 0.0
  %5752 = vmatpush1.msra.mxu0 0.0
  %5753 = vmatprep.mubr.f32.mxu0 0.0
  %5754 = vmatmul.mubr.f32.gmra.mrb[0].mxu0 %v5687
  %v5755 = vpop.f32.mrb[0].mxu0
  %v5756 = vadd.f32 0.0, %v5755
  %v5757 = vpop.f32.mrb[0].mxu0
  %5758 = vdwg.mxu0
  %v5759 = vadd.f32 %v5680, %v5756
  %s5760 = scalar_lea.vmem %s5, 256
  %v5761 = vld [vmem:[%s5760] sm:$0xff]
  %5762 = vrot.lane.b32.xlu0 %v5372, 120
  %v5763 = vpop.permute.xlu0 %5762
  %v5766 = vsel %vm2587, %v5761, 0
  %5768 = vmatprep.subr.mxu0 0.0
  %5769 = vmatpush1.msra.mxu0 %v5763
  %5770 = vmatprep.subr.mxu0 0.0
  %5771 = vmatpush1.msra.mxu0 0.0
  %5772 = vmatprep.subr.mxu0 0.0
  %5773 = vmatpush1.msra.mxu0 0.0
  %5774 = vmatprep.subr.mxu0 0.0
  %5775 = vmatpush1.msra.mxu0 0.0
  %5776 = vmatprep.subr.mxu0 0.0
  %5777 = vmatpush1.msra.mxu0 0.0
  %5778 = vmatprep.subr.mxu0 0.0
  %5779 = vmatpush1.msra.mxu0 0.0
  %5780 = vmatprep.subr.mxu0 0.0
  %5781 = vmatpush1.msra.mxu0 0.0
  %5782 = vmatprep.subr.mxu0 0.0
  %5783 = vmatpush1.msra.mxu0 0.0
  %5784 = vmatprep.subr.mxu0 0.0
  %5785 = vmatpush1.msra.mxu0 0.0
  %5786 = vmatprep.subr.mxu0 0.0
  %5787 = vmatpush1.msra.mxu0 0.0
  %5788 = vmatprep.subr.mxu0 0.0
  %5789 = vmatpush1.msra.mxu0 0.0
  %5790 = vmatprep.subr.mxu0 0.0
  %5791 = vmatpush1.msra.mxu0 0.0
  %5792 = vmatprep.subr.mxu0 0.0
  %5793 = vmatpush1.msra.mxu0 0.0
  %5794 = vmatprep.subr.mxu0 0.0
  %5795 = vmatpush1.msra.mxu0 0.0
  %5796 = vmatprep.subr.mxu0 0.0
  %5797 = vmatpush1.msra.mxu0 0.0
  %5798 = vmatprep.subr.mxu0 0.0
  %5799 = vmatpush1.msra.mxu0 0.0
  %5800 = vmatprep.subr.mxu0 0.0
  %5801 = vmatpush1.msra.mxu0 0.0
  %5802 = vmatprep.subr.mxu0 0.0
  %5803 = vmatpush1.msra.mxu0 0.0
  %5804 = vmatprep.subr.mxu0 0.0
  %5805 = vmatpush1.msra.mxu0 0.0
  %5806 = vmatprep.subr.mxu0 0.0
  %5807 = vmatpush1.msra.mxu0 0.0
  %5808 = vmatprep.subr.mxu0 0.0
  %5809 = vmatpush1.msra.mxu0 0.0
  %5810 = vmatprep.subr.mxu0 0.0
  %5811 = vmatpush1.msra.mxu0 0.0
  %5812 = vmatprep.subr.mxu0 0.0
  %5813 = vmatpush1.msra.mxu0 0.0
  %5814 = vmatprep.subr.mxu0 0.0
  %5815 = vmatpush1.msra.mxu0 0.0
  %5816 = vmatprep.subr.mxu0 0.0
  %5817 = vmatpush1.msra.mxu0 0.0
  %5818 = vmatprep.subr.mxu0 0.0
  %5819 = vmatpush1.msra.mxu0 0.0
  %5820 = vmatprep.subr.mxu0 0.0
  %5821 = vmatpush1.msra.mxu0 0.0
  %5822 = vmatprep.subr.mxu0 0.0
  %5823 = vmatpush1.msra.mxu0 0.0
  %5824 = vmatprep.subr.mxu0 0.0
  %5825 = vmatpush1.msra.mxu0 0.0
  %5826 = vmatprep.subr.mxu0 0.0
  %5827 = vmatpush1.msra.mxu0 0.0
  %5828 = vmatprep.subr.mxu0 0.0
  %5829 = vmatpush1.msra.mxu0 0.0
  %5830 = vmatprep.subr.mxu0 0.0
  %5831 = vmatpush1.msra.mxu0 0.0
  %5832 = vmatprep.mubr.f32.mxu0 0.0
  %5833 = vmatmul.mubr.f32.gmra.mrb[0].mxu0 %v5766
  %v5834 = vpop.f32.mrb[0].mxu0
  %v5835 = vadd.f32 0.0, %v5834
  %v5836 = vpop.f32.mrb[0].mxu0
  %5837 = vdwg.mxu0
  %v5838 = vadd.f32 %v5759, %v5835
  %s5839 = scalar_lea.vmem %s5, 264
  %v5840 = vld [vmem:[%s5839] sm:$0xff]
  %5841 = vrot.lane.b32.xlu0 %v5372, 116
  %v5842 = vpop.permute.xlu0 %5841
  %v5845 = vsel %vm2587, %v5840, 0
  %5847 = vmatprep.subr.mxu0 0.0
  %5848 = vmatpush1.msra.mxu0 %v5842
  %5849 = vmatprep.subr.mxu0 0.0
  %5850 = vmatpush1.msra.mxu0 0.0
  %5851 = vmatprep.subr.mxu0 0.0
  %5852 = vmatpush1.msra.mxu0 0.0
  %5853 = vmatprep.subr.mxu0 0.0
  %5854 = vmatpush1.msra.mxu0 0.0
  %5855 = vmatprep.subr.mxu0 0.0
  %5856 = vmatpush1.msra.mxu0 0.0
  %5857 = vmatprep.subr.mxu0 0.0
  %5858 = vmatpush1.msra.mxu0 0.0
  %5859 = vmatprep.subr.mxu0 0.0
  %5860 = vmatpush1.msra.mxu0 0.0
  %5861 = vmatprep.subr.mxu0 0.0
  %5862 = vmatpush1.msra.mxu0 0.0
  %5863 = vmatprep.subr.mxu0 0.0
  %5864 = vmatpush1.msra.mxu0 0.0
  %5865 = vmatprep.subr.mxu0 0.0
  %5866 = vmatpush1.msra.mxu0 0.0
  %5867 = vmatprep.subr.mxu0 0.0
  %5868 = vmatpush1.msra.mxu0 0.0
  %5869 = vmatprep.subr.mxu0 0.0
  %5870 = vmatpush1.msra.mxu0 0.0
  %5871 = vmatprep.subr.mxu0 0.0
  %5872 = vmatpush1.msra.mxu0 0.0
  %5873 = vmatprep.subr.mxu0 0.0
  %5874 = vmatpush1.msra.mxu0 0.0
  %5875 = vmatprep.subr.mxu0 0.0
  %5876 = vmatpush1.msra.mxu0 0.0
  %5877 = vmatprep.subr.mxu0 0.0
  %5878 = vmatpush1.msra.mxu0 0.0
  %5879 = vmatprep.subr.mxu0 0.0
  %5880 = vmatpush1.msra.mxu0 0.0
  %5881 = vmatprep.subr.mxu0 0.0
  %5882 = vmatpush1.msra.mxu0 0.0
  %5883 = vmatprep.subr.mxu0 0.0
  %5884 = vmatpush1.msra.mxu0 0.0
  %5885 = vmatprep.subr.mxu0 0.0
  %5886 = vmatpush1.msra.mxu0 0.0
  %5887 = vmatprep.subr.mxu0 0.0
  %5888 = vmatpush1.msra.mxu0 0.0
  %5889 = vmatprep.subr.mxu0 0.0
  %5890 = vmatpush1.msra.mxu0 0.0
  %5891 = vmatprep.subr.mxu0 0.0
  %5892 = vmatpush1.msra.mxu0 0.0
  %5893 = vmatprep.subr.mxu0 0.0
  %5894 = vmatpush1.msra.mxu0 0.0
  %5895 = vmatprep.subr.mxu0 0.0
  %5896 = vmatpush1.msra.mxu0 0.0
  %5897 = vmatprep.subr.mxu0 0.0
  %5898 = vmatpush1.msra.mxu0 0.0
  %5899 = vmatprep.subr.mxu0 0.0
  %5900 = vmatpush1.msra.mxu0 0.0
  %5901 = vmatprep.subr.mxu0 0.0
  %5902 = vmatpush1.msra.mxu0 0.0
  %5903 = vmatprep.subr.mxu0 0.0
  %5904 = vmatpush1.msra.mxu0 0.0
  %5905 = vmatprep.subr.mxu0 0.0
  %5906 = vmatpush1.msra.mxu0 0.0
  %5907 = vmatprep.subr.mxu0 0.0
  %5908 = vmatpush1.msra.mxu0 0.0
  %5909 = vmatprep.subr.mxu0 0.0
  %5910 = vmatpush1.msra.mxu0 0.0
  %5911 = vmatprep.mubr.f32.mxu0 0.0
  %5912 = vmatmul.mubr.f32.gmra.mrb[0].mxu0 %v5845
  %v5913 = vpop.f32.mrb[0].mxu0
  %v5914 = vadd.f32 0.0, %v5913
  %v5915 = vpop.f32.mrb[0].mxu0
  %5916 = vdwg.mxu0
  %v5917 = vadd.f32 %v5838, %v5914
  %s5918 = scalar_lea.vmem %s5, 272
  %v5919 = vld [vmem:[%s5918] sm:$0xff]
  %5920 = vrot.lane.b32.xlu0 %v5372, 115
  %v5921 = vpop.permute.xlu0 %5920
  %v5924 = vsel %vm2587, %v5919, 0
  %5926 = vmatprep.subr.mxu0 0.0
  %5927 = vmatpush1.msra.mxu0 %v5921
  %5928 = vmatprep.subr.mxu0 0.0
  %5929 = vmatpush1.msra.mxu0 0.0
  %5930 = vmatprep.subr.mxu0 0.0
  %5931 = vmatpush1.msra.mxu0 0.0
  %5932 = vmatprep.subr.mxu0 0.0
  %5933 = vmatpush1.msra.mxu0 0.0
  %5934 = vmatprep.subr.mxu0 0.0
  %5935 = vmatpush1.msra.mxu0 0.0
  %5936 = vmatprep.subr.mxu0 0.0
  %5937 = vmatpush1.msra.mxu0 0.0
  %5938 = vmatprep.subr.mxu0 0.0
  %5939 = vmatpush1.msra.mxu0 0.0
  %5940 = vmatprep.subr.mxu0 0.0
  %5941 = vmatpush1.msra.mxu0 0.0
  %5942 = vmatprep.subr.mxu0 0.0
  %5943 = vmatpush1.msra.mxu0 0.0
  %5944 = vmatprep.subr.mxu0 0.0
  %5945 = vmatpush1.msra.mxu0 0.0
  %5946 = vmatprep.subr.mxu0 0.0
  %5947 = vmatpush1.msra.mxu0 0.0
  %5948 = vmatprep.subr.mxu0 0.0
  %5949 = vmatpush1.msra.mxu0 0.0
  %5950 = vmatprep.subr.mxu0 0.0
  %5951 = vmatpush1.msra.mxu0 0.0
  %5952 = vmatprep.subr.mxu0 0.0
  %5953 = vmatpush1.msra.mxu0 0.0
  %5954 = vmatprep.subr.mxu0 0.0
  %5955 = vmatpush1.msra.mxu0 0.0
  %5956 = vmatprep.subr.mxu0 0.0
  %5957 = vmatpush1.msra.mxu0 0.0
  %5958 = vmatprep.subr.mxu0 0.0
  %5959 = vmatpush1.msra.mxu0 0.0
  %5960 = vmatprep.subr.mxu0 0.0
  %5961 = vmatpush1.msra.mxu0 0.0
  %5962 = vmatprep.subr.mxu0 0.0
  %5963 = vmatpush1.msra.mxu0 0.0
  %5964 = vmatprep.subr.mxu0 0.0
  %5965 = vmatpush1.msra.mxu0 0.0
  %5966 = vmatprep.subr.mxu0 0.0
  %5967 = vmatpush1.msra.mxu0 0.0
  %5968 = vmatprep.subr.mxu0 0.0
  %5969 = vmatpush1.msra.mxu0 0.0
  %5970 = vmatprep.subr.mxu0 0.0
  %5971 = vmatpush1.msra.mxu0 0.0
  %5972 = vmatprep.subr.mxu0 0.0
  %5973 = vmatpush1.msra.mxu0 0.0
  %5974 = vmatprep.subr.mxu0 0.0
  %5975 = vmatpush1.msra.mxu0 0.0
  %5976 = vmatprep.subr.mxu0 0.0
  %5977 = vmatpush1.msra.mxu0 0.0
  %5978 = vmatprep.subr.mxu0 0.0
  %5979 = vmatpush1.msra.mxu0 0.0
  %5980 = vmatprep.subr.mxu0 0.0
  %5981 = vmatpush1.msra.mxu0 0.0
  %5982 = vmatprep.subr.mxu0 0.0
  %5983 = vmatpush1.msra.mxu0 0.0
  %5984 = vmatprep.subr.mxu0 0.0
  %5985 = vmatpush1.msra.mxu0 0.0
  %5986 = vmatprep.subr.mxu0 0.0
  %5987 = vmatpush1.msra.mxu0 0.0
  %5988 = vmatprep.subr.mxu0 0.0
  %5989 = vmatpush1.msra.mxu0 0.0
  %5990 = vmatprep.mubr.f32.mxu0 0.0
  %5991 = vmatmul.mubr.f32.gmra.mrb[0].mxu0 %v5924
  %v5992 = vpop.f32.mrb[0].mxu0
  %v5993 = vadd.f32 0.0, %v5992
  %v5994 = vpop.f32.mrb[0].mxu0
  %5995 = vdwg.mxu0
  %v5996 = vadd.f32 %v5917, %v5993
  %s5997 = scalar_lea.vmem %s5, 280
  %v5998 = vld [vmem:[%s5997] sm:$0xff]
  %5999 = vrot.lane.b32.xlu0 %v5372, 114
  %v6000 = vpop.permute.xlu0 %5999
  %v6003 = vsel %vm2587, %v5998, 0
  %6005 = vmatprep.subr.mxu0 0.0
  %6006 = vmatpush1.msra.mxu0 %v6000
  %6007 = vmatprep.subr.mxu0 0.0
  %6008 = vmatpush1.msra.mxu0 0.0
  %6009 = vmatprep.subr.mxu0 0.0
  %6010 = vmatpush1.msra.mxu0 0.0
  %6011 = vmatprep.subr.mxu0 0.0
  %6012 = vmatpush1.msra.mxu0 0.0
  %6013 = vmatprep.subr.mxu0 0.0
  %6014 = vmatpush1.msra.mxu0 0.0
  %6015 = vmatprep.subr.mxu0 0.0
  %6016 = vmatpush1.msra.mxu0 0.0
  %6017 = vmatprep.subr.mxu0 0.0
  %6018 = vmatpush1.msra.mxu0 0.0
  %6019 = vmatprep.subr.mxu0 0.0
  %6020 = vmatpush1.msra.mxu0 0.0
  %6021 = vmatprep.subr.mxu0 0.0
  %6022 = vmatpush1.msra.mxu0 0.0
  %6023 = vmatprep.subr.mxu0 0.0
  %6024 = vmatpush1.msra.mxu0 0.0
  %6025 = vmatprep.subr.mxu0 0.0
  %6026 = vmatpush1.msra.mxu0 0.0
  %6027 = vmatprep.subr.mxu0 0.0
  %6028 = vmatpush1.msra.mxu0 0.0
  %6029 = vmatprep.subr.mxu0 0.0
  %6030 = vmatpush1.msra.mxu0 0.0
  %6031 = vmatprep.subr.mxu0 0.0
  %6032 = vmatpush1.msra.mxu0 0.0
  %6033 = vmatprep.subr.mxu0 0.0
  %6034 = vmatpush1.msra.mxu0 0.0
  %6035 = vmatprep.subr.mxu0 0.0
  %6036 = vmatpush1.msra.mxu0 0.0
  %6037 = vmatprep.subr.mxu0 0.0
  %6038 = vmatpush1.msra.mxu0 0.0
  %6039 = vmatprep.subr.mxu0 0.0
  %6040 = vmatpush1.msra.mxu0 0.0
  %6041 = vmatprep.subr.mxu0 0.0
  %6042 = vmatpush1.msra.mxu0 0.0
  %6043 = vmatprep.subr.mxu0 0.0
  %6044 = vmatpush1.msra.mxu0 0.0
  %6045 = vmatprep.subr.mxu0 0.0
  %6046 = vmatpush1.msra.mxu0 0.0
  %6047 = vmatprep.subr.mxu0 0.0
  %6048 = vmatpush1.msra.mxu0 0.0
  %6049 = vmatprep.subr.mxu0 0.0
  %6050 = vmatpush1.msra.mxu0 0.0
  %6051 = vmatprep.subr.mxu0 0.0
  %6052 = vmatpush1.msra.mxu0 0.0
  %6053 = vmatprep.subr.mxu0 0.0
  %6054 = vmatpush1.msra.mxu0 0.0
  %6055 = vmatprep.subr.mxu0 0.0
  %6056 = vmatpush1.msra.mxu0 0.0
  %6057 = vmatprep.subr.mxu0 0.0
  %6058 = vmatpush1.msra.mxu0 0.0
  %6059 = vmatprep.subr.mxu0 0.0
  %6060 = vmatpush1.msra.mxu0 0.0
  %6061 = vmatprep.subr.mxu0 0.0
  %6062 = vmatpush1.msra.mxu0 0.0
  %6063 = vmatprep.subr.mxu0 0.0
  %6064 = vmatpush1.msra.mxu0 0.0
  %6065 = vmatprep.subr.mxu0 0.0
  %6066 = vmatpush1.msra.mxu0 0.0
  %6067 = vmatprep.subr.mxu0 0.0
  %6068 = vmatpush1.msra.mxu0 0.0
  %6069 = vmatprep.mubr.f32.mxu0 0.0
  %6070 = vmatmul.mubr.f32.gmra.mrb[0].mxu0 %v6003
  %v6071 = vpop.f32.mrb[0].mxu0
  %v6072 = vadd.f32 0.0, %v6071
  %v6073 = vpop.f32.mrb[0].mxu0
  %6074 = vdwg.mxu0
  %v6075 = vadd.f32 %v5996, %v6072
  %6077 = vset.pattern.permute.xlu0 0
  %6078 = vperm.xlu0 %6077, %v5362
  %v6079 = vpop.permute.xlu0 %6078
  %v6081 = vadd.f32 %v6075, %v6079
  %v6082 = vmax.f32 %v6081, 0.0
  %v6084 = vsel %vm2805, %v6082, 0
  %6086 = vmatprep.subr.mxu0 0.0
  %6087 = vmatpush1.msra.mxu0 %v4484
  %6088 = vmatprep.subr.mxu0 0.0
  %6089 = vmatpush1.msra.mxu0 %v4485
  %6090 = vmatprep.subr.mxu0 0.0
  %6091 = vmatpush1.msra.mxu0 %v4486
  %6092 = vmatprep.subr.mxu0 0.0
  %6093 = vmatpush1.msra.mxu0 %v4487
  %6094 = vmatprep.subr.mxu0 0.0
  %6095 = vmatpush1.msra.mxu0 %v4488
  %6096 = vmatprep.subr.mxu0 0.0
  %6097 = vmatpush1.msra.mxu0 %v4489
  %6098 = vmatprep.subr.mxu0 0.0
  %6099 = vmatpush1.msra.mxu0 %v4490
  %6100 = vmatprep.subr.mxu0 0.0
  %6101 = vmatpush1.msra.mxu0 %v4491
  %6102 = vmatprep.subr.mxu0 0.0
  %6103 = vmatpush1.msra.mxu0 %v4492
  %6104 = vmatprep.subr.mxu0 0.0
  %6105 = vmatpush1.msra.mxu0 0.0
  %6106 = vmatprep.subr.mxu0 0.0
  %6107 = vmatpush1.msra.mxu0 0.0
  %6108 = vmatprep.subr.mxu0 0.0
  %6109 = vmatpush1.msra.mxu0 0.0
  %6110 = vmatprep.subr.mxu0 0.0
  %6111 = vmatpush1.msra.mxu0 0.0
  %6112 = vmatprep.subr.mxu0 0.0
  %6113 = vmatpush1.msra.mxu0 0.0
  %6114 = vmatprep.subr.mxu0 0.0
  %6115 = vmatpush1.msra.mxu0 0.0
  %6116 = vmatprep.subr.mxu0 0.0
  %6117 = vmatpush1.msra.mxu0 0.0
  %6118 = vmatprep.subr.mxu0 0.0
  %6119 = vmatpush1.msra.mxu0 0.0
  %6120 = vmatprep.subr.mxu0 0.0
  %6121 = vmatpush1.msra.mxu0 0.0
  %6122 = vmatprep.subr.mxu0 0.0
  %6123 = vmatpush1.msra.mxu0 0.0
  %6124 = vmatprep.subr.mxu0 0.0
  %6125 = vmatpush1.msra.mxu0 0.0
  %6126 = vmatprep.subr.mxu0 0.0
  %6127 = vmatpush1.msra.mxu0 0.0
  %6128 = vmatprep.subr.mxu0 0.0
  %6129 = vmatpush1.msra.mxu0 0.0
  %6130 = vmatprep.subr.mxu0 0.0
  %6131 = vmatpush1.msra.mxu0 0.0
  %6132 = vmatprep.subr.mxu0 0.0
  %6133 = vmatpush1.msra.mxu0 0.0
  %6134 = vmatprep.subr.mxu0 0.0
  %6135 = vmatpush1.msra.mxu0 0.0
  %6136 = vmatprep.subr.mxu0 0.0
  %6137 = vmatpush1.msra.mxu0 0.0
  %6138 = vmatprep.subr.mxu0 0.0
  %6139 = vmatpush1.msra.mxu0 0.0
  %6140 = vmatprep.subr.mxu0 0.0
  %6141 = vmatpush1.msra.mxu0 0.0
  %6142 = vmatprep.subr.mxu0 0.0
  %6143 = vmatpush1.msra.mxu0 0.0
  %6144 = vmatprep.subr.mxu0 0.0
  %6145 = vmatpush1.msra.mxu0 0.0
  %6146 = vmatprep.subr.mxu0 0.0
  %6147 = vmatpush1.msra.mxu0 0.0
  %6148 = vmatprep.subr.mxu0 0.0
  %6149 = vmatpush1.msra.mxu0 0.0
  %6150 = vmatprep.mubr.f32.mxu0 0.0
  %6151 = vmatmul.mubr.f32.gmra.mrb[0].mxu0 %v6084
  %v6152 = vpop.f32.mrb[0].mxu0
  %v6153 = vadd.f32 0.0, %v6152
  %v6154 = vpop.f32.mrb[0].mxu0
  %6155 = vdwg.mxu0
  %s6156 = scalar_lea.vmem %s6, 32
  %v6157 = vld [vmem:[%s6156] sm:$0xff]
  %s6158 = scalar_lea.vmem %s5, 288
  %v6159 = vld [vmem:[%s6158] sm:$0xff]
  %s6160 = scalar_lea.vmem %s5, 296
  %v6161 = vld [vmem:[%s6160] sm:$0xff]
  %6162 = vrot.lane.b32.xlu0 %v6153, 72
  %v6163 = vpop.permute.xlu0 %6162
  %v6164 = vsel %vm2843, %v6163, %v6153
  %6165 = vrot.lane.b32.xlu0 %v6164, 72
  %v6166 = vpop.permute.xlu0 %6165
  %v6167 = vsel %vm2843, %v6166, %v6153
  %6169 = vrot.lane.b32.xlu0 %v6167, 127
  %v6170 = vpop.permute.xlu0 %6169
  %v6173 = vsel %vm2587, %v6161, 0
  %6175 = vmatprep.subr.mxu0 0.0
  %6176 = vmatpush1.msra.mxu0 %v6170
  %6177 = vmatprep.subr.mxu0 0.0
  %6178 = vmatpush1.msra.mxu0 0.0
  %6179 = vmatprep.subr.mxu0 0.0
  %6180 = vmatpush1.msra.mxu0 0.0
  %6181 = vmatprep.subr.mxu0 0.0
  %6182 = vmatpush1.msra.mxu0 0.0
  %6183 = vmatprep.subr.mxu0 0.0
  %6184 = vmatpush1.msra.mxu0 0.0
  %6185 = vmatprep.subr.mxu0 0.0
  %6186 = vmatpush1.msra.mxu0 0.0
  %6187 = vmatprep.subr.mxu0 0.0
  %6188 = vmatpush1.msra.mxu0 0.0
  %6189 = vmatprep.subr.mxu0 0.0
  %6190 = vmatpush1.msra.mxu0 0.0
  %6191 = vmatprep.subr.mxu0 0.0
  %6192 = vmatpush1.msra.mxu0 0.0
  %6193 = vmatprep.subr.mxu0 0.0
  %6194 = vmatpush1.msra.mxu0 0.0
  %6195 = vmatprep.subr.mxu0 0.0
  %6196 = vmatpush1.msra.mxu0 0.0
  %6197 = vmatprep.subr.mxu0 0.0
  %6198 = vmatpush1.msra.mxu0 0.0
  %6199 = vmatprep.subr.mxu0 0.0
  %6200 = vmatpush1.msra.mxu0 0.0
  %6201 = vmatprep.subr.mxu0 0.0
  %6202 = vmatpush1.msra.mxu0 0.0
  %6203 = vmatprep.subr.mxu0 0.0
  %6204 = vmatpush1.msra.mxu0 0.0
  %6205 = vmatprep.subr.mxu0 0.0
  %6206 = vmatpush1.msra.mxu0 0.0
  %6207 = vmatprep.subr.mxu0 0.0
  %6208 = vmatpush1.msra.mxu0 0.0
  %6209 = vmatprep.subr.mxu0 0.0
  %6210 = vmatpush1.msra.mxu0 0.0
  %6211 = vmatprep.subr.mxu0 0.0
  %6212 = vmatpush1.msra.mxu0 0.0
  %6213 = vmatprep.subr.mxu0 0.0
  %6214 = vmatpush1.msra.mxu0 0.0
  %6215 = vmatprep.subr.mxu0 0.0
  %6216 = vmatpush1.msra.mxu0 0.0
  %6217 = vmatprep.subr.mxu0 0.0
  %6218 = vmatpush1.msra.mxu0 0.0
  %6219 = vmatprep.subr.mxu0 0.0
  %6220 = vmatpush1.msra.mxu0 0.0
  %6221 = vmatprep.subr.mxu0 0.0
  %6222 = vmatpush1.msra.mxu0 0.0
  %6223 = vmatprep.subr.mxu0 0.0
  %6224 = vmatpush1.msra.mxu0 0.0
  %6225 = vmatprep.subr.mxu0 0.0
  %6226 = vmatpush1.msra.mxu0 0.0
  %6227 = vmatprep.subr.mxu0 0.0
  %6228 = vmatpush1.msra.mxu0 0.0
  %6229 = vmatprep.subr.mxu0 0.0
  %6230 = vmatpush1.msra.mxu0 0.0
  %6231 = vmatprep.subr.mxu0 0.0
  %6232 = vmatpush1.msra.mxu0 0.0
  %6233 = vmatprep.subr.mxu0 0.0
  %6234 = vmatpush1.msra.mxu0 0.0
  %6235 = vmatprep.subr.mxu0 0.0
  %6236 = vmatpush1.msra.mxu0 0.0
  %6237 = vmatprep.subr.mxu0 0.0
  %6238 = vmatpush1.msra.mxu0 0.0
  %6239 = vmatprep.mubr.f32.mxu0 0.0
  %6240 = vmatmul.mubr.f32.gmra.mrb[0].mxu0 %v6173
  %v6241 = vpop.f32.mrb[0].mxu0
  %v6242 = vadd.f32 0.0, %v6241
  %v6243 = vpop.f32.mrb[0].mxu0
  %6244 = vdwg.mxu0
  %v6246 = vsel %vm2587, %v6159, 0
  %6248 = vmatprep.subr.mxu0 0.0
  %6249 = vmatpush1.msra.mxu0 %v6153
  %6250 = vmatprep.subr.mxu0 0.0
  %6251 = vmatpush1.msra.mxu0 0.0
  %6252 = vmatprep.subr.mxu0 0.0
  %6253 = vmatpush1.msra.mxu0 0.0
  %6254 = vmatprep.subr.mxu0 0.0
  %6255 = vmatpush1.msra.mxu0 0.0
  %6256 = vmatprep.subr.mxu0 0.0
  %6257 = vmatpush1.msra.mxu0 0.0
  %6258 = vmatprep.subr.mxu0 0.0
  %6259 = vmatpush1.msra.mxu0 0.0
  %6260 = vmatprep.subr.mxu0 0.0
  %6261 = vmatpush1.msra.mxu0 0.0
  %6262 = vmatprep.subr.mxu0 0.0
  %6263 = vmatpush1.msra.mxu0 0.0
  %6264 = vmatprep.subr.mxu0 0.0
  %6265 = vmatpush1.msra.mxu0 0.0
  %6266 = vmatprep.subr.mxu0 0.0
  %6267 = vmatpush1.msra.mxu0 0.0
  %6268 = vmatprep.subr.mxu0 0.0
  %6269 = vmatpush1.msra.mxu0 0.0
  %6270 = vmatprep.subr.mxu0 0.0
  %6271 = vmatpush1.msra.mxu0 0.0
  %6272 = vmatprep.subr.mxu0 0.0
  %6273 = vmatpush1.msra.mxu0 0.0
  %6274 = vmatprep.subr.mxu0 0.0
  %6275 = vmatpush1.msra.mxu0 0.0
  %6276 = vmatprep.subr.mxu0 0.0
  %6277 = vmatpush1.msra.mxu0 0.0
  %6278 = vmatprep.subr.mxu0 0.0
  %6279 = vmatpush1.msra.mxu0 0.0
  %6280 = vmatprep.subr.mxu0 0.0
  %6281 = vmatpush1.msra.mxu0 0.0
  %6282 = vmatprep.subr.mxu0 0.0
  %6283 = vmatpush1.msra.mxu0 0.0
  %6284 = vmatprep.subr.mxu0 0.0
  %6285 = vmatpush1.msra.mxu0 0.0
  %6286 = vmatprep.subr.mxu0 0.0
  %6287 = vmatpush1.msra.mxu0 0.0
  %6288 = vmatprep.subr.mxu0 0.0
  %6289 = vmatpush1.msra.mxu0 0.0
  %6290 = vmatprep.subr.mxu0 0.0
  %6291 = vmatpush1.msra.mxu0 0.0
  %6292 = vmatprep.subr.mxu0 0.0
  %6293 = vmatpush1.msra.mxu0 0.0
  %6294 = vmatprep.subr.mxu0 0.0
  %6295 = vmatpush1.msra.mxu0 0.0
  %6296 = vmatprep.subr.mxu0 0.0
  %6297 = vmatpush1.msra.mxu0 0.0
  %6298 = vmatprep.subr.mxu0 0.0
  %6299 = vmatpush1.msra.mxu0 0.0
  %6300 = vmatprep.subr.mxu0 0.0
  %6301 = vmatpush1.msra.mxu0 0.0
  %6302 = vmatprep.subr.mxu0 0.0
  %6303 = vmatpush1.msra.mxu0 0.0
  %6304 = vmatprep.subr.mxu0 0.0
  %6305 = vmatpush1.msra.mxu0 0.0
  %6306 = vmatprep.subr.mxu0 0.0
  %6307 = vmatpush1.msra.mxu0 0.0
  %6308 = vmatprep.subr.mxu0 0.0
  %6309 = vmatpush1.msra.mxu0 0.0
  %6310 = vmatprep.subr.mxu0 0.0
  %6311 = vmatpush1.msra.mxu0 0.0
  %6312 = vmatprep.mubr.f32.mxu0 0.0
  %6313 = vmatmul.mubr.f32.gmra.mrb[0].mxu0 %v6246
  %v6314 = vpop.f32.mrb[0].mxu0
  %v6315 = vadd.f32 %v6242, %v6314
  %v6316 = vpop.f32.mrb[0].mxu0
  %6317 = vdwg.mxu0
  %s6318 = scalar_lea.vmem %s5, 304
  %v6319 = vld [vmem:[%s6318] sm:$0xff]
  %6320 = vrot.lane.b32.xlu0 %v6167, 126
  %v6321 = vpop.permute.xlu0 %6320
  %v6324 = vsel %vm2587, %v6319, 0
  %6326 = vmatprep.subr.mxu0 0.0
  %6327 = vmatpush1.msra.mxu0 %v6321
  %6328 = vmatprep.subr.mxu0 0.0
  %6329 = vmatpush1.msra.mxu0 0.0
  %6330 = vmatprep.subr.mxu0 0.0
  %6331 = vmatpush1.msra.mxu0 0.0
  %6332 = vmatprep.subr.mxu0 0.0
  %6333 = vmatpush1.msra.mxu0 0.0
  %6334 = vmatprep.subr.mxu0 0.0
  %6335 = vmatpush1.msra.mxu0 0.0
  %6336 = vmatprep.subr.mxu0 0.0
  %6337 = vmatpush1.msra.mxu0 0.0
  %6338 = vmatprep.subr.mxu0 0.0
  %6339 = vmatpush1.msra.mxu0 0.0
  %6340 = vmatprep.subr.mxu0 0.0
  %6341 = vmatpush1.msra.mxu0 0.0
  %6342 = vmatprep.subr.mxu0 0.0
  %6343 = vmatpush1.msra.mxu0 0.0
  %6344 = vmatprep.subr.mxu0 0.0
  %6345 = vmatpush1.msra.mxu0 0.0
  %6346 = vmatprep.subr.mxu0 0.0
  %6347 = vmatpush1.msra.mxu0 0.0
  %6348 = vmatprep.subr.mxu0 0.0
  %6349 = vmatpush1.msra.mxu0 0.0
  %6350 = vmatprep.subr.mxu0 0.0
  %6351 = vmatpush1.msra.mxu0 0.0
  %6352 = vmatprep.subr.mxu0 0.0
  %6353 = vmatpush1.msra.mxu0 0.0
  %6354 = vmatprep.subr.mxu0 0.0
  %6355 = vmatpush1.msra.mxu0 0.0
  %6356 = vmatprep.subr.mxu0 0.0
  %6357 = vmatpush1.msra.mxu0 0.0
  %6358 = vmatprep.subr.mxu0 0.0
  %6359 = vmatpush1.msra.mxu0 0.0
  %6360 = vmatprep.subr.mxu0 0.0
  %6361 = vmatpush1.msra.mxu0 0.0
  %6362 = vmatprep.subr.mxu0 0.0
  %6363 = vmatpush1.msra.mxu0 0.0
  %6364 = vmatprep.subr.mxu0 0.0
  %6365 = vmatpush1.msra.mxu0 0.0
  %6366 = vmatprep.subr.mxu0 0.0
  %6367 = vmatpush1.msra.mxu0 0.0
  %6368 = vmatprep.subr.mxu0 0.0
  %6369 = vmatpush1.msra.mxu0 0.0
  %6370 = vmatprep.subr.mxu0 0.0
  %6371 = vmatpush1.msra.mxu0 0.0
  %6372 = vmatprep.subr.mxu0 0.0
  %6373 = vmatpush1.msra.mxu0 0.0
  %6374 = vmatprep.subr.mxu0 0.0
  %6375 = vmatpush1.msra.mxu0 0.0
  %6376 = vmatprep.subr.mxu0 0.0
  %6377 = vmatpush1.msra.mxu0 0.0
  %6378 = vmatprep.subr.mxu0 0.0
  %6379 = vmatpush1.msra.mxu0 0.0
  %6380 = vmatprep.subr.mxu0 0.0
  %6381 = vmatpush1.msra.mxu0 0.0
  %6382 = vmatprep.subr.mxu0 0.0
  %6383 = vmatpush1.msra.mxu0 0.0
  %6384 = vmatprep.subr.mxu0 0.0
  %6385 = vmatpush1.msra.mxu0 0.0
  %6386 = vmatprep.subr.mxu0 0.0
  %6387 = vmatpush1.msra.mxu0 0.0
  %6388 = vmatprep.subr.mxu0 0.0
  %6389 = vmatpush1.msra.mxu0 0.0
  %6390 = vmatprep.mubr.f32.mxu0 0.0
  %6391 = vmatmul.mubr.f32.gmra.mrb[0].mxu0 %v6324
  %v6392 = vpop.f32.mrb[0].mxu0
  %v6393 = vadd.f32 0.0, %v6392
  %v6394 = vpop.f32.mrb[0].mxu0
  %6395 = vdwg.mxu0
  %v6396 = vadd.f32 %v6315, %v6393
  %s6397 = scalar_lea.vmem %s5, 312
  %v6398 = vld [vmem:[%s6397] sm:$0xff]
  %6399 = vrot.lane.b32.xlu0 %v6167, 122
  %v6400 = vpop.permute.xlu0 %6399
  %v6403 = vsel %vm2587, %v6398, 0
  %6405 = vmatprep.subr.mxu0 0.0
  %6406 = vmatpush1.msra.mxu0 %v6400
  %6407 = vmatprep.subr.mxu0 0.0
  %6408 = vmatpush1.msra.mxu0 0.0
  %6409 = vmatprep.subr.mxu0 0.0
  %6410 = vmatpush1.msra.mxu0 0.0
  %6411 = vmatprep.subr.mxu0 0.0
  %6412 = vmatpush1.msra.mxu0 0.0
  %6413 = vmatprep.subr.mxu0 0.0
  %6414 = vmatpush1.msra.mxu0 0.0
  %6415 = vmatprep.subr.mxu0 0.0
  %6416 = vmatpush1.msra.mxu0 0.0
  %6417 = vmatprep.subr.mxu0 0.0
  %6418 = vmatpush1.msra.mxu0 0.0
  %6419 = vmatprep.subr.mxu0 0.0
  %6420 = vmatpush1.msra.mxu0 0.0
  %6421 = vmatprep.subr.mxu0 0.0
  %6422 = vmatpush1.msra.mxu0 0.0
  %6423 = vmatprep.subr.mxu0 0.0
  %6424 = vmatpush1.msra.mxu0 0.0
  %6425 = vmatprep.subr.mxu0 0.0
  %6426 = vmatpush1.msra.mxu0 0.0
  %6427 = vmatprep.subr.mxu0 0.0
  %6428 = vmatpush1.msra.mxu0 0.0
  %6429 = vmatprep.subr.mxu0 0.0
  %6430 = vmatpush1.msra.mxu0 0.0
  %6431 = vmatprep.subr.mxu0 0.0
  %6432 = vmatpush1.msra.mxu0 0.0
  %6433 = vmatprep.subr.mxu0 0.0
  %6434 = vmatpush1.msra.mxu0 0.0
  %6435 = vmatprep.subr.mxu0 0.0
  %6436 = vmatpush1.msra.mxu0 0.0
  %6437 = vmatprep.subr.mxu0 0.0
  %6438 = vmatpush1.msra.mxu0 0.0
  %6439 = vmatprep.subr.mxu0 0.0
  %6440 = vmatpush1.msra.mxu0 0.0
  %6441 = vmatprep.subr.mxu0 0.0
  %6442 = vmatpush1.msra.mxu0 0.0
  %6443 = vmatprep.subr.mxu0 0.0
  %6444 = vmatpush1.msra.mxu0 0.0
  %6445 = vmatprep.subr.mxu0 0.0
  %6446 = vmatpush1.msra.mxu0 0.0
  %6447 = vmatprep.subr.mxu0 0.0
  %6448 = vmatpush1.msra.mxu0 0.0
  %6449 = vmatprep.subr.mxu0 0.0
  %6450 = vmatpush1.msra.mxu0 0.0
  %6451 = vmatprep.subr.mxu0 0.0
  %6452 = vmatpush1.msra.mxu0 0.0
  %6453 = vmatprep.subr.mxu0 0.0
  %6454 = vmatpush1.msra.mxu0 0.0
  %6455 = vmatprep.subr.mxu0 0.0
  %6456 = vmatpush1.msra.mxu0 0.0
  %6457 = vmatprep.subr.mxu0 0.0
  %6458 = vmatpush1.msra.mxu0 0.0
  %6459 = vmatprep.subr.mxu0 0.0
  %6460 = vmatpush1.msra.mxu0 0.0
  %6461 = vmatprep.subr.mxu0 0.0
  %6462 = vmatpush1.msra.mxu0 0.0
  %6463 = vmatprep.subr.mxu0 0.0
  %6464 = vmatpush1.msra.mxu0 0.0
  %6465 = vmatprep.subr.mxu0 0.0
  %6466 = vmatpush1.msra.mxu0 0.0
  %6467 = vmatprep.subr.mxu0 0.0
  %6468 = vmatpush1.msra.mxu0 0.0
  %6469 = vmatprep.mubr.f32.mxu0 0.0
  %6470 = vmatmul.mubr.f32.gmra.mrb[0].mxu0 %v6403
  %v6471 = vpop.f32.mrb[0].mxu0
  %v6472 = vadd.f32 0.0, %v6471
  %v6473 = vpop.f32.mrb[0].mxu0
  %6474 = vdwg.mxu0
  %v6475 = vadd.f32 %v6396, %v6472
  %s6476 = scalar_lea.vmem %s5, 320
  %v6477 = vld [vmem:[%s6476] sm:$0xff]
  %6478 = vrot.lane.b32.xlu0 %v6167, 121
  %v6479 = vpop.permute.xlu0 %6478
  %v6482 = vsel %vm2587, %v6477, 0
  %6484 = vmatprep.subr.mxu0 0.0
  %6485 = vmatpush1.msra.mxu0 %v6479
  %6486 = vmatprep.subr.mxu0 0.0
  %6487 = vmatpush1.msra.mxu0 0.0
  %6488 = vmatprep.subr.mxu0 0.0
  %6489 = vmatpush1.msra.mxu0 0.0
  %6490 = vmatprep.subr.mxu0 0.0
  %6491 = vmatpush1.msra.mxu0 0.0
  %6492 = vmatprep.subr.mxu0 0.0
  %6493 = vmatpush1.msra.mxu0 0.0
  %6494 = vmatprep.subr.mxu0 0.0
  %6495 = vmatpush1.msra.mxu0 0.0
  %6496 = vmatprep.subr.mxu0 0.0
  %6497 = vmatpush1.msra.mxu0 0.0
  %6498 = vmatprep.subr.mxu0 0.0
  %6499 = vmatpush1.msra.mxu0 0.0
  %6500 = vmatprep.subr.mxu0 0.0
  %6501 = vmatpush1.msra.mxu0 0.0
  %6502 = vmatprep.subr.mxu0 0.0
  %6503 = vmatpush1.msra.mxu0 0.0
  %6504 = vmatprep.subr.mxu0 0.0
  %6505 = vmatpush1.msra.mxu0 0.0
  %6506 = vmatprep.subr.mxu0 0.0
  %6507 = vmatpush1.msra.mxu0 0.0
  %6508 = vmatprep.subr.mxu0 0.0
  %6509 = vmatpush1.msra.mxu0 0.0
  %6510 = vmatprep.subr.mxu0 0.0
  %6511 = vmatpush1.msra.mxu0 0.0
  %6512 = vmatprep.subr.mxu0 0.0
  %6513 = vmatpush1.msra.mxu0 0.0
  %6514 = vmatprep.subr.mxu0 0.0
  %6515 = vmatpush1.msra.mxu0 0.0
  %6516 = vmatprep.subr.mxu0 0.0
  %6517 = vmatpush1.msra.mxu0 0.0
  %6518 = vmatprep.subr.mxu0 0.0
  %6519 = vmatpush1.msra.mxu0 0.0
  %6520 = vmatprep.subr.mxu0 0.0
  %6521 = vmatpush1.msra.mxu0 0.0
  %6522 = vmatprep.subr.mxu0 0.0
  %6523 = vmatpush1.msra.mxu0 0.0
  %6524 = vmatprep.subr.mxu0 0.0
  %6525 = vmatpush1.msra.mxu0 0.0
  %6526 = vmatprep.subr.mxu0 0.0
  %6527 = vmatpush1.msra.mxu0 0.0
  %6528 = vmatprep.subr.mxu0 0.0
  %6529 = vmatpush1.msra.mxu0 0.0
  %6530 = vmatprep.subr.mxu0 0.0
  %6531 = vmatpush1.msra.mxu0 0.0
  %6532 = vmatprep.subr.mxu0 0.0
  %6533 = vmatpush1.msra.mxu0 0.0
  %6534 = vmatprep.subr.mxu0 0.0
  %6535 = vmatpush1.msra.mxu0 0.0
  %6536 = vmatprep.subr.mxu0 0.0
  %6537 = vmatpush1.msra.mxu0 0.0
  %6538 = vmatprep.subr.mxu0 0.0
  %6539 = vmatpush1.msra.mxu0 0.0
  %6540 = vmatprep.subr.mxu0 0.0
  %6541 = vmatpush1.msra.mxu0 0.0
  %6542 = vmatprep.subr.mxu0 0.0
  %6543 = vmatpush1.msra.mxu0 0.0
  %6544 = vmatprep.subr.mxu0 0.0
  %6545 = vmatpush1.msra.mxu0 0.0
  %6546 = vmatprep.subr.mxu0 0.0
  %6547 = vmatpush1.msra.mxu0 0.0
  %6548 = vmatprep.mubr.f32.mxu0 0.0
  %6549 = vmatmul.mubr.f32.gmra.mrb[0].mxu0 %v6482
  %v6550 = vpop.f32.mrb[0].mxu0
  %v6551 = vadd.f32 0.0, %v6550
  %v6552 = vpop.f32.mrb[0].mxu0
  %6553 = vdwg.mxu0
  %v6554 = vadd.f32 %v6475, %v6551
  %s6555 = scalar_lea.vmem %s5, 328
  %v6556 = vld [vmem:[%s6555] sm:$0xff]
  %6557 = vrot.lane.b32.xlu0 %v6167, 120
  %v6558 = vpop.permute.xlu0 %6557
  %v6561 = vsel %vm2587, %v6556, 0
  %6563 = vmatprep.subr.mxu0 0.0
  %6564 = vmatpush1.msra.mxu0 %v6558
  %6565 = vmatprep.subr.mxu0 0.0
  %6566 = vmatpush1.msra.mxu0 0.0
  %6567 = vmatprep.subr.mxu0 0.0
  %6568 = vmatpush1.msra.mxu0 0.0
  %6569 = vmatprep.subr.mxu0 0.0
  %6570 = vmatpush1.msra.mxu0 0.0
  %6571 = vmatprep.subr.mxu0 0.0
  %6572 = vmatpush1.msra.mxu0 0.0
  %6573 = vmatprep.subr.mxu0 0.0
  %6574 = vmatpush1.msra.mxu0 0.0
  %6575 = vmatprep.subr.mxu0 0.0
  %6576 = vmatpush1.msra.mxu0 0.0
  %6577 = vmatprep.subr.mxu0 0.0
  %6578 = vmatpush1.msra.mxu0 0.0
  %6579 = vmatprep.subr.mxu0 0.0
  %6580 = vmatpush1.msra.mxu0 0.0
  %6581 = vmatprep.subr.mxu0 0.0
  %6582 = vmatpush1.msra.mxu0 0.0
  %6583 = vmatprep.subr.mxu0 0.0
  %6584 = vmatpush1.msra.mxu0 0.0
  %6585 = vmatprep.subr.mxu0 0.0
  %6586 = vmatpush1.msra.mxu0 0.0
  %6587 = vmatprep.subr.mxu0 0.0
  %6588 = vmatpush1.msra.mxu0 0.0
  %6589 = vmatprep.subr.mxu0 0.0
  %6590 = vmatpush1.msra.mxu0 0.0
  %6591 = vmatprep.subr.mxu0 0.0
  %6592 = vmatpush1.msra.mxu0 0.0
  %6593 = vmatprep.subr.mxu0 0.0
  %6594 = vmatpush1.msra.mxu0 0.0
  %6595 = vmatprep.subr.mxu0 0.0
  %6596 = vmatpush1.msra.mxu0 0.0
  %6597 = vmatprep.subr.mxu0 0.0
  %6598 = vmatpush1.msra.mxu0 0.0
  %6599 = vmatprep.subr.mxu0 0.0
  %6600 = vmatpush1.msra.mxu0 0.0
  %6601 = vmatprep.subr.mxu0 0.0
  %6602 = vmatpush1.msra.mxu0 0.0
  %6603 = vmatprep.subr.mxu0 0.0
  %6604 = vmatpush1.msra.mxu0 0.0
  %6605 = vmatprep.subr.mxu0 0.0
  %6606 = vmatpush1.msra.mxu0 0.0
  %6607 = vmatprep.subr.mxu0 0.0
  %6608 = vmatpush1.msra.mxu0 0.0
  %6609 = vmatprep.subr.mxu0 0.0
  %6610 = vmatpush1.msra.mxu0 0.0
  %6611 = vmatprep.subr.mxu0 0.0
  %6612 = vmatpush1.msra.mxu0 0.0
  %6613 = vmatprep.subr.mxu0 0.0
  %6614 = vmatpush1.msra.mxu0 0.0
  %6615 = vmatprep.subr.mxu0 0.0
  %6616 = vmatpush1.msra.mxu0 0.0
  %6617 = vmatprep.subr.mxu0 0.0
  %6618 = vmatpush1.msra.mxu0 0.0
  %6619 = vmatprep.subr.mxu0 0.0
  %6620 = vmatpush1.msra.mxu0 0.0
  %6621 = vmatprep.subr.mxu0 0.0
  %6622 = vmatpush1.msra.mxu0 0.0
  %6623 = vmatprep.subr.mxu0 0.0
  %6624 = vmatpush1.msra.mxu0 0.0
  %6625 = vmatprep.subr.mxu0 0.0
  %6626 = vmatpush1.msra.mxu0 0.0
  %6627 = vmatprep.mubr.f32.mxu0 0.0
  %6628 = vmatmul.mubr.f32.gmra.mrb[0].mxu0 %v6561
  %v6629 = vpop.f32.mrb[0].mxu0
  %v6630 = vadd.f32 0.0, %v6629
  %v6631 = vpop.f32.mrb[0].mxu0
  %6632 = vdwg.mxu0
  %v6633 = vadd.f32 %v6554, %v6630
  %s6634 = scalar_lea.vmem %s5, 336
  %v6635 = vld [vmem:[%s6634] sm:$0xff]
  %6636 = vrot.lane.b32.xlu0 %v6167, 116
  %v6637 = vpop.permute.xlu0 %6636
  %v6640 = vsel %vm2587, %v6635, 0
  %6642 = vmatprep.subr.mxu0 0.0
  %6643 = vmatpush1.msra.mxu0 %v6637
  %6644 = vmatprep.subr.mxu0 0.0
  %6645 = vmatpush1.msra.mxu0 0.0
  %6646 = vmatprep.subr.mxu0 0.0
  %6647 = vmatpush1.msra.mxu0 0.0
  %6648 = vmatprep.subr.mxu0 0.0
  %6649 = vmatpush1.msra.mxu0 0.0
  %6650 = vmatprep.subr.mxu0 0.0
  %6651 = vmatpush1.msra.mxu0 0.0
  %6652 = vmatprep.subr.mxu0 0.0
  %6653 = vmatpush1.msra.mxu0 0.0
  %6654 = vmatprep.subr.mxu0 0.0
  %6655 = vmatpush1.msra.mxu0 0.0
  %6656 = vmatprep.subr.mxu0 0.0
  %6657 = vmatpush1.msra.mxu0 0.0
  %6658 = vmatprep.subr.mxu0 0.0
  %6659 = vmatpush1.msra.mxu0 0.0
  %6660 = vmatprep.subr.mxu0 0.0
  %6661 = vmatpush1.msra.mxu0 0.0
  %6662 = vmatprep.subr.mxu0 0.0
  %6663 = vmatpush1.msra.mxu0 0.0
  %6664 = vmatprep.subr.mxu0 0.0
  %6665 = vmatpush1.msra.mxu0 0.0
  %6666 = vmatprep.subr.mxu0 0.0
  %6667 = vmatpush1.msra.mxu0 0.0
  %6668 = vmatprep.subr.mxu0 0.0
  %6669 = vmatpush1.msra.mxu0 0.0
  %6670 = vmatprep.subr.mxu0 0.0
  %6671 = vmatpush1.msra.mxu0 0.0
  %6672 = vmatprep.subr.mxu0 0.0
  %6673 = vmatpush1.msra.mxu0 0.0
  %6674 = vmatprep.subr.mxu0 0.0
  %6675 = vmatpush1.msra.mxu0 0.0
  %6676 = vmatprep.subr.mxu0 0.0
  %6677 = vmatpush1.msra.mxu0 0.0
  %6678 = vmatprep.subr.mxu0 0.0
  %6679 = vmatpush1.msra.mxu0 0.0
  %6680 = vmatprep.subr.mxu0 0.0
  %6681 = vmatpush1.msra.mxu0 0.0
  %6682 = vmatprep.subr.mxu0 0.0
  %6683 = vmatpush1.msra.mxu0 0.0
  %6684 = vmatprep.subr.mxu0 0.0
  %6685 = vmatpush1.msra.mxu0 0.0
  %6686 = vmatprep.subr.mxu0 0.0
  %6687 = vmatpush1.msra.mxu0 0.0
  %6688 = vmatprep.subr.mxu0 0.0
  %6689 = vmatpush1.msra.mxu0 0.0
  %6690 = vmatprep.subr.mxu0 0.0
  %6691 = vmatpush1.msra.mxu0 0.0
  %6692 = vmatprep.subr.mxu0 0.0
  %6693 = vmatpush1.msra.mxu0 0.0
  %6694 = vmatprep.subr.mxu0 0.0
  %6695 = vmatpush1.msra.mxu0 0.0
  %6696 = vmatprep.subr.mxu0 0.0
  %6697 = vmatpush1.msra.mxu0 0.0
  %6698 = vmatprep.subr.mxu0 0.0
  %6699 = vmatpush1.msra.mxu0 0.0
  %6700 = vmatprep.subr.mxu0 0.0
  %6701 = vmatpush1.msra.mxu0 0.0
  %6702 = vmatprep.subr.mxu0 0.0
  %6703 = vmatpush1.msra.mxu0 0.0
  %6704 = vmatprep.subr.mxu0 0.0
  %6705 = vmatpush1.msra.mxu0 0.0
  %6706 = vmatprep.mubr.f32.mxu0 0.0
  %6707 = vmatmul.mubr.f32.gmra.mrb[0].mxu0 %v6640
  %v6708 = vpop.f32.mrb[0].mxu0
  %v6709 = vadd.f32 0.0, %v6708
  %v6710 = vpop.f32.mrb[0].mxu0
  %6711 = vdwg.mxu0
  %v6712 = vadd.f32 %v6633, %v6709
  %s6713 = scalar_lea.vmem %s5, 344
  %v6714 = vld [vmem:[%s6713] sm:$0xff]
  %6715 = vrot.lane.b32.xlu0 %v6167, 115
  %v6716 = vpop.permute.xlu0 %6715
  %v6719 = vsel %vm2587, %v6714, 0
  %6721 = vmatprep.subr.mxu0 0.0
  %6722 = vmatpush1.msra.mxu0 %v6716
  %6723 = vmatprep.subr.mxu0 0.0
  %6724 = vmatpush1.msra.mxu0 0.0
  %6725 = vmatprep.subr.mxu0 0.0
  %6726 = vmatpush1.msra.mxu0 0.0
  %6727 = vmatprep.subr.mxu0 0.0
  %6728 = vmatpush1.msra.mxu0 0.0
  %6729 = vmatprep.subr.mxu0 0.0
  %6730 = vmatpush1.msra.mxu0 0.0
  %6731 = vmatprep.subr.mxu0 0.0
  %6732 = vmatpush1.msra.mxu0 0.0
  %6733 = vmatprep.subr.mxu0 0.0
  %6734 = vmatpush1.msra.mxu0 0.0
  %6735 = vmatprep.subr.mxu0 0.0
  %6736 = vmatpush1.msra.mxu0 0.0
  %6737 = vmatprep.subr.mxu0 0.0
  %6738 = vmatpush1.msra.mxu0 0.0
  %6739 = vmatprep.subr.mxu0 0.0
  %6740 = vmatpush1.msra.mxu0 0.0
  %6741 = vmatprep.subr.mxu0 0.0
  %6742 = vmatpush1.msra.mxu0 0.0
  %6743 = vmatprep.subr.mxu0 0.0
  %6744 = vmatpush1.msra.mxu0 0.0
  %6745 = vmatprep.subr.mxu0 0.0
  %6746 = vmatpush1.msra.mxu0 0.0
  %6747 = vmatprep.subr.mxu0 0.0
  %6748 = vmatpush1.msra.mxu0 0.0
  %6749 = vmatprep.subr.mxu0 0.0
  %6750 = vmatpush1.msra.mxu0 0.0
  %6751 = vmatprep.subr.mxu0 0.0
  %6752 = vmatpush1.msra.mxu0 0.0
  %6753 = vmatprep.subr.mxu0 0.0
  %6754 = vmatpush1.msra.mxu0 0.0
  %6755 = vmatprep.subr.mxu0 0.0
  %6756 = vmatpush1.msra.mxu0 0.0
  %6757 = vmatprep.subr.mxu0 0.0
  %6758 = vmatpush1.msra.mxu0 0.0
  %6759 = vmatprep.subr.mxu0 0.0
  %6760 = vmatpush1.msra.mxu0 0.0
  %6761 = vmatprep.subr.mxu0 0.0
  %6762 = vmatpush1.msra.mxu0 0.0
  %6763 = vmatprep.subr.mxu0 0.0
  %6764 = vmatpush1.msra.mxu0 0.0
  %6765 = vmatprep.subr.mxu0 0.0
  %6766 = vmatpush1.msra.mxu0 0.0
  %6767 = vmatprep.subr.mxu0 0.0
  %6768 = vmatpush1.msra.mxu0 0.0
  %6769 = vmatprep.subr.mxu0 0.0
  %6770 = vmatpush1.msra.mxu0 0.0
  %6771 = vmatprep.subr.mxu0 0.0
  %6772 = vmatpush1.msra.mxu0 0.0
  %6773 = vmatprep.subr.mxu0 0.0
  %6774 = vmatpush1.msra.mxu0 0.0
  %6775 = vmatprep.subr.mxu0 0.0
  %6776 = vmatpush1.msra.mxu0 0.0
  %6777 = vmatprep.subr.mxu0 0.0
  %6778 = vmatpush1.msra.mxu0 0.0
  %6779 = vmatprep.subr.mxu0 0.0
  %6780 = vmatpush1.msra.mxu0 0.0
  %6781 = vmatprep.subr.mxu0 0.0
  %6782 = vmatpush1.msra.mxu0 0.0
  %6783 = vmatprep.subr.mxu0 0.0
  %6784 = vmatpush1.msra.mxu0 0.0
  %6785 = vmatprep.mubr.f32.mxu0 0.0
  %6786 = vmatmul.mubr.f32.gmra.mrb[0].mxu0 %v6719
  %v6787 = vpop.f32.mrb[0].mxu0
  %v6788 = vadd.f32 0.0, %v6787
  %v6789 = vpop.f32.mrb[0].mxu0
  %6790 = vdwg.mxu0
  %v6791 = vadd.f32 %v6712, %v6788
  %s6792 = scalar_lea.vmem %s5, 352
  %v6793 = vld [vmem:[%s6792] sm:$0xff]
  %6794 = vrot.lane.b32.xlu0 %v6167, 114
  %v6795 = vpop.permute.xlu0 %6794
  %v6798 = vsel %vm2587, %v6793, 0
  %6800 = vmatprep.subr.mxu0 0.0
  %6801 = vmatpush1.msra.mxu0 %v6795
  %6802 = vmatprep.subr.mxu0 0.0
  %6803 = vmatpush1.msra.mxu0 0.0
  %6804 = vmatprep.subr.mxu0 0.0
  %6805 = vmatpush1.msra.mxu0 0.0
  %6806 = vmatprep.subr.mxu0 0.0
  %6807 = vmatpush1.msra.mxu0 0.0
  %6808 = vmatprep.subr.mxu0 0.0
  %6809 = vmatpush1.msra.mxu0 0.0
  %6810 = vmatprep.subr.mxu0 0.0
  %6811 = vmatpush1.msra.mxu0 0.0
  %6812 = vmatprep.subr.mxu0 0.0
  %6813 = vmatpush1.msra.mxu0 0.0
  %6814 = vmatprep.subr.mxu0 0.0
  %6815 = vmatpush1.msra.mxu0 0.0
  %6816 = vmatprep.subr.mxu0 0.0
  %6817 = vmatpush1.msra.mxu0 0.0
  %6818 = vmatprep.subr.mxu0 0.0
  %6819 = vmatpush1.msra.mxu0 0.0
  %6820 = vmatprep.subr.mxu0 0.0
  %6821 = vmatpush1.msra.mxu0 0.0
  %6822 = vmatprep.subr.mxu0 0.0
  %6823 = vmatpush1.msra.mxu0 0.0
  %6824 = vmatprep.subr.mxu0 0.0
  %6825 = vmatpush1.msra.mxu0 0.0
  %6826 = vmatprep.subr.mxu0 0.0
  %6827 = vmatpush1.msra.mxu0 0.0
  %6828 = vmatprep.subr.mxu0 0.0
  %6829 = vmatpush1.msra.mxu0 0.0
  %6830 = vmatprep.subr.mxu0 0.0
  %6831 = vmatpush1.msra.mxu0 0.0
  %6832 = vmatprep.subr.mxu0 0.0
  %6833 = vmatpush1.msra.mxu0 0.0
  %6834 = vmatprep.subr.mxu0 0.0
  %6835 = vmatpush1.msra.mxu0 0.0
  %6836 = vmatprep.subr.mxu0 0.0
  %6837 = vmatpush1.msra.mxu0 0.0
  %6838 = vmatprep.subr.mxu0 0.0
  %6839 = vmatpush1.msra.mxu0 0.0
  %6840 = vmatprep.subr.mxu0 0.0
  %6841 = vmatpush1.msra.mxu0 0.0
  %6842 = vmatprep.subr.mxu0 0.0
  %6843 = vmatpush1.msra.mxu0 0.0
  %6844 = vmatprep.subr.mxu0 0.0
  %6845 = vmatpush1.msra.mxu0 0.0
  %6846 = vmatprep.subr.mxu0 0.0
  %6847 = vmatpush1.msra.mxu0 0.0
  %6848 = vmatprep.subr.mxu0 0.0
  %6849 = vmatpush1.msra.mxu0 0.0
  %6850 = vmatprep.subr.mxu0 0.0
  %6851 = vmatpush1.msra.mxu0 0.0
  %6852 = vmatprep.subr.mxu0 0.0
  %6853 = vmatpush1.msra.mxu0 0.0
  %6854 = vmatprep.subr.mxu0 0.0
  %6855 = vmatpush1.msra.mxu0 0.0
  %6856 = vmatprep.subr.mxu0 0.0
  %6857 = vmatpush1.msra.mxu0 0.0
  %6858 = vmatprep.subr.mxu0 0.0
  %6859 = vmatpush1.msra.mxu0 0.0
  %6860 = vmatprep.subr.mxu0 0.0
  %6861 = vmatpush1.msra.mxu0 0.0
  %6862 = vmatprep.subr.mxu0 0.0
  %6863 = vmatpush1.msra.mxu0 0.0
  %6864 = vmatprep.mubr.f32.mxu0 0.0
  %6865 = vmatmul.mubr.f32.gmra.mrb[0].mxu0 %v6798
  %v6866 = vpop.f32.mrb[0].mxu0
  %v6867 = vadd.f32 0.0, %v6866
  %v6868 = vpop.f32.mrb[0].mxu0
  %6869 = vdwg.mxu0
  %v6870 = vadd.f32 %v6791, %v6867
  %6872 = vset.pattern.permute.xlu0 0
  %6873 = vperm.xlu0 %6872, %v6157
  %v6874 = vpop.permute.xlu0 %6873
  %v6876 = vadd.f32 %v6870, %v6874
  %v6877 = vmax.f32 %v6876, 0.0
  %v6878 = vld [vmem:[%s10] sm:$0xff]
  %v6879 = vld [vmem:[%s10 + $0x8] sm:$0xff]
  %v6880 = vld [vmem:[%s10 + $0x10] sm:$0xff]
  %v6881 = vld [vmem:[%s10 + $0x18] sm:$0xff]
  %s6882 = scalar_lea.vmem %s10, 32
  %v6883 = vld [vmem:[%s6882] sm:$0xff]
  %v6884 = vld [vmem:[%s6882 + $0x8] sm:$0xff]
  %v6885 = vld [vmem:[%s6882 + $0x10] sm:$0xff]
  %v6886 = vld [vmem:[%s6882 + $0x18] sm:$0xff]
  %6887 = vrot.lane.b32.xlu0 %v6877, 72
  %v6888 = vpop.permute.xlu0 %6887
  %v6889 = vsel %vm2843, %v6888, %v6877
  %6890 = vrot.lane.b32.xlu0 %v6889, 72
  %v6891 = vpop.permute.xlu0 %6890
  %v6892 = vsel %vm2843, %v6891, %v6877
  %6894 = vrot.lane.b32.xlu0 %v6892, 127
  %v6895 = vpop.permute.xlu0 %6894
  %v6898 = vsel %vm2587, %v6883, 0
  %v6901 = vsel %vm2587, %v6884, 0
  %v6904 = vsel %vm2587, %v6885, 0
  %v6907 = vsel %vm2587, %v6886, 0
  %6909 = vmatprep.subr.mxu0 0.0
  %6910 = vmatpush1.msra.mxu0 %v6895
  %6911 = vmatprep.subr.mxu0 0.0
  %6912 = vmatpush1.msra.mxu0 0.0
  %6913 = vmatprep.subr.mxu0 0.0
  %6914 = vmatpush1.msra.mxu0 0.0
  %6915 = vmatprep.subr.mxu0 0.0
  %6916 = vmatpush1.msra.mxu0 0.0
  %6917 = vmatprep.subr.mxu0 0.0
  %6918 = vmatpush1.msra.mxu0 0.0
  %6919 = vmatprep.subr.mxu0 0.0
  %6920 = vmatpush1.msra.mxu0 0.0
  %6921 = vmatprep.subr.mxu0 0.0
  %6922 = vmatpush1.msra.mxu0 0.0
  %6923 = vmatprep.subr.mxu0 0.0
  %6924 = vmatpush1.msra.mxu0 0.0
  %6925 = vmatprep.subr.mxu0 0.0
  %6926 = vmatpush1.msra.mxu0 0.0
  %6927 = vmatprep.subr.mxu0 0.0
  %6928 = vmatpush1.msra.mxu0 0.0
  %6929 = vmatprep.subr.mxu0 0.0
  %6930 = vmatpush1.msra.mxu0 0.0
  %6931 = vmatprep.subr.mxu0 0.0
  %6932 = vmatpush1.msra.mxu0 0.0
  %6933 = vmatprep.subr.mxu0 0.0
  %6934 = vmatpush1.msra.mxu0 0.0
  %6935 = vmatprep.subr.mxu0 0.0
  %6936 = vmatpush1.msra.mxu0 0.0
  %6937 = vmatprep.subr.mxu0 0.0
  %6938 = vmatpush1.msra.mxu0 0.0
  %6939 = vmatprep.subr.mxu0 0.0
  %6940 = vmatpush1.msra.mxu0 0.0
  %6941 = vmatprep.subr.mxu0 0.0
  %6942 = vmatpush1.msra.mxu0 0.0
  %6943 = vmatprep.subr.mxu0 0.0
  %6944 = vmatpush1.msra.mxu0 0.0
  %6945 = vmatprep.subr.mxu0 0.0
  %6946 = vmatpush1.msra.mxu0 0.0
  %6947 = vmatprep.subr.mxu0 0.0
  %6948 = vmatpush1.msra.mxu0 0.0
  %6949 = vmatprep.subr.mxu0 0.0
  %6950 = vmatpush1.msra.mxu0 0.0
  %6951 = vmatprep.subr.mxu0 0.0
  %6952 = vmatpush1.msra.mxu0 0.0
  %6953 = vmatprep.subr.mxu0 0.0
  %6954 = vmatpush1.msra.mxu0 0.0
  %6955 = vmatprep.subr.mxu0 0.0
  %6956 = vmatpush1.msra.mxu0 0.0
  %6957 = vmatprep.subr.mxu0 0.0
  %6958 = vmatpush1.msra.mxu0 0.0
  %6959 = vmatprep.subr.mxu0 0.0
  %6960 = vmatpush1.msra.mxu0 0.0
  %6961 = vmatprep.subr.mxu0 0.0
  %6962 = vmatpush1.msra.mxu0 0.0
  %6963 = vmatprep.subr.mxu0 0.0
  %6964 = vmatpush1.msra.mxu0 0.0
  %6965 = vmatprep.subr.mxu0 0.0
  %6966 = vmatpush1.msra.mxu0 0.0
  %6967 = vmatprep.subr.mxu0 0.0
  %6968 = vmatpush1.msra.mxu0 0.0
  %6969 = vmatprep.subr.mxu0 0.0
  %6970 = vmatpush1.msra.mxu0 0.0
  %6971 = vmatprep.subr.mxu0 0.0
  %6972 = vmatpush1.msra.mxu0 0.0
  %6973 = vmatprep.mubr.f32.mxu0 0.0
  %6974 = vmatmul.mubr.f32.gmra.mrb[0].mxu0 %v6898
  %v6975 = vpop.f32.mrb[0].mxu0
  %v6976 = vadd.f32 0.0, %v6975
  %v6977 = vpop.f32.mrb[0].mxu0
  %6978 = vmatprep.mubr.f32.mxu0 0.0
  %6979 = vmatmul.mubr.f32.gmra.mrb[0].mxu0 %v6901
  %v6980 = vpop.f32.mrb[0].mxu0
  %v6981 = vadd.f32 0.0, %v6980
  %v6982 = vpop.f32.mrb[0].mxu0
  %6983 = vmatprep.mubr.f32.mxu0 0.0
  %6984 = vmatmul.mubr.f32.gmra.mrb[0].mxu0 %v6904
  %v6985 = vpop.f32.mrb[0].mxu0
  %v6986 = vadd.f32 0.0, %v6985
  %v6987 = vpop.f32.mrb[0].mxu0
  %6988 = vmatprep.mubr.f32.mxu0 0.0
  %6989 = vmatmul.mubr.f32.gmra.mrb[0].mxu0 %v6907
  %v6990 = vpop.f32.mrb[0].mxu0
  %v6991 = vadd.f32 0.0, %v6990
  %v6992 = vpop.f32.mrb[0].mxu0
  %6993 = vdwg.mxu0
  %v6995 = vsel %vm2587, %v6878, 0
  %v6998 = vsel %vm2587, %v6879, 0
  %v7001 = vsel %vm2587, %v6880, 0
  %v7004 = vsel %vm2587, %v6881, 0
  %7006 = vmatprep.subr.mxu0 0.0
  %7007 = vmatpush1.msra.mxu0 %v6877
  %7008 = vmatprep.subr.mxu0 0.0
  %7009 = vmatpush1.msra.mxu0 0.0
  %7010 = vmatprep.subr.mxu0 0.0
  %7011 = vmatpush1.msra.mxu0 0.0
  %7012 = vmatprep.subr.mxu0 0.0
  %7013 = vmatpush1.msra.mxu0 0.0
  %7014 = vmatprep.subr.mxu0 0.0
  %7015 = vmatpush1.msra.mxu0 0.0
  %7016 = vmatprep.subr.mxu0 0.0
  %7017 = vmatpush1.msra.mxu0 0.0
  %7018 = vmatprep.subr.mxu0 0.0
  %7019 = vmatpush1.msra.mxu0 0.0
  %7020 = vmatprep.subr.mxu0 0.0
  %7021 = vmatpush1.msra.mxu0 0.0
  %7022 = vmatprep.subr.mxu0 0.0
  %7023 = vmatpush1.msra.mxu0 0.0
  %7024 = vmatprep.subr.mxu0 0.0
  %7025 = vmatpush1.msra.mxu0 0.0
  %7026 = vmatprep.subr.mxu0 0.0
  %7027 = vmatpush1.msra.mxu0 0.0
  %7028 = vmatprep.subr.mxu0 0.0
  %7029 = vmatpush1.msra.mxu0 0.0
  %7030 = vmatprep.subr.mxu0 0.0
  %7031 = vmatpush1.msra.mxu0 0.0
  %7032 = vmatprep.subr.mxu0 0.0
  %7033 = vmatpush1.msra.mxu0 0.0
  %7034 = vmatprep.subr.mxu0 0.0
  %7035 = vmatpush1.msra.mxu0 0.0
  %7036 = vmatprep.subr.mxu0 0.0
  %7037 = vmatpush1.msra.mxu0 0.0
  %7038 = vmatprep.subr.mxu0 0.0
  %7039 = vmatpush1.msra.mxu0 0.0
  %7040 = vmatprep.subr.mxu0 0.0
  %7041 = vmatpush1.msra.mxu0 0.0
  %7042 = vmatprep.subr.mxu0 0.0
  %7043 = vmatpush1.msra.mxu0 0.0
  %7044 = vmatprep.subr.mxu0 0.0
  %7045 = vmatpush1.msra.mxu0 0.0
  %7046 = vmatprep.subr.mxu0 0.0
  %7047 = vmatpush1.msra.mxu0 0.0
  %7048 = vmatprep.subr.mxu0 0.0
  %7049 = vmatpush1.msra.mxu0 0.0
  %7050 = vmatprep.subr.mxu0 0.0
  %7051 = vmatpush1.msra.mxu0 0.0
  %7052 = vmatprep.subr.mxu0 0.0
  %7053 = vmatpush1.msra.mxu0 0.0
  %7054 = vmatprep.subr.mxu0 0.0
  %7055 = vmatpush1.msra.mxu0 0.0
  %7056 = vmatprep.subr.mxu0 0.0
  %7057 = vmatpush1.msra.mxu0 0.0
  %7058 = vmatprep.subr.mxu0 0.0
  %7059 = vmatpush1.msra.mxu0 0.0
  %7060 = vmatprep.subr.mxu0 0.0
  %7061 = vmatpush1.msra.mxu0 0.0
  %7062 = vmatprep.subr.mxu0 0.0
  %7063 = vmatpush1.msra.mxu0 0.0
  %7064 = vmatprep.subr.mxu0 0.0
  %7065 = vmatpush1.msra.mxu0 0.0
  %7066 = vmatprep.subr.mxu0 0.0
  %7067 = vmatpush1.msra.mxu0 0.0
  %7068 = vmatprep.subr.mxu0 0.0
  %7069 = vmatpush1.msra.mxu0 0.0
  %7070 = vmatprep.mubr.f32.mxu0 0.0
  %7071 = vmatmul.mubr.f32.gmra.mrb[0].mxu0 %v6995
  %v7072 = vpop.f32.mrb[0].mxu0
  %v7073 = vadd.f32 %v6976, %v7072
  %v7074 = vpop.f32.mrb[0].mxu0
  %7075 = vmatprep.mubr.f32.mxu0 0.0
  %7076 = vmatmul.mubr.f32.gmra.mrb[0].mxu0 %v6998
  %v7077 = vpop.f32.mrb[0].mxu0
  %v7078 = vadd.f32 %v6981, %v7077
  %v7079 = vpop.f32.mrb[0].mxu0
  %7080 = vmatprep.mubr.f32.mxu0 0.0
  %7081 = vmatmul.mubr.f32.gmra.mrb[0].mxu0 %v7001
  %v7082 = vpop.f32.mrb[0].mxu0
  %v7083 = vadd.f32 %v6986, %v7082
  %v7084 = vpop.f32.mrb[0].mxu0
  %7085 = vmatprep.mubr.f32.mxu0 0.0
  %7086 = vmatmul.mubr.f32.gmra.mrb[0].mxu0 %v7004
  %v7087 = vpop.f32.mrb[0].mxu0
  %v7088 = vadd.f32 %v6991, %v7087
  %v7089 = vpop.f32.mrb[0].mxu0
  %7090 = vdwg.mxu0
  %s7091 = scalar_lea.vmem %s10, 64
  %v7092 = vld [vmem:[%s7091] sm:$0xff]
  %v7093 = vld [vmem:[%s7091 + $0x8] sm:$0xff]
  %v7094 = vld [vmem:[%s7091 + $0x10] sm:$0xff]
  %v7095 = vld [vmem:[%s7091 + $0x18] sm:$0xff]
  %7096 = vrot.lane.b32.xlu0 %v6892, 126
  %v7097 = vpop.permute.xlu0 %7096
  %v7100 = vsel %vm2587, %v7092, 0
  %v7103 = vsel %vm2587, %v7093, 0
  %v7106 = vsel %vm2587, %v7094, 0
  %v7109 = vsel %vm2587, %v7095, 0
  %7111 = vmatprep.subr.mxu0 0.0
  %7112 = vmatpush1.msra.mxu0 %v7097
  %7113 = vmatprep.subr.mxu0 0.0
  %7114 = vmatpush1.msra.mxu0 0.0
  %7115 = vmatprep.subr.mxu0 0.0
  %7116 = vmatpush1.msra.mxu0 0.0
  %7117 = vmatprep.subr.mxu0 0.0
  %7118 = vmatpush1.msra.mxu0 0.0
  %7119 = vmatprep.subr.mxu0 0.0
  %7120 = vmatpush1.msra.mxu0 0.0
  %7121 = vmatprep.subr.mxu0 0.0
  %7122 = vmatpush1.msra.mxu0 0.0
  %7123 = vmatprep.subr.mxu0 0.0
  %7124 = vmatpush1.msra.mxu0 0.0
  %7125 = vmatprep.subr.mxu0 0.0
  %7126 = vmatpush1.msra.mxu0 0.0
  %7127 = vmatprep.subr.mxu0 0.0
  %7128 = vmatpush1.msra.mxu0 0.0
  %7129 = vmatprep.subr.mxu0 0.0
  %7130 = vmatpush1.msra.mxu0 0.0
  %7131 = vmatprep.subr.mxu0 0.0
  %7132 = vmatpush1.msra.mxu0 0.0
  %7133 = vmatprep.subr.mxu0 0.0
  %7134 = vmatpush1.msra.mxu0 0.0
  %7135 = vmatprep.subr.mxu0 0.0
  %7136 = vmatpush1.msra.mxu0 0.0
  %7137 = vmatprep.subr.mxu0 0.0
  %7138 = vmatpush1.msra.mxu0 0.0
  %7139 = vmatprep.subr.mxu0 0.0
  %7140 = vmatpush1.msra.mxu0 0.0
  %7141 = vmatprep.subr.mxu0 0.0
  %7142 = vmatpush1.msra.mxu0 0.0
  %7143 = vmatprep.subr.mxu0 0.0
  %7144 = vmatpush1.msra.mxu0 0.0
  %7145 = vmatprep.subr.mxu0 0.0
  %7146 = vmatpush1.msra.mxu0 0.0
  %7147 = vmatprep.subr.mxu0 0.0
  %7148 = vmatpush1.msra.mxu0 0.0
  %7149 = vmatprep.subr.mxu0 0.0
  %7150 = vmatpush1.msra.mxu0 0.0
  %7151 = vmatprep.subr.mxu0 0.0
  %7152 = vmatpush1.msra.mxu0 0.0
  %7153 = vmatprep.subr.mxu0 0.0
  %7154 = vmatpush1.msra.mxu0 0.0
  %7155 = vmatprep.subr.mxu0 0.0
  %7156 = vmatpush1.msra.mxu0 0.0
  %7157 = vmatprep.subr.mxu0 0.0
  %7158 = vmatpush1.msra.mxu0 0.0
  %7159 = vmatprep.subr.mxu0 0.0
  %7160 = vmatpush1.msra.mxu0 0.0
  %7161 = vmatprep.subr.mxu0 0.0
  %7162 = vmatpush1.msra.mxu0 0.0
  %7163 = vmatprep.subr.mxu0 0.0
  %7164 = vmatpush1.msra.mxu0 0.0
  %7165 = vmatprep.subr.mxu0 0.0
  %7166 = vmatpush1.msra.mxu0 0.0
  %7167 = vmatprep.subr.mxu0 0.0
  %7168 = vmatpush1.msra.mxu0 0.0
  %7169 = vmatprep.subr.mxu0 0.0
  %7170 = vmatpush1.msra.mxu0 0.0
  %7171 = vmatprep.subr.mxu0 0.0
  %7172 = vmatpush1.msra.mxu0 0.0
  %7173 = vmatprep.subr.mxu0 0.0
  %7174 = vmatpush1.msra.mxu0 0.0
  %7175 = vmatprep.mubr.f32.mxu0 0.0
  %7176 = vmatmul.mubr.f32.gmra.mrb[0].mxu0 %v7100
  %v7177 = vpop.f32.mrb[0].mxu0
  %v7178 = vadd.f32 0.0, %v7177
  %v7179 = vpop.f32.mrb[0].mxu0
  %7180 = vmatprep.mubr.f32.mxu0 0.0
  %7181 = vmatmul.mubr.f32.gmra.mrb[0].mxu0 %v7103
  %v7182 = vpop.f32.mrb[0].mxu0
  %v7183 = vadd.f32 0.0, %v7182
  %v7184 = vpop.f32.mrb[0].mxu0
  %7185 = vmatprep.mubr.f32.mxu0 0.0
  %7186 = vmatmul.mubr.f32.gmra.mrb[0].mxu0 %v7106
  %v7187 = vpop.f32.mrb[0].mxu0
  %v7188 = vadd.f32 0.0, %v7187
  %v7189 = vpop.f32.mrb[0].mxu0
  %7190 = vmatprep.mubr.f32.mxu0 0.0
  %7191 = vmatmul.mubr.f32.gmra.mrb[0].mxu0 %v7109
  %v7192 = vpop.f32.mrb[0].mxu0
  %v7193 = vadd.f32 0.0, %v7192
  %v7194 = vpop.f32.mrb[0].mxu0
  %7195 = vdwg.mxu0
  %v7196 = vadd.f32 %v7073, %v7178
  %v7197 = vadd.f32 %v7078, %v7183
  %v7198 = vadd.f32 %v7083, %v7188
  %v7199 = vadd.f32 %v7088, %v7193
  %s7200 = scalar_lea.vmem %s10, 96
  %v7201 = vld [vmem:[%s7200] sm:$0xff]
  %v7202 = vld [vmem:[%s7200 + $0x8] sm:$0xff]
  %v7203 = vld [vmem:[%s7200 + $0x10] sm:$0xff]
  %v7204 = vld [vmem:[%s7200 + $0x18] sm:$0xff]
  %7205 = vrot.lane.b32.xlu0 %v6892, 125
  %v7206 = vpop.permute.xlu0 %7205
  %v7209 = vsel %vm2587, %v7201, 0
  %v7212 = vsel %vm2587, %v7202, 0
  %v7215 = vsel %vm2587, %v7203, 0
  %v7218 = vsel %vm2587, %v7204, 0
  %7220 = vmatprep.subr.mxu0 0.0
  %7221 = vmatpush1.msra.mxu0 %v7206
  %7222 = vmatprep.subr.mxu0 0.0
  %7223 = vmatpush1.msra.mxu0 0.0
  %7224 = vmatprep.subr.mxu0 0.0
  %7225 = vmatpush1.msra.mxu0 0.0
  %7226 = vmatprep.subr.mxu0 0.0
  %7227 = vmatpush1.msra.mxu0 0.0
  %7228 = vmatprep.subr.mxu0 0.0
  %7229 = vmatpush1.msra.mxu0 0.0
  %7230 = vmatprep.subr.mxu0 0.0
  %7231 = vmatpush1.msra.mxu0 0.0
  %7232 = vmatprep.subr.mxu0 0.0
  %7233 = vmatpush1.msra.mxu0 0.0
  %7234 = vmatprep.subr.mxu0 0.0
  %7235 = vmatpush1.msra.mxu0 0.0
  %7236 = vmatprep.subr.mxu0 0.0
  %7237 = vmatpush1.msra.mxu0 0.0
  %7238 = vmatprep.subr.mxu0 0.0
  %7239 = vmatpush1.msra.mxu0 0.0
  %7240 = vmatprep.subr.mxu0 0.0
  %7241 = vmatpush1.msra.mxu0 0.0
  %7242 = vmatprep.subr.mxu0 0.0
  %7243 = vmatpush1.msra.mxu0 0.0
  %7244 = vmatprep.subr.mxu0 0.0
  %7245 = vmatpush1.msra.mxu0 0.0
  %7246 = vmatprep.subr.mxu0 0.0
  %7247 = vmatpush1.msra.mxu0 0.0
  %7248 = vmatprep.subr.mxu0 0.0
  %7249 = vmatpush1.msra.mxu0 0.0
  %7250 = vmatprep.subr.mxu0 0.0
  %7251 = vmatpush1.msra.mxu0 0.0
  %7252 = vmatprep.subr.mxu0 0.0
  %7253 = vmatpush1.msra.mxu0 0.0
  %7254 = vmatprep.subr.mxu0 0.0
  %7255 = vmatpush1.msra.mxu0 0.0
  %7256 = vmatprep.subr.mxu0 0.0
  %7257 = vmatpush1.msra.mxu0 0.0
  %7258 = vmatprep.subr.mxu0 0.0
  %7259 = vmatpush1.msra.mxu0 0.0
  %7260 = vmatprep.subr.mxu0 0.0
  %7261 = vmatpush1.msra.mxu0 0.0
  %7262 = vmatprep.subr.mxu0 0.0
  %7263 = vmatpush1.msra.mxu0 0.0
  %7264 = vmatprep.subr.mxu0 0.0
  %7265 = vmatpush1.msra.mxu0 0.0
  %7266 = vmatprep.subr.mxu0 0.0
  %7267 = vmatpush1.msra.mxu0 0.0
  %7268 = vmatprep.subr.mxu0 0.0
  %7269 = vmatpush1.msra.mxu0 0.0
  %7270 = vmatprep.subr.mxu0 0.0
  %7271 = vmatpush1.msra.mxu0 0.0
  %7272 = vmatprep.subr.mxu0 0.0
  %7273 = vmatpush1.msra.mxu0 0.0
  %7274 = vmatprep.subr.mxu0 0.0
  %7275 = vmatpush1.msra.mxu0 0.0
  %7276 = vmatprep.subr.mxu0 0.0
  %7277 = vmatpush1.msra.mxu0 0.0
  %7278 = vmatprep.subr.mxu0 0.0
  %7279 = vmatpush1.msra.mxu0 0.0
  %7280 = vmatprep.subr.mxu0 0.0
  %7281 = vmatpush1.msra.mxu0 0.0
  %7282 = vmatprep.subr.mxu0 0.0
  %7283 = vmatpush1.msra.mxu0 0.0
  %7284 = vmatprep.mubr.f32.mxu0 0.0
  %7285 = vmatmul.mubr.f32.gmra.mrb[0].mxu0 %v7209
  %v7286 = vpop.f32.mrb[0].mxu0
  %v7287 = vadd.f32 0.0, %v7286
  %v7288 = vpop.f32.mrb[0].mxu0
  %7289 = vmatprep.mubr.f32.mxu0 0.0
  %7290 = vmatmul.mubr.f32.gmra.mrb[0].mxu0 %v7212
  %v7291 = vpop.f32.mrb[0].mxu0
  %v7292 = vadd.f32 0.0, %v7291
  %v7293 = vpop.f32.mrb[0].mxu0
  %7294 = vmatprep.mubr.f32.mxu0 0.0
  %7295 = vmatmul.mubr.f32.gmra.mrb[0].mxu0 %v7215
  %v7296 = vpop.f32.mrb[0].mxu0
  %v7297 = vadd.f32 0.0, %v7296
  %v7298 = vpop.f32.mrb[0].mxu0
  %7299 = vmatprep.mubr.f32.mxu0 0.0
  %7300 = vmatmul.mubr.f32.gmra.mrb[0].mxu0 %v7218
  %v7301 = vpop.f32.mrb[0].mxu0
  %v7302 = vadd.f32 0.0, %v7301
  %v7303 = vpop.f32.mrb[0].mxu0
  %7304 = vdwg.mxu0
  %v7305 = vadd.f32 %v7196, %v7287
  %v7306 = vadd.f32 %v7197, %v7292
  %v7307 = vadd.f32 %v7198, %v7297
  %v7308 = vadd.f32 %v7199, %v7302
  %s7309 = scalar_lea.vmem %s10, 128
  %v7310 = vld [vmem:[%s7309] sm:$0xff]
  %v7311 = vld [vmem:[%s7309 + $0x8] sm:$0xff]
  %v7312 = vld [vmem:[%s7309 + $0x10] sm:$0xff]
  %v7313 = vld [vmem:[%s7309 + $0x18] sm:$0xff]
  %7314 = vrot.lane.b32.xlu0 %v6892, 122
  %v7315 = vpop.permute.xlu0 %7314
  %v7318 = vsel %vm2587, %v7310, 0
  %v7321 = vsel %vm2587, %v7311, 0
  %v7324 = vsel %vm2587, %v7312, 0
  %v7327 = vsel %vm2587, %v7313, 0
  %7329 = vmatprep.subr.mxu0 0.0
  %7330 = vmatpush1.msra.mxu0 %v7315
  %7331 = vmatprep.subr.mxu0 0.0
  %7332 = vmatpush1.msra.mxu0 0.0
  %7333 = vmatprep.subr.mxu0 0.0
  %7334 = vmatpush1.msra.mxu0 0.0
  %7335 = vmatprep.subr.mxu0 0.0
  %7336 = vmatpush1.msra.mxu0 0.0
  %7337 = vmatprep.subr.mxu0 0.0
  %7338 = vmatpush1.msra.mxu0 0.0
  %7339 = vmatprep.subr.mxu0 0.0
  %7340 = vmatpush1.msra.mxu0 0.0
  %7341 = vmatprep.subr.mxu0 0.0
  %7342 = vmatpush1.msra.mxu0 0.0
  %7343 = vmatprep.subr.mxu0 0.0
  %7344 = vmatpush1.msra.mxu0 0.0
  %7345 = vmatprep.subr.mxu0 0.0
  %7346 = vmatpush1.msra.mxu0 0.0
  %7347 = vmatprep.subr.mxu0 0.0
  %7348 = vmatpush1.msra.mxu0 0.0
  %7349 = vmatprep.subr.mxu0 0.0
  %7350 = vmatpush1.msra.mxu0 0.0
  %7351 = vmatprep.subr.mxu0 0.0
  %7352 = vmatpush1.msra.mxu0 0.0
  %7353 = vmatprep.subr.mxu0 0.0
  %7354 = vmatpush1.msra.mxu0 0.0
  %7355 = vmatprep.subr.mxu0 0.0
  %7356 = vmatpush1.msra.mxu0 0.0
  %7357 = vmatprep.subr.mxu0 0.0
  %7358 = vmatpush1.msra.mxu0 0.0
  %7359 = vmatprep.subr.mxu0 0.0
  %7360 = vmatpush1.msra.mxu0 0.0
  %7361 = vmatprep.subr.mxu0 0.0
  %7362 = vmatpush1.msra.mxu0 0.0
  %7363 = vmatprep.subr.mxu0 0.0
  %7364 = vmatpush1.msra.mxu0 0.0
  %7365 = vmatprep.subr.mxu0 0.0
  %7366 = vmatpush1.msra.mxu0 0.0
  %7367 = vmatprep.subr.mxu0 0.0
  %7368 = vmatpush1.msra.mxu0 0.0
  %7369 = vmatprep.subr.mxu0 0.0
  %7370 = vmatpush1.msra.mxu0 0.0
  %7371 = vmatprep.subr.mxu0 0.0
  %7372 = vmatpush1.msra.mxu0 0.0
  %7373 = vmatprep.subr.mxu0 0.0
  %7374 = vmatpush1.msra.mxu0 0.0
  %7375 = vmatprep.subr.mxu0 0.0
  %7376 = vmatpush1.msra.mxu0 0.0
  %7377 = vmatprep.subr.mxu0 0.0
  %7378 = vmatpush1.msra.mxu0 0.0
  %7379 = vmatprep.subr.mxu0 0.0
  %7380 = vmatpush1.msra.mxu0 0.0
  %7381 = vmatprep.subr.mxu0 0.0
  %7382 = vmatpush1.msra.mxu0 0.0
  %7383 = vmatprep.subr.mxu0 0.0
  %7384 = vmatpush1.msra.mxu0 0.0
  %7385 = vmatprep.subr.mxu0 0.0
  %7386 = vmatpush1.msra.mxu0 0.0
  %7387 = vmatprep.subr.mxu0 0.0
  %7388 = vmatpush1.msra.mxu0 0.0
  %7389 = vmatprep.subr.mxu0 0.0
  %7390 = vmatpush1.msra.mxu0 0.0
  %7391 = vmatprep.subr.mxu0 0.0
  %7392 = vmatpush1.msra.mxu0 0.0
  %7393 = vmatprep.mubr.f32.mxu0 0.0
  %7394 = vmatmul.mubr.f32.gmra.mrb[0].mxu0 %v7318
  %v7395 = vpop.f32.mrb[0].mxu0
  %v7396 = vadd.f32 0.0, %v7395
  %v7397 = vpop.f32.mrb[0].mxu0
  %7398 = vmatprep.mubr.f32.mxu0 0.0
  %7399 = vmatmul.mubr.f32.gmra.mrb[0].mxu0 %v7321
  %v7400 = vpop.f32.mrb[0].mxu0
  %v7401 = vadd.f32 0.0, %v7400
  %v7402 = vpop.f32.mrb[0].mxu0
  %7403 = vmatprep.mubr.f32.mxu0 0.0
  %7404 = vmatmul.mubr.f32.gmra.mrb[0].mxu0 %v7324
  %v7405 = vpop.f32.mrb[0].mxu0
  %v7406 = vadd.f32 0.0, %v7405
  %v7407 = vpop.f32.mrb[0].mxu0
  %7408 = vmatprep.mubr.f32.mxu0 0.0
  %7409 = vmatmul.mubr.f32.gmra.mrb[0].mxu0 %v7327
  %v7410 = vpop.f32.mrb[0].mxu0
  %v7411 = vadd.f32 0.0, %v7410
  %v7412 = vpop.f32.mrb[0].mxu0
  %7413 = vdwg.mxu0
  %v7414 = vadd.f32 %v7305, %v7396
  %v7415 = vadd.f32 %v7306, %v7401
  %v7416 = vadd.f32 %v7307, %v7406
  %v7417 = vadd.f32 %v7308, %v7411
  %s7418 = scalar_lea.vmem %s10, 160
  %v7419 = vld [vmem:[%s7418] sm:$0xff]
  %v7420 = vld [vmem:[%s7418 + $0x8] sm:$0xff]
  %v7421 = vld [vmem:[%s7418 + $0x10] sm:$0xff]
  %v7422 = vld [vmem:[%s7418 + $0x18] sm:$0xff]
  %7423 = vrot.lane.b32.xlu0 %v6892, 121
  %v7424 = vpop.permute.xlu0 %7423
  %v7427 = vsel %vm2587, %v7419, 0
  %v7430 = vsel %vm2587, %v7420, 0
  %v7433 = vsel %vm2587, %v7421, 0
  %v7436 = vsel %vm2587, %v7422, 0
  %7438 = vmatprep.subr.mxu0 0.0
  %7439 = vmatpush1.msra.mxu0 %v7424
  %7440 = vmatprep.subr.mxu0 0.0
  %7441 = vmatpush1.msra.mxu0 0.0
  %7442 = vmatprep.subr.mxu0 0.0
  %7443 = vmatpush1.msra.mxu0 0.0
  %7444 = vmatprep.subr.mxu0 0.0
  %7445 = vmatpush1.msra.mxu0 0.0
  %7446 = vmatprep.subr.mxu0 0.0
  %7447 = vmatpush1.msra.mxu0 0.0
  %7448 = vmatprep.subr.mxu0 0.0
  %7449 = vmatpush1.msra.mxu0 0.0
  %7450 = vmatprep.subr.mxu0 0.0
  %7451 = vmatpush1.msra.mxu0 0.0
  %7452 = vmatprep.subr.mxu0 0.0
  %7453 = vmatpush1.msra.mxu0 0.0
  %7454 = vmatprep.subr.mxu0 0.0
  %7455 = vmatpush1.msra.mxu0 0.0
  %7456 = vmatprep.subr.mxu0 0.0
  %7457 = vmatpush1.msra.mxu0 0.0
  %7458 = vmatprep.subr.mxu0 0.0
  %7459 = vmatpush1.msra.mxu0 0.0
  %7460 = vmatprep.subr.mxu0 0.0
  %7461 = vmatpush1.msra.mxu0 0.0
  %7462 = vmatprep.subr.mxu0 0.0
  %7463 = vmatpush1.msra.mxu0 0.0
  %7464 = vmatprep.subr.mxu0 0.0
  %7465 = vmatpush1.msra.mxu0 0.0
  %7466 = vmatprep.subr.mxu0 0.0
  %7467 = vmatpush1.msra.mxu0 0.0
  %7468 = vmatprep.subr.mxu0 0.0
  %7469 = vmatpush1.msra.mxu0 0.0
  %7470 = vmatprep.subr.mxu0 0.0
  %7471 = vmatpush1.msra.mxu0 0.0
  %7472 = vmatprep.subr.mxu0 0.0
  %7473 = vmatpush1.msra.mxu0 0.0
  %7474 = vmatprep.subr.mxu0 0.0
  %7475 = vmatpush1.msra.mxu0 0.0
  %7476 = vmatprep.subr.mxu0 0.0
  %7477 = vmatpush1.msra.mxu0 0.0
  %7478 = vmatprep.subr.mxu0 0.0
  %7479 = vmatpush1.msra.mxu0 0.0
  %7480 = vmatprep.subr.mxu0 0.0
  %7481 = vmatpush1.msra.mxu0 0.0
  %7482 = vmatprep.subr.mxu0 0.0
  %7483 = vmatpush1.msra.mxu0 0.0
  %7484 = vmatprep.subr.mxu0 0.0
  %7485 = vmatpush1.msra.mxu0 0.0
  %7486 = vmatprep.subr.mxu0 0.0
  %7487 = vmatpush1.msra.mxu0 0.0
  %7488 = vmatprep.subr.mxu0 0.0
  %7489 = vmatpush1.msra.mxu0 0.0
  %7490 = vmatprep.subr.mxu0 0.0
  %7491 = vmatpush1.msra.mxu0 0.0
  %7492 = vmatprep.subr.mxu0 0.0
  %7493 = vmatpush1.msra.mxu0 0.0
  %7494 = vmatprep.subr.mxu0 0.0
  %7495 = vmatpush1.msra.mxu0 0.0
  %7496 = vmatprep.subr.mxu0 0.0
  %7497 = vmatpush1.msra.mxu0 0.0
  %7498 = vmatprep.subr.mxu0 0.0
  %7499 = vmatpush1.msra.mxu0 0.0
  %7500 = vmatprep.subr.mxu0 0.0
  %7501 = vmatpush1.msra.mxu0 0.0
  %7502 = vmatprep.mubr.f32.mxu0 0.0
  %7503 = vmatmul.mubr.f32.gmra.mrb[0].mxu0 %v7427
  %v7504 = vpop.f32.mrb[0].mxu0
  %v7505 = vadd.f32 0.0, %v7504
  %v7506 = vpop.f32.mrb[0].mxu0
  %7507 = vmatprep.mubr.f32.mxu0 0.0
  %7508 = vmatmul.mubr.f32.gmra.mrb[0].mxu0 %v7430
  %v7509 = vpop.f32.mrb[0].mxu0
  %v7510 = vadd.f32 0.0, %v7509
  %v7511 = vpop.f32.mrb[0].mxu0
  %7512 = vmatprep.mubr.f32.mxu0 0.0
  %7513 = vmatmul.mubr.f32.gmra.mrb[0].mxu0 %v7433
  %v7514 = vpop.f32.mrb[0].mxu0
  %v7515 = vadd.f32 0.0, %v7514
  %v7516 = vpop.f32.mrb[0].mxu0
  %7517 = vmatprep.mubr.f32.mxu0 0.0
  %7518 = vmatmul.mubr.f32.gmra.mrb[0].mxu0 %v7436
  %v7519 = vpop.f32.mrb[0].mxu0
  %v7520 = vadd.f32 0.0, %v7519
  %v7521 = vpop.f32.mrb[0].mxu0
  %7522 = vdwg.mxu0
  %v7523 = vadd.f32 %v7414, %v7505
  %v7524 = vadd.f32 %v7415, %v7510
  %v7525 = vadd.f32 %v7416, %v7515
  %v7526 = vadd.f32 %v7417, %v7520
  %s7527 = scalar_lea.vmem %s10, 192
  %v7528 = vld [vmem:[%s7527] sm:$0xff]
  %v7529 = vld [vmem:[%s7527 + $0x8] sm:$0xff]
  %v7530 = vld [vmem:[%s7527 + $0x10] sm:$0xff]
  %v7531 = vld [vmem:[%s7527 + $0x18] sm:$0xff]
  %7532 = vrot.lane.b32.xlu0 %v6892, 120
  %v7533 = vpop.permute.xlu0 %7532
  %v7536 = vsel %vm2587, %v7528, 0
  %v7539 = vsel %vm2587, %v7529, 0
  %v7542 = vsel %vm2587, %v7530, 0
  %v7545 = vsel %vm2587, %v7531, 0
  %7547 = vmatprep.subr.mxu0 0.0
  %7548 = vmatpush1.msra.mxu0 %v7533
  %7549 = vmatprep.subr.mxu0 0.0
  %7550 = vmatpush1.msra.mxu0 0.0
  %7551 = vmatprep.subr.mxu0 0.0
  %7552 = vmatpush1.msra.mxu0 0.0
  %7553 = vmatprep.subr.mxu0 0.0
  %7554 = vmatpush1.msra.mxu0 0.0
  %7555 = vmatprep.subr.mxu0 0.0
  %7556 = vmatpush1.msra.mxu0 0.0
  %7557 = vmatprep.subr.mxu0 0.0
  %7558 = vmatpush1.msra.mxu0 0.0
  %7559 = vmatprep.subr.mxu0 0.0
  %7560 = vmatpush1.msra.mxu0 0.0
  %7561 = vmatprep.subr.mxu0 0.0
  %7562 = vmatpush1.msra.mxu0 0.0
  %7563 = vmatprep.subr.mxu0 0.0
  %7564 = vmatpush1.msra.mxu0 0.0
  %7565 = vmatprep.subr.mxu0 0.0
  %7566 = vmatpush1.msra.mxu0 0.0
  %7567 = vmatprep.subr.mxu0 0.0
  %7568 = vmatpush1.msra.mxu0 0.0
  %7569 = vmatprep.subr.mxu0 0.0
  %7570 = vmatpush1.msra.mxu0 0.0
  %7571 = vmatprep.subr.mxu0 0.0
  %7572 = vmatpush1.msra.mxu0 0.0
  %7573 = vmatprep.subr.mxu0 0.0
  %7574 = vmatpush1.msra.mxu0 0.0
  %7575 = vmatprep.subr.mxu0 0.0
  %7576 = vmatpush1.msra.mxu0 0.0
  %7577 = vmatprep.subr.mxu0 0.0
  %7578 = vmatpush1.msra.mxu0 0.0
  %7579 = vmatprep.subr.mxu0 0.0
  %7580 = vmatpush1.msra.mxu0 0.0
  %7581 = vmatprep.subr.mxu0 0.0
  %7582 = vmatpush1.msra.mxu0 0.0
  %7583 = vmatprep.subr.mxu0 0.0
  %7584 = vmatpush1.msra.mxu0 0.0
  %7585 = vmatprep.subr.mxu0 0.0
  %7586 = vmatpush1.msra.mxu0 0.0
  %7587 = vmatprep.subr.mxu0 0.0
  %7588 = vmatpush1.msra.mxu0 0.0
  %7589 = vmatprep.subr.mxu0 0.0
  %7590 = vmatpush1.msra.mxu0 0.0
  %7591 = vmatprep.subr.mxu0 0.0
  %7592 = vmatpush1.msra.mxu0 0.0
  %7593 = vmatprep.subr.mxu0 0.0
  %7594 = vmatpush1.msra.mxu0 0.0
  %7595 = vmatprep.subr.mxu0 0.0
  %7596 = vmatpush1.msra.mxu0 0.0
  %7597 = vmatprep.subr.mxu0 0.0
  %7598 = vmatpush1.msra.mxu0 0.0
  %7599 = vmatprep.subr.mxu0 0.0
  %7600 = vmatpush1.msra.mxu0 0.0
  %7601 = vmatprep.subr.mxu0 0.0
  %7602 = vmatpush1.msra.mxu0 0.0
  %7603 = vmatprep.subr.mxu0 0.0
  %7604 = vmatpush1.msra.mxu0 0.0
  %7605 = vmatprep.subr.mxu0 0.0
  %7606 = vmatpush1.msra.mxu0 0.0
  %7607 = vmatprep.subr.mxu0 0.0
  %7608 = vmatpush1.msra.mxu0 0.0
  %7609 = vmatprep.subr.mxu0 0.0
  %7610 = vmatpush1.msra.mxu0 0.0
  %7611 = vmatprep.mubr.f32.mxu0 0.0
  %7612 = vmatmul.mubr.f32.gmra.mrb[0].mxu0 %v7536
  %v7613 = vpop.f32.mrb[0].mxu0
  %v7614 = vadd.f32 0.0, %v7613
  %v7615 = vpop.f32.mrb[0].mxu0
  %7616 = vmatprep.mubr.f32.mxu0 0.0
  %7617 = vmatmul.mubr.f32.gmra.mrb[0].mxu0 %v7539
  %v7618 = vpop.f32.mrb[0].mxu0
  %v7619 = vadd.f32 0.0, %v7618
  %v7620 = vpop.f32.mrb[0].mxu0
  %7621 = vmatprep.mubr.f32.mxu0 0.0
  %7622 = vmatmul.mubr.f32.gmra.mrb[0].mxu0 %v7542
  %v7623 = vpop.f32.mrb[0].mxu0
  %v7624 = vadd.f32 0.0, %v7623
  %v7625 = vpop.f32.mrb[0].mxu0
  %7626 = vmatprep.mubr.f32.mxu0 0.0
  %7627 = vmatmul.mubr.f32.gmra.mrb[0].mxu0 %v7545
  %v7628 = vpop.f32.mrb[0].mxu0
  %v7629 = vadd.f32 0.0, %v7628
  %v7630 = vpop.f32.mrb[0].mxu0
  %7631 = vdwg.mxu0
  %v7632 = vadd.f32 %v7523, %v7614
  %v7633 = vadd.f32 %v7524, %v7619
  %v7634 = vadd.f32 %v7525, %v7624
  %v7635 = vadd.f32 %v7526, %v7629
  %s7636 = scalar_lea.vmem %s10, 224
  %v7637 = vld [vmem:[%s7636] sm:$0xff]
  %v7638 = vld [vmem:[%s7636 + $0x8] sm:$0xff]
  %v7639 = vld [vmem:[%s7636 + $0x10] sm:$0xff]
  %v7640 = vld [vmem:[%s7636 + $0x18] sm:$0xff]
  %7641 = vrot.lane.b32.xlu0 %v6892, 119
  %v7642 = vpop.permute.xlu0 %7641
  %v7645 = vsel %vm2587, %v7637, 0
  %v7648 = vsel %vm2587, %v7638, 0
  %v7651 = vsel %vm2587, %v7639, 0
  %v7654 = vsel %vm2587, %v7640, 0
  %7656 = vmatprep.subr.mxu0 0.0
  %7657 = vmatpush1.msra.mxu0 %v7642
  %7658 = vmatprep.subr.mxu0 0.0
  %7659 = vmatpush1.msra.mxu0 0.0
  %7660 = vmatprep.subr.mxu0 0.0
  %7661 = vmatpush1.msra.mxu0 0.0
  %7662 = vmatprep.subr.mxu0 0.0
  %7663 = vmatpush1.msra.mxu0 0.0
  %7664 = vmatprep.subr.mxu0 0.0
  %7665 = vmatpush1.msra.mxu0 0.0
  %7666 = vmatprep.subr.mxu0 0.0
  %7667 = vmatpush1.msra.mxu0 0.0
  %7668 = vmatprep.subr.mxu0 0.0
  %7669 = vmatpush1.msra.mxu0 0.0
  %7670 = vmatprep.subr.mxu0 0.0
  %7671 = vmatpush1.msra.mxu0 0.0
  %7672 = vmatprep.subr.mxu0 0.0
  %7673 = vmatpush1.msra.mxu0 0.0
  %7674 = vmatprep.subr.mxu0 0.0
  %7675 = vmatpush1.msra.mxu0 0.0
  %7676 = vmatprep.subr.mxu0 0.0
  %7677 = vmatpush1.msra.mxu0 0.0
  %7678 = vmatprep.subr.mxu0 0.0
  %7679 = vmatpush1.msra.mxu0 0.0
  %7680 = vmatprep.subr.mxu0 0.0
  %7681 = vmatpush1.msra.mxu0 0.0
  %7682 = vmatprep.subr.mxu0 0.0
  %7683 = vmatpush1.msra.mxu0 0.0
  %7684 = vmatprep.subr.mxu0 0.0
  %7685 = vmatpush1.msra.mxu0 0.0
  %7686 = vmatprep.subr.mxu0 0.0
  %7687 = vmatpush1.msra.mxu0 0.0
  %7688 = vmatprep.subr.mxu0 0.0
  %7689 = vmatpush1.msra.mxu0 0.0
  %7690 = vmatprep.subr.mxu0 0.0
  %7691 = vmatpush1.msra.mxu0 0.0
  %7692 = vmatprep.subr.mxu0 0.0
  %7693 = vmatpush1.msra.mxu0 0.0
  %7694 = vmatprep.subr.mxu0 0.0
  %7695 = vmatpush1.msra.mxu0 0.0
  %7696 = vmatprep.subr.mxu0 0.0
  %7697 = vmatpush1.msra.mxu0 0.0
  %7698 = vmatprep.subr.mxu0 0.0
  %7699 = vmatpush1.msra.mxu0 0.0
  %7700 = vmatprep.subr.mxu0 0.0
  %7701 = vmatpush1.msra.mxu0 0.0
  %7702 = vmatprep.subr.mxu0 0.0
  %7703 = vmatpush1.msra.mxu0 0.0
  %7704 = vmatprep.subr.mxu0 0.0
  %7705 = vmatpush1.msra.mxu0 0.0
  %7706 = vmatprep.subr.mxu0 0.0
  %7707 = vmatpush1.msra.mxu0 0.0
  %7708 = vmatprep.subr.mxu0 0.0
  %7709 = vmatpush1.msra.mxu0 0.0
  %7710 = vmatprep.subr.mxu0 0.0
  %7711 = vmatpush1.msra.mxu0 0.0
  %7712 = vmatprep.subr.mxu0 0.0
  %7713 = vmatpush1.msra.mxu0 0.0
  %7714 = vmatprep.subr.mxu0 0.0
  %7715 = vmatpush1.msra.mxu0 0.0
  %7716 = vmatprep.subr.mxu0 0.0
  %7717 = vmatpush1.msra.mxu0 0.0
  %7718 = vmatprep.subr.mxu0 0.0
  %7719 = vmatpush1.msra.mxu0 0.0
  %7720 = vmatprep.mubr.f32.mxu0 0.0
  %7721 = vmatmul.mubr.f32.gmra.mrb[0].mxu0 %v7645
  %v7722 = vpop.f32.mrb[0].mxu0
  %v7723 = vadd.f32 0.0, %v7722
  %v7724 = vpop.f32.mrb[0].mxu0
  %7725 = vmatprep.mubr.f32.mxu0 0.0
  %7726 = vmatmul.mubr.f32.gmra.mrb[0].mxu0 %v7648
  %v7727 = vpop.f32.mrb[0].mxu0
  %v7728 = vadd.f32 0.0, %v7727
  %v7729 = vpop.f32.mrb[0].mxu0
  %7730 = vmatprep.mubr.f32.mxu0 0.0
  %7731 = vmatmul.mubr.f32.gmra.mrb[0].mxu0 %v7651
  %v7732 = vpop.f32.mrb[0].mxu0
  %v7733 = vadd.f32 0.0, %v7732
  %v7734 = vpop.f32.mrb[0].mxu0
  %7735 = vmatprep.mubr.f32.mxu0 0.0
  %7736 = vmatmul.mubr.f32.gmra.mrb[0].mxu0 %v7654
  %v7737 = vpop.f32.mrb[0].mxu0
  %v7738 = vadd.f32 0.0, %v7737
  %v7739 = vpop.f32.mrb[0].mxu0
  %7740 = vdwg.mxu0
  %v7741 = vadd.f32 %v7632, %v7723
  %v7742 = vadd.f32 %v7633, %v7728
  %v7743 = vadd.f32 %v7634, %v7733
  %v7744 = vadd.f32 %v7635, %v7738
  %s7745 = scalar_lea.vmem %s10, 256
  %v7746 = vld [vmem:[%s7745] sm:$0xff]
  %v7747 = vld [vmem:[%s7745 + $0x8] sm:$0xff]
  %v7748 = vld [vmem:[%s7745 + $0x10] sm:$0xff]
  %v7749 = vld [vmem:[%s7745 + $0x18] sm:$0xff]
  %7750 = vrot.lane.b32.xlu0 %v6892, 116
  %v7751 = vpop.permute.xlu0 %7750
  %v7754 = vsel %vm2587, %v7746, 0
  %v7757 = vsel %vm2587, %v7747, 0
  %v7760 = vsel %vm2587, %v7748, 0
  %v7763 = vsel %vm2587, %v7749, 0
  %7765 = vmatprep.subr.mxu0 0.0
  %7766 = vmatpush1.msra.mxu0 %v7751
  %7767 = vmatprep.subr.mxu0 0.0
  %7768 = vmatpush1.msra.mxu0 0.0
  %7769 = vmatprep.subr.mxu0 0.0
  %7770 = vmatpush1.msra.mxu0 0.0
  %7771 = vmatprep.subr.mxu0 0.0
  %7772 = vmatpush1.msra.mxu0 0.0
  %7773 = vmatprep.subr.mxu0 0.0
  %7774 = vmatpush1.msra.mxu0 0.0
  %7775 = vmatprep.subr.mxu0 0.0
  %7776 = vmatpush1.msra.mxu0 0.0
  %7777 = vmatprep.subr.mxu0 0.0
  %7778 = vmatpush1.msra.mxu0 0.0
  %7779 = vmatprep.subr.mxu0 0.0
  %7780 = vmatpush1.msra.mxu0 0.0
  %7781 = vmatprep.subr.mxu0 0.0
  %7782 = vmatpush1.msra.mxu0 0.0
  %7783 = vmatprep.subr.mxu0 0.0
  %7784 = vmatpush1.msra.mxu0 0.0
  %7785 = vmatprep.subr.mxu0 0.0
  %7786 = vmatpush1.msra.mxu0 0.0
  %7787 = vmatprep.subr.mxu0 0.0
  %7788 = vmatpush1.msra.mxu0 0.0
  %7789 = vmatprep.subr.mxu0 0.0
  %7790 = vmatpush1.msra.mxu0 0.0
  %7791 = vmatprep.subr.mxu0 0.0
  %7792 = vmatpush1.msra.mxu0 0.0
  %7793 = vmatprep.subr.mxu0 0.0
  %7794 = vmatpush1.msra.mxu0 0.0
  %7795 = vmatprep.subr.mxu0 0.0
  %7796 = vmatpush1.msra.mxu0 0.0
  %7797 = vmatprep.subr.mxu0 0.0
  %7798 = vmatpush1.msra.mxu0 0.0
  %7799 = vmatprep.subr.mxu0 0.0
  %7800 = vmatpush1.msra.mxu0 0.0
  %7801 = vmatprep.subr.mxu0 0.0
  %7802 = vmatpush1.msra.mxu0 0.0
  %7803 = vmatprep.subr.mxu0 0.0
  %7804 = vmatpush1.msra.mxu0 0.0
  %7805 = vmatprep.subr.mxu0 0.0
  %7806 = vmatpush1.msra.mxu0 0.0
  %7807 = vmatprep.subr.mxu0 0.0
  %7808 = vmatpush1.msra.mxu0 0.0
  %7809 = vmatprep.subr.mxu0 0.0
  %7810 = vmatpush1.msra.mxu0 0.0
  %7811 = vmatprep.subr.mxu0 0.0
  %7812 = vmatpush1.msra.mxu0 0.0
  %7813 = vmatprep.subr.mxu0 0.0
  %7814 = vmatpush1.msra.mxu0 0.0
  %7815 = vmatprep.subr.mxu0 0.0
  %7816 = vmatpush1.msra.mxu0 0.0
  %7817 = vmatprep.subr.mxu0 0.0
  %7818 = vmatpush1.msra.mxu0 0.0
  %7819 = vmatprep.subr.mxu0 0.0
  %7820 = vmatpush1.msra.mxu0 0.0
  %7821 = vmatprep.subr.mxu0 0.0
  %7822 = vmatpush1.msra.mxu0 0.0
  %7823 = vmatprep.subr.mxu0 0.0
  %7824 = vmatpush1.msra.mxu0 0.0
  %7825 = vmatprep.subr.mxu0 0.0
  %7826 = vmatpush1.msra.mxu0 0.0
  %7827 = vmatprep.subr.mxu0 0.0
  %7828 = vmatpush1.msra.mxu0 0.0
  %7829 = vmatprep.mubr.f32.mxu0 0.0
  %7830 = vmatmul.mubr.f32.gmra.mrb[0].mxu0 %v7754
  %v7831 = vpop.f32.mrb[0].mxu0
  %v7832 = vadd.f32 0.0, %v7831
  %v7833 = vpop.f32.mrb[0].mxu0
  %7834 = vmatprep.mubr.f32.mxu0 0.0
  %7835 = vmatmul.mubr.f32.gmra.mrb[0].mxu0 %v7757
  %v7836 = vpop.f32.mrb[0].mxu0
  %v7837 = vadd.f32 0.0, %v7836
  %v7838 = vpop.f32.mrb[0].mxu0
  %7839 = vmatprep.mubr.f32.mxu0 0.0
  %7840 = vmatmul.mubr.f32.gmra.mrb[0].mxu0 %v7760
  %v7841 = vpop.f32.mrb[0].mxu0
  %v7842 = vadd.f32 0.0, %v7841
  %v7843 = vpop.f32.mrb[0].mxu0
  %7844 = vmatprep.mubr.f32.mxu0 0.0
  %7845 = vmatmul.mubr.f32.gmra.mrb[0].mxu0 %v7763
  %v7846 = vpop.f32.mrb[0].mxu0
  %v7847 = vadd.f32 0.0, %v7846
  %v7848 = vpop.f32.mrb[0].mxu0
  %7849 = vdwg.mxu0
  %v7850 = vadd.f32 %v7741, %v7832
  %v7851 = vadd.f32 %v7742, %v7837
  %v7852 = vadd.f32 %v7743, %v7842
  %v7853 = vadd.f32 %v7744, %v7847
  %s7854 = scalar_lea.vmem %s10, 288
  %v7855 = vld [vmem:[%s7854] sm:$0xff]
  %v7856 = vld [vmem:[%s7854 + $0x8] sm:$0xff]
  %v7857 = vld [vmem:[%s7854 + $0x10] sm:$0xff]
  %v7858 = vld [vmem:[%s7854 + $0x18] sm:$0xff]
  %7859 = vrot.lane.b32.xlu0 %v6892, 115
  %v7860 = vpop.permute.xlu0 %7859
  %v7863 = vsel %vm2587, %v7855, 0
  %v7866 = vsel %vm2587, %v7856, 0
  %v7869 = vsel %vm2587, %v7857, 0
  %v7872 = vsel %vm2587, %v7858, 0
  %7874 = vmatprep.subr.mxu0 0.0
  %7875 = vmatpush1.msra.mxu0 %v7860
  %7876 = vmatprep.subr.mxu0 0.0
  %7877 = vmatpush1.msra.mxu0 0.0
  %7878 = vmatprep.subr.mxu0 0.0
  %7879 = vmatpush1.msra.mxu0 0.0
  %7880 = vmatprep.subr.mxu0 0.0
  %7881 = vmatpush1.msra.mxu0 0.0
  %7882 = vmatprep.subr.mxu0 0.0
  %7883 = vmatpush1.msra.mxu0 0.0
  %7884 = vmatprep.subr.mxu0 0.0
  %7885 = vmatpush1.msra.mxu0 0.0
  %7886 = vmatprep.subr.mxu0 0.0
  %7887 = vmatpush1.msra.mxu0 0.0
  %7888 = vmatprep.subr.mxu0 0.0
  %7889 = vmatpush1.msra.mxu0 0.0
  %7890 = vmatprep.subr.mxu0 0.0
  %7891 = vmatpush1.msra.mxu0 0.0
  %7892 = vmatprep.subr.mxu0 0.0
  %7893 = vmatpush1.msra.mxu0 0.0
  %7894 = vmatprep.subr.mxu0 0.0
  %7895 = vmatpush1.msra.mxu0 0.0
  %7896 = vmatprep.subr.mxu0 0.0
  %7897 = vmatpush1.msra.mxu0 0.0
  %7898 = vmatprep.subr.mxu0 0.0
  %7899 = vmatpush1.msra.mxu0 0.0
  %7900 = vmatprep.subr.mxu0 0.0
  %7901 = vmatpush1.msra.mxu0 0.0
  %7902 = vmatprep.subr.mxu0 0.0
  %7903 = vmatpush1.msra.mxu0 0.0
  %7904 = vmatprep.subr.mxu0 0.0
  %7905 = vmatpush1.msra.mxu0 0.0
  %7906 = vmatprep.subr.mxu0 0.0
  %7907 = vmatpush1.msra.mxu0 0.0
  %7908 = vmatprep.subr.mxu0 0.0
  %7909 = vmatpush1.msra.mxu0 0.0
  %7910 = vmatprep.subr.mxu0 0.0
  %7911 = vmatpush1.msra.mxu0 0.0
  %7912 = vmatprep.subr.mxu0 0.0
  %7913 = vmatpush1.msra.mxu0 0.0
  %7914 = vmatprep.subr.mxu0 0.0
  %7915 = vmatpush1.msra.mxu0 0.0
  %7916 = vmatprep.subr.mxu0 0.0
  %7917 = vmatpush1.msra.mxu0 0.0
  %7918 = vmatprep.subr.mxu0 0.0
  %7919 = vmatpush1.msra.mxu0 0.0
  %7920 = vmatprep.subr.mxu0 0.0
  %7921 = vmatpush1.msra.mxu0 0.0
  %7922 = vmatprep.subr.mxu0 0.0
  %7923 = vmatpush1.msra.mxu0 0.0
  %7924 = vmatprep.subr.mxu0 0.0
  %7925 = vmatpush1.msra.mxu0 0.0
  %7926 = vmatprep.subr.mxu0 0.0
  %7927 = vmatpush1.msra.mxu0 0.0
  %7928 = vmatprep.subr.mxu0 0.0
  %7929 = vmatpush1.msra.mxu0 0.0
  %7930 = vmatprep.subr.mxu0 0.0
  %7931 = vmatpush1.msra.mxu0 0.0
  %7932 = vmatprep.subr.mxu0 0.0
  %7933 = vmatpush1.msra.mxu0 0.0
  %7934 = vmatprep.subr.mxu0 0.0
  %7935 = vmatpush1.msra.mxu0 0.0
  %7936 = vmatprep.subr.mxu0 0.0
  %7937 = vmatpush1.msra.mxu0 0.0
  %7938 = vmatprep.mubr.f32.mxu0 0.0
  %7939 = vmatmul.mubr.f32.gmra.mrb[0].mxu0 %v7863
  %v7940 = vpop.f32.mrb[0].mxu0
  %v7941 = vadd.f32 0.0, %v7940
  %v7942 = vpop.f32.mrb[0].mxu0
  %7943 = vmatprep.mubr.f32.mxu0 0.0
  %7944 = vmatmul.mubr.f32.gmra.mrb[0].mxu0 %v7866
  %v7945 = vpop.f32.mrb[0].mxu0
  %v7946 = vadd.f32 0.0, %v7945
  %v7947 = vpop.f32.mrb[0].mxu0
  %7948 = vmatprep.mubr.f32.mxu0 0.0
  %7949 = vmatmul.mubr.f32.gmra.mrb[0].mxu0 %v7869
  %v7950 = vpop.f32.mrb[0].mxu0
  %v7951 = vadd.f32 0.0, %v7950
  %v7952 = vpop.f32.mrb[0].mxu0
  %7953 = vmatprep.mubr.f32.mxu0 0.0
  %7954 = vmatmul.mubr.f32.gmra.mrb[0].mxu0 %v7872
  %v7955 = vpop.f32.mrb[0].mxu0
  %v7956 = vadd.f32 0.0, %v7955
  %v7957 = vpop.f32.mrb[0].mxu0
  %7958 = vdwg.mxu0
  %v7959 = vadd.f32 %v7850, %v7941
  %v7960 = vadd.f32 %v7851, %v7946
  %v7961 = vadd.f32 %v7852, %v7951
  %v7962 = vadd.f32 %v7853, %v7956
  %s7963 = scalar_lea.vmem %s10, 320
  %v7964 = vld [vmem:[%s7963] sm:$0xff]
  %v7965 = vld [vmem:[%s7963 + $0x8] sm:$0xff]
  %v7966 = vld [vmem:[%s7963 + $0x10] sm:$0xff]
  %v7967 = vld [vmem:[%s7963 + $0x18] sm:$0xff]
  %7968 = vrot.lane.b32.xlu0 %v6892, 114
  %v7969 = vpop.permute.xlu0 %7968
  %v7972 = vsel %vm2587, %v7964, 0
  %v7975 = vsel %vm2587, %v7965, 0
  %v7978 = vsel %vm2587, %v7966, 0
  %v7981 = vsel %vm2587, %v7967, 0
  %7983 = vmatprep.subr.mxu0 0.0
  %7984 = vmatpush1.msra.mxu0 %v7969
  %7985 = vmatprep.subr.mxu0 0.0
  %7986 = vmatpush1.msra.mxu0 0.0
  %7987 = vmatprep.subr.mxu0 0.0
  %7988 = vmatpush1.msra.mxu0 0.0
  %7989 = vmatprep.subr.mxu0 0.0
  %7990 = vmatpush1.msra.mxu0 0.0
  %7991 = vmatprep.subr.mxu0 0.0
  %7992 = vmatpush1.msra.mxu0 0.0
  %7993 = vmatprep.subr.mxu0 0.0
  %7994 = vmatpush1.msra.mxu0 0.0
  %7995 = vmatprep.subr.mxu0 0.0
  %7996 = vmatpush1.msra.mxu0 0.0
  %7997 = vmatprep.subr.mxu0 0.0
  %7998 = vmatpush1.msra.mxu0 0.0
  %7999 = vmatprep.subr.mxu0 0.0
  %8000 = vmatpush1.msra.mxu0 0.0
  %8001 = vmatprep.subr.mxu0 0.0
  %8002 = vmatpush1.msra.mxu0 0.0
  %8003 = vmatprep.subr.mxu0 0.0
  %8004 = vmatpush1.msra.mxu0 0.0
  %8005 = vmatprep.subr.mxu0 0.0
  %8006 = vmatpush1.msra.mxu0 0.0
  %8007 = vmatprep.subr.mxu0 0.0
  %8008 = vmatpush1.msra.mxu0 0.0
  %8009 = vmatprep.subr.mxu0 0.0
  %8010 = vmatpush1.msra.mxu0 0.0
  %8011 = vmatprep.subr.mxu0 0.0
  %8012 = vmatpush1.msra.mxu0 0.0
  %8013 = vmatprep.subr.mxu0 0.0
  %8014 = vmatpush1.msra.mxu0 0.0
  %8015 = vmatprep.subr.mxu0 0.0
  %8016 = vmatpush1.msra.mxu0 0.0
  %8017 = vmatprep.subr.mxu0 0.0
  %8018 = vmatpush1.msra.mxu0 0.0
  %8019 = vmatprep.subr.mxu0 0.0
  %8020 = vmatpush1.msra.mxu0 0.0
  %8021 = vmatprep.subr.mxu0 0.0
  %8022 = vmatpush1.msra.mxu0 0.0
  %8023 = vmatprep.subr.mxu0 0.0
  %8024 = vmatpush1.msra.mxu0 0.0
  %8025 = vmatprep.subr.mxu0 0.0
  %8026 = vmatpush1.msra.mxu0 0.0
  %8027 = vmatprep.subr.mxu0 0.0
  %8028 = vmatpush1.msra.mxu0 0.0
  %8029 = vmatprep.subr.mxu0 0.0
  %8030 = vmatpush1.msra.mxu0 0.0
  %8031 = vmatprep.subr.mxu0 0.0
  %8032 = vmatpush1.msra.mxu0 0.0
  %8033 = vmatprep.subr.mxu0 0.0
  %8034 = vmatpush1.msra.mxu0 0.0
  %8035 = vmatprep.subr.mxu0 0.0
  %8036 = vmatpush1.msra.mxu0 0.0
  %8037 = vmatprep.subr.mxu0 0.0
  %8038 = vmatpush1.msra.mxu0 0.0
  %8039 = vmatprep.subr.mxu0 0.0
  %8040 = vmatpush1.msra.mxu0 0.0
  %8041 = vmatprep.subr.mxu0 0.0
  %8042 = vmatpush1.msra.mxu0 0.0
  %8043 = vmatprep.subr.mxu0 0.0
  %8044 = vmatpush1.msra.mxu0 0.0
  %8045 = vmatprep.subr.mxu0 0.0
  %8046 = vmatpush1.msra.mxu0 0.0
  %8047 = vmatprep.mubr.f32.mxu0 0.0
  %8048 = vmatmul.mubr.f32.gmra.mrb[0].mxu0 %v7972
  %v8049 = vpop.f32.mrb[0].mxu0
  %v8050 = vadd.f32 0.0, %v8049
  %v8051 = vpop.f32.mrb[0].mxu0
  %8052 = vmatprep.mubr.f32.mxu0 0.0
  %8053 = vmatmul.mubr.f32.gmra.mrb[0].mxu0 %v7975
  %v8054 = vpop.f32.mrb[0].mxu0
  %v8055 = vadd.f32 0.0, %v8054
  %v8056 = vpop.f32.mrb[0].mxu0
  %8057 = vmatprep.mubr.f32.mxu0 0.0
  %8058 = vmatmul.mubr.f32.gmra.mrb[0].mxu0 %v7978
  %v8059 = vpop.f32.mrb[0].mxu0
  %v8060 = vadd.f32 0.0, %v8059
  %v8061 = vpop.f32.mrb[0].mxu0
  %8062 = vmatprep.mubr.f32.mxu0 0.0
  %8063 = vmatmul.mubr.f32.gmra.mrb[0].mxu0 %v7981
  %v8064 = vpop.f32.mrb[0].mxu0
  %v8065 = vadd.f32 0.0, %v8064
  %v8066 = vpop.f32.mrb[0].mxu0
  %8067 = vdwg.mxu0
  %v8068 = vadd.f32 %v7959, %v8050
  %v8069 = vadd.f32 %v7960, %v8055
  %v8070 = vadd.f32 %v7961, %v8060
  %v8071 = vadd.f32 %v7962, %v8065
  %s8072 = scalar_lea.vmem %s10, 352
  %v8073 = vld [vmem:[%s8072] sm:$0xff]
  %v8074 = vld [vmem:[%s8072 + $0x8] sm:$0xff]
  %v8075 = vld [vmem:[%s8072 + $0x10] sm:$0xff]
  %v8076 = vld [vmem:[%s8072 + $0x18] sm:$0xff]
  %8077 = vrot.lane.b32.xlu0 %v6892, 113
  %v8078 = vpop.permute.xlu0 %8077
  %v8081 = vsel %vm2587, %v8073, 0
  %v8084 = vsel %vm2587, %v8074, 0
  %v8087 = vsel %vm2587, %v8075, 0
  %v8090 = vsel %vm2587, %v8076, 0
  %8092 = vmatprep.subr.mxu0 0.0
  %8093 = vmatpush1.msra.mxu0 %v8078
  %8094 = vmatprep.subr.mxu0 0.0
  %8095 = vmatpush1.msra.mxu0 0.0
  %8096 = vmatprep.subr.mxu0 0.0
  %8097 = vmatpush1.msra.mxu0 0.0
  %8098 = vmatprep.subr.mxu0 0.0
  %8099 = vmatpush1.msra.mxu0 0.0
  %8100 = vmatprep.subr.mxu0 0.0
  %8101 = vmatpush1.msra.mxu0 0.0
  %8102 = vmatprep.subr.mxu0 0.0
  %8103 = vmatpush1.msra.mxu0 0.0
  %8104 = vmatprep.subr.mxu0 0.0
  %8105 = vmatpush1.msra.mxu0 0.0
  %8106 = vmatprep.subr.mxu0 0.0
  %8107 = vmatpush1.msra.mxu0 0.0
  %8108 = vmatprep.subr.mxu0 0.0
  %8109 = vmatpush1.msra.mxu0 0.0
  %8110 = vmatprep.subr.mxu0 0.0
  %8111 = vmatpush1.msra.mxu0 0.0
  %8112 = vmatprep.subr.mxu0 0.0
  %8113 = vmatpush1.msra.mxu0 0.0
  %8114 = vmatprep.subr.mxu0 0.0
  %8115 = vmatpush1.msra.mxu0 0.0
  %8116 = vmatprep.subr.mxu0 0.0
  %8117 = vmatpush1.msra.mxu0 0.0
  %8118 = vmatprep.subr.mxu0 0.0
  %8119 = vmatpush1.msra.mxu0 0.0
  %8120 = vmatprep.subr.mxu0 0.0
  %8121 = vmatpush1.msra.mxu0 0.0
  %8122 = vmatprep.subr.mxu0 0.0
  %8123 = vmatpush1.msra.mxu0 0.0
  %8124 = vmatprep.subr.mxu0 0.0
  %8125 = vmatpush1.msra.mxu0 0.0
  %8126 = vmatprep.subr.mxu0 0.0
  %8127 = vmatpush1.msra.mxu0 0.0
  %8128 = vmatprep.subr.mxu0 0.0
  %8129 = vmatpush1.msra.mxu0 0.0
  %8130 = vmatprep.subr.mxu0 0.0
  %8131 = vmatpush1.msra.mxu0 0.0
  %8132 = vmatprep.subr.mxu0 0.0
  %8133 = vmatpush1.msra.mxu0 0.0
  %8134 = vmatprep.subr.mxu0 0.0
  %8135 = vmatpush1.msra.mxu0 0.0
  %8136 = vmatprep.subr.mxu0 0.0
  %8137 = vmatpush1.msra.mxu0 0.0
  %8138 = vmatprep.subr.mxu0 0.0
  %8139 = vmatpush1.msra.mxu0 0.0
  %8140 = vmatprep.subr.mxu0 0.0
  %8141 = vmatpush1.msra.mxu0 0.0
  %8142 = vmatprep.subr.mxu0 0.0
  %8143 = vmatpush1.msra.mxu0 0.0
  %8144 = vmatprep.subr.mxu0 0.0
  %8145 = vmatpush1.msra.mxu0 0.0
  %8146 = vmatprep.subr.mxu0 0.0
  %8147 = vmatpush1.msra.mxu0 0.0
  %8148 = vmatprep.subr.mxu0 0.0
  %8149 = vmatpush1.msra.mxu0 0.0
  %8150 = vmatprep.subr.mxu0 0.0
  %8151 = vmatpush1.msra.mxu0 0.0
  %8152 = vmatprep.subr.mxu0 0.0
  %8153 = vmatpush1.msra.mxu0 0.0
  %8154 = vmatprep.subr.mxu0 0.0
  %8155 = vmatpush1.msra.mxu0 0.0
  %8156 = vmatprep.mubr.f32.mxu0 0.0
  %8157 = vmatmul.mubr.f32.gmra.mrb[0].mxu0 %v8081
  %v8158 = vpop.f32.mrb[0].mxu0
  %v8159 = vadd.f32 0.0, %v8158
  %v8160 = vpop.f32.mrb[0].mxu0
  %8161 = vmatprep.mubr.f32.mxu0 0.0
  %8162 = vmatmul.mubr.f32.gmra.mrb[0].mxu0 %v8084
  %v8163 = vpop.f32.mrb[0].mxu0
  %v8164 = vadd.f32 0.0, %v8163
  %v8165 = vpop.f32.mrb[0].mxu0
  %8166 = vmatprep.mubr.f32.mxu0 0.0
  %8167 = vmatmul.mubr.f32.gmra.mrb[0].mxu0 %v8087
  %v8168 = vpop.f32.mrb[0].mxu0
  %v8169 = vadd.f32 0.0, %v8168
  %v8170 = vpop.f32.mrb[0].mxu0
  %8171 = vmatprep.mubr.f32.mxu0 0.0
  %8172 = vmatmul.mubr.f32.gmra.mrb[0].mxu0 %v8090
  %v8173 = vpop.f32.mrb[0].mxu0
  %v8174 = vadd.f32 0.0, %v8173
  %v8175 = vpop.f32.mrb[0].mxu0
  %8176 = vdwg.mxu0
  %v8177 = vadd.f32 %v8068, %v8159
  %v8178 = vadd.f32 %v8069, %v8164
  %v8179 = vadd.f32 %v8070, %v8169
  %v8180 = vadd.f32 %v8071, %v8174
  %s8181 = scalar_lea.vmem %s10, 384
  %v8182 = vld [vmem:[%s8181] sm:$0xff]
  %v8183 = vld [vmem:[%s8181 + $0x8] sm:$0xff]
  %v8184 = vld [vmem:[%s8181 + $0x10] sm:$0xff]
  %v8185 = vld [vmem:[%s8181 + $0x18] sm:$0xff]
  %8186 = vrot.lane.b32.xlu0 %v6892, 110
  %v8187 = vpop.permute.xlu0 %8186
  %v8190 = vsel %vm2587, %v8182, 0
  %v8193 = vsel %vm2587, %v8183, 0
  %v8196 = vsel %vm2587, %v8184, 0
  %v8199 = vsel %vm2587, %v8185, 0
  %8201 = vmatprep.subr.mxu0 0.0
  %8202 = vmatpush1.msra.mxu0 %v8187
  %8203 = vmatprep.subr.mxu0 0.0
  %8204 = vmatpush1.msra.mxu0 0.0
  %8205 = vmatprep.subr.mxu0 0.0
  %8206 = vmatpush1.msra.mxu0 0.0
  %8207 = vmatprep.subr.mxu0 0.0
  %8208 = vmatpush1.msra.mxu0 0.0
  %8209 = vmatprep.subr.mxu0 0.0
  %8210 = vmatpush1.msra.mxu0 0.0
  %8211 = vmatprep.subr.mxu0 0.0
  %8212 = vmatpush1.msra.mxu0 0.0
  %8213 = vmatprep.subr.mxu0 0.0
  %8214 = vmatpush1.msra.mxu0 0.0
  %8215 = vmatprep.subr.mxu0 0.0
  %8216 = vmatpush1.msra.mxu0 0.0
  %8217 = vmatprep.subr.mxu0 0.0
  %8218 = vmatpush1.msra.mxu0 0.0
  %8219 = vmatprep.subr.mxu0 0.0
  %8220 = vmatpush1.msra.mxu0 0.0
  %8221 = vmatprep.subr.mxu0 0.0
  %8222 = vmatpush1.msra.mxu0 0.0
  %8223 = vmatprep.subr.mxu0 0.0
  %8224 = vmatpush1.msra.mxu0 0.0
  %8225 = vmatprep.subr.mxu0 0.0
  %8226 = vmatpush1.msra.mxu0 0.0
  %8227 = vmatprep.subr.mxu0 0.0
  %8228 = vmatpush1.msra.mxu0 0.0
  %8229 = vmatprep.subr.mxu0 0.0
  %8230 = vmatpush1.msra.mxu0 0.0
  %8231 = vmatprep.subr.mxu0 0.0
  %8232 = vmatpush1.msra.mxu0 0.0
  %8233 = vmatprep.subr.mxu0 0.0
  %8234 = vmatpush1.msra.mxu0 0.0
  %8235 = vmatprep.subr.mxu0 0.0
  %8236 = vmatpush1.msra.mxu0 0.0
  %8237 = vmatprep.subr.mxu0 0.0
  %8238 = vmatpush1.msra.mxu0 0.0
  %8239 = vmatprep.subr.mxu0 0.0
  %8240 = vmatpush1.msra.mxu0 0.0
  %8241 = vmatprep.subr.mxu0 0.0
  %8242 = vmatpush1.msra.mxu0 0.0
  %8243 = vmatprep.subr.mxu0 0.0
  %8244 = vmatpush1.msra.mxu0 0.0
  %8245 = vmatprep.subr.mxu0 0.0
  %8246 = vmatpush1.msra.mxu0 0.0
  %8247 = vmatprep.subr.mxu0 0.0
  %8248 = vmatpush1.msra.mxu0 0.0
  %8249 = vmatprep.subr.mxu0 0.0
  %8250 = vmatpush1.msra.mxu0 0.0
  %8251 = vmatprep.subr.mxu0 0.0
  %8252 = vmatpush1.msra.mxu0 0.0
  %8253 = vmatprep.subr.mxu0 0.0
  %8254 = vmatpush1.msra.mxu0 0.0
  %8255 = vmatprep.subr.mxu0 0.0
  %8256 = vmatpush1.msra.mxu0 0.0
  %8257 = vmatprep.subr.mxu0 0.0
  %8258 = vmatpush1.msra.mxu0 0.0
  %8259 = vmatprep.subr.mxu0 0.0
  %8260 = vmatpush1.msra.mxu0 0.0
  %8261 = vmatprep.subr.mxu0 0.0
  %8262 = vmatpush1.msra.mxu0 0.0
  %8263 = vmatprep.subr.mxu0 0.0
  %8264 = vmatpush1.msra.mxu0 0.0
  %8265 = vmatprep.mubr.f32.mxu0 0.0
  %8266 = vmatmul.mubr.f32.gmra.mrb[0].mxu0 %v8190
  %v8267 = vpop.f32.mrb[0].mxu0
  %v8268 = vadd.f32 0.0, %v8267
  %v8269 = vpop.f32.mrb[0].mxu0
  %8270 = vmatprep.mubr.f32.mxu0 0.0
  %8271 = vmatmul.mubr.f32.gmra.mrb[0].mxu0 %v8193
  %v8272 = vpop.f32.mrb[0].mxu0
  %v8273 = vadd.f32 0.0, %v8272
  %v8274 = vpop.f32.mrb[0].mxu0
  %8275 = vmatprep.mubr.f32.mxu0 0.0
  %8276 = vmatmul.mubr.f32.gmra.mrb[0].mxu0 %v8196
  %v8277 = vpop.f32.mrb[0].mxu0
  %v8278 = vadd.f32 0.0, %v8277
  %v8279 = vpop.f32.mrb[0].mxu0
  %8280 = vmatprep.mubr.f32.mxu0 0.0
  %8281 = vmatmul.mubr.f32.gmra.mrb[0].mxu0 %v8199
  %v8282 = vpop.f32.mrb[0].mxu0
  %v8283 = vadd.f32 0.0, %v8282
  %v8284 = vpop.f32.mrb[0].mxu0
  %8285 = vdwg.mxu0
  %v8286 = vadd.f32 %v8177, %v8268
  %v8287 = vadd.f32 %v8178, %v8273
  %v8288 = vadd.f32 %v8179, %v8278
  %v8289 = vadd.f32 %v8180, %v8283
  %s8290 = scalar_lea.vmem %s10, 416
  %v8291 = vld [vmem:[%s8290] sm:$0xff]
  %v8292 = vld [vmem:[%s8290 + $0x8] sm:$0xff]
  %v8293 = vld [vmem:[%s8290 + $0x10] sm:$0xff]
  %v8294 = vld [vmem:[%s8290 + $0x18] sm:$0xff]
  %8295 = vrot.lane.b32.xlu0 %v6892, 109
  %v8296 = vpop.permute.xlu0 %8295
  %v8299 = vsel %vm2587, %v8291, 0
  %v8302 = vsel %vm2587, %v8292, 0
  %v8305 = vsel %vm2587, %v8293, 0
  %v8308 = vsel %vm2587, %v8294, 0
  %8310 = vmatprep.subr.mxu0 0.0
  %8311 = vmatpush1.msra.mxu0 %v8296
  %8312 = vmatprep.subr.mxu0 0.0
  %8313 = vmatpush1.msra.mxu0 0.0
  %8314 = vmatprep.subr.mxu0 0.0
  %8315 = vmatpush1.msra.mxu0 0.0
  %8316 = vmatprep.subr.mxu0 0.0
  %8317 = vmatpush1.msra.mxu0 0.0
  %8318 = vmatprep.subr.mxu0 0.0
  %8319 = vmatpush1.msra.mxu0 0.0
  %8320 = vmatprep.subr.mxu0 0.0
  %8321 = vmatpush1.msra.mxu0 0.0
  %8322 = vmatprep.subr.mxu0 0.0
  %8323 = vmatpush1.msra.mxu0 0.0
  %8324 = vmatprep.subr.mxu0 0.0
  %8325 = vmatpush1.msra.mxu0 0.0
  %8326 = vmatprep.subr.mxu0 0.0
  %8327 = vmatpush1.msra.mxu0 0.0
  %8328 = vmatprep.subr.mxu0 0.0
  %8329 = vmatpush1.msra.mxu0 0.0
  %8330 = vmatprep.subr.mxu0 0.0
  %8331 = vmatpush1.msra.mxu0 0.0
  %8332 = vmatprep.subr.mxu0 0.0
  %8333 = vmatpush1.msra.mxu0 0.0
  %8334 = vmatprep.subr.mxu0 0.0
  %8335 = vmatpush1.msra.mxu0 0.0
  %8336 = vmatprep.subr.mxu0 0.0
  %8337 = vmatpush1.msra.mxu0 0.0
  %8338 = vmatprep.subr.mxu0 0.0
  %8339 = vmatpush1.msra.mxu0 0.0
  %8340 = vmatprep.subr.mxu0 0.0
  %8341 = vmatpush1.msra.mxu0 0.0
  %8342 = vmatprep.subr.mxu0 0.0
  %8343 = vmatpush1.msra.mxu0 0.0
  %8344 = vmatprep.subr.mxu0 0.0
  %8345 = vmatpush1.msra.mxu0 0.0
  %8346 = vmatprep.subr.mxu0 0.0
  %8347 = vmatpush1.msra.mxu0 0.0
  %8348 = vmatprep.subr.mxu0 0.0
  %8349 = vmatpush1.msra.mxu0 0.0
  %8350 = vmatprep.subr.mxu0 0.0
  %8351 = vmatpush1.msra.mxu0 0.0
  %8352 = vmatprep.subr.mxu0 0.0
  %8353 = vmatpush1.msra.mxu0 0.0
  %8354 = vmatprep.subr.mxu0 0.0
  %8355 = vmatpush1.msra.mxu0 0.0
  %8356 = vmatprep.subr.mxu0 0.0
  %8357 = vmatpush1.msra.mxu0 0.0
  %8358 = vmatprep.subr.mxu0 0.0
  %8359 = vmatpush1.msra.mxu0 0.0
  %8360 = vmatprep.subr.mxu0 0.0
  %8361 = vmatpush1.msra.mxu0 0.0
  %8362 = vmatprep.subr.mxu0 0.0
  %8363 = vmatpush1.msra.mxu0 0.0
  %8364 = vmatprep.subr.mxu0 0.0
  %8365 = vmatpush1.msra.mxu0 0.0
  %8366 = vmatprep.subr.mxu0 0.0
  %8367 = vmatpush1.msra.mxu0 0.0
  %8368 = vmatprep.subr.mxu0 0.0
  %8369 = vmatpush1.msra.mxu0 0.0
  %8370 = vmatprep.subr.mxu0 0.0
  %8371 = vmatpush1.msra.mxu0 0.0
  %8372 = vmatprep.subr.mxu0 0.0
  %8373 = vmatpush1.msra.mxu0 0.0
  %8374 = vmatprep.mubr.f32.mxu0 0.0
  %8375 = vmatmul.mubr.f32.gmra.mrb[0].mxu0 %v8299
  %v8376 = vpop.f32.mrb[0].mxu0
  %v8377 = vadd.f32 0.0, %v8376
  %v8378 = vpop.f32.mrb[0].mxu0
  %8379 = vmatprep.mubr.f32.mxu0 0.0
  %8380 = vmatmul.mubr.f32.gmra.mrb[0].mxu0 %v8302
  %v8381 = vpop.f32.mrb[0].mxu0
  %v8382 = vadd.f32 0.0, %v8381
  %v8383 = vpop.f32.mrb[0].mxu0
  %8384 = vmatprep.mubr.f32.mxu0 0.0
  %8385 = vmatmul.mubr.f32.gmra.mrb[0].mxu0 %v8305
  %v8386 = vpop.f32.mrb[0].mxu0
  %v8387 = vadd.f32 0.0, %v8386
  %v8388 = vpop.f32.mrb[0].mxu0
  %8389 = vmatprep.mubr.f32.mxu0 0.0
  %8390 = vmatmul.mubr.f32.gmra.mrb[0].mxu0 %v8308
  %v8391 = vpop.f32.mrb[0].mxu0
  %v8392 = vadd.f32 0.0, %v8391
  %v8393 = vpop.f32.mrb[0].mxu0
  %8394 = vdwg.mxu0
  %v8395 = vadd.f32 %v8286, %v8377
  %v8396 = vadd.f32 %v8287, %v8382
  %v8397 = vadd.f32 %v8288, %v8387
  %v8398 = vadd.f32 %v8289, %v8392
  %s8399 = scalar_lea.vmem %s10, 448
  %v8400 = vld [vmem:[%s8399] sm:$0xff]
  %v8401 = vld [vmem:[%s8399 + $0x8] sm:$0xff]
  %v8402 = vld [vmem:[%s8399 + $0x10] sm:$0xff]
  %v8403 = vld [vmem:[%s8399 + $0x18] sm:$0xff]
  %8404 = vrot.lane.b32.xlu0 %v6892, 108
  %v8405 = vpop.permute.xlu0 %8404
  %v8408 = vsel %vm2587, %v8400, 0
  %v8411 = vsel %vm2587, %v8401, 0
  %v8414 = vsel %vm2587, %v8402, 0
  %v8417 = vsel %vm2587, %v8403, 0
  %8419 = vmatprep.subr.mxu0 0.0
  %8420 = vmatpush1.msra.mxu0 %v8405
  %8421 = vmatprep.subr.mxu0 0.0
  %8422 = vmatpush1.msra.mxu0 0.0
  %8423 = vmatprep.subr.mxu0 0.0
  %8424 = vmatpush1.msra.mxu0 0.0
  %8425 = vmatprep.subr.mxu0 0.0
  %8426 = vmatpush1.msra.mxu0 0.0
  %8427 = vmatprep.subr.mxu0 0.0
  %8428 = vmatpush1.msra.mxu0 0.0
  %8429 = vmatprep.subr.mxu0 0.0
  %8430 = vmatpush1.msra.mxu0 0.0
  %8431 = vmatprep.subr.mxu0 0.0
  %8432 = vmatpush1.msra.mxu0 0.0
  %8433 = vmatprep.subr.mxu0 0.0
  %8434 = vmatpush1.msra.mxu0 0.0
  %8435 = vmatprep.subr.mxu0 0.0
  %8436 = vmatpush1.msra.mxu0 0.0
  %8437 = vmatprep.subr.mxu0 0.0
  %8438 = vmatpush1.msra.mxu0 0.0
  %8439 = vmatprep.subr.mxu0 0.0
  %8440 = vmatpush1.msra.mxu0 0.0
  %8441 = vmatprep.subr.mxu0 0.0
  %8442 = vmatpush1.msra.mxu0 0.0
  %8443 = vmatprep.subr.mxu0 0.0
  %8444 = vmatpush1.msra.mxu0 0.0
  %8445 = vmatprep.subr.mxu0 0.0
  %8446 = vmatpush1.msra.mxu0 0.0
  %8447 = vmatprep.subr.mxu0 0.0
  %8448 = vmatpush1.msra.mxu0 0.0
  %8449 = vmatprep.subr.mxu0 0.0
  %8450 = vmatpush1.msra.mxu0 0.0
  %8451 = vmatprep.subr.mxu0 0.0
  %8452 = vmatpush1.msra.mxu0 0.0
  %8453 = vmatprep.subr.mxu0 0.0
  %8454 = vmatpush1.msra.mxu0 0.0
  %8455 = vmatprep.subr.mxu0 0.0
  %8456 = vmatpush1.msra.mxu0 0.0
  %8457 = vmatprep.subr.mxu0 0.0
  %8458 = vmatpush1.msra.mxu0 0.0
  %8459 = vmatprep.subr.mxu0 0.0
  %8460 = vmatpush1.msra.mxu0 0.0
  %8461 = vmatprep.subr.mxu0 0.0
  %8462 = vmatpush1.msra.mxu0 0.0
  %8463 = vmatprep.subr.mxu0 0.0
  %8464 = vmatpush1.msra.mxu0 0.0
  %8465 = vmatprep.subr.mxu0 0.0
  %8466 = vmatpush1.msra.mxu0 0.0
  %8467 = vmatprep.subr.mxu0 0.0
  %8468 = vmatpush1.msra.mxu0 0.0
  %8469 = vmatprep.subr.mxu0 0.0
  %8470 = vmatpush1.msra.mxu0 0.0
  %8471 = vmatprep.subr.mxu0 0.0
  %8472 = vmatpush1.msra.mxu0 0.0
  %8473 = vmatprep.subr.mxu0 0.0
  %8474 = vmatpush1.msra.mxu0 0.0
  %8475 = vmatprep.subr.mxu0 0.0
  %8476 = vmatpush1.msra.mxu0 0.0
  %8477 = vmatprep.subr.mxu0 0.0
  %8478 = vmatpush1.msra.mxu0 0.0
  %8479 = vmatprep.subr.mxu0 0.0
  %8480 = vmatpush1.msra.mxu0 0.0
  %8481 = vmatprep.subr.mxu0 0.0
  %8482 = vmatpush1.msra.mxu0 0.0
  %8483 = vmatprep.mubr.f32.mxu0 0.0
  %8484 = vmatmul.mubr.f32.gmra.mrb[0].mxu0 %v8408
  %v8485 = vpop.f32.mrb[0].mxu0
  %v8486 = vadd.f32 0.0, %v8485
  %v8487 = vpop.f32.mrb[0].mxu0
  %8488 = vmatprep.mubr.f32.mxu0 0.0
  %8489 = vmatmul.mubr.f32.gmra.mrb[0].mxu0 %v8411
  %v8490 = vpop.f32.mrb[0].mxu0
  %v8491 = vadd.f32 0.0, %v8490
  %v8492 = vpop.f32.mrb[0].mxu0
  %8493 = vmatprep.mubr.f32.mxu0 0.0
  %8494 = vmatmul.mubr.f32.gmra.mrb[0].mxu0 %v8414
  %v8495 = vpop.f32.mrb[0].mxu0
  %v8496 = vadd.f32 0.0, %v8495
  %v8497 = vpop.f32.mrb[0].mxu0
  %8498 = vmatprep.mubr.f32.mxu0 0.0
  %8499 = vmatmul.mubr.f32.gmra.mrb[0].mxu0 %v8417
  %v8500 = vpop.f32.mrb[0].mxu0
  %v8501 = vadd.f32 0.0, %v8500
  %v8502 = vpop.f32.mrb[0].mxu0
  %8503 = vdwg.mxu0
  %v8504 = vadd.f32 %v8395, %v8486
  %v8505 = vadd.f32 %v8396, %v8491
  %v8506 = vadd.f32 %v8397, %v8496
  %v8507 = vadd.f32 %v8398, %v8501
  %s8508 = scalar_lea.vmem %s10, 480
  %v8509 = vld [vmem:[%s8508] sm:$0xff]
  %v8510 = vld [vmem:[%s8508 + $0x8] sm:$0xff]
  %v8511 = vld [vmem:[%s8508 + $0x10] sm:$0xff]
  %v8512 = vld [vmem:[%s8508 + $0x18] sm:$0xff]
  %8513 = vrot.lane.b32.xlu0 %v6892, 107
  %v8514 = vpop.permute.xlu0 %8513
  %v8517 = vsel %vm2587, %v8509, 0
  %v8520 = vsel %vm2587, %v8510, 0
  %v8523 = vsel %vm2587, %v8511, 0
  %v8526 = vsel %vm2587, %v8512, 0
  %8528 = vmatprep.subr.mxu0 0.0
  %8529 = vmatpush1.msra.mxu0 %v8514
  %8530 = vmatprep.subr.mxu0 0.0
  %8531 = vmatpush1.msra.mxu0 0.0
  %8532 = vmatprep.subr.mxu0 0.0
  %8533 = vmatpush1.msra.mxu0 0.0
  %8534 = vmatprep.subr.mxu0 0.0
  %8535 = vmatpush1.msra.mxu0 0.0
  %8536 = vmatprep.subr.mxu0 0.0
  %8537 = vmatpush1.msra.mxu0 0.0
  %8538 = vmatprep.subr.mxu0 0.0
  %8539 = vmatpush1.msra.mxu0 0.0
  %8540 = vmatprep.subr.mxu0 0.0
  %8541 = vmatpush1.msra.mxu0 0.0
  %8542 = vmatprep.subr.mxu0 0.0
  %8543 = vmatpush1.msra.mxu0 0.0
  %8544 = vmatprep.subr.mxu0 0.0
  %8545 = vmatpush1.msra.mxu0 0.0
  %8546 = vmatprep.subr.mxu0 0.0
  %8547 = vmatpush1.msra.mxu0 0.0
  %8548 = vmatprep.subr.mxu0 0.0
  %8549 = vmatpush1.msra.mxu0 0.0
  %8550 = vmatprep.subr.mxu0 0.0
  %8551 = vmatpush1.msra.mxu0 0.0
  %8552 = vmatprep.subr.mxu0 0.0
  %8553 = vmatpush1.msra.mxu0 0.0
  %8554 = vmatprep.subr.mxu0 0.0
  %8555 = vmatpush1.msra.mxu0 0.0
  %8556 = vmatprep.subr.mxu0 0.0
  %8557 = vmatpush1.msra.mxu0 0.0
  %8558 = vmatprep.subr.mxu0 0.0
  %8559 = vmatpush1.msra.mxu0 0.0
  %8560 = vmatprep.subr.mxu0 0.0
  %8561 = vmatpush1.msra.mxu0 0.0
  %8562 = vmatprep.subr.mxu0 0.0
  %8563 = vmatpush1.msra.mxu0 0.0
  %8564 = vmatprep.subr.mxu0 0.0
  %8565 = vmatpush1.msra.mxu0 0.0
  %8566 = vmatprep.subr.mxu0 0.0
  %8567 = vmatpush1.msra.mxu0 0.0
  %8568 = vmatprep.subr.mxu0 0.0
  %8569 = vmatpush1.msra.mxu0 0.0
  %8570 = vmatprep.subr.mxu0 0.0
  %8571 = vmatpush1.msra.mxu0 0.0
  %8572 = vmatprep.subr.mxu0 0.0
  %8573 = vmatpush1.msra.mxu0 0.0
  %8574 = vmatprep.subr.mxu0 0.0
  %8575 = vmatpush1.msra.mxu0 0.0
  %8576 = vmatprep.subr.mxu0 0.0
  %8577 = vmatpush1.msra.mxu0 0.0
  %8578 = vmatprep.subr.mxu0 0.0
  %8579 = vmatpush1.msra.mxu0 0.0
  %8580 = vmatprep.subr.mxu0 0.0
  %8581 = vmatpush1.msra.mxu0 0.0
  %8582 = vmatprep.subr.mxu0 0.0
  %8583 = vmatpush1.msra.mxu0 0.0
  %8584 = vmatprep.subr.mxu0 0.0
  %8585 = vmatpush1.msra.mxu0 0.0
  %8586 = vmatprep.subr.mxu0 0.0
  %8587 = vmatpush1.msra.mxu0 0.0
  %8588 = vmatprep.subr.mxu0 0.0
  %8589 = vmatpush1.msra.mxu0 0.0
  %8590 = vmatprep.subr.mxu0 0.0
  %8591 = vmatpush1.msra.mxu0 0.0
  %8592 = vmatprep.mubr.f32.mxu0 0.0
  %8593 = vmatmul.mubr.f32.gmra.mrb[0].mxu0 %v8517
  %v8594 = vpop.f32.mrb[0].mxu0
  %v8595 = vadd.f32 0.0, %v8594
  %v8596 = vpop.f32.mrb[0].mxu0
  %8597 = vmatprep.mubr.f32.mxu0 0.0
  %8598 = vmatmul.mubr.f32.gmra.mrb[0].mxu0 %v8520
  %v8599 = vpop.f32.mrb[0].mxu0
  %v8600 = vadd.f32 0.0, %v8599
  %v8601 = vpop.f32.mrb[0].mxu0
  %8602 = vmatprep.mubr.f32.mxu0 0.0
  %8603 = vmatmul.mubr.f32.gmra.mrb[0].mxu0 %v8523
  %v8604 = vpop.f32.mrb[0].mxu0
  %v8605 = vadd.f32 0.0, %v8604
  %v8606 = vpop.f32.mrb[0].mxu0
  %8607 = vmatprep.mubr.f32.mxu0 0.0
  %8608 = vmatmul.mubr.f32.gmra.mrb[0].mxu0 %v8526
  %v8609 = vpop.f32.mrb[0].mxu0
  %v8610 = vadd.f32 0.0, %v8609
  %v8611 = vpop.f32.mrb[0].mxu0
  %8612 = vdwg.mxu0
  %v8613 = vadd.f32 %v8504, %v8595
  %v8614 = vadd.f32 %v8505, %v8600
  %v8615 = vadd.f32 %v8506, %v8605
  %v8616 = vadd.f32 %v8507, %v8610
  %v8617 = vld [vmem:[%s12] sm:$0xff]
  %v8618 = vld [vmem:[%s12 + $0x8] sm:$0xff]
  %v8619 = vld [vmem:[%s12 + $0x10] sm:$0xff]
  %v8620 = vld [vmem:[%s12 + $0x18] sm:$0xff]
  %v8621 = vld [vmem:[%s12 + $0x20] sm:$0xff]
  %v8622 = vld [vmem:[%s12 + $0x28] sm:$0xff]
  %v8623 = vld [vmem:[%s12 + $0x30] sm:$0xff]
  %v8624 = vld [vmem:[%s12 + $0x38] sm:$0xff]
  %v8625 = vld [vmem:[%s12 + $0x40] sm:$0xff]
  %v8626 = vld [vmem:[%s11] sm:$0xff]
  %v8627 = vld [vmem:[%s11 + $0x8] sm:$0xff]
  %v8628 = vld [vmem:[%s11 + $0x10] sm:$0xff]
  %v8629 = vld [vmem:[%s11 + $0x18] sm:$0xff]
  %8631 = vset.pattern.permute.xlu0 0
  %8632 = vperm.xlu0 %8631, %v8626
  %v8633 = vpop.permute.xlu0 %8632
  %8636 = vset.pattern.permute.xlu0 0
  %8637 = vperm.xlu0 %8636, %v8627
  %v8638 = vpop.permute.xlu0 %8637
  %8641 = vset.pattern.permute.xlu0 0
  %8642 = vperm.xlu0 %8641, %v8628
  %v8643 = vpop.permute.xlu0 %8642
  %8646 = vset.pattern.permute.xlu0 0
  %8647 = vperm.xlu0 %8646, %v8629
  %v8648 = vpop.permute.xlu0 %8647
  %v8651 = vsel %vm2805, %v8613, 0
  %v8654 = vsel %vm2805, %v8614, 0
  %v8657 = vsel %vm2805, %v8615, 0
  %v8660 = vsel %vm2805, %v8616, 0
  %8662 = vmatprep.subr.mxu0 0.0
  %8663 = vmatpush1.msra.mxu0 %v8617
  %8664 = vmatprep.subr.mxu0 0.0
  %8665 = vmatpush1.msra.mxu0 %v8618
  %8666 = vmatprep.subr.mxu0 0.0
  %8667 = vmatpush1.msra.mxu0 %v8619
  %8668 = vmatprep.subr.mxu0 0.0
  %8669 = vmatpush1.msra.mxu0 %v8620
  %8670 = vmatprep.subr.mxu0 0.0
  %8671 = vmatpush1.msra.mxu0 %v8621
  %8672 = vmatprep.subr.mxu0 0.0
  %8673 = vmatpush1.msra.mxu0 %v8622
  %8674 = vmatprep.subr.mxu0 0.0
  %8675 = vmatpush1.msra.mxu0 %v8623
  %8676 = vmatprep.subr.mxu0 0.0
  %8677 = vmatpush1.msra.mxu0 %v8624
  %8678 = vmatprep.subr.mxu0 0.0
  %8679 = vmatpush1.msra.mxu0 %v8625
  %8680 = vmatprep.subr.mxu0 0.0
  %8681 = vmatpush1.msra.mxu0 0.0
  %8682 = vmatprep.subr.mxu0 0.0
  %8683 = vmatpush1.msra.mxu0 0.0
  %8684 = vmatprep.subr.mxu0 0.0
  %8685 = vmatpush1.msra.mxu0 0.0
  %8686 = vmatprep.subr.mxu0 0.0
  %8687 = vmatpush1.msra.mxu0 0.0
  %8688 = vmatprep.subr.mxu0 0.0
  %8689 = vmatpush1.msra.mxu0 0.0
  %8690 = vmatprep.subr.mxu0 0.0
  %8691 = vmatpush1.msra.mxu0 0.0
  %8692 = vmatprep.subr.mxu0 0.0
  %8693 = vmatpush1.msra.mxu0 0.0
  %8694 = vmatprep.subr.mxu0 0.0
  %8695 = vmatpush1.msra.mxu0 0.0
  %8696 = vmatprep.subr.mxu0 0.0
  %8697 = vmatpush1.msra.mxu0 0.0
  %8698 = vmatprep.subr.mxu0 0.0
  %8699 = vmatpush1.msra.mxu0 0.0
  %8700 = vmatprep.subr.mxu0 0.0
  %8701 = vmatpush1.msra.mxu0 0.0
  %8702 = vmatprep.subr.mxu0 0.0
  %8703 = vmatpush1.msra.mxu0 0.0
  %8704 = vmatprep.subr.mxu0 0.0
  %8705 = vmatpush1.msra.mxu0 0.0
  %8706 = vmatprep.subr.mxu0 0.0
  %8707 = vmatpush1.msra.mxu0 0.0
  %8708 = vmatprep.subr.mxu0 0.0
  %8709 = vmatpush1.msra.mxu0 0.0
  %8710 = vmatprep.subr.mxu0 0.0
  %8711 = vmatpush1.msra.mxu0 0.0
  %8712 = vmatprep.subr.mxu0 0.0
  %8713 = vmatpush1.msra.mxu0 0.0
  %8714 = vmatprep.subr.mxu0 0.0
  %8715 = vmatpush1.msra.mxu0 0.0
  %8716 = vmatprep.subr.mxu0 0.0
  %8717 = vmatpush1.msra.mxu0 0.0
  %8718 = vmatprep.subr.mxu0 0.0
  %8719 = vmatpush1.msra.mxu0 0.0
  %8720 = vmatprep.subr.mxu0 0.0
  %8721 = vmatpush1.msra.mxu0 0.0
  %8722 = vmatprep.subr.mxu0 0.0
  %8723 = vmatpush1.msra.mxu0 0.0
  %8724 = vmatprep.subr.mxu0 0.0
  %8725 = vmatpush1.msra.mxu0 0.0
  %8726 = vmatprep.mubr.f32.mxu0 0.0
  %8727 = vmatmul.mubr.f32.gmra.mrb[0].mxu0 %v8651
  %v8728 = vpop.f32.mrb[0].mxu0
  %v8729 = vadd.f32 %v8633, %v8728
  %v8730 = vpop.f32.mrb[0].mxu0
  %8731 = vmatprep.mubr.f32.mxu0 0.0
  %8732 = vmatmul.mubr.f32.gmra.mrb[0].mxu0 %v8654
  %v8733 = vpop.f32.mrb[0].mxu0
  %v8734 = vadd.f32 %v8638, %v8733
  %v8735 = vpop.f32.mrb[0].mxu0
  %8736 = vmatprep.mubr.f32.mxu0 0.0
  %8737 = vmatmul.mubr.f32.gmra.mrb[0].mxu0 %v8657
  %v8738 = vpop.f32.mrb[0].mxu0
  %v8739 = vadd.f32 %v8643, %v8738
  %v8740 = vpop.f32.mrb[0].mxu0
  %8741 = vmatprep.mubr.f32.mxu0 0.0
  %8742 = vmatmul.mubr.f32.gmra.mrb[0].mxu0 %v8660
  %v8743 = vpop.f32.mrb[0].mxu0
  %v8744 = vadd.f32 %v8648, %v8743
  %v8745 = vpop.f32.mrb[0].mxu0
  %8746 = vdwg.mxu0
  %v8747 = vld [vmem:[%s13] sm:$0xff]
  %v8748 = vld [vmem:[%s13 + $0x8] sm:$0xff]
  %v8749 = vld [vmem:[%s13 + $0x10] sm:$0xff]
  %v8750 = vld [vmem:[%s13 + $0x18] sm:$0xff]
  %v8751 = vld [vmem:[%s13 + $0x20] sm:$0xff]
  %v8752 = vld [vmem:[%s13 + $0x28] sm:$0xff]
  %v8753 = vld [vmem:[%s13 + $0x30] sm:$0xff]
  %v8754 = vld [vmem:[%s13 + $0x38] sm:$0xff]
  %v8755 = vld [vmem:[%s13 + $0x40] sm:$0xff]
  %v8756 = vld [vmem:[%s13 + $0x48] sm:$0xff]
  %v8757 = vld [vmem:[%s13 + $0x50] sm:$0xff]
  %v8758 = vld [vmem:[%s13 + $0x58] sm:$0xff]
  %v8759 = vld [vmem:[%s13 + $0x60] sm:$0xff]
  %v8760 = vld [vmem:[%s13 + $0x68] sm:$0xff]
  %v8761 = vld [vmem:[%s13 + $0x70] sm:$0xff]
  %v8762 = vld [vmem:[%s13 + $0x78] sm:$0xff]
  %v8763 = vld [vmem:[%s15] sm:$0xff]
  %v8764 = vld [vmem:[%s15 + $0x8] sm:$0xff]
  %v8765 = vld [vmem:[%s15 + $0x10] sm:$0xff]
  %v8766 = vld [vmem:[%s15 + $0x18] sm:$0xff]
  %v8767 = vld [vmem:[%s15 + $0x20] sm:$0xff]
  %v8768 = vld [vmem:[%s15 + $0x28] sm:$0xff]
  %v8769 = vld [vmem:[%s15 + $0x30] sm:$0xff]
  %v8770 = vld [vmem:[%s15 + $0x38] sm:$0xff]
  %v8771 = vld [vmem:[%s15 + $0x40] sm:$0xff]
  %v8772 = vld [vmem:[%s15 + $0x48] sm:$0xff]
  %v8773 = vld [vmem:[%s15 + $0x50] sm:$0xff]
  %v8774 = vld [vmem:[%s15 + $0x58] sm:$0xff]
  %v8775 = vld [vmem:[%s15 + $0x60] sm:$0xff]
  %v8776 = vld [vmem:[%s15 + $0x68] sm:$0xff]
  %v8777 = vld [vmem:[%s15 + $0x70] sm:$0xff]
  %v8778 = vld [vmem:[%s15 + $0x78] sm:$0xff]
  %8780 = vset.pattern.permute.xlu0 0
  %8781 = vperm.xlu0 %8780, %v8763
  %v8782 = vpop.permute.xlu0 %8781
  %8785 = vset.pattern.permute.xlu0 0
  %8786 = vperm.xlu0 %8785, %v8764
  %v8787 = vpop.permute.xlu0 %8786
  %8790 = vset.pattern.permute.xlu0 0
  %8791 = vperm.xlu0 %8790, %v8765
  %v8792 = vpop.permute.xlu0 %8791
  %8795 = vset.pattern.permute.xlu0 0
  %8796 = vperm.xlu0 %8795, %v8766
  %v8797 = vpop.permute.xlu0 %8796
  %8800 = vset.pattern.permute.xlu0 0
  %8801 = vperm.xlu0 %8800, %v8767
  %v8802 = vpop.permute.xlu0 %8801
  %8805 = vset.pattern.permute.xlu0 0
  %8806 = vperm.xlu0 %8805, %v8768
  %v8807 = vpop.permute.xlu0 %8806
  %8810 = vset.pattern.permute.xlu0 0
  %8811 = vperm.xlu0 %8810, %v8769
  %v8812 = vpop.permute.xlu0 %8811
  %8815 = vset.pattern.permute.xlu0 0
  %8816 = vperm.xlu0 %8815, %v8770
  %v8817 = vpop.permute.xlu0 %8816
  %8820 = vset.pattern.permute.xlu0 0
  %8821 = vperm.xlu0 %8820, %v8771
  %v8822 = vpop.permute.xlu0 %8821
  %8825 = vset.pattern.permute.xlu0 0
  %8826 = vperm.xlu0 %8825, %v8772
  %v8827 = vpop.permute.xlu0 %8826
  %8830 = vset.pattern.permute.xlu0 0
  %8831 = vperm.xlu0 %8830, %v8773
  %v8832 = vpop.permute.xlu0 %8831
  %8835 = vset.pattern.permute.xlu0 0
  %8836 = vperm.xlu0 %8835, %v8774
  %v8837 = vpop.permute.xlu0 %8836
  %8840 = vset.pattern.permute.xlu0 0
  %8841 = vperm.xlu0 %8840, %v8775
  %v8842 = vpop.permute.xlu0 %8841
  %8845 = vset.pattern.permute.xlu0 0
  %8846 = vperm.xlu0 %8845, %v8776
  %v8847 = vpop.permute.xlu0 %8846
  %8850 = vset.pattern.permute.xlu0 0
  %8851 = vperm.xlu0 %8850, %v8777
  %v8852 = vpop.permute.xlu0 %8851
  %8855 = vset.pattern.permute.xlu0 0
  %8856 = vperm.xlu0 %8855, %v8778
  %v8857 = vpop.permute.xlu0 %8856
  %vm8859 = vcmask 261120
  %v8861 = vsel %vm8859, %v8747, 0
  %v8864 = vsel %vm8859, %v8748, 0
  %v8867 = vsel %vm8859, %v8749, 0
  %v8870 = vsel %vm8859, %v8750, 0
  %v8873 = vsel %vm8859, %v8751, 0
  %v8876 = vsel %vm8859, %v8752, 0
  %v8879 = vsel %vm8859, %v8753, 0
  %v8882 = vsel %vm8859, %v8754, 0
  %v8885 = vsel %vm8859, %v8755, 0
  %v8888 = vsel %vm8859, %v8756, 0
  %v8891 = vsel %vm8859, %v8757, 0
  %v8894 = vsel %vm8859, %v8758, 0
  %v8897 = vsel %vm8859, %v8759, 0
  %v8900 = vsel %vm8859, %v8760, 0
  %v8903 = vsel %vm8859, %v8761, 0
  %v8906 = vsel %vm8859, %v8762, 0
  %8908 = vmatprep.subr.mxu0 0.0
  %8909 = vmatpush1.msra.mxu0 %v8729
  %8910 = vmatprep.subr.mxu0 0.0
  %8911 = vmatpush1.msra.mxu0 %v8734
  %8912 = vmatprep.subr.mxu0 0.0
  %8913 = vmatpush1.msra.mxu0 %v8739
  %8914 = vmatprep.subr.mxu0 0.0
  %8915 = vmatpush1.msra.mxu0 %v8744
  %8916 = vmatprep.subr.mxu0 0.0
  %8917 = vmatpush1.msra.mxu0 0.0
  %8918 = vmatprep.subr.mxu0 0.0
  %8919 = vmatpush1.msra.mxu0 0.0
  %8920 = vmatprep.subr.mxu0 0.0
  %8921 = vmatpush1.msra.mxu0 0.0
  %8922 = vmatprep.subr.mxu0 0.0
  %8923 = vmatpush1.msra.mxu0 0.0
  %8924 = vmatprep.subr.mxu0 0.0
  %8925 = vmatpush1.msra.mxu0 0.0
  %8926 = vmatprep.subr.mxu0 0.0
  %8927 = vmatpush1.msra.mxu0 0.0
  %8928 = vmatprep.subr.mxu0 0.0
  %8929 = vmatpush1.msra.mxu0 0.0
  %8930 = vmatprep.subr.mxu0 0.0
  %8931 = vmatpush1.msra.mxu0 0.0
  %8932 = vmatprep.subr.mxu0 0.0
  %8933 = vmatpush1.msra.mxu0 0.0
  %8934 = vmatprep.subr.mxu0 0.0
  %8935 = vmatpush1.msra.mxu0 0.0
  %8936 = vmatprep.subr.mxu0 0.0
  %8937 = vmatpush1.msra.mxu0 0.0
  %8938 = vmatprep.subr.mxu0 0.0
  %8939 = vmatpush1.msra.mxu0 0.0
  %8940 = vmatprep.subr.mxu0 0.0
  %8941 = vmatpush1.msra.mxu0 0.0
  %8942 = vmatprep.subr.mxu0 0.0
  %8943 = vmatpush1.msra.mxu0 0.0
  %8944 = vmatprep.subr.mxu0 0.0
  %8945 = vmatpush1.msra.mxu0 0.0
  %8946 = vmatprep.subr.mxu0 0.0
  %8947 = vmatpush1.msra.mxu0 0.0
  %8948 = vmatprep.subr.mxu0 0.0
  %8949 = vmatpush1.msra.mxu0 0.0
  %8950 = vmatprep.subr.mxu0 0.0
  %8951 = vmatpush1.msra.mxu0 0.0
  %8952 = vmatprep.subr.mxu0 0.0
  %8953 = vmatpush1.msra.mxu0 0.0
  %8954 = vmatprep.subr.mxu0 0.0
  %8955 = vmatpush1.msra.mxu0 0.0
  %8956 = vmatprep.subr.mxu0 0.0
  %8957 = vmatpush1.msra.mxu0 0.0
  %8958 = vmatprep.subr.mxu0 0.0
  %8959 = vmatpush1.msra.mxu0 0.0
  %8960 = vmatprep.subr.mxu0 0.0
  %8961 = vmatpush1.msra.mxu0 0.0
  %8962 = vmatprep.subr.mxu0 0.0
  %8963 = vmatpush1.msra.mxu0 0.0
  %8964 = vmatprep.subr.mxu0 0.0
  %8965 = vmatpush1.msra.mxu0 0.0
  %8966 = vmatprep.subr.mxu0 0.0
  %8967 = vmatpush1.msra.mxu0 0.0
  %8968 = vmatprep.subr.mxu0 0.0
  %8969 = vmatpush1.msra.mxu0 0.0
  %8970 = vmatprep.subr.mxu0 0.0
  %8971 = vmatpush1.msra.mxu0 0.0
  %8972 = vmatprep.mubr.f32.mxu0 0.0
  %8973 = vmatmul.mubr.f32.gmra.mrb[0].mxu0 %v8861
  %v8974 = vpop.f32.mrb[0].mxu0
  %v8975 = vadd.f32 %v8782, %v8974
  %v8976 = vpop.f32.mrb[0].mxu0
  %8977 = vmatprep.mubr.f32.mxu0 0.0
  %8978 = vmatmul.mubr.f32.gmra.mrb[0].mxu0 %v8864
  %v8979 = vpop.f32.mrb[0].mxu0
  %v8980 = vadd.f32 %v8787, %v8979
  %v8981 = vpop.f32.mrb[0].mxu0
  %8982 = vmatprep.mubr.f32.mxu0 0.0
  %8983 = vmatmul.mubr.f32.gmra.mrb[0].mxu0 %v8867
  %v8984 = vpop.f32.mrb[0].mxu0
  %v8985 = vadd.f32 %v8792, %v8984
  %v8986 = vpop.f32.mrb[0].mxu0
  %8987 = vmatprep.mubr.f32.mxu0 0.0
  %8988 = vmatmul.mubr.f32.gmra.mrb[0].mxu0 %v8870
  %v8989 = vpop.f32.mrb[0].mxu0
  %v8990 = vadd.f32 %v8797, %v8989
  %v8991 = vpop.f32.mrb[0].mxu0
  %8992 = vmatprep.mubr.f32.mxu0 0.0
  %8993 = vmatmul.mubr.f32.gmra.mrb[0].mxu0 %v8873
  %v8994 = vpop.f32.mrb[0].mxu0
  %v8995 = vadd.f32 %v8802, %v8994
  %v8996 = vpop.f32.mrb[0].mxu0
  %8997 = vmatprep.mubr.f32.mxu0 0.0
  %8998 = vmatmul.mubr.f32.gmra.mrb[0].mxu0 %v8876
  %v8999 = vpop.f32.mrb[0].mxu0
  %v9000 = vadd.f32 %v8807, %v8999
  %v9001 = vpop.f32.mrb[0].mxu0
  %9002 = vmatprep.mubr.f32.mxu0 0.0
  %9003 = vmatmul.mubr.f32.gmra.mrb[0].mxu0 %v8879
  %v9004 = vpop.f32.mrb[0].mxu0
  %v9005 = vadd.f32 %v8812, %v9004
  %v9006 = vpop.f32.mrb[0].mxu0
  %9007 = vmatprep.mubr.f32.mxu0 0.0
  %9008 = vmatmul.mubr.f32.gmra.mrb[0].mxu0 %v8882
  %v9009 = vpop.f32.mrb[0].mxu0
  %v9010 = vadd.f32 %v8817, %v9009
  %v9011 = vpop.f32.mrb[0].mxu0
  %9012 = vmatprep.mubr.f32.mxu0 0.0
  %9013 = vmatmul.mubr.f32.gmra.mrb[0].mxu0 %v8885
  %v9014 = vpop.f32.mrb[0].mxu0
  %v9015 = vadd.f32 %v8822, %v9014
  %v9016 = vpop.f32.mrb[0].mxu0
  %9017 = vmatprep.mubr.f32.mxu0 0.0
  %9018 = vmatmul.mubr.f32.gmra.mrb[0].mxu0 %v8888
  %v9019 = vpop.f32.mrb[0].mxu0
  %v9020 = vadd.f32 %v8827, %v9019
  %v9021 = vpop.f32.mrb[0].mxu0
  %9022 = vmatprep.mubr.f32.mxu0 0.0
  %9023 = vmatmul.mubr.f32.gmra.mrb[0].mxu0 %v8891
  %v9024 = vpop.f32.mrb[0].mxu0
  %v9025 = vadd.f32 %v8832, %v9024
  %v9026 = vpop.f32.mrb[0].mxu0
  %9027 = vmatprep.mubr.f32.mxu0 0.0
  %9028 = vmatmul.mubr.f32.gmra.mrb[0].mxu0 %v8894
  %v9029 = vpop.f32.mrb[0].mxu0
  %v9030 = vadd.f32 %v8837, %v9029
  %v9031 = vpop.f32.mrb[0].mxu0
  %9032 = vmatprep.mubr.f32.mxu0 0.0
  %9033 = vmatmul.mubr.f32.gmra.mrb[0].mxu0 %v8897
  %v9034 = vpop.f32.mrb[0].mxu0
  %v9035 = vadd.f32 %v8842, %v9034
  %v9036 = vpop.f32.mrb[0].mxu0
  %9037 = vmatprep.mubr.f32.mxu0 0.0
  %9038 = vmatmul.mubr.f32.gmra.mrb[0].mxu0 %v8900
  %v9039 = vpop.f32.mrb[0].mxu0
  %v9040 = vadd.f32 %v8847, %v9039
  %v9041 = vpop.f32.mrb[0].mxu0
  %9042 = vmatprep.mubr.f32.mxu0 0.0
  %9043 = vmatmul.mubr.f32.gmra.mrb[0].mxu0 %v8903
  %v9044 = vpop.f32.mrb[0].mxu0
  %v9045 = vadd.f32 %v8852, %v9044
  %v9046 = vpop.f32.mrb[0].mxu0
  %9047 = vmatprep.mubr.f32.mxu0 0.0
  %9048 = vmatmul.mubr.f32.gmra.mrb[0].mxu0 %v8906
  %v9049 = vpop.f32.mrb[0].mxu0
  %v9050 = vadd.f32 %v8857, %v9049
  %v9051 = vpop.f32.mrb[0].mxu0
  %9052 = vdwg.mxu0
  %v9053 = vld [vmem:[%s14] sm:$0xff]
  %v9054 = vld [vmem:[%s14 + $0x8] sm:$0xff]
  %v9055 = vld [vmem:[%s14 + $0x10] sm:$0xff]
  %v9056 = vld [vmem:[%s14 + $0x18] sm:$0xff]
  %v9057 = vld [vmem:[%s14 + $0x20] sm:$0xff]
  %v9058 = vld [vmem:[%s14 + $0x28] sm:$0xff]
  %v9059 = vld [vmem:[%s14 + $0x30] sm:$0xff]
  %v9060 = vld [vmem:[%s14 + $0x38] sm:$0xff]
  %v9061 = vld [vmem:[%s14 + $0x40] sm:$0xff]
  %v9062 = vld [vmem:[%s14 + $0x48] sm:$0xff]
  %v9063 = vld [vmem:[%s14 + $0x50] sm:$0xff]
  %v9064 = vld [vmem:[%s14 + $0x58] sm:$0xff]
  %v9065 = vld [vmem:[%s14 + $0x60] sm:$0xff]
  %v9066 = vld [vmem:[%s14 + $0x68] sm:$0xff]
  %v9067 = vld [vmem:[%s14 + $0x70] sm:$0xff]
  %v9068 = vld [vmem:[%s14 + $0x78] sm:$0xff]
  %v9070 = vsel %vm8859, %v9053, 0
  %v9073 = vsel %vm8859, %v9054, 0
  %v9076 = vsel %vm8859, %v9055, 0
  %v9079 = vsel %vm8859, %v9056, 0
  %v9082 = vsel %vm8859, %v9057, 0
  %v9085 = vsel %vm8859, %v9058, 0
  %v9088 = vsel %vm8859, %v9059, 0
  %v9091 = vsel %vm8859, %v9060, 0
  %v9094 = vsel %vm8859, %v9061, 0
  %v9097 = vsel %vm8859, %v9062, 0
  %v9100 = vsel %vm8859, %v9063, 0
  %v9103 = vsel %vm8859, %v9064, 0
  %v9106 = vsel %vm8859, %v9065, 0
  %v9109 = vsel %vm8859, %v9066, 0
  %v9112 = vsel %vm8859, %v9067, 0
  %v9115 = vsel %vm8859, %v9068, 0
  %9117 = vmatprep.subr.mxu0 0.0
  %9118 = vmatpush1.msra.mxu0 0.0
  %9119 = vmatprep.subr.mxu0 0.0
  %9120 = vmatpush1.msra.mxu0 0.0
  %9121 = vmatprep.subr.mxu0 0.0
  %9122 = vmatpush1.msra.mxu0 0.0
  %9123 = vmatprep.subr.mxu0 0.0
  %9124 = vmatpush1.msra.mxu0 0.0
  %9125 = vmatprep.subr.mxu0 0.0
  %9126 = vmatpush1.msra.mxu0 0.0
  %9127 = vmatprep.subr.mxu0 0.0
  %9128 = vmatpush1.msra.mxu0 0.0
  %9129 = vmatprep.subr.mxu0 0.0
  %9130 = vmatpush1.msra.mxu0 0.0
  %9131 = vmatprep.subr.mxu0 0.0
  %9132 = vmatpush1.msra.mxu0 0.0
  %9133 = vmatprep.subr.mxu0 0.0
  %9134 = vmatpush1.msra.mxu0 0.0
  %9135 = vmatprep.subr.mxu0 0.0
  %9136 = vmatpush1.msra.mxu0 0.0
  %9137 = vmatprep.subr.mxu0 0.0
  %9138 = vmatpush1.msra.mxu0 0.0
  %9139 = vmatprep.subr.mxu0 0.0
  %9140 = vmatpush1.msra.mxu0 0.0
  %9141 = vmatprep.subr.mxu0 0.0
  %9142 = vmatpush1.msra.mxu0 0.0
  %9143 = vmatprep.subr.mxu0 0.0
  %9144 = vmatpush1.msra.mxu0 0.0
  %9145 = vmatprep.subr.mxu0 0.0
  %9146 = vmatpush1.msra.mxu0 0.0
  %9147 = vmatprep.subr.mxu0 0.0
  %9148 = vmatpush1.msra.mxu0 0.0
  %9149 = vmatprep.subr.mxu0 0.0
  %9150 = vmatpush1.msra.mxu0 0.0
  %9151 = vmatprep.subr.mxu0 0.0
  %9152 = vmatpush1.msra.mxu0 0.0
  %9153 = vmatprep.subr.mxu0 0.0
  %9154 = vmatpush1.msra.mxu0 0.0
  %9155 = vmatprep.subr.mxu0 0.0
  %9156 = vmatpush1.msra.mxu0 0.0
  %9157 = vmatprep.subr.mxu0 0.0
  %9158 = vmatpush1.msra.mxu0 0.0
  %9159 = vmatprep.subr.mxu0 0.0
  %9160 = vmatpush1.msra.mxu0 0.0
  %9161 = vmatprep.subr.mxu0 0.0
  %9162 = vmatpush1.msra.mxu0 0.0
  %9163 = vmatprep.subr.mxu0 0.0
  %9164 = vmatpush1.msra.mxu0 0.0
  %9165 = vmatprep.subr.mxu0 0.0
  %9166 = vmatpush1.msra.mxu0 0.0
  %9167 = vmatprep.subr.mxu0 0.0
  %9168 = vmatpush1.msra.mxu0 0.0
  %9169 = vmatprep.subr.mxu0 0.0
  %9170 = vmatpush1.msra.mxu0 0.0
  %9171 = vmatprep.subr.mxu0 0.0
  %9172 = vmatpush1.msra.mxu0 0.0
  %9173 = vmatprep.subr.mxu0 0.0
  %9174 = vmatpush1.msra.mxu0 0.0
  %9175 = vmatprep.subr.mxu0 0.0
  %9176 = vmatpush1.msra.mxu0 0.0
  %9177 = vmatprep.subr.mxu0 0.0
  %9178 = vmatpush1.msra.mxu0 0.0
  %9179 = vmatprep.subr.mxu0 0.0
  %9180 = vmatpush1.msra.mxu0 0.0
  %9181 = vmatprep.mubr.f32.mxu0 0.0
  %9182 = vmatmul.mubr.f32.gmra.mrb[0].mxu0 %v9070
  %v9183 = vpop.f32.mrb[0].mxu0
  %v9184 = vadd.f32 0.0, %v9183
  %v9185 = vpop.f32.mrb[0].mxu0
  %9186 = vmatprep.mubr.f32.mxu0 0.0
  %9187 = vmatmul.mubr.f32.gmra.mrb[0].mxu0 %v9073
  %v9188 = vpop.f32.mrb[0].mxu0
  %v9189 = vadd.f32 0.0, %v9188
  %v9190 = vpop.f32.mrb[0].mxu0
  %9191 = vmatprep.mubr.f32.mxu0 0.0
  %9192 = vmatmul.mubr.f32.gmra.mrb[0].mxu0 %v9076
  %v9193 = vpop.f32.mrb[0].mxu0
  %v9194 = vadd.f32 0.0, %v9193
  %v9195 = vpop.f32.mrb[0].mxu0
  %9196 = vmatprep.mubr.f32.mxu0 0.0
  %9197 = vmatmul.mubr.f32.gmra.mrb[0].mxu0 %v9079
  %v9198 = vpop.f32.mrb[0].mxu0
  %v9199 = vadd.f32 0.0, %v9198
  %v9200 = vpop.f32.mrb[0].mxu0
  %9201 = vmatprep.mubr.f32.mxu0 0.0
  %9202 = vmatmul.mubr.f32.gmra.mrb[0].mxu0 %v9082
  %v9203 = vpop.f32.mrb[0].mxu0
  %v9204 = vadd.f32 0.0, %v9203
  %v9205 = vpop.f32.mrb[0].mxu0
  %9206 = vmatprep.mubr.f32.mxu0 0.0
  %9207 = vmatmul.mubr.f32.gmra.mrb[0].mxu0 %v9085
  %v9208 = vpop.f32.mrb[0].mxu0
  %v9209 = vadd.f32 0.0, %v9208
  %v9210 = vpop.f32.mrb[0].mxu0
  %9211 = vmatprep.mubr.f32.mxu0 0.0
  %9212 = vmatmul.mubr.f32.gmra.mrb[0].mxu0 %v9088
  %v9213 = vpop.f32.mrb[0].mxu0
  %v9214 = vadd.f32 0.0, %v9213
  %v9215 = vpop.f32.mrb[0].mxu0
  %9216 = vmatprep.mubr.f32.mxu0 0.0
  %9217 = vmatmul.mubr.f32.gmra.mrb[0].mxu0 %v9091
  %v9218 = vpop.f32.mrb[0].mxu0
  %v9219 = vadd.f32 0.0, %v9218
  %v9220 = vpop.f32.mrb[0].mxu0
  %9221 = vmatprep.mubr.f32.mxu0 0.0
  %9222 = vmatmul.mubr.f32.gmra.mrb[0].mxu0 %v9094
  %v9223 = vpop.f32.mrb[0].mxu0
  %v9224 = vadd.f32 0.0, %v9223
  %v9225 = vpop.f32.mrb[0].mxu0
  %9226 = vmatprep.mubr.f32.mxu0 0.0
  %9227 = vmatmul.mubr.f32.gmra.mrb[0].mxu0 %v9097
  %v9228 = vpop.f32.mrb[0].mxu0
  %v9229 = vadd.f32 0.0, %v9228
  %v9230 = vpop.f32.mrb[0].mxu0
  %9231 = vmatprep.mubr.f32.mxu0 0.0
  %9232 = vmatmul.mubr.f32.gmra.mrb[0].mxu0 %v9100
  %v9233 = vpop.f32.mrb[0].mxu0
  %v9234 = vadd.f32 0.0, %v9233
  %v9235 = vpop.f32.mrb[0].mxu0
  %9236 = vmatprep.mubr.f32.mxu0 0.0
  %9237 = vmatmul.mubr.f32.gmra.mrb[0].mxu0 %v9103
  %v9238 = vpop.f32.mrb[0].mxu0
  %v9239 = vadd.f32 0.0, %v9238
  %v9240 = vpop.f32.mrb[0].mxu0
  %9241 = vmatprep.mubr.f32.mxu0 0.0
  %9242 = vmatmul.mubr.f32.gmra.mrb[0].mxu0 %v9106
  %v9243 = vpop.f32.mrb[0].mxu0
  %v9244 = vadd.f32 0.0, %v9243
  %v9245 = vpop.f32.mrb[0].mxu0
  %9246 = vmatprep.mubr.f32.mxu0 0.0
  %9247 = vmatmul.mubr.f32.gmra.mrb[0].mxu0 %v9109
  %v9248 = vpop.f32.mrb[0].mxu0
  %v9249 = vadd.f32 0.0, %v9248
  %v9250 = vpop.f32.mrb[0].mxu0
  %9251 = vmatprep.mubr.f32.mxu0 0.0
  %9252 = vmatmul.mubr.f32.gmra.mrb[0].mxu0 %v9112
  %v9253 = vpop.f32.mrb[0].mxu0
  %v9254 = vadd.f32 0.0, %v9253
  %v9255 = vpop.f32.mrb[0].mxu0
  %9256 = vmatprep.mubr.f32.mxu0 0.0
  %9257 = vmatmul.mubr.f32.gmra.mrb[0].mxu0 %v9115
  %v9258 = vpop.f32.mrb[0].mxu0
  %v9259 = vadd.f32 0.0, %v9258
  %v9260 = vpop.f32.mrb[0].mxu0
  %9261 = vdwg.mxu0
  %v9262 = vadd.f32 %v8975, %v9184
  %v9263 = vadd.f32 %v8980, %v9189
  %v9264 = vadd.f32 %v8985, %v9194
  %v9265 = vadd.f32 %v8990, %v9199
  %v9266 = vadd.f32 %v8995, %v9204
  %v9267 = vadd.f32 %v9000, %v9209
  %v9268 = vadd.f32 %v9005, %v9214
  %v9269 = vadd.f32 %v9010, %v9219
  %v9270 = vadd.f32 %v9015, %v9224
  %v9271 = vadd.f32 %v9020, %v9229
  %v9272 = vadd.f32 %v9025, %v9234
  %v9273 = vadd.f32 %v9030, %v9239
  %v9274 = vadd.f32 %v9035, %v9244
  %v9275 = vadd.f32 %v9040, %v9249
  %v9276 = vadd.f32 %v9045, %v9254
  %v9277 = vadd.f32 %v9050, %v9259
  %v9278 = vxor.u32 %v9262, 2147483648
  %v9279 = vxor.u32 %v9263, 2147483648
  %v9280 = vxor.u32 %v9264, 2147483648
  %v9281 = vxor.u32 %v9265, 2147483648
  %v9282 = vxor.u32 %v9266, 2147483648
  %v9283 = vxor.u32 %v9267, 2147483648
  %v9284 = vxor.u32 %v9268, 2147483648
  %v9285 = vxor.u32 %v9269, 2147483648
  %v9286 = vxor.u32 %v9274, 2147483648
  %v9287 = vxor.u32 %v9275, 2147483648
  %v9288 = vxor.u32 %v9276, 2147483648
  %v9289 = vxor.u32 %v9277, 2147483648
  %v9290 = vmul.f32 %v9278, 1.442695
  %v9291 = vpow.pop %v9290
  %v9292 = vmul.f32 %v9279, 1.442695
  %v9293 = vpow.pop %v9292
  %v9294 = vmul.f32 %v9280, 1.442695
  %v9295 = vpow.pop %v9294
  %v9296 = vmul.f32 %v9281, 1.442695
  %v9297 = vpow.pop %v9296
  %v9298 = vmul.f32 %v9282, 1.442695
  %v9299 = vpow.pop %v9298
  %v9300 = vmul.f32 %v9283, 1.442695
  %v9301 = vpow.pop %v9300
  %v9302 = vmul.f32 %v9284, 1.442695
  %v9303 = vpow.pop %v9302
  %v9304 = vmul.f32 %v9285, 1.442695
  %v9305 = vpow.pop %v9304
  %v9306 = vmul.f32 %v9286, 1.442695
  %v9307 = vpow.pop %v9306
  %v9308 = vmul.f32 %v9287, 1.442695
  %v9309 = vpow.pop %v9308
  %v9310 = vmul.f32 %v9288, 1.442695
  %v9311 = vpow.pop %v9310
  %v9312 = vmul.f32 %v9289, 1.442695
  %v9313 = vpow.pop %v9312
  %v9314 = vadd.f32 %v9291, 1.0
  %v9315 = vadd.f32 %v9293, 1.0
  %v9316 = vadd.f32 %v9295, 1.0
  %v9317 = vadd.f32 %v9297, 1.0
  %v9318 = vadd.f32 %v9299, 1.0
  %v9319 = vadd.f32 %v9301, 1.0
  %v9320 = vadd.f32 %v9303, 1.0
  %v9321 = vadd.f32 %v9305, 1.0
  %v9322 = vadd.f32 %v9307, 1.0
  %v9323 = vadd.f32 %v9309, 1.0
  %v9324 = vadd.f32 %v9311, 1.0
  %v9325 = vadd.f32 %v9313, 1.0
  %v9326 = vrcp.pop %v9314
  %v9327 = vmul.f32 1.0, %v9326
  %v9328 = vrcp.pop %v9315
  %v9329 = vmul.f32 1.0, %v9328
  %v9330 = vrcp.pop %v9316
  %v9331 = vmul.f32 1.0, %v9330
  %v9332 = vrcp.pop %v9317
  %v9333 = vmul.f32 1.0, %v9332
  %v9334 = vrcp.pop %v9318
  %v9335 = vmul.f32 1.0, %v9334
  %v9336 = vrcp.pop %v9319
  %v9337 = vmul.f32 1.0, %v9336
  %v9338 = vrcp.pop %v9320
  %v9339 = vmul.f32 1.0, %v9338
  %v9340 = vrcp.pop %v9321
  %v9341 = vmul.f32 1.0, %v9340
  %v9342 = vrcp.pop %v9322
  %v9343 = vmul.f32 1.0, %v9342
  %v9344 = vrcp.pop %v9323
  %v9345 = vmul.f32 1.0, %v9344
  %v9346 = vrcp.pop %v9324
  %v9347 = vmul.f32 1.0, %v9346
  %v9348 = vrcp.pop %v9325
  %v9349 = vmul.f32 1.0, %v9348
  %v9350 = vtanh.pop %v9270
  %v9351 = vtanh.pop %v9271
  %v9352 = vtanh.pop %v9272
  %v9353 = vtanh.pop %v9273
  %v9354 = vmul.f32 %v9335, 0.0
  %v9355 = vmul.f32 %v9337, 0.0
  %v9356 = vmul.f32 %v9339, 0.0
  %v9357 = vmul.f32 %v9341, 0.0
  %v9358 = vmul.f32 %v9327, %v9350
  %v9359 = vmul.f32 %v9329, %v9351
  %v9360 = vmul.f32 %v9331, %v9352
  %v9361 = vmul.f32 %v9333, %v9353
  %v9362 = vadd.f32 %v9354, %v9358
  %v9363 = vadd.f32 %v9355, %v9359
  %v9364 = vadd.f32 %v9356, %v9360
  %v9365 = vadd.f32 %v9357, %v9361
  %v9366 = vtanh.pop %v9362
  %v9367 = vtanh.pop %v9363
  %v9368 = vtanh.pop %v9364
  %v9369 = vtanh.pop %v9365
  %v9370 = vmul.f32 %v9343, %v9366
  %v9371 = vmul.f32 %v9345, %v9367
  %v9372 = vmul.f32 %v9347, %v9368
  %v9373 = vmul.f32 %v9349, %v9369
  %9374 = vmatprep.subr.mxu0 0.0
  %9375 = vmatpush1.msra.mxu0 %v9370
  %9376 = vmatprep.subr.mxu0 0.0
  %9377 = vmatpush1.msra.mxu0 %v9371
  %9378 = vmatprep.subr.mxu0 0.0
  %9379 = vmatpush1.msra.mxu0 %v9372
  %9380 = vmatprep.subr.mxu0 0.0
  %9381 = vmatpush1.msra.mxu0 %v9373
  %9382 = vmatprep.subr.mxu0 0.0
  %9383 = vmatpush1.msra.mxu0 0.0
  %9384 = vmatprep.subr.mxu0 0.0
  %9385 = vmatpush1.msra.mxu0 0.0
  %9386 = vmatprep.subr.mxu0 0.0
  %9387 = vmatpush1.msra.mxu0 0.0
  %9388 = vmatprep.subr.mxu0 0.0
  %9389 = vmatpush1.msra.mxu0 0.0
  %9390 = vmatprep.subr.mxu0 0.0
  %9391 = vmatpush1.msra.mxu0 0.0
  %9392 = vmatprep.subr.mxu0 0.0
  %9393 = vmatpush1.msra.mxu0 0.0
  %9394 = vmatprep.subr.mxu0 0.0
  %9395 = vmatpush1.msra.mxu0 0.0
  %9396 = vmatprep.subr.mxu0 0.0
  %9397 = vmatpush1.msra.mxu0 0.0
  %9398 = vmatprep.subr.mxu0 0.0
  %9399 = vmatpush1.msra.mxu0 0.0
  %9400 = vmatprep.subr.mxu0 0.0
  %9401 = vmatpush1.msra.mxu0 0.0
  %9402 = vmatprep.subr.mxu0 0.0
  %9403 = vmatpush1.msra.mxu0 0.0
  %9404 = vmatprep.subr.mxu0 0.0
  %9405 = vmatpush1.msra.mxu0 0.0
  %9406 = vmatprep.subr.mxu0 0.0
  %9407 = vmatpush1.msra.mxu0 0.0
  %9408 = vmatprep.subr.mxu0 0.0
  %9409 = vmatpush1.msra.mxu0 0.0
  %9410 = vmatprep.subr.mxu0 0.0
  %9411 = vmatpush1.msra.mxu0 0.0
  %9412 = vmatprep.subr.mxu0 0.0
  %9413 = vmatpush1.msra.mxu0 0.0
  %9414 = vmatprep.subr.mxu0 0.0
  %9415 = vmatpush1.msra.mxu0 0.0
  %9416 = vmatprep.subr.mxu0 0.0
  %9417 = vmatpush1.msra.mxu0 0.0
  %9418 = vmatprep.subr.mxu0 0.0
  %9419 = vmatpush1.msra.mxu0 0.0
  %9420 = vmatprep.subr.mxu0 0.0
  %9421 = vmatpush1.msra.mxu0 0.0
  %9422 = vmatprep.subr.mxu0 0.0
  %9423 = vmatpush1.msra.mxu0 0.0
  %9424 = vmatprep.subr.mxu0 0.0
  %9425 = vmatpush1.msra.mxu0 0.0
  %9426 = vmatprep.subr.mxu0 0.0
  %9427 = vmatpush1.msra.mxu0 0.0
  %9428 = vmatprep.subr.mxu0 0.0
  %9429 = vmatpush1.msra.mxu0 0.0
  %9430 = vmatprep.subr.mxu0 0.0
  %9431 = vmatpush1.msra.mxu0 0.0
  %9432 = vmatprep.subr.mxu0 0.0
  %9433 = vmatpush1.msra.mxu0 0.0
  %9434 = vmatprep.subr.mxu0 0.0
  %9435 = vmatpush1.msra.mxu0 0.0
  %9436 = vmatprep.subr.mxu0 0.0
  %9437 = vmatpush1.msra.mxu0 0.0
  %9438 = vmatprep.mubr.f32.mxu0 0.0
  %9439 = vmatmul.mubr.f32.gmra.mrb[0].mxu0 %v9070
  %v9440 = vpop.f32.mrb[0].mxu0
  %v9441 = vadd.f32 0.0, %v9440
  %v9442 = vpop.f32.mrb[0].mxu0
  %9443 = vmatprep.mubr.f32.mxu0 0.0
  %9444 = vmatmul.mubr.f32.gmra.mrb[0].mxu0 %v9073
  %v9445 = vpop.f32.mrb[0].mxu0
  %v9446 = vadd.f32 0.0, %v9445
  %v9447 = vpop.f32.mrb[0].mxu0
  %9448 = vmatprep.mubr.f32.mxu0 0.0
  %9449 = vmatmul.mubr.f32.gmra.mrb[0].mxu0 %v9076
  %v9450 = vpop.f32.mrb[0].mxu0
  %v9451 = vadd.f32 0.0, %v9450
  %v9452 = vpop.f32.mrb[0].mxu0
  %9453 = vmatprep.mubr.f32.mxu0 0.0
  %9454 = vmatmul.mubr.f32.gmra.mrb[0].mxu0 %v9079
  %v9455 = vpop.f32.mrb[0].mxu0
  %v9456 = vadd.f32 0.0, %v9455
  %v9457 = vpop.f32.mrb[0].mxu0
  %9458 = vmatprep.mubr.f32.mxu0 0.0
  %9459 = vmatmul.mubr.f32.gmra.mrb[0].mxu0 %v9082
  %v9460 = vpop.f32.mrb[0].mxu0
  %v9461 = vadd.f32 0.0, %v9460
  %v9462 = vpop.f32.mrb[0].mxu0
  %9463 = vmatprep.mubr.f32.mxu0 0.0
  %9464 = vmatmul.mubr.f32.gmra.mrb[0].mxu0 %v9085
  %v9465 = vpop.f32.mrb[0].mxu0
  %v9466 = vadd.f32 0.0, %v9465
  %v9467 = vpop.f32.mrb[0].mxu0
  %9468 = vmatprep.mubr.f32.mxu0 0.0
  %9469 = vmatmul.mubr.f32.gmra.mrb[0].mxu0 %v9088
  %v9470 = vpop.f32.mrb[0].mxu0
  %v9471 = vadd.f32 0.0, %v9470
  %v9472 = vpop.f32.mrb[0].mxu0
  %9473 = vmatprep.mubr.f32.mxu0 0.0
  %9474 = vmatmul.mubr.f32.gmra.mrb[0].mxu0 %v9091
  %v9475 = vpop.f32.mrb[0].mxu0
  %v9476 = vadd.f32 0.0, %v9475
  %v9477 = vpop.f32.mrb[0].mxu0
  %9478 = vmatprep.mubr.f32.mxu0 0.0
  %9479 = vmatmul.mubr.f32.gmra.mrb[0].mxu0 %v9094
  %v9480 = vpop.f32.mrb[0].mxu0
  %v9481 = vadd.f32 0.0, %v9480
  %v9482 = vpop.f32.mrb[0].mxu0
  %9483 = vmatprep.mubr.f32.mxu0 0.0
  %9484 = vmatmul.mubr.f32.gmra.mrb[0].mxu0 %v9097
  %v9485 = vpop.f32.mrb[0].mxu0
  %v9486 = vadd.f32 0.0, %v9485
  %v9487 = vpop.f32.mrb[0].mxu0
  %9488 = vmatprep.mubr.f32.mxu0 0.0
  %9489 = vmatmul.mubr.f32.gmra.mrb[0].mxu0 %v9100
  %v9490 = vpop.f32.mrb[0].mxu0
  %v9491 = vadd.f32 0.0, %v9490
  %v9492 = vpop.f32.mrb[0].mxu0
  %9493 = vmatprep.mubr.f32.mxu0 0.0
  %9494 = vmatmul.mubr.f32.gmra.mrb[0].mxu0 %v9103
  %v9495 = vpop.f32.mrb[0].mxu0
  %v9496 = vadd.f32 0.0, %v9495
  %v9497 = vpop.f32.mrb[0].mxu0
  %9498 = vmatprep.mubr.f32.mxu0 0.0
  %9499 = vmatmul.mubr.f32.gmra.mrb[0].mxu0 %v9106
  %v9500 = vpop.f32.mrb[0].mxu0
  %v9501 = vadd.f32 0.0, %v9500
  %v9502 = vpop.f32.mrb[0].mxu0
  %9503 = vmatprep.mubr.f32.mxu0 0.0
  %9504 = vmatmul.mubr.f32.gmra.mrb[0].mxu0 %v9109
  %v9505 = vpop.f32.mrb[0].mxu0
  %v9506 = vadd.f32 0.0, %v9505
  %v9507 = vpop.f32.mrb[0].mxu0
  %9508 = vmatprep.mubr.f32.mxu0 0.0
  %9509 = vmatmul.mubr.f32.gmra.mrb[0].mxu0 %v9112
  %v9510 = vpop.f32.mrb[0].mxu0
  %v9511 = vadd.f32 0.0, %v9510
  %v9512 = vpop.f32.mrb[0].mxu0
  %9513 = vmatprep.mubr.f32.mxu0 0.0
  %9514 = vmatmul.mubr.f32.gmra.mrb[0].mxu0 %v9115
  %v9515 = vpop.f32.mrb[0].mxu0
  %v9516 = vadd.f32 0.0, %v9515
  %v9517 = vpop.f32.mrb[0].mxu0
  %9518 = vdwg.mxu0
  %9535 = vrot.lane.b32.xlu0 %v9441, 1
  %v9536 = vpop.permute.xlu0 %9535
  %9537 = vrot.lane.b32.xlu0 %v9446, 1
  %v9538 = vpop.permute.xlu0 %9537
  %9539 = vrot.lane.b32.xlu0 %v9451, 1
  %v9540 = vpop.permute.xlu0 %9539
  %9541 = vrot.lane.b32.xlu0 %v9456, 1
  %v9542 = vpop.permute.xlu0 %9541
  %9543 = vrot.lane.b32.xlu0 %v9461, 1
  %v9544 = vpop.permute.xlu0 %9543
  %9545 = vrot.lane.b32.xlu0 %v9466, 1
  %v9546 = vpop.permute.xlu0 %9545
  %9547 = vrot.lane.b32.xlu0 %v9471, 1
  %v9548 = vpop.permute.xlu0 %9547
  %9549 = vrot.lane.b32.xlu0 %v9476, 1
  %v9550 = vpop.permute.xlu0 %9549
  %9551 = vrot.lane.b32.xlu0 %v9481, 1
  %v9552 = vpop.permute.xlu0 %9551
  %9553 = vrot.lane.b32.xlu0 %v9486, 1
  %v9554 = vpop.permute.xlu0 %9553
  %9555 = vrot.lane.b32.xlu0 %v9491, 1
  %v9556 = vpop.permute.xlu0 %9555
  %9557 = vrot.lane.b32.xlu0 %v9496, 1
  %v9558 = vpop.permute.xlu0 %9557
  %9559 = vrot.lane.b32.xlu0 %v9501, 1
  %v9560 = vpop.permute.xlu0 %9559
  %9561 = vrot.lane.b32.xlu0 %v9506, 1
  %v9562 = vpop.permute.xlu0 %9561
  %9563 = vrot.lane.b32.xlu0 %v9511, 1
  %v9564 = vpop.permute.xlu0 %9563
  %9565 = vrot.lane.b32.xlu0 %v9516, 1
  %v9566 = vpop.permute.xlu0 %9565
  %v9583 = vadd.f32 %v8975, %v9536
  %v9584 = vadd.f32 %v8980, %v9538
  %v9585 = vadd.f32 %v8985, %v9540
  %v9586 = vadd.f32 %v8990, %v9542
  %v9587 = vadd.f32 %v8995, %v9544
  %v9588 = vadd.f32 %v9000, %v9546
  %v9589 = vadd.f32 %v9005, %v9548
  %v9590 = vadd.f32 %v9010, %v9550
  %v9591 = vadd.f32 %v9015, %v9552
  %v9592 = vadd.f32 %v9020, %v9554
  %v9593 = vadd.f32 %v9025, %v9556
  %v9594 = vadd.f32 %v9030, %v9558
  %v9595 = vadd.f32 %v9035, %v9560
  %v9596 = vadd.f32 %v9040, %v9562
  %v9597 = vadd.f32 %v9045, %v9564
  %v9598 = vadd.f32 %v9050, %v9566
  %v9599 = vxor.u32 %v9583, 2147483648
  %v9600 = vxor.u32 %v9584, 2147483648
  %v9601 = vxor.u32 %v9585, 2147483648
  %v9602 = vxor.u32 %v9586, 2147483648
  %v9603 = vxor.u32 %v9587, 2147483648
  %v9604 = vxor.u32 %v9588, 2147483648
  %v9605 = vxor.u32 %v9589, 2147483648
  %v9606 = vxor.u32 %v9590, 2147483648
  %v9607 = vxor.u32 %v9595, 2147483648
  %v9608 = vxor.u32 %v9596, 2147483648
  %v9609 = vxor.u32 %v9597, 2147483648
  %v9610 = vxor.u32 %v9598, 2147483648
  %v9611 = vmul.f32 %v9599, 1.442695
  %v9612 = vpow.pop %v9611
  %v9613 = vmul.f32 %v9600, 1.442695
  %v9614 = vpow.pop %v9613
  %v9615 = vmul.f32 %v9601, 1.442695
  %v9616 = vpow.pop %v9615
  %v9617 = vmul.f32 %v9602, 1.442695
  %v9618 = vpow.pop %v9617
  %v9619 = vmul.f32 %v9603, 1.442695
  %v9620 = vpow.pop %v9619
  %v9621 = vmul.f32 %v9604, 1.442695
  %v9622 = vpow.pop %v9621
  %v9623 = vmul.f32 %v9605, 1.442695
  %v9624 = vpow.pop %v9623
  %v9625 = vmul.f32 %v9606, 1.442695
  %v9626 = vpow.pop %v9625
  %v9627 = vmul.f32 %v9607, 1.442695
  %v9628 = vpow.pop %v9627
  %v9629 = vmul.f32 %v9608, 1.442695
  %v9630 = vpow.pop %v9629
  %v9631 = vmul.f32 %v9609, 1.442695
  %v9632 = vpow.pop %v9631
  %v9633 = vmul.f32 %v9610, 1.442695
  %v9634 = vpow.pop %v9633
  %v9635 = vadd.f32 %v9612, 1.0
  %v9636 = vadd.f32 %v9614, 1.0
  %v9637 = vadd.f32 %v9616, 1.0
  %v9638 = vadd.f32 %v9618, 1.0
  %v9639 = vadd.f32 %v9620, 1.0
  %v9640 = vadd.f32 %v9622, 1.0
  %v9641 = vadd.f32 %v9624, 1.0
  %v9642 = vadd.f32 %v9626, 1.0
  %v9643 = vadd.f32 %v9628, 1.0
  %v9644 = vadd.f32 %v9630, 1.0
  %v9645 = vadd.f32 %v9632, 1.0
  %v9646 = vadd.f32 %v9634, 1.0
  %v9647 = vrcp.pop %v9635
  %v9648 = vmul.f32 1.0, %v9647
  %v9649 = vrcp.pop %v9636
  %v9650 = vmul.f32 1.0, %v9649
  %v9651 = vrcp.pop %v9637
  %v9652 = vmul.f32 1.0, %v9651
  %v9653 = vrcp.pop %v9638
  %v9654 = vmul.f32 1.0, %v9653
  %v9655 = vrcp.pop %v9639
  %v9656 = vmul.f32 1.0, %v9655
  %v9657 = vrcp.pop %v9640
  %v9658 = vmul.f32 1.0, %v9657
  %v9659 = vrcp.pop %v9641
  %v9660 = vmul.f32 1.0, %v9659
  %v9661 = vrcp.pop %v9642
  %v9662 = vmul.f32 1.0, %v9661
  %v9663 = vrcp.pop %v9643
  %v9664 = vmul.f32 1.0, %v9663
  %v9665 = vrcp.pop %v9644
  %v9666 = vmul.f32 1.0, %v9665
  %v9667 = vrcp.pop %v9645
  %v9668 = vmul.f32 1.0, %v9667
  %v9669 = vrcp.pop %v9646
  %v9670 = vmul.f32 1.0, %v9669
  %v9671 = vtanh.pop %v9591
  %v9672 = vtanh.pop %v9592
  %v9673 = vtanh.pop %v9593
  %v9674 = vtanh.pop %v9594
  %9679 = vrot.lane.b32.xlu0 %v9362, 1
  %v9680 = vpop.permute.xlu0 %9679
  %9681 = vrot.lane.b32.xlu0 %v9363, 1
  %v9682 = vpop.permute.xlu0 %9681
  %9683 = vrot.lane.b32.xlu0 %v9364, 1
  %v9684 = vpop.permute.xlu0 %9683
  %9685 = vrot.lane.b32.xlu0 %v9365, 1
  %v9686 = vpop.permute.xlu0 %9685
  %v9691 = vmul.f32 %v9656, %v9680
  %v9692 = vmul.f32 %v9658, %v9682
  %v9693 = vmul.f32 %v9660, %v9684
  %v9694 = vmul.f32 %v9662, %v9686
  %v9695 = vmul.f32 %v9648, %v9671
  %v9696 = vmul.f32 %v9650, %v9672
  %v9697 = vmul.f32 %v9652, %v9673
  %v9698 = vmul.f32 %v9654, %v9674
  %v9699 = vadd.f32 %v9691, %v9695
  %v9700 = vadd.f32 %v9692, %v9696
  %v9701 = vadd.f32 %v9693, %v9697
  %v9702 = vadd.f32 %v9694, %v9698
  %v9703 = vtanh.pop %v9699
  %v9704 = vtanh.pop %v9700
  %v9705 = vtanh.pop %v9701
  %v9706 = vtanh.pop %v9702
  %v9707 = vmul.f32 %v9664, %v9703
  %v9708 = vmul.f32 %v9666, %v9704
  %v9709 = vmul.f32 %v9668, %v9705
  %v9710 = vmul.f32 %v9670, %v9706
  %v9711 = vld [vmem:[%s16] sm:$0xff]
  %v9712 = vld [vmem:[%s16 + $0x8] sm:$0x3]
  %v9713 = vld [vmem:[%s17] sm:$0xff]
  %v9714 = vld [vmem:[%s17 + $0x8] sm:$0x3]
  %9719 = vrot.lane.b32.xlu0 %v9707, 127
  %v9720 = vpop.permute.xlu0 %9719
  %9721 = vrot.lane.b32.xlu0 %v9708, 127
  %v9722 = vpop.permute.xlu0 %9721
  %9723 = vrot.lane.b32.xlu0 %v9709, 127
  %v9724 = vpop.permute.xlu0 %9723
  %9725 = vrot.lane.b32.xlu0 %v9710, 127
  %v9726 = vpop.permute.xlu0 %9725
  %v9732 = vsel %vm8859, %v9711, 0
  %v9735 = vsel %vm8859, %v9712, 0
  %9737 = vmatprep.subr.mxu0 0.0
  %9738 = vmatpush1.msra.mxu0 %v9720
  %9739 = vmatprep.subr.mxu0 0.0
  %9740 = vmatpush1.msra.mxu0 %v9722
  %9741 = vmatprep.subr.mxu0 0.0
  %9742 = vmatpush1.msra.mxu0 %v9724
  %9743 = vmatprep.subr.mxu0 0.0
  %9744 = vmatpush1.msra.mxu0 %v9726
  %9745 = vmatprep.subr.mxu0 0.0
  %9746 = vmatpush1.msra.mxu0 0.0
  %9747 = vmatprep.subr.mxu0 0.0
  %9748 = vmatpush1.msra.mxu0 0.0
  %9749 = vmatprep.subr.mxu0 0.0
  %9750 = vmatpush1.msra.mxu0 0.0
  %9751 = vmatprep.subr.mxu0 0.0
  %9752 = vmatpush1.msra.mxu0 0.0
  %9753 = vmatprep.subr.mxu0 0.0
  %9754 = vmatpush1.msra.mxu0 0.0
  %9755 = vmatprep.subr.mxu0 0.0
  %9756 = vmatpush1.msra.mxu0 0.0
  %9757 = vmatprep.subr.mxu0 0.0
  %9758 = vmatpush1.msra.mxu0 0.0
  %9759 = vmatprep.subr.mxu0 0.0
  %9760 = vmatpush1.msra.mxu0 0.0
  %9761 = vmatprep.subr.mxu0 0.0
  %9762 = vmatpush1.msra.mxu0 0.0
  %9763 = vmatprep.subr.mxu0 0.0
  %9764 = vmatpush1.msra.mxu0 0.0
  %9765 = vmatprep.subr.mxu0 0.0
  %9766 = vmatpush1.msra.mxu0 0.0
  %9767 = vmatprep.subr.mxu0 0.0
  %9768 = vmatpush1.msra.mxu0 0.0
  %9769 = vmatprep.subr.mxu0 0.0
  %9770 = vmatpush1.msra.mxu0 0.0
  %9771 = vmatprep.subr.mxu0 0.0
  %9772 = vmatpush1.msra.mxu0 0.0
  %9773 = vmatprep.subr.mxu0 0.0
  %9774 = vmatpush1.msra.mxu0 0.0
  %9775 = vmatprep.subr.mxu0 0.0
  %9776 = vmatpush1.msra.mxu0 0.0
  %9777 = vmatprep.subr.mxu0 0.0
  %9778 = vmatpush1.msra.mxu0 0.0
  %9779 = vmatprep.subr.mxu0 0.0
  %9780 = vmatpush1.msra.mxu0 0.0
  %9781 = vmatprep.subr.mxu0 0.0
  %9782 = vmatpush1.msra.mxu0 0.0
  %9783 = vmatprep.subr.mxu0 0.0
  %9784 = vmatpush1.msra.mxu0 0.0
  %9785 = vmatprep.subr.mxu0 0.0
  %9786 = vmatpush1.msra.mxu0 0.0
  %9787 = vmatprep.subr.mxu0 0.0
  %9788 = vmatpush1.msra.mxu0 0.0
  %9789 = vmatprep.subr.mxu0 0.0
  %9790 = vmatpush1.msra.mxu0 0.0
  %9791 = vmatprep.subr.mxu0 0.0
  %9792 = vmatpush1.msra.mxu0 0.0
  %9793 = vmatprep.subr.mxu0 0.0
  %9794 = vmatpush1.msra.mxu0 0.0
  %9795 = vmatprep.subr.mxu0 0.0
  %9796 = vmatpush1.msra.mxu0 0.0
  %9797 = vmatprep.subr.mxu0 0.0
  %9798 = vmatpush1.msra.mxu0 0.0
  %9799 = vmatprep.subr.mxu0 0.0
  %9800 = vmatpush1.msra.mxu0 0.0
  %9801 = vmatprep.mubr.f32.mxu0 0.0
  %9802 = vmatmul.mubr.f32.gmra.mrb[0].mxu0 %v9732
  %v9803 = vpop.f32.mrb[0].mxu0
  %v9804 = vadd.f32 %v9713, %v9803
  %v9805 = vpop.f32.mrb[0].mxu0
  %9806 = vmatprep.mubr.f32.mxu0 0.0
  %9807 = vmatmul.mubr.f32.gmra.mrb[0].mxu0 %v9735
  %v9808 = vpop.f32.mrb[0].mxu0
  %v9809 = vadd.f32 %v9714, %v9808
  %v9810 = vpop.f32.mrb[0].mxu0
  %9811 = vdwg.mxu0
  %vm9812 = vcmask 7168
  %v9813 = vsel %vm9812, %v9804, -inf
  %vm9814 = vcmask 1024
  %v9815 = vsel %vm9814, %v9809, -inf
  %v9816 = vmax.f32 %v9813, %v9815
  %v9817 = vrot.slane %v9816, 4
  %v9818 = vmax.f32 %v9816, %v9817
  %v9819 = vrot.slane %v9818, 2
  %v9820 = vmax.f32 %v9818, %v9819
  %v9821 = vrot.slane %v9820, 1
  %v9822 = vmax.f32 %v9820, %v9821
  %v9823 = vsub.f32 %v9804, %v9822
  %v9824 = vsub.f32 %v9809, %v9822
  %v9825 = vmul.f32 %v9823, 1.442695
  %v9826 = vpow.pop %v9825
  %v9827 = vmul.f32 %v9824, 1.442695
  %v9828 = vpow.pop %v9827
  %v9829 = vsel %vm9812, %v9826, 0.0
  %v9830 = vsel %vm9814, %v9828, 0.0
  %v9831 = vadd.f32 %v9829, %v9830
  %v9832 = vrot.slane %v9831, 4
  %v9833 = vadd.f32 %v9831, %v9832
  %v9834 = vrot.slane %v9833, 2
  %v9835 = vadd.f32 %v9833, %v9834
  %v9836 = vrot.slane %v9835, 1
  %v9837 = vadd.f32 %v9835, %v9836
  %v9838 = vrcp.pop %v9837
  %v9839 = vmul.f32 %v9826, %v9838
  %v9840 = vmul.f32 %v9828, %v9838
  %9841 = vst.msk [vmem:[%s18] sm:$0xff] %vm9812, %v9839
  %9842 = vst.msk [vmem:[%s18 + $0x8] sm:$0x3] %vm9814, %v9840
  // Predicated region
  $region74: #{net_forward.1} parent=0 // pred_check
    _
  $region75: #{net_forward.1} parent=0 // pred_check_branch
    %9844 = sbr.rel (0) target = $region77
  $region76: #{net_forward.1} parent=0 // pred_region
    _
  $region77: #{net_forward.1} parent=0 // pred_fallthru
    _
  // Predicated region
  $region78: #{net_forward.1} parent=0 // pred_check
    _
  $region79: #{net_forward.1} parent=0 // pred_check_branch
    %9846 = sbr.rel (0) target = $region81
  $region80: #{net_forward.1} parent=0 // pred_region
    _
  $region81: #{net_forward.1} parent=0 // pred_fallthru
    _

</llo_original>
